<compile_context>
chip_gen: v5e
topology: v5e:2x2
jax: 0.10.0
libtpu: 0.0.40
codegen_flags: <defaults>
</compile_context>

<pallas_src>
import math
from functools import partial

import jax
import jax.numpy as jnp
from jax import lax
from jax.experimental import pallas as pl
from jax.experimental.pallas import tpu as pltpu


def _decoder_layer_kernel(tgt_ref, mem_ref,
                          sa_wqkv_ref, sa_b_ref, sa_wo_ref, sa_bo_ref,
                          ca_wq_ref, ca_bq_ref, ca_wkv_ref, ca_bkv_ref,
                          ca_wo_ref, ca_bo_ref,
                          w1_ref, b1_ref, w2_ref, b2_ref, eps_ref,
                          out_ref, *, nhead):
    t, bn, c = tgt_ref.shape          # tgt block: (T, block_n, C)
    s = mem_ref.shape[0]              # mem block: (S, block_n, C)
    dh = c // nhead
    bf16 = jnp.bfloat16

    def mm(a_f32, w_ref):
        # bf16 MXU operands, f32 accumulation.
        return jnp.dot(a_f32.astype(bf16), w_ref[...],
                       preferred_element_type=jnp.float32)

    def gather_batch_major(ref):
        # (L, bn, C) block -> batch-major (bn*L, C) slab.  VMEM-local reorder
        # (replaces the former wrapper-side HBM transposes); uses only integer
        # ref indexing + concatenate along the major axis.
        return jnp.concatenate([ref[:, b, :] for b in range(bn)], axis=0)

    x = gather_batch_major(tgt_ref)          # (bn*t, c) f32 residual stream
    mem = gather_batch_major(mem_ref)        # (bn*s, c) f32

    def attention(q, k, v):
        # q: (bn, t, c) bf16, k/v: (bn, L, c) bf16.  Per-head, batched over bn.
        outs = []
        for h in range(nhead):               # static loop, nhead iterations
            lo = h * dh
            qh = q[:, :, lo:lo + dh]
            kh = k[:, :, lo:lo + dh]
            vh = v[:, :, lo:lo + dh]
            logits = jnp.einsum("bqd,bkd->bqk", qh, kh,
                                preferred_element_type=jnp.float32)
            logits = logits - jnp.max(logits, axis=-1, keepdims=True)
            p = jnp.exp(logits)
            p = p * pl.reciprocal(jnp.sum(p, axis=-1, keepdims=True), approx=True)
            ctx = jnp.einsum("bqk,bkd->bqd", p.astype(bf16), vh,
                             preferred_element_type=jnp.float32)     # (bn, t, dh)
            outs.append(ctx.astype(bf16))
        # lane-dense head reassembly -> (bn*t, c) bf16 out-projection input
        return jnp.concatenate(outs, axis=-1).reshape(bn * t, c)

    # ---- 1) self-attention (fused QKV, single K=C out-projection) + residual ----
    qkv = mm(x, sa_wqkv_ref) + sa_b_ref[...]                 # (bn*t, 3C)
    q = qkv[:, 0:c].reshape(bn, t, c).astype(bf16)
    k = qkv[:, c:2 * c].reshape(bn, t, c).astype(bf16)
    v = qkv[:, 2 * c:3 * c].reshape(bn, t, c).astype(bf16)
    ctx = attention(q, k, v)
    x = x + (jnp.dot(ctx, sa_wo_ref[...], preferred_element_type=jnp.float32)
             + sa_bo_ref[...])

    # ---- 2) cross-attention (fused KV) + residual ----
    qx = (mm(x, ca_wq_ref) + ca_bq_ref[...]).reshape(bn, t, c).astype(bf16)
    kv = mm(mem, ca_wkv_ref) + ca_bkv_ref[...]               # (bn*s, 2C)
    kx = kv[:, 0:c].reshape(bn, s, c).astype(bf16)
    vx = kv[:, c:2 * c].reshape(bn, s, c).astype(bf16)
    ctx = attention(qx, kx, vx)
    x = x + (jnp.dot(ctx, ca_wo_ref[...], preferred_element_type=jnp.float32)
             + ca_bo_ref[...])

    # ---- 3) feed-forward: ScaledLinear -> DoubleSwish -> ScaledLinear + residual ----
    hidden = mm(x, w1_ref) + b1_ref[...]                     # (bn*t, F) f32
    hidden = (hidden * jax.nn.sigmoid(hidden - 1.0)).astype(bf16)   # DoubleSwish
    x = x + (jnp.dot(hidden, w2_ref[...], preferred_element_type=jnp.float32)
             + b2_ref[...])

    # ---- 4) BasicNorm: x * rsqrt(mean(x^2, -1) + exp(eps)); exp(eps) precomputed ----
    eps = eps_ref[0, 0]
    y = x * lax.rsqrt(jnp.mean(x * x, axis=-1, keepdims=True) + eps)

    # ---- scatter the batch-major slab back to the (T, block_n, C) output block ----
    for b in range(bn):
        out_ref[:, b, :] = y[b * t:(b + 1) * t, :]


def prepare_params(params, nhead):
    """One-time parameter transforms: transpose to (in, out) layout, fold the
    1/sqrt(head_dim) scale into the Q projection, cast weights to bf16, exp(eps)."""
    C = params["sa_out_w"].shape[0]
    dh = C // nhead
    qscale = 1.0 / math.sqrt(dh)
    bf = lambda a: a.astype(jnp.bfloat16)
    row = lambda v: v.reshape(1, -1).astype(jnp.float32)

    sa_w = jnp.concatenate([params["sa_in_w"][:C] * qscale,
                            params["sa_in_w"][C:]], axis=0)
    sa_b = jnp.concatenate([params["sa_in_b"][:C] * qscale,
                            params["sa_in_b"][C:]], axis=0)
    return dict(
        sa_wqkv=bf(sa_w.T),                                # (C, 3C)
        sa_b=row(sa_b),
        sa_wo=bf(params["sa_out_w"].T),                    # (C, C)
        sa_bo=row(params["sa_out_b"]),
        ca_wq=bf((params["ca_in_w"][:C] * qscale).T),      # (C, C)
        ca_bq=row(params["ca_in_b"][:C] * qscale),
        ca_wkv=bf(params["ca_in_w"][C:].T),                # (C, 2C)
        ca_bkv=row(params["ca_in_b"][C:]),
        ca_wo=bf(params["ca_out_w"].T),                    # (C, C)
        ca_bo=row(params["ca_out_b"]),
        ff_w1=bf(params["ff_w1"].T),                       # (C, F)
        ff_b1=row(params["ff_b1"]),
        ff_w2=bf(params["ff_w2"].T),                       # (F, C)
        ff_b2=row(params["ff_b2"]),
        eps=jnp.exp(params["eps"]).reshape(1, 1).astype(jnp.float32),
    )


def _vmem_bytes_estimate(bn, T, S, C, F):
    """Rough per-step VMEM footprint (bytes) used to size block_n."""
    f32, bf = 4, 2
    io = 2 * f32 * (T * bn * C + S * bn * C + T * bn * C)      # double-buffered blocks
    w = bf * (3 * C * C + C * C + C * C + 2 * C * C + C * C + C * F + F * C) \
        + f32 * (9 * C + F)                                    # single-buffered weights
    act = f32 * bn * T * (3 * C + F + 4 * C) + f32 * bn * S * 2 * C \
        + bf * bn * (2 * T * C + 2 * S * C) + 2 * f32 * bn * T * S
    return io + w + act


def _choose_block_n(N, T, S, C, F, budget):
    # block_n must divide N and satisfy the (8,128) rule on the (block_n, C) dims.
    cands = [d for d in range(1, N + 1) if N % d == 0 and (d % 8 == 0 or d == N)]
    fitting = [d for d in cands if _vmem_bytes_estimate(d, T, S, C, F) <= budget]
    multi = [d for d in fitting if N // d >= 2]   # keep >= 2 grid steps when possible
    if multi:
        return max(multi)
    if fitting:
        return max(fitting)
    return min(cands)


def transformer_decoder_layer(tgt_tnc, mem_snc, params, *, nhead, block_n=None):
    """tgt_tnc: (T, N, C), mem_snc: (S, N, C) -> (T, N, C)  (PyTorch convention)."""
    T, N, C = tgt_tnc.shape
    S = mem_snc.shape[0]
    assert C % nhead == 0, "d_model must be divisible by nhead"
    F = params["ff_w1"].shape[0]

    p = prepare_params(params, nhead)   # one-time transform; hoist for repeated calls

    # Generation-aware VMEM plan (64 MiB v7x vs 128 MiB v5e/v6e).
    try:
        vmem_cap = int(pltpu.get_tpu_info().vmem_capacity_bytes)
    except Exception:
        vmem_cap = 64 * 1024 * 1024     # assume the smallest (v7x) if query unavailable
    vmem_limit = max(32 * 1024 * 1024,
                     min(vmem_cap * 7 // 8, 112 * 1024 * 1024))
    budget = vmem_cap * 3 // 4

    if block_n is None:
        block_n = _choose_block_n(N, T, S, C, F, budget)
    assert N % block_n == 0 and (block_n % 8 == 0 or block_n == N), (
        "block_n must divide N and be a multiple of 8 (or equal N) "
        "for the (8,128) BlockSpec rule")
    grid_steps = N // block_n

    def const_spec(arr):
        nd = arr.ndim
        idx = lambda g, _nd=nd: (0,) * _nd
        try:   # single-buffer resident weights (block index never changes)
            return pl.BlockSpec(arr.shape, idx, pipeline_mode=pl.Buffered(1))
        except Exception:
            return pl.BlockSpec(arr.shape, idx)

    in_specs = [
        pl.BlockSpec((T, block_n, C), lambda g: (0, g, 0)),    # tgt block, (T, N, C)
        pl.BlockSpec((S, block_n, C), lambda g: (0, g, 0)),    # mem block, (S, N, C)
        const_spec(p["sa_wqkv"]), const_spec(p["sa_b"]),
        const_spec(p["sa_wo"]), const_spec(p["sa_bo"]),
        const_spec(p["ca_wq"]), const_spec(p["ca_bq"]),
        const_spec(p["ca_wkv"]), const_spec(p["ca_bkv"]),
        const_spec(p["ca_wo"]), const_spec(p["ca_bo"]),
        const_spec(p["ff_w1"]), const_spec(p["ff_b1"]),
        const_spec(p["ff_w2"]), const_spec(p["ff_b2"]),
        pl.BlockSpec((1, 1), lambda g: (0, 0),
                     memory_space=pltpu.MemorySpace.SMEM),     # exp(eps) scalar
    ]

    out = pl.pallas_call(
        partial(_decoder_layer_kernel, nhead=nhead),
        out_shape=jax.ShapeDtypeStruct((T, N, C), jnp.float32),
        grid=(grid_steps,),
        in_specs=in_specs,
        out_specs=pl.BlockSpec((T, block_n, C), lambda g: (0, g, 0)),
        compiler_params=pltpu.CompilerParams(
            dimension_semantics=("parallel",),
            vmem_limit_bytes=int(vmem_limit),
        ),
    )(
        tgt_tnc, mem_snc,
        p["sa_wqkv"], p["sa_b"], p["sa_wo"], p["sa_bo"],
        p["ca_wq"], p["ca_bq"], p["ca_wkv"], p["ca_bkv"], p["ca_wo"], p["ca_bo"],
        p["ff_w1"], p["ff_b1"], p["ff_w2"], p["ff_b2"],
        p["eps"],
    )
    return out                                                 # already (T, N, C)


def init_params(key, d_model, nhead, dim_ff):
    C, F = d_model, dim_ff
    ks = jax.random.split(key, 12)

    def w(k, shape, scale=1.0):
        fan_in = shape[-1]
        return jax.random.normal(k, shape, jnp.float32) * (scale / math.sqrt(fan_in))

    def b(k, n, scale=1.0):
        return jax.random.normal(k, (n,), jnp.float32) * (0.01 * scale)

    return dict(
        sa_in_w=w(ks[0], (3 * C, C)), sa_in_b=b(ks[1], 3 * C),
        sa_out_w=w(ks[2], (C, C)), sa_out_b=b(ks[3], C),
        ca_in_w=w(ks[4], (3 * C, C)), ca_in_b=b(ks[5], 3 * C),
        ca_out_w=w(ks[6], (C, C)), ca_out_b=b(ks[7], C),
        ff_w1=w(ks[8], (F, C)), ff_b1=b(ks[9], F),
        # second ScaledLinear in feed_forward has initial_scale=0.25
        ff_w2=w(ks[10], (C, F), 0.25), ff_b2=b(ks[11], C, 0.25),
        # BasicNorm stores log(eps) with default eps=0.25
        eps=jnp.array(math.log(0.25), jnp.float32),
    )


def reference_forward(tgt_tnc, mem_snc, p, nhead):
    """Pure-JAX f32 reference with identical (eval-mode) semantics."""
    def mha(q, kv, in_w, in_b, out_w, out_b):
        T, N, C = q.shape
        S = kv.shape[0]
        Dh = C // nhead
        qp = jnp.einsum("tnc,ec->tne", q, in_w[:C]) + in_b[:C]
        kp = jnp.einsum("snc,ec->sne", kv, in_w[C:2 * C]) + in_b[C:2 * C]
        vp = jnp.einsum("snc,ec->sne", kv, in_w[2 * C:]) + in_b[2 * C:]
        qp = qp * (Dh ** -0.5)
        qh = qp.reshape(T, N, nhead, Dh)
        kh = kp.reshape(S, N, nhead, Dh)
        vh = vp.reshape(S, N, nhead, Dh)
        logits = jnp.einsum("tnhd,snhd->nhts", qh, kh)
        attn = jax.nn.softmax(logits, axis=-1)
        ctx = jnp.einsum("nhts,snhd->tnhd", attn, vh).reshape(T, N, C)
        return jnp.einsum("tnc,ec->tne", ctx, out_w) + out_b

    x = tgt_tnc + mha(tgt_tnc, tgt_tnc, p["sa_in_w"], p["sa_in_b"],
                      p["sa_out_w"], p["sa_out_b"])
    x = x + mha(x, mem_snc, p["ca_in_w"], p["ca_in_b"],
                p["ca_out_w"], p["ca_out_b"])
    h = jnp.einsum("tnc,fc->tnf", x, p["ff_w1"]) + p["ff_b1"]
    h = h * jax.nn.sigmoid(h - 1.0)
    x = x + (jnp.einsum("tnf,cf->tnc", h, p["ff_w2"]) + p["ff_b2"])
    scales = (jnp.mean(x * x, axis=-1, keepdims=True) + jnp.exp(p["eps"])) ** -0.5
    return x * scales


if __name__ == "__main__":
    # Small but layout-representative config: C is a full 128-lane vreg width,
    # N is a multiple of 8 so block_n=8 gives 2 parallel grid steps.
    T, S, N = 8, 16, 16          # tgt len, memory len, batch
    d_model, nhead, dim_ff = 128, 4, 256

    key = jax.random.PRNGKey(0)
    k_tgt, k_mem, k_p = jax.random.split(key, 3)
    tgt = jax.random.normal(k_tgt, (T, N, d_model), jnp.float32)
    mem = jax.random.normal(k_mem, (S, N, d_model), jnp.float32)
    params = init_params(k_p, d_model, nhead, dim_ff)

    out = transformer_decoder_layer(tgt, mem, params, nhead=nhead)
    out = jax.block_until_ready(out)

    ref = reference_forward(tgt, mem, params, nhead)
    assert out.shape == (T, N, d_model)
    max_err = float(jnp.max(jnp.abs(out - ref)))
    # bf16 MXU operands / approx softmax reciprocal vs a pure-f32 reference
    assert jnp.allclose(out, ref, rtol=4e-2, atol=4e-2), f"max_err={max_err}"
    print("KERNEL_OK")
</pallas_src>

<mosaic_0001>
module attributes {stable_mosaic.version = 11 : i64} {
  func.func @_decoder_layer_kernel(%arg0: i32, %arg1: memref<8x8x128xf32, #tpu.memory_space<vmem>>, %arg2: memref<16x8x128xf32, #tpu.memory_space<vmem>>, %arg3: memref<128x384xbf16, #tpu.memory_space<vmem>>, %arg4: memref<1x384xf32, #tpu.memory_space<vmem>>, %arg5: memref<128x128xbf16, #tpu.memory_space<vmem>>, %arg6: memref<1x128xf32, #tpu.memory_space<vmem>>, %arg7: memref<128x128xbf16, #tpu.memory_space<vmem>>, %arg8: memref<1x128xf32, #tpu.memory_space<vmem>>, %arg9: memref<128x256xbf16, #tpu.memory_space<vmem>>, %arg10: memref<1x256xf32, #tpu.memory_space<vmem>>, %arg11: memref<128x128xbf16, #tpu.memory_space<vmem>>, %arg12: memref<1x128xf32, #tpu.memory_space<vmem>>, %arg13: memref<128x256xbf16, #tpu.memory_space<vmem>>, %arg14: memref<1x256xf32, #tpu.memory_space<vmem>>, %arg15: memref<256x128xbf16, #tpu.memory_space<vmem>>, %arg16: memref<1x128xf32, #tpu.memory_space<vmem>>, %arg17: memref<1x1xf32, #tpu.memory_space<smem>>, %arg18: memref<8x8x128xf32, #tpu.memory_space<vmem>>) attributes {dimension_semantics = [#tpu.dimension_semantics<parallel>], iteration_bounds = array<i64: 2>, scalar_prefetch = 0 : i64, scratch_operands = 0 : i64, tpu.core_type = #tpu.core_type<tc>, window_params = [{transform_indices = @transform_0, window_bounds = array<i64: 8, 8, 128>}, {transform_indices = @transform_1, window_bounds = array<i64: 16, 8, 128>}, {pipeline_mode = #tpu.pipeline_mode<synchronous>, transform_indices = @transform_2, window_bounds = array<i64: 128, 384>}, {pipeline_mode = #tpu.pipeline_mode<synchronous>, transform_indices = @transform_3, window_bounds = array<i64: 1, 384>}, {pipeline_mode = #tpu.pipeline_mode<synchronous>, transform_indices = @transform_4, window_bounds = array<i64: 128, 128>}, {pipeline_mode = #tpu.pipeline_mode<synchronous>, transform_indices = @transform_5, window_bounds = array<i64: 1, 128>}, {pipeline_mode = #tpu.pipeline_mode<synchronous>, transform_indices = @transform_6, window_bounds = array<i64: 128, 128>}, {pipeline_mode = #tpu.pipeline_mode<synchronous>, transform_indices = @transform_7, window_bounds = array<i64: 1, 128>}, {pipeline_mode = #tpu.pipeline_mode<synchronous>, transform_indices = @transform_8, window_bounds = array<i64: 128, 256>}, {pipeline_mode = #tpu.pipeline_mode<synchronous>, transform_indices = @transform_9, window_bounds = array<i64: 1, 256>}, {pipeline_mode = #tpu.pipeline_mode<synchronous>, transform_indices = @transform_10, window_bounds = array<i64: 128, 128>}, {pipeline_mode = #tpu.pipeline_mode<synchronous>, transform_indices = @transform_11, window_bounds = array<i64: 1, 128>}, {pipeline_mode = #tpu.pipeline_mode<synchronous>, transform_indices = @transform_12, window_bounds = array<i64: 128, 256>}, {pipeline_mode = #tpu.pipeline_mode<synchronous>, transform_indices = @transform_13, window_bounds = array<i64: 1, 256>}, {pipeline_mode = #tpu.pipeline_mode<synchronous>, transform_indices = @transform_14, window_bounds = array<i64: 256, 128>}, {pipeline_mode = #tpu.pipeline_mode<synchronous>, transform_indices = @transform_15, window_bounds = array<i64: 1, 128>}, {transform_indices = @transform_16, window_bounds = array<i64: 1, 1>}, {transform_indices = @transform_17, window_bounds = array<i64: 8, 8, 128>}]} {
    %c0 = arith.constant 0 : index
    %c0_0 = arith.constant 0 : index
    %c0_1 = arith.constant 0 : index
    %0 = vector.load %arg1[%c0, %c0_0, %c0_1] : memref<8x8x128xf32, #tpu.memory_space<vmem>>, vector<8x1x128xf32>
    %1 = vector.shape_cast %0 : vector<8x1x128xf32> to vector<8x128xf32>
    %c0_2 = arith.constant 0 : index
    %c1 = arith.constant 1 : index
    %c0_3 = arith.constant 0 : index
    %2 = vector.load %arg1[%c0_2, %c1, %c0_3] : memref<8x8x128xf32, #tpu.memory_space<vmem>>, vector<8x1x128xf32>
    %3 = vector.shape_cast %2 : vector<8x1x128xf32> to vector<8x128xf32>
    %c0_4 = arith.constant 0 : index
    %c2 = arith.constant 2 : index
    %c0_5 = arith.constant 0 : index
    %4 = vector.load %arg1[%c0_4, %c2, %c0_5] : memref<8x8x128xf32, #tpu.memory_space<vmem>>, vector<8x1x128xf32>
    %5 = vector.shape_cast %4 : vector<8x1x128xf32> to vector<8x128xf32>
    %c0_6 = arith.constant 0 : index
    %c3 = arith.constant 3 : index
    %c0_7 = arith.constant 0 : index
    %6 = vector.load %arg1[%c0_6, %c3, %c0_7] : memref<8x8x128xf32, #tpu.memory_space<vmem>>, vector<8x1x128xf32>
    %7 = vector.shape_cast %6 : vector<8x1x128xf32> to vector<8x128xf32>
    %c0_8 = arith.constant 0 : index
    %c4 = arith.constant 4 : index
    %c0_9 = arith.constant 0 : index
    %8 = vector.load %arg1[%c0_8, %c4, %c0_9] : memref<8x8x128xf32, #tpu.memory_space<vmem>>, vector<8x1x128xf32>
    %9 = vector.shape_cast %8 : vector<8x1x128xf32> to vector<8x128xf32>
    %c0_10 = arith.constant 0 : index
    %c5 = arith.constant 5 : index
    %c0_11 = arith.constant 0 : index
    %10 = vector.load %arg1[%c0_10, %c5, %c0_11] : memref<8x8x128xf32, #tpu.memory_space<vmem>>, vector<8x1x128xf32>
    %11 = vector.shape_cast %10 : vector<8x1x128xf32> to vector<8x128xf32>
    %c0_12 = arith.constant 0 : index
    %c6 = arith.constant 6 : index
    %c0_13 = arith.constant 0 : index
    %12 = vector.load %arg1[%c0_12, %c6, %c0_13] : memref<8x8x128xf32, #tpu.memory_space<vmem>>, vector<8x1x128xf32>
    %13 = vector.shape_cast %12 : vector<8x1x128xf32> to vector<8x128xf32>
    %c0_14 = arith.constant 0 : index
    %c7 = arith.constant 7 : index
    %c0_15 = arith.constant 0 : index
    %14 = vector.load %arg1[%c0_14, %c7, %c0_15] : memref<8x8x128xf32, #tpu.memory_space<vmem>>, vector<8x1x128xf32>
    %15 = vector.shape_cast %14 : vector<8x1x128xf32> to vector<8x128xf32>
    %16 = tpu.concatenate %1, %3, %5, %7, %9, %11, %13, %15 in 0 : vector<8x128xf32>, vector<8x128xf32>, vector<8x128xf32>, vector<8x128xf32>, vector<8x128xf32>, vector<8x128xf32>, vector<8x128xf32>, vector<8x128xf32> -> vector<64x128xf32>
    %c0_16 = arith.constant 0 : index
    %c0_17 = arith.constant 0 : index
    %c0_18 = arith.constant 0 : index
    %17 = vector.load %arg2[%c0_16, %c0_17, %c0_18] : memref<16x8x128xf32, #tpu.memory_space<vmem>>, vector<16x1x128xf32>
    %18 = vector.shape_cast %17 : vector<16x1x128xf32> to vector<16x128xf32>
    %c0_19 = arith.constant 0 : index
    %c1_20 = arith.constant 1 : index
    %c0_21 = arith.constant 0 : index
    %19 = vector.load %arg2[%c0_19, %c1_20, %c0_21] : memref<16x8x128xf32, #tpu.memory_space<vmem>>, vector<16x1x128xf32>
    %20 = vector.shape_cast %19 : vector<16x1x128xf32> to vector<16x128xf32>
    %c0_22 = arith.constant 0 : index
    %c2_23 = arith.constant 2 : index
    %c0_24 = arith.constant 0 : index
    %21 = vector.load %arg2[%c0_22, %c2_23, %c0_24] : memref<16x8x128xf32, #tpu.memory_space<vmem>>, vector<16x1x128xf32>
    %22 = vector.shape_cast %21 : vector<16x1x128xf32> to vector<16x128xf32>
    %c0_25 = arith.constant 0 : index
    %c3_26 = arith.constant 3 : index
    %c0_27 = arith.constant 0 : index
    %23 = vector.load %arg2[%c0_25, %c3_26, %c0_27] : memref<16x8x128xf32, #tpu.memory_space<vmem>>, vector<16x1x128xf32>
    %24 = vector.shape_cast %23 : vector<16x1x128xf32> to vector<16x128xf32>
    %c0_28 = arith.constant 0 : index
    %c4_29 = arith.constant 4 : index
    %c0_30 = arith.constant 0 : index
    %25 = vector.load %arg2[%c0_28, %c4_29, %c0_30] : memref<16x8x128xf32, #tpu.memory_space<vmem>>, vector<16x1x128xf32>
    %26 = vector.shape_cast %25 : vector<16x1x128xf32> to vector<16x128xf32>
    %c0_31 = arith.constant 0 : index
    %c5_32 = arith.constant 5 : index
    %c0_33 = arith.constant 0 : index
    %27 = vector.load %arg2[%c0_31, %c5_32, %c0_33] : memref<16x8x128xf32, #tpu.memory_space<vmem>>, vector<16x1x128xf32>
    %28 = vector.shape_cast %27 : vector<16x1x128xf32> to vector<16x128xf32>
    %c0_34 = arith.constant 0 : index
    %c6_35 = arith.constant 6 : index
    %c0_36 = arith.constant 0 : index
    %29 = vector.load %arg2[%c0_34, %c6_35, %c0_36] : memref<16x8x128xf32, #tpu.memory_space<vmem>>, vector<16x1x128xf32>
    %30 = vector.shape_cast %29 : vector<16x1x128xf32> to vector<16x128xf32>
    %c0_37 = arith.constant 0 : index
    %c7_38 = arith.constant 7 : index
    %c0_39 = arith.constant 0 : index
    %31 = vector.load %arg2[%c0_37, %c7_38, %c0_39] : memref<16x8x128xf32, #tpu.memory_space<vmem>>, vector<16x1x128xf32>
    %32 = vector.shape_cast %31 : vector<16x1x128xf32> to vector<16x128xf32>
    %33 = tpu.concatenate %18, %20, %22, %24, %26, %28, %30, %32 in 0 : vector<16x128xf32>, vector<16x128xf32>, vector<16x128xf32>, vector<16x128xf32>, vector<16x128xf32>, vector<16x128xf32>, vector<16x128xf32>, vector<16x128xf32> -> vector<128x128xf32>
    %34 = arith.truncf %16 : vector<64x128xf32> to vector<64x128xbf16>
    %c0_40 = arith.constant 0 : index
    %c0_41 = arith.constant 0 : index
    %35 = vector.load %arg3[%c0_40, %c0_41] : memref<128x384xbf16, #tpu.memory_space<vmem>>, vector<128x384xbf16>
    %cst = arith.constant dense<0.000000e+00> : vector<64x384xf32>
    %36 = tpu.matmul %34, %35, %cst {dimension_numbers = #tpu.dot_dimension_numbers<[1], [0], [0], [1], [0, 0, 1, 1], [], []>} : vector<64x128xbf16>, vector<128x384xbf16>, vector<64x384xf32> -> vector<64x384xf32>
    %c0_42 = arith.constant 0 : index
    %c0_43 = arith.constant 0 : index
    %37 = vector.load %arg4[%c0_42, %c0_43] : memref<1x384xf32, #tpu.memory_space<vmem>>, vector<1x384xf32>
    %38 = vector.broadcast %37 : vector<1x384xf32> to vector<64x384xf32>
    %39 = arith.addf %36, %38 : vector<64x384xf32>
    %40 = vector.extract_strided_slice %39 {offsets = [0, 0], sizes = [64, 128], strides = [1, 1]} : vector<64x384xf32> to vector<64x128xf32>
    %41 = vector.shape_cast %40 : vector<64x128xf32> to vector<8x8x128xf32>
    %42 = arith.truncf %41 : vector<8x8x128xf32> to vector<8x8x128xbf16>
    %43 = vector.extract_strided_slice %39 {offsets = [0, 128], sizes = [64, 128], strides = [1, 1]} : vector<64x384xf32> to vector<64x128xf32>
    %44 = vector.shape_cast %43 : vector<64x128xf32> to vector<8x8x128xf32>
    %45 = arith.truncf %44 : vector<8x8x128xf32> to vector<8x8x128xbf16>
    %46 = vector.extract_strided_slice %39 {offsets = [0, 256], sizes = [64, 128], strides = [1, 1]} : vector<64x384xf32> to vector<64x128xf32>
    %47 = vector.shape_cast %46 : vector<64x128xf32> to vector<8x8x128xf32>
    %48 = arith.truncf %47 : vector<8x8x128xf32> to vector<8x8x128xbf16>
    %49 = vector.extract_strided_slice %42 {offsets = [0, 0, 0], sizes = [8, 8, 32], strides = [1, 1, 1]} : vector<8x8x128xbf16> to vector<8x8x32xbf16>
    %50 = vector.extract_strided_slice %45 {offsets = [0, 0, 0], sizes = [8, 8, 32], strides = [1, 1, 1]} : vector<8x8x128xbf16> to vector<8x8x32xbf16>
    %51 = vector.extract_strided_slice %48 {offsets = [0, 0, 0], sizes = [8, 8, 32], strides = [1, 1, 1]} : vector<8x8x128xbf16> to vector<8x8x32xbf16>
    "tpu.trace_start"() <{level = 10 : i32, message = "bqd,bkd->bqk"}> : () -> ()
    %cst_44 = arith.constant dense<0.000000e+00> : vector<8x8x8xf32>
    %52 = tpu.matmul %49, %50, %cst_44 {dimension_numbers = #tpu.dot_dimension_numbers<[2], [2], [1], [1], [0, 0, 0, 1, 1, 1], [0], [0]>} : vector<8x8x32xbf16>, vector<8x8x32xbf16>, vector<8x8x8xf32> -> vector<8x8x8xf32>
    "tpu.trace_stop"() : () -> ()
    %cst_45 = arith.constant dense<0xFF800000> : vector<8x8xf32>
    %53 = vector.multi_reduction <maximumf>, %52, %cst_45 [2] : vector<8x8x8xf32> to vector<8x8xf32>
    %54 = vector.shape_cast %53 : vector<8x8xf32> to vector<8x8x1xf32>
    %55 = vector.broadcast %54 : vector<8x8x1xf32> to vector<8x8x8xf32>
    %56 = arith.subf %52, %55 : vector<8x8x8xf32>
    %57 = math.exp %56 : vector<8x8x8xf32>
    %cst_46 = arith.constant dense<0.000000e+00> : vector<8x8xf32>
    %58 = vector.multi_reduction <add>, %57, %cst_46 [2] : vector<8x8x8xf32> to vector<8x8xf32>
    %59 = vector.shape_cast %58 : vector<8x8xf32> to vector<8x8x1xf32>
    %60 = tpu.reciprocal %59 {approx = true} : vector<8x8x1xf32> -> vector<8x8x1xf32>
    %61 = vector.broadcast %60 : vector<8x8x1xf32> to vector<8x8x8xf32>
    %62 = arith.mulf %57, %61 : vector<8x8x8xf32>
    %63 = arith.truncf %62 : vector<8x8x8xf32> to vector<8x8x8xbf16>
    "tpu.trace_start"() <{level = 10 : i32, message = "bqk,bkd->bqd"}> : () -> ()
    %cst_47 = arith.constant dense<0.000000e+00> : vector<8x8x32xf32>
    %64 = tpu.matmul %63, %51, %cst_47 {dimension_numbers = #tpu.dot_dimension_numbers<[2], [1], [1], [2], [0, 0, 0, 1, 1, 2], [0], [0]>} : vector<8x8x8xbf16>, vector<8x8x32xbf16>, vector<8x8x32xf32> -> vector<8x8x32xf32>
    "tpu.trace_stop"() : () -> ()
    %65 = arith.truncf %64 : vector<8x8x32xf32> to vector<8x8x32xbf16>
    %66 = vector.extract_strided_slice %42 {offsets = [0, 0, 32], sizes = [8, 8, 32], strides = [1, 1, 1]} : vector<8x8x128xbf16> to vector<8x8x32xbf16>
    %67 = vector.extract_strided_slice %45 {offsets = [0, 0, 32], sizes = [8, 8, 32], strides = [1, 1, 1]} : vector<8x8x128xbf16> to vector<8x8x32xbf16>
    %68 = vector.extract_strided_slice %48 {offsets = [0, 0, 32], sizes = [8, 8, 32], strides = [1, 1, 1]} : vector<8x8x128xbf16> to vector<8x8x32xbf16>
    "tpu.trace_start"() <{level = 10 : i32, message = "bqd,bkd->bqk"}> : () -> ()
    %cst_48 = arith.constant dense<0.000000e+00> : vector<8x8x8xf32>
    %69 = tpu.matmul %66, %67, %cst_48 {dimension_numbers = #tpu.dot_dimension_numbers<[2], [2], [1], [1], [0, 0, 0, 1, 1, 1], [0], [0]>} : vector<8x8x32xbf16>, vector<8x8x32xbf16>, vector<8x8x8xf32> -> vector<8x8x8xf32>
    "tpu.trace_stop"() : () -> ()
    %cst_49 = arith.constant dense<0xFF800000> : vector<8x8xf32>
    %70 = vector.multi_reduction <maximumf>, %69, %cst_49 [2] : vector<8x8x8xf32> to vector<8x8xf32>
    %71 = vector.shape_cast %70 : vector<8x8xf32> to vector<8x8x1xf32>
    %72 = vector.broadcast %71 : vector<8x8x1xf32> to vector<8x8x8xf32>
    %73 = arith.subf %69, %72 : vector<8x8x8xf32>
    %74 = math.exp %73 : vector<8x8x8xf32>
    %cst_50 = arith.constant dense<0.000000e+00> : vector<8x8xf32>
    %75 = vector.multi_reduction <add>, %74, %cst_50 [2] : vector<8x8x8xf32> to vector<8x8xf32>
    %76 = vector.shape_cast %75 : vector<8x8xf32> to vector<8x8x1xf32>
    %77 = tpu.reciprocal %76 {approx = true} : vector<8x8x1xf32> -> vector<8x8x1xf32>
    %78 = vector.broadcast %77 : vector<8x8x1xf32> to vector<8x8x8xf32>
    %79 = arith.mulf %74, %78 : vector<8x8x8xf32>
    %80 = arith.truncf %79 : vector<8x8x8xf32> to vector<8x8x8xbf16>
    "tpu.trace_start"() <{level = 10 : i32, message = "bqk,bkd->bqd"}> : () -> ()
    %cst_51 = arith.constant dense<0.000000e+00> : vector<8x8x32xf32>
    %81 = tpu.matmul %80, %68, %cst_51 {dimension_numbers = #tpu.dot_dimension_numbers<[2], [1], [1], [2], [0, 0, 0, 1, 1, 2], [0], [0]>} : vector<8x8x8xbf16>, vector<8x8x32xbf16>, vector<8x8x32xf32> -> vector<8x8x32xf32>
    "tpu.trace_stop"() : () -> ()
    %82 = arith.truncf %81 : vector<8x8x32xf32> to vector<8x8x32xbf16>
    %83 = vector.extract_strided_slice %42 {offsets = [0, 0, 64], sizes = [8, 8, 32], strides = [1, 1, 1]} : vector<8x8x128xbf16> to vector<8x8x32xbf16>
    %84 = vector.extract_strided_slice %45 {offsets = [0, 0, 64], sizes = [8, 8, 32], strides = [1, 1, 1]} : vector<8x8x128xbf16> to vector<8x8x32xbf16>
    %85 = vector.extract_strided_slice %48 {offsets = [0, 0, 64], sizes = [8, 8, 32], strides = [1, 1, 1]} : vector<8x8x128xbf16> to vector<8x8x32xbf16>
    "tpu.trace_start"() <{level = 10 : i32, message = "bqd,bkd->bqk"}> : () -> ()
    %cst_52 = arith.constant dense<0.000000e+00> : vector<8x8x8xf32>
    %86 = tpu.matmul %83, %84, %cst_52 {dimension_numbers = #tpu.dot_dimension_numbers<[2], [2], [1], [1], [0, 0, 0, 1, 1, 1], [0], [0]>} : vector<8x8x32xbf16>, vector<8x8x32xbf16>, vector<8x8x8xf32> -> vector<8x8x8xf32>
    "tpu.trace_stop"() : () -> ()
    %cst_53 = arith.constant dense<0xFF800000> : vector<8x8xf32>
    %87 = vector.multi_reduction <maximumf>, %86, %cst_53 [2] : vector<8x8x8xf32> to vector<8x8xf32>
    %88 = vector.shape_cast %87 : vector<8x8xf32> to vector<8x8x1xf32>
    %89 = vector.broadcast %88 : vector<8x8x1xf32> to vector<8x8x8xf32>
    %90 = arith.subf %86, %89 : vector<8x8x8xf32>
    %91 = math.exp %90 : vector<8x8x8xf32>
    %cst_54 = arith.constant dense<0.000000e+00> : vector<8x8xf32>
    %92 = vector.multi_reduction <add>, %91, %cst_54 [2] : vector<8x8x8xf32> to vector<8x8xf32>
    %93 = vector.shape_cast %92 : vector<8x8xf32> to vector<8x8x1xf32>
    %94 = tpu.reciprocal %93 {approx = true} : vector<8x8x1xf32> -> vector<8x8x1xf32>
    %95 = vector.broadcast %94 : vector<8x8x1xf32> to vector<8x8x8xf32>
    %96 = arith.mulf %91, %95 : vector<8x8x8xf32>
    %97 = arith.truncf %96 : vector<8x8x8xf32> to vector<8x8x8xbf16>
    "tpu.trace_start"() <{level = 10 : i32, message = "bqk,bkd->bqd"}> : () -> ()
    %cst_55 = arith.constant dense<0.000000e+00> : vector<8x8x32xf32>
    %98 = tpu.matmul %97, %85, %cst_55 {dimension_numbers = #tpu.dot_dimension_numbers<[2], [1], [1], [2], [0, 0, 0, 1, 1, 2], [0], [0]>} : vector<8x8x8xbf16>, vector<8x8x32xbf16>, vector<8x8x32xf32> -> vector<8x8x32xf32>
    "tpu.trace_stop"() : () -> ()
    %99 = arith.truncf %98 : vector<8x8x32xf32> to vector<8x8x32xbf16>
    %100 = vector.extract_strided_slice %42 {offsets = [0, 0, 96], sizes = [8, 8, 32], strides = [1, 1, 1]} : vector<8x8x128xbf16> to vector<8x8x32xbf16>
    %101 = vector.extract_strided_slice %45 {offsets = [0, 0, 96], sizes = [8, 8, 32], strides = [1, 1, 1]} : vector<8x8x128xbf16> to vector<8x8x32xbf16>
    %102 = vector.extract_strided_slice %48 {offsets = [0, 0, 96], sizes = [8, 8, 32], strides = [1, 1, 1]} : vector<8x8x128xbf16> to vector<8x8x32xbf16>
    "tpu.trace_start"() <{level = 10 : i32, message = "bqd,bkd->bqk"}> : () -> ()
    %cst_56 = arith.constant dense<0.000000e+00> : vector<8x8x8xf32>
    %103 = tpu.matmul %100, %101, %cst_56 {dimension_numbers = #tpu.dot_dimension_numbers<[2], [2], [1], [1], [0, 0, 0, 1, 1, 1], [0], [0]>} : vector<8x8x32xbf16>, vector<8x8x32xbf16>, vector<8x8x8xf32> -> vector<8x8x8xf32>
    "tpu.trace_stop"() : () -> ()
    %cst_57 = arith.constant dense<0xFF800000> : vector<8x8xf32>
    %104 = vector.multi_reduction <maximumf>, %103, %cst_57 [2] : vector<8x8x8xf32> to vector<8x8xf32>
    %105 = vector.shape_cast %104 : vector<8x8xf32> to vector<8x8x1xf32>
    %106 = vector.broadcast %105 : vector<8x8x1xf32> to vector<8x8x8xf32>
    %107 = arith.subf %103, %106 : vector<8x8x8xf32>
    %108 = math.exp %107 : vector<8x8x8xf32>
    %cst_58 = arith.constant dense<0.000000e+00> : vector<8x8xf32>
    %109 = vector.multi_reduction <add>, %108, %cst_58 [2] : vector<8x8x8xf32> to vector<8x8xf32>
    %110 = vector.shape_cast %109 : vector<8x8xf32> to vector<8x8x1xf32>
    %111 = tpu.reciprocal %110 {approx = true} : vector<8x8x1xf32> -> vector<8x8x1xf32>
    %112 = vector.broadcast %111 : vector<8x8x1xf32> to vector<8x8x8xf32>
    %113 = arith.mulf %108, %112 : vector<8x8x8xf32>
    %114 = arith.truncf %113 : vector<8x8x8xf32> to vector<8x8x8xbf16>
    "tpu.trace_start"() <{level = 10 : i32, message = "bqk,bkd->bqd"}> : () -> ()
    %cst_59 = arith.constant dense<0.000000e+00> : vector<8x8x32xf32>
    %115 = tpu.matmul %114, %102, %cst_59 {dimension_numbers = #tpu.dot_dimension_numbers<[2], [1], [1], [2], [0, 0, 0, 1, 1, 2], [0], [0]>} : vector<8x8x8xbf16>, vector<8x8x32xbf16>, vector<8x8x32xf32> -> vector<8x8x32xf32>
    "tpu.trace_stop"() : () -> ()
    %116 = arith.truncf %115 : vector<8x8x32xf32> to vector<8x8x32xbf16>
    %117 = tpu.concatenate %65, %82, %99, %116 in 2 : vector<8x8x32xbf16>, vector<8x8x32xbf16>, vector<8x8x32xbf16>, vector<8x8x32xbf16> -> vector<8x8x128xbf16>
    %118 = vector.shape_cast %117 : vector<8x8x128xbf16> to vector<64x128xbf16>
    %c0_60 = arith.constant 0 : index
    %c0_61 = arith.constant 0 : index
    %119 = vector.load %arg5[%c0_60, %c0_61] : memref<128x128xbf16, #tpu.memory_space<vmem>>, vector<128x128xbf16>
    %cst_62 = arith.constant dense<0.000000e+00> : vector<64x128xf32>
    %120 = tpu.matmul %118, %119, %cst_62 {dimension_numbers = #tpu.dot_dimension_numbers<[1], [0], [0], [1], [0, 0, 1, 1], [], []>} : vector<64x128xbf16>, vector<128x128xbf16>, vector<64x128xf32> -> vector<64x128xf32>
    %c0_63 = arith.constant 0 : index
    %c0_64 = arith.constant 0 : index
    %121 = vector.load %arg6[%c0_63, %c0_64] : memref<1x128xf32, #tpu.memory_space<vmem>>, vector<1x128xf32>
    %122 = vector.broadcast %121 : vector<1x128xf32> to vector<64x128xf32>
    %123 = arith.addf %120, %122 : vector<64x128xf32>
    %124 = arith.addf %16, %123 : vector<64x128xf32>
    %125 = arith.truncf %124 : vector<64x128xf32> to vector<64x128xbf16>
    %c0_65 = arith.constant 0 : index
    %c0_66 = arith.constant 0 : index
    %126 = vector.load %arg7[%c0_65, %c0_66] : memref<128x128xbf16, #tpu.memory_space<vmem>>, vector<128x128xbf16>
    %cst_67 = arith.constant dense<0.000000e+00> : vector<64x128xf32>
    %127 = tpu.matmul %125, %126, %cst_67 {dimension_numbers = #tpu.dot_dimension_numbers<[1], [0], [0], [1], [0, 0, 1, 1], [], []>} : vector<64x128xbf16>, vector<128x128xbf16>, vector<64x128xf32> -> vector<64x128xf32>
    %c0_68 = arith.constant 0 : index
    %c0_69 = arith.constant 0 : index
    %128 = vector.load %arg8[%c0_68, %c0_69] : memref<1x128xf32, #tpu.memory_space<vmem>>, vector<1x128xf32>
    %129 = vector.broadcast %128 : vector<1x128xf32> to vector<64x128xf32>
    %130 = arith.addf %127, %129 : vector<64x128xf32>
    %131 = vector.shape_cast %130 : vector<64x128xf32> to vector<8x8x128xf32>
    %132 = arith.truncf %131 : vector<8x8x128xf32> to vector<8x8x128xbf16>
    %133 = arith.truncf %33 : vector<128x128xf32> to vector<128x128xbf16>
    %c0_70 = arith.constant 0 : index
    %c0_71 = arith.constant 0 : index
    %134 = vector.load %arg9[%c0_70, %c0_71] : memref<128x256xbf16, #tpu.memory_space<vmem>>, vector<128x256xbf16>
    %cst_72 = arith.constant dense<0.000000e+00> : vector<128x256xf32>
    %135 = tpu.matmul %133, %134, %cst_72 {dimension_numbers = #tpu.dot_dimension_numbers<[1], [0], [0], [1], [0, 0, 1, 1], [], []>} : vector<128x128xbf16>, vector<128x256xbf16>, vector<128x256xf32> -> vector<128x256xf32>
    %c0_73 = arith.constant 0 : index
    %c0_74 = arith.constant 0 : index
    %136 = vector.load %arg10[%c0_73, %c0_74] : memref<1x256xf32, #tpu.memory_space<vmem>>, vector<1x256xf32>
    %137 = vector.broadcast %136 : vector<1x256xf32> to vector<128x256xf32>
    %138 = arith.addf %135, %137 : vector<128x256xf32>
    %139 = vector.extract_strided_slice %138 {offsets = [0, 0], sizes = [128, 128], strides = [1, 1]} : vector<128x256xf32> to vector<128x128xf32>
    %140 = vector.shape_cast %139 : vector<128x128xf32> to vector<8x16x128xf32>
    %141 = arith.truncf %140 : vector<8x16x128xf32> to vector<8x16x128xbf16>
    %142 = vector.extract_strided_slice %138 {offsets = [0, 128], sizes = [128, 128], strides = [1, 1]} : vector<128x256xf32> to vector<128x128xf32>
    %143 = vector.shape_cast %142 : vector<128x128xf32> to vector<8x16x128xf32>
    %144 = arith.truncf %143 : vector<8x16x128xf32> to vector<8x16x128xbf16>
    %145 = vector.extract_strided_slice %132 {offsets = [0, 0, 0], sizes = [8, 8, 32], strides = [1, 1, 1]} : vector<8x8x128xbf16> to vector<8x8x32xbf16>
    %146 = vector.extract_strided_slice %141 {offsets = [0, 0, 0], sizes = [8, 16, 32], strides = [1, 1, 1]} : vector<8x16x128xbf16> to vector<8x16x32xbf16>
    %147 = vector.extract_strided_slice %144 {offsets = [0, 0, 0], sizes = [8, 16, 32], strides = [1, 1, 1]} : vector<8x16x128xbf16> to vector<8x16x32xbf16>
    "tpu.trace_start"() <{level = 10 : i32, message = "bqd,bkd->bqk"}> : () -> ()
    %cst_75 = arith.constant dense<0.000000e+00> : vector<8x8x16xf32>
    %148 = tpu.matmul %145, %146, %cst_75 {dimension_numbers = #tpu.dot_dimension_numbers<[2], [2], [1], [1], [0, 0, 0, 1, 1, 1], [0], [0]>} : vector<8x8x32xbf16>, vector<8x16x32xbf16>, vector<8x8x16xf32> -> vector<8x8x16xf32>
    "tpu.trace_stop"() : () -> ()
    %cst_76 = arith.constant dense<0xFF800000> : vector<8x8xf32>
    %149 = vector.multi_reduction <maximumf>, %148, %cst_76 [2] : vector<8x8x16xf32> to vector<8x8xf32>
    %150 = vector.shape_cast %149 : vector<8x8xf32> to vector<8x8x1xf32>
    %151 = vector.broadcast %150 : vector<8x8x1xf32> to vector<8x8x16xf32>
    %152 = arith.subf %148, %151 : vector<8x8x16xf32>
    %153 = math.exp %152 : vector<8x8x16xf32>
    %cst_77 = arith.constant dense<0.000000e+00> : vector<8x8xf32>
    %154 = vector.multi_reduction <add>, %153, %cst_77 [2] : vector<8x8x16xf32> to vector<8x8xf32>
    %155 = vector.shape_cast %154 : vector<8x8xf32> to vector<8x8x1xf32>
    %156 = tpu.reciprocal %155 {approx = true} : vector<8x8x1xf32> -> vector<8x8x1xf32>
    %157 = vector.broadcast %156 : vector<8x8x1xf32> to vector<8x8x16xf32>
    %158 = arith.mulf %153, %157 : vector<8x8x16xf32>
    %159 = arith.truncf %158 : vector<8x8x16xf32> to vector<8x8x16xbf16>
    "tpu.trace_start"() <{level = 10 : i32, message = "bqk,bkd->bqd"}> : () -> ()
    %cst_78 = arith.constant dense<0.000000e+00> : vector<8x8x32xf32>
    %160 = tpu.matmul %159, %147, %cst_78 {dimension_numbers = #tpu.dot_dimension_numbers<[2], [1], [1], [2], [0, 0, 0, 1, 1, 2], [0], [0]>} : vector<8x8x16xbf16>, vector<8x16x32xbf16>, vector<8x8x32xf32> -> vector<8x8x32xf32>
    "tpu.trace_stop"() : () -> ()
    %161 = arith.truncf %160 : vector<8x8x32xf32> to vector<8x8x32xbf16>
    %162 = vector.extract_strided_slice %132 {offsets = [0, 0, 32], sizes = [8, 8, 32], strides = [1, 1, 1]} : vector<8x8x128xbf16> to vector<8x8x32xbf16>
    %163 = vector.extract_strided_slice %141 {offsets = [0, 0, 32], sizes = [8, 16, 32], strides = [1, 1, 1]} : vector<8x16x128xbf16> to vector<8x16x32xbf16>
    %164 = vector.extract_strided_slice %144 {offsets = [0, 0, 32], sizes = [8, 16, 32], strides = [1, 1, 1]} : vector<8x16x128xbf16> to vector<8x16x32xbf16>
    "tpu.trace_start"() <{level = 10 : i32, message = "bqd,bkd->bqk"}> : () -> ()
    %cst_79 = arith.constant dense<0.000000e+00> : vector<8x8x16xf32>
    %165 = tpu.matmul %162, %163, %cst_79 {dimension_numbers = #tpu.dot_dimension_numbers<[2], [2], [1], [1], [0, 0, 0, 1, 1, 1], [0], [0]>} : vector<8x8x32xbf16>, vector<8x16x32xbf16>, vector<8x8x16xf32> -> vector<8x8x16xf32>
    "tpu.trace_stop"() : () -> ()
    %cst_80 = arith.constant dense<0xFF800000> : vector<8x8xf32>
    %166 = vector.multi_reduction <maximumf>, %165, %cst_80 [2] : vector<8x8x16xf32> to vector<8x8xf32>
    %167 = vector.shape_cast %166 : vector<8x8xf32> to vector<8x8x1xf32>
    %168 = vector.broadcast %167 : vector<8x8x1xf32> to vector<8x8x16xf32>
    %169 = arith.subf %165, %168 : vector<8x8x16xf32>
    %170 = math.exp %169 : vector<8x8x16xf32>
    %cst_81 = arith.constant dense<0.000000e+00> : vector<8x8xf32>
    %171 = vector.multi_reduction <add>, %170, %cst_81 [2] : vector<8x8x16xf32> to vector<8x8xf32>
    %172 = vector.shape_cast %171 : vector<8x8xf32> to vector<8x8x1xf32>
    %173 = tpu.reciprocal %172 {approx = true} : vector<8x8x1xf32> -> vector<8x8x1xf32>
    %174 = vector.broadcast %173 : vector<8x8x1xf32> to vector<8x8x16xf32>
    %175 = arith.mulf %170, %174 : vector<8x8x16xf32>
    %176 = arith.truncf %175 : vector<8x8x16xf32> to vector<8x8x16xbf16>
    "tpu.trace_start"() <{level = 10 : i32, message = "bqk,bkd->bqd"}> : () -> ()
    %cst_82 = arith.constant dense<0.000000e+00> : vector<8x8x32xf32>
    %177 = tpu.matmul %176, %164, %cst_82 {dimension_numbers = #tpu.dot_dimension_numbers<[2], [1], [1], [2], [0, 0, 0, 1, 1, 2], [0], [0]>} : vector<8x8x16xbf16>, vector<8x16x32xbf16>, vector<8x8x32xf32> -> vector<8x8x32xf32>
    "tpu.trace_stop"() : () -> ()
    %178 = arith.truncf %177 : vector<8x8x32xf32> to vector<8x8x32xbf16>
    %179 = vector.extract_strided_slice %132 {offsets = [0, 0, 64], sizes = [8, 8, 32], strides = [1, 1, 1]} : vector<8x8x128xbf16> to vector<8x8x32xbf16>
    %180 = vector.extract_strided_slice %141 {offsets = [0, 0, 64], sizes = [8, 16, 32], strides = [1, 1, 1]} : vector<8x16x128xbf16> to vector<8x16x32xbf16>
    %181 = vector.extract_strided_slice %144 {offsets = [0, 0, 64], sizes = [8, 16, 32], strides = [1, 1, 1]} : vector<8x16x128xbf16> to vector<8x16x32xbf16>
    "tpu.trace_start"() <{level = 10 : i32, message = "bqd,bkd->bqk"}> : () -> ()
    %cst_83 = arith.constant dense<0.000000e+00> : vector<8x8x16xf32>
    %182 = tpu.matmul %179, %180, %cst_83 {dimension_numbers = #tpu.dot_dimension_numbers<[2], [2], [1], [1], [0, 0, 0, 1, 1, 1], [0], [0]>} : vector<8x8x32xbf16>, vector<8x16x32xbf16>, vector<8x8x16xf32> -> vector<8x8x16xf32>
    "tpu.trace_stop"() : () -> ()
    %cst_84 = arith.constant dense<0xFF800000> : vector<8x8xf32>
    %183 = vector.multi_reduction <maximumf>, %182, %cst_84 [2] : vector<8x8x16xf32> to vector<8x8xf32>
    %184 = vector.shape_cast %183 : vector<8x8xf32> to vector<8x8x1xf32>
    %185 = vector.broadcast %184 : vector<8x8x1xf32> to vector<8x8x16xf32>
    %186 = arith.subf %182, %185 : vector<8x8x16xf32>
    %187 = math.exp %186 : vector<8x8x16xf32>
    %cst_85 = arith.constant dense<0.000000e+00> : vector<8x8xf32>
    %188 = vector.multi_reduction <add>, %187, %cst_85 [2] : vector<8x8x16xf32> to vector<8x8xf32>
    %189 = vector.shape_cast %188 : vector<8x8xf32> to vector<8x8x1xf32>
    %190 = tpu.reciprocal %189 {approx = true} : vector<8x8x1xf32> -> vector<8x8x1xf32>
    %191 = vector.broadcast %190 : vector<8x8x1xf32> to vector<8x8x16xf32>
    %192 = arith.mulf %187, %191 : vector<8x8x16xf32>
    %193 = arith.truncf %192 : vector<8x8x16xf32> to vector<8x8x16xbf16>
    "tpu.trace_start"() <{level = 10 : i32, message = "bqk,bkd->bqd"}> : () -> ()
    %cst_86 = arith.constant dense<0.000000e+00> : vector<8x8x32xf32>
    %194 = tpu.matmul %193, %181, %cst_86 {dimension_numbers = #tpu.dot_dimension_numbers<[2], [1], [1], [2], [0, 0, 0, 1, 1, 2], [0], [0]>} : vector<8x8x16xbf16>, vector<8x16x32xbf16>, vector<8x8x32xf32> -> vector<8x8x32xf32>
    "tpu.trace_stop"() : () -> ()
    %195 = arith.truncf %194 : vector<8x8x32xf32> to vector<8x8x32xbf16>
    %196 = vector.extract_strided_slice %132 {offsets = [0, 0, 96], sizes = [8, 8, 32], strides = [1, 1, 1]} : vector<8x8x128xbf16> to vector<8x8x32xbf16>
    %197 = vector.extract_strided_slice %141 {offsets = [0, 0, 96], sizes = [8, 16, 32], strides = [1, 1, 1]} : vector<8x16x128xbf16> to vector<8x16x32xbf16>
    %198 = vector.extract_strided_slice %144 {offsets = [0, 0, 96], sizes = [8, 16, 32], strides = [1, 1, 1]} : vector<8x16x128xbf16> to vector<8x16x32xbf16>
    "tpu.trace_start"() <{level = 10 : i32, message = "bqd,bkd->bqk"}> : () -> ()
    %cst_87 = arith.constant dense<0.000000e+00> : vector<8x8x16xf32>
    %199 = tpu.matmul %196, %197, %cst_87 {dimension_numbers = #tpu.dot_dimension_numbers<[2], [2], [1], [1], [0, 0, 0, 1, 1, 1], [0], [0]>} : vector<8x8x32xbf16>, vector<8x16x32xbf16>, vector<8x8x16xf32> -> vector<8x8x16xf32>
    "tpu.trace_stop"() : () -> ()
    %cst_88 = arith.constant dense<0xFF800000> : vector<8x8xf32>
    %200 = vector.multi_reduction <maximumf>, %199, %cst_88 [2] : vector<8x8x16xf32> to vector<8x8xf32>
    %201 = vector.shape_cast %200 : vector<8x8xf32> to vector<8x8x1xf32>
    %202 = vector.broadcast %201 : vector<8x8x1xf32> to vector<8x8x16xf32>
    %203 = arith.subf %199, %202 : vector<8x8x16xf32>
    %204 = math.exp %203 : vector<8x8x16xf32>
    %cst_89 = arith.constant dense<0.000000e+00> : vector<8x8xf32>
    %205 = vector.multi_reduction <add>, %204, %cst_89 [2] : vector<8x8x16xf32> to vector<8x8xf32>
    %206 = vector.shape_cast %205 : vector<8x8xf32> to vector<8x8x1xf32>
    %207 = tpu.reciprocal %206 {approx = true} : vector<8x8x1xf32> -> vector<8x8x1xf32>
    %208 = vector.broadcast %207 : vector<8x8x1xf32> to vector<8x8x16xf32>
    %209 = arith.mulf %204, %208 : vector<8x8x16xf32>
    %210 = arith.truncf %209 : vector<8x8x16xf32> to vector<8x8x16xbf16>
    "tpu.trace_start"() <{level = 10 : i32, message = "bqk,bkd->bqd"}> : () -> ()
    %cst_90 = arith.constant dense<0.000000e+00> : vector<8x8x32xf32>
    %211 = tpu.matmul %210, %198, %cst_90 {dimension_numbers = #tpu.dot_dimension_numbers<[2], [1], [1], [2], [0, 0, 0, 1, 1, 2], [0], [0]>} : vector<8x8x16xbf16>, vector<8x16x32xbf16>, vector<8x8x32xf32> -> vector<8x8x32xf32>
    "tpu.trace_stop"() : () -> ()
    %212 = arith.truncf %211 : vector<8x8x32xf32> to vector<8x8x32xbf16>
    %213 = tpu.concatenate %161, %178, %195, %212 in 2 : vector<8x8x32xbf16>, vector<8x8x32xbf16>, vector<8x8x32xbf16>, vector<8x8x32xbf16> -> vector<8x8x128xbf16>
    %214 = vector.shape_cast %213 : vector<8x8x128xbf16> to vector<64x128xbf16>
    %c0_91 = arith.constant 0 : index
    %c0_92 = arith.constant 0 : index
    %215 = vector.load %arg11[%c0_91, %c0_92] : memref<128x128xbf16, #tpu.memory_space<vmem>>, vector<128x128xbf16>
    %cst_93 = arith.constant dense<0.000000e+00> : vector<64x128xf32>
    %216 = tpu.matmul %214, %215, %cst_93 {dimension_numbers = #tpu.dot_dimension_numbers<[1], [0], [0], [1], [0, 0, 1, 1], [], []>} : vector<64x128xbf16>, vector<128x128xbf16>, vector<64x128xf32> -> vector<64x128xf32>
    %c0_94 = arith.constant 0 : index
    %c0_95 = arith.constant 0 : index
    %217 = vector.load %arg12[%c0_94, %c0_95] : memref<1x128xf32, #tpu.memory_space<vmem>>, vector<1x128xf32>
    %218 = vector.broadcast %217 : vector<1x128xf32> to vector<64x128xf32>
    %219 = arith.addf %216, %218 : vector<64x128xf32>
    %220 = arith.addf %124, %219 : vector<64x128xf32>
    %221 = arith.truncf %220 : vector<64x128xf32> to vector<64x128xbf16>
    %c0_96 = arith.constant 0 : index
    %c0_97 = arith.constant 0 : index
    %222 = vector.load %arg13[%c0_96, %c0_97] : memref<128x256xbf16, #tpu.memory_space<vmem>>, vector<128x256xbf16>
    %cst_98 = arith.constant dense<0.000000e+00> : vector<64x256xf32>
    %223 = tpu.matmul %221, %222, %cst_98 {dimension_numbers = #tpu.dot_dimension_numbers<[1], [0], [0], [1], [0, 0, 1, 1], [], []>} : vector<64x128xbf16>, vector<128x256xbf16>, vector<64x256xf32> -> vector<64x256xf32>
    %c0_99 = arith.constant 0 : index
    %c0_100 = arith.constant 0 : index
    %224 = vector.load %arg14[%c0_99, %c0_100] : memref<1x256xf32, #tpu.memory_space<vmem>>, vector<1x256xf32>
    %225 = vector.broadcast %224 : vector<1x256xf32> to vector<64x256xf32>
    %226 = arith.addf %223, %225 : vector<64x256xf32>
    %cst_101 = arith.constant 1.000000e+00 : f32
    %227 = vector.broadcast %cst_101 : f32 to vector<64x256xf32>
    %228 = arith.subf %226, %227 : vector<64x256xf32>
    %229 = arith.negf %228 : vector<64x256xf32>
    %230 = math.exp %229 : vector<64x256xf32>
    %cst_102 = arith.constant 1.000000e+00 : f32
    %231 = vector.broadcast %cst_102 : f32 to vector<64x256xf32>
    %232 = arith.addf %231, %230 : vector<64x256xf32>
    %233 = arith.divf %231, %232 : vector<64x256xf32>
    %234 = arith.mulf %226, %233 : vector<64x256xf32>
    %235 = arith.truncf %234 : vector<64x256xf32> to vector<64x256xbf16>
    %c0_103 = arith.constant 0 : index
    %c0_104 = arith.constant 0 : index
    %236 = vector.load %arg15[%c0_103, %c0_104] : memref<256x128xbf16, #tpu.memory_space<vmem>>, vector<256x128xbf16>
    %cst_105 = arith.constant dense<0.000000e+00> : vector<64x128xf32>
    %237 = tpu.matmul %235, %236, %cst_105 {dimension_numbers = #tpu.dot_dimension_numbers<[1], [0], [0], [1], [0, 0, 1, 1], [], []>} : vector<64x256xbf16>, vector<256x128xbf16>, vector<64x128xf32> -> vector<64x128xf32>
    %c0_106 = arith.constant 0 : index
    %c0_107 = arith.constant 0 : index
    %238 = vector.load %arg16[%c0_106, %c0_107] : memref<1x128xf32, #tpu.memory_space<vmem>>, vector<1x128xf32>
    %239 = vector.broadcast %238 : vector<1x128xf32> to vector<64x128xf32>
    %240 = arith.addf %237, %239 : vector<64x128xf32>
    %241 = arith.addf %220, %240 : vector<64x128xf32>
    %c0_108 = arith.constant 0 : index
    %c0_109 = arith.constant 0 : index
    %242 = memref.load %arg17[%c0_108, %c0_109] : memref<1x1xf32, #tpu.memory_space<smem>>
    %243 = arith.mulf %241, %241 : vector<64x128xf32>
    %cst_110 = arith.constant dense<0.000000e+00> : vector<64xf32>
    %244 = vector.multi_reduction <add>, %243, %cst_110 [1] : vector<64x128xf32> to vector<64xf32>
    %245 = vector.shape_cast %244 : vector<64xf32> to vector<64x1xf32>
    %cst_111 = arith.constant 1.280000e+02 : f32
    %246 = vector.broadcast %cst_111 : f32 to vector<64x1xf32>
    %247 = arith.divf %245, %246 : vector<64x1xf32>
    %248 = vector.broadcast %242 : f32 to vector<64x1xf32>
    %249 = arith.addf %247, %248 : vector<64x1xf32>
    %250 = math.rsqrt %249 : vector<64x1xf32>
    %251 = vector.broadcast %250 : vector<64x1xf32> to vector<64x128xf32>
    %252 = arith.mulf %241, %251 : vector<64x128xf32>
    %253 = vector.extract_strided_slice %252 {offsets = [0, 0], sizes = [8, 128], strides = [1, 1]} : vector<64x128xf32> to vector<8x128xf32>
    %c0_112 = arith.constant 0 : index
    %c0_113 = arith.constant 0 : index
    %c0_114 = arith.constant 0 : index
    %254 = vector.load %arg18[%c0_112, %c0_113, %c0_114] : memref<8x8x128xf32, #tpu.memory_space<vmem>>, vector<8x1x128xf32>
    %255 = vector.shape_cast %254 : vector<8x1x128xf32> to vector<8x128xf32>
    %256 = vector.shape_cast %253 : vector<8x128xf32> to vector<8x1x128xf32>
    tpu.vector_store %arg18[%c0_112, %c0_113, %c0_114], %256 {strides = array<i32>} : memref<8x8x128xf32, #tpu.memory_space<vmem>>, vector<8x1x128xf32>,
    %257 = vector.extract_strided_slice %252 {offsets = [8, 0], sizes = [8, 128], strides = [1, 1]} : vector<64x128xf32> to vector<8x128xf32>
    %c0_115 = arith.constant 0 : index
    %c1_116 = arith.constant 1 : index
    %c0_117 = arith.constant 0 : index
    %258 = vector.load %arg18[%c0_115, %c1_116, %c0_117] : memref<8x8x128xf32, #tpu.memory_space<vmem>>, vector<8x1x128xf32>
    %259 = vector.shape_cast %258 : vector<8x1x128xf32> to vector<8x128xf32>
    %260 = vector.shape_cast %257 : vector<8x128xf32> to vector<8x1x128xf32>
    tpu.vector_store %arg18[%c0_115, %c1_116, %c0_117], %260 {strides = array<i32>} : memref<8x8x128xf32, #tpu.memory_space<vmem>>, vector<8x1x128xf32>,
    %261 = vector.extract_strided_slice %252 {offsets = [16, 0], sizes = [8, 128], strides = [1, 1]} : vector<64x128xf32> to vector<8x128xf32>
    %c0_118 = arith.constant 0 : index
    %c2_119 = arith.constant 2 : index
    %c0_120 = arith.constant 0 : index
    %262 = vector.load %arg18[%c0_118, %c2_119, %c0_120] : memref<8x8x128xf32, #tpu.memory_space<vmem>>, vector<8x1x128xf32>
    %263 = vector.shape_cast %262 : vector<8x1x128xf32> to vector<8x128xf32>
    %264 = vector.shape_cast %261 : vector<8x128xf32> to vector<8x1x128xf32>
    tpu.vector_store %arg18[%c0_118, %c2_119, %c0_120], %264 {strides = array<i32>} : memref<8x8x128xf32, #tpu.memory_space<vmem>>, vector<8x1x128xf32>,
    %265 = vector.extract_strided_slice %252 {offsets = [24, 0], sizes = [8, 128], strides = [1, 1]} : vector<64x128xf32> to vector<8x128xf32>
    %c0_121 = arith.constant 0 : index
    %c3_122 = arith.constant 3 : index
    %c0_123 = arith.constant 0 : index
    %266 = vector.load %arg18[%c0_121, %c3_122, %c0_123] : memref<8x8x128xf32, #tpu.memory_space<vmem>>, vector<8x1x128xf32>
    %267 = vector.shape_cast %266 : vector<8x1x128xf32> to vector<8x128xf32>
    %268 = vector.shape_cast %265 : vector<8x128xf32> to vector<8x1x128xf32>
    tpu.vector_store %arg18[%c0_121, %c3_122, %c0_123], %268 {strides = array<i32>} : memref<8x8x128xf32, #tpu.memory_space<vmem>>, vector<8x1x128xf32>,
    %269 = vector.extract_strided_slice %252 {offsets = [32, 0], sizes = [8, 128], strides = [1, 1]} : vector<64x128xf32> to vector<8x128xf32>
    %c0_124 = arith.constant 0 : index
    %c4_125 = arith.constant 4 : index
    %c0_126 = arith.constant 0 : index
    %270 = vector.load %arg18[%c0_124, %c4_125, %c0_126] : memref<8x8x128xf32, #tpu.memory_space<vmem>>, vector<8x1x128xf32>
    %271 = vector.shape_cast %270 : vector<8x1x128xf32> to vector<8x128xf32>
    %272 = vector.shape_cast %269 : vector<8x128xf32> to vector<8x1x128xf32>
    tpu.vector_store %arg18[%c0_124, %c4_125, %c0_126], %272 {strides = array<i32>} : memref<8x8x128xf32, #tpu.memory_space<vmem>>, vector<8x1x128xf32>,
    %273 = vector.extract_strided_slice %252 {offsets = [40, 0], sizes = [8, 128], strides = [1, 1]} : vector<64x128xf32> to vector<8x128xf32>
    %c0_127 = arith.constant 0 : index
    %c5_128 = arith.constant 5 : index
    %c0_129 = arith.constant 0 : index
    %274 = vector.load %arg18[%c0_127, %c5_128, %c0_129] : memref<8x8x128xf32, #tpu.memory_space<vmem>>, vector<8x1x128xf32>
    %275 = vector.shape_cast %274 : vector<8x1x128xf32> to vector<8x128xf32>
    %276 = vector.shape_cast %273 : vector<8x128xf32> to vector<8x1x128xf32>
    tpu.vector_store %arg18[%c0_127, %c5_128, %c0_129], %276 {strides = array<i32>} : memref<8x8x128xf32, #tpu.memory_space<vmem>>, vector<8x1x128xf32>,
    %277 = vector.extract_strided_slice %252 {offsets = [48, 0], sizes = [8, 128], strides = [1, 1]} : vector<64x128xf32> to vector<8x128xf32>
    %c0_130 = arith.constant 0 : index
    %c6_131 = arith.constant 6 : index
    %c0_132 = arith.constant 0 : index
    %278 = vector.load %arg18[%c0_130, %c6_131, %c0_132] : memref<8x8x128xf32, #tpu.memory_space<vmem>>, vector<8x1x128xf32>
    %279 = vector.shape_cast %278 : vector<8x1x128xf32> to vector<8x128xf32>
    %280 = vector.shape_cast %277 : vector<8x128xf32> to vector<8x1x128xf32>
    tpu.vector_store %arg18[%c0_130, %c6_131, %c0_132], %280 {strides = array<i32>} : memref<8x8x128xf32, #tpu.memory_space<vmem>>, vector<8x1x128xf32>,
    %281 = vector.extract_strided_slice %252 {offsets = [56, 0], sizes = [8, 128], strides = [1, 1]} : vector<64x128xf32> to vector<8x128xf32>
    %c0_133 = arith.constant 0 : index
    %c7_134 = arith.constant 7 : index
    %c0_135 = arith.constant 0 : index
    %282 = vector.load %arg18[%c0_133, %c7_134, %c0_135] : memref<8x8x128xf32, #tpu.memory_space<vmem>>, vector<8x1x128xf32>
    %283 = vector.shape_cast %282 : vector<8x1x128xf32> to vector<8x128xf32>
    %284 = vector.shape_cast %281 : vector<8x128xf32> to vector<8x1x128xf32>
    tpu.vector_store %arg18[%c0_133, %c7_134, %c0_135], %284 {strides = array<i32>} : memref<8x8x128xf32, #tpu.memory_space<vmem>>, vector<8x1x128xf32>,
    return
  }
  func.func @transform_0(%arg0: i32) -> (i32, i32, i32) {
    %c0_i32 = arith.constant 0 : i32
    %c0_i32_0 = arith.constant 0 : i32
    %c0_i32_1 = arith.constant 0 : i32
    return %c0_i32, %arg0, %c0_i32_0 : i32, i32, i32
  }
  func.func @transform_1(%arg0: i32) -> (i32, i32, i32) {
    %c0_i32 = arith.constant 0 : i32
    %c0_i32_0 = arith.constant 0 : i32
    %c0_i32_1 = arith.constant 0 : i32
    return %c0_i32, %arg0, %c0_i32_0 : i32, i32, i32
  }
  func.func @transform_2(%arg0: i32) -> (i32, i32) {
    %c0_i32 = arith.constant 0 : i32
    %c0_i32_0 = arith.constant 0 : i32
    %c0_i32_1 = arith.constant 0 : i32
    return %c0_i32, %c0_i32_0 : i32, i32
  }
  func.func @transform_3(%arg0: i32) -> (i32, i32) {
    %c0_i32 = arith.constant 0 : i32
    %c0_i32_0 = arith.constant 0 : i32
    %c0_i32_1 = arith.constant 0 : i32
    return %c0_i32, %c0_i32_0 : i32, i32
  }
  func.func @transform_4(%arg0: i32) -> (i32, i32) {
    %c0_i32 = arith.constant 0 : i32
    %c0_i32_0 = arith.constant 0 : i32
    %c0_i32_1 = arith.constant 0 : i32
    return %c0_i32, %c0_i32_0 : i32, i32
  }
  func.func @transform_5(%arg0: i32) -> (i32, i32) {
    %c0_i32 = arith.constant 0 : i32
    %c0_i32_0 = arith.constant 0 : i32
    %c0_i32_1 = arith.constant 0 : i32
    return %c0_i32, %c0_i32_0 : i32, i32
  }
  func.func @transform_6(%arg0: i32) -> (i32, i32) {
    %c0_i32 = arith.constant 0 : i32
    %c0_i32_0 = arith.constant 0 : i32
    %c0_i32_1 = arith.constant 0 : i32
    return %c0_i32, %c0_i32_0 : i32, i32
  }
  func.func @transform_7(%arg0: i32) -> (i32, i32) {
    %c0_i32 = arith.constant 0 : i32
    %c0_i32_0 = arith.constant 0 : i32
    %c0_i32_1 = arith.constant 0 : i32
    return %c0_i32, %c0_i32_0 : i32, i32
  }
  func.func @transform_8(%arg0: i32) -> (i32, i32) {
    %c0_i32 = arith.constant 0 : i32
    %c0_i32_0 = arith.constant 0 : i32
    %c0_i32_1 = arith.constant 0 : i32
    return %c0_i32, %c0_i32_0 : i32, i32
  }
  func.func @transform_9(%arg0: i32) -> (i32, i32) {
    %c0_i32 = arith.constant 0 : i32
    %c0_i32_0 = arith.constant 0 : i32
    %c0_i32_1 = arith.constant 0 : i32
    return %c0_i32, %c0_i32_0 : i32, i32
  }
  func.func @transform_10(%arg0: i32) -> (i32, i32) {
    %c0_i32 = arith.constant 0 : i32
    %c0_i32_0 = arith.constant 0 : i32
    %c0_i32_1 = arith.constant 0 : i32
    return %c0_i32, %c0_i32_0 : i32, i32
  }
  func.func @transform_11(%arg0: i32) -> (i32, i32) {
    %c0_i32 = arith.constant 0 : i32
    %c0_i32_0 = arith.constant 0 : i32
    %c0_i32_1 = arith.constant 0 : i32
    return %c0_i32, %c0_i32_0 : i32, i32
  }
  func.func @transform_12(%arg0: i32) -> (i32, i32) {
    %c0_i32 = arith.constant 0 : i32
    %c0_i32_0 = arith.constant 0 : i32
    %c0_i32_1 = arith.constant 0 : i32
    return %c0_i32, %c0_i32_0 : i32, i32
  }
  func.func @transform_13(%arg0: i32) -> (i32, i32) {
    %c0_i32 = arith.constant 0 : i32
    %c0_i32_0 = arith.constant 0 : i32
    %c0_i32_1 = arith.constant 0 : i32
    return %c0_i32, %c0_i32_0 : i32, i32
  }
  func.func @transform_14(%arg0: i32) -> (i32, i32) {
    %c0_i32 = arith.constant 0 : i32
    %c0_i32_0 = arith.constant 0 : i32
    %c0_i32_1 = arith.constant 0 : i32
    return %c0_i32, %c0_i32_0 : i32, i32
  }
  func.func @transform_15(%arg0: i32) -> (i32, i32) {
    %c0_i32 = arith.constant 0 : i32
    %c0_i32_0 = arith.constant 0 : i32
    %c0_i32_1 = arith.constant 0 : i32
    return %c0_i32, %c0_i32_0 : i32, i32
  }
  func.func @transform_16(%arg0: i32) -> (i32, i32) {
    %c0_i32 = arith.constant 0 : i32
    %c0_i32_0 = arith.constant 0 : i32
    %c0_i32_1 = arith.constant 0 : i32
    return %c0_i32, %c0_i32_0 : i32, i32
  }
  func.func @transform_17(%arg0: i32) -> (i32, i32, i32) {
    %c0_i32 = arith.constant 0 : i32
    %c0_i32_0 = arith.constant 0 : i32
    %c0_i32_1 = arith.constant 0 : i32
    return %c0_i32, %arg0, %c0_i32_0 : i32, i32, i32
  }
}

</mosaic_0001>

<llo_original>
// kernel: tpu_custom_call.1
$region0: #{tpu_custom_call.1}
  #allocation0 [shape = 'u32[]', space=smem, size = 0x4, offset = 0x4, fixed_abs, tag = 'smem constant byte address 0x4 - core index']
  #allocation1 [shape = 'u32[72,128]{1,0:T(1,128)}', space=vmem, size = 0x9000, scoped, tag = 'internal scratch']
  #allocation2 [shape = 'f32[1,1]{1,0:T(1,128)S(6)}', space=smem, size = 0x200, scoped, tag = 'scoped memory for tpu_custom_call.1']
  %s0 = inlined_call_operand.hbm [shape: f32[8,16,128], index: 0, kind: input, shape index: {}]
  %s1 = inlined_call_operand.hbm [shape: f32[16,16,128], index: 1, kind: input, shape index: {}]
  %s2 = inlined_call_operand.hbm [shape: bf16[128,384], index: 2, kind: input, shape index: {}]
  %s3 = inlined_call_operand.vmem [shape: f32[1,384], index: 3, kind: input, shape index: {}]
  %s4 = inlined_call_operand.hbm [shape: bf16[128,128], index: 4, kind: input, shape index: {}]
  %s5 = inlined_call_operand.hbm [shape: f32[1,128], index: 5, kind: input, shape index: {}]
  %s6 = inlined_call_operand.hbm [shape: bf16[128,128], index: 6, kind: input, shape index: {}]
  %s7 = inlined_call_operand.vmem [shape: f32[1,128], index: 7, kind: input, shape index: {}]
  %s8 = inlined_call_operand.hbm [shape: bf16[128,256], index: 8, kind: input, shape index: {}]
  %s9 = inlined_call_operand.vmem [shape: f32[1,256], index: 9, kind: input, shape index: {}]
  %s10 = inlined_call_operand.hbm [shape: bf16[128,128], index: 10, kind: input, shape index: {}]
  %s11 = inlined_call_operand.vmem [shape: f32[1,128], index: 11, kind: input, shape index: {}]
  %s12 = inlined_call_operand.hbm [shape: bf16[128,256], index: 12, kind: input, shape index: {}]
  %s13 = inlined_call_operand.vmem [shape: f32[1,256], index: 13, kind: input, shape index: {}]
  %s14 = inlined_call_operand.hbm [shape: bf16[256,128], index: 14, kind: input, shape index: {}]
  %s15 = inlined_call_operand.vmem [shape: f32[1,128], index: 15, kind: input, shape index: {}]
  %s16 = inlined_call_operand.<no memory space> [shape: f32[1,1], index: 16, kind: input, shape index: {}]
  %s17 = inlined_call_operand.hbm [shape: f32[8,16,128], index: 17, kind: output, shape index: {}]
  %s18 = sld [smem:[#allocation0]]
  $region141: #{tpu_custom_call.1} parent=0
    _
  %s20 = ssub.s32 1, %s18
  %s21 = scalar_select 0, %s20, %s18
  %22 = sst [smem:[#allocation2]] %s16
  $region1: #{tpu_custom_call.1} parent=0
    #allocation3 [shape = 'u8[65536]{0}', space=vmem, size = 0x10000, scoped, tag = 'input window, operand 0']
    #allocation4 [shape = 's32[2]{0}', space=sflag, size = 0x8, scoped, tag = 'scoped memory for tpu_custom_call.1']
    #allocation5 [shape = 's32[2]{0}', space=sflag, size = 0x8, scoped, tag = 'scoped memory for tpu_custom_call.1']
    #allocation6 [shape = 'u8[131072]{0}', space=vmem, size = 0x20000, scoped, tag = 'input window, operand 1']
    #allocation7 [shape = 's32[2]{0}', space=sflag, size = 0x8, scoped, tag = 'scoped memory for tpu_custom_call.1']
    #allocation8 [shape = 'u8[98304]{0}', space=vmem, size = 0x18000, scoped, tag = 'input window, operand 2, single buffered']
    #allocation9 [shape = 'u8[32768]{0}', space=vmem, size = 0x8000, scoped, tag = 'input window, operand 4, single buffered']
    #allocation10 [shape = 's32[1]{0}', space=sflag, size = 0x4, scoped, tag = 'scoped memory for tpu_custom_call.1']
    #allocation11 [shape = 'u8[512]{0}', space=vmem, size = 0x400, scoped, tag = 'input window, operand 5, single buffered']
    #allocation12 [shape = 'u8[32768]{0}', space=vmem, size = 0x8000, scoped, tag = 'input window, operand 6, single buffered']
    #allocation13 [shape = 's32[1]{0}', space=sflag, size = 0x4, scoped, tag = 'scoped memory for tpu_custom_call.1']
    #allocation14 [shape = 'u8[65536]{0}', space=vmem, size = 0x10000, scoped, tag = 'input window, operand 8, single buffered']
    #allocation15 [shape = 'u8[32768]{0}', space=vmem, size = 0x8000, scoped, tag = 'input window, operand 10, single buffered']
    #allocation16 [shape = 's32[1]{0}', space=sflag, size = 0x4, scoped, tag = 'scoped memory for tpu_custom_call.1']
    #allocation17 [shape = 'u8[65536]{0}', space=vmem, size = 0x10000, scoped, tag = 'input window, operand 12, single buffered']
    #allocation18 [shape = 'u8[65536]{0}', space=vmem, size = 0x10000, scoped, tag = 'input window, operand 14, single buffered']
    #allocation19 [shape = 's32[1]{0}', space=sflag, size = 0x4, scoped, tag = 'scoped memory for tpu_custom_call.1']
    #allocation20 [shape = 'u8[65536]{0}', space=vmem, size = 0x10000, scoped, tag = 'output window, operand 0']
    %23 = vsyncpa [#allocation4], 0
    %s24 = scalar_lea.sflag [#allocation4], 1
    %25 = vsyncpa %s24, 0
    %26 = vsyncpa [#allocation7], 0
    %s27 = scalar_lea.sflag [#allocation7], 1
    %28 = vsyncpa %s27, 0
    %29 = vsyncpa [#allocation10], 0
    %30 = vsyncpa [#allocation13], 0
    %31 = vsyncpa [#allocation16], 0
    %32 = vsyncpa [#allocation19], 0
    %33 = vsyncpa [#allocation5], 0
    %s34 = scalar_lea.sflag [#allocation5], 1
    %35 = vsyncpa %s34, 0
    loop: start=0, step=1, limit=4
    $region2: #{tpu_custom_call.1} parent=1 // loop_pre_header
      _
    $region3: #{tpu_custom_call.1} parent=1 // loop_header
      %s37 = sphi 0, %s41
      %p38 = scmp.ge.s32.totalorder %s37, 4
      %s47 = sphi 0, %s49
      %s50 = sphi 0, %s47
      %s51 = sphi 0, %s50
      %s67 = sphi 0, %s51
      %s73 = sphi 0, %s75
      %s76 = sphi 0, %s73
      %s77 = sphi 0, %s76
      %s93 = sphi 0, %s77
      %s97 = sphi 0, %s97
      %s99 = sphi 0, %s97
      %s100 = sphi 0, %s99
      %s114 = sphi 0, %s100
      %s118 = sphi 0, %s118
      %s120 = sphi 0, %s118
      %s121 = sphi 0, %s120
      %s135 = sphi 0, %s121
      %s139 = sphi 0, %s139
      %s141 = sphi 0, %s139
      %s142 = sphi 0, %s141
      %s156 = sphi 0, %s142
      %s160 = sphi 0, %s160
      %s162 = sphi 0, %s160
      %s163 = sphi 0, %s162
      %s177 = sphi 0, %s163
      %s181 = sphi 0, %s181
      %s183 = sphi 0, %s181
      %s184 = sphi 0, %s183
      %s198 = sphi 0, %s184
      %s202 = sphi 0, %s202
      %s204 = sphi 0, %s202
      %s205 = sphi 0, %s204
      %s219 = sphi 0, %s205
      %s223 = sphi 0, %s223
      %s225 = sphi 0, %s223
      %s226 = sphi 0, %s225
      %s240 = sphi 0, %s226
      %s244 = sphi 0, %s244
      %s246 = sphi 0, %s244
      %s247 = sphi 0, %s246
      %s261 = sphi 0, %s247
      %s265 = sphi 0, %s265
      %s267 = sphi 0, %s265
      %s268 = sphi 0, %s267
      %s282 = sphi 0, %s268
      %s286 = sphi 0, %s286
      %s288 = sphi 0, %s286
      %s289 = sphi 0, %s288
      %s303 = sphi 0, %s289
      %s307 = sphi 0, %s307
      %s309 = sphi 0, %s307
      %s310 = sphi 0, %s309
      %s324 = sphi 0, %s310
      %s328 = sphi 0, %s328
      %s330 = sphi 0, %s328
      %s331 = sphi 0, %s330
      %s345 = sphi 0, %s331
      %s349 = sphi 0, %s349
      %s351 = sphi 0, %s349
      %s352 = sphi 0, %s351
      %s366 = sphi 0, %s352
      %s370 = sphi 0, %s370
      %s372 = sphi 0, %s370
      %s373 = sphi 0, %s372
      %s387 = sphi 0, %s373
      %s391 = sphi 0, %s391
      %s393 = sphi 0, %s391
      %s394 = sphi 0, %s393
      %s408 = sphi 0, %s394
      %s414 = sphi 0, %s416
      %s417 = sphi 0, %s414
      %s418 = sphi 0, %s417
      %s434 = sphi 0, %s418
    $region4: #{tpu_custom_call.1} parent=1 // loop_header_branch
      %40 = sbr.rel (%p38) target = $region8
    $region5: #{tpu_custom_call.1} parent=1 // loop_body
      %s42 = ssub.s32 %s37, 1
      %s43 = ssub.s32 %s37, 2
      %s44 = sadd.s32 %s37, 1
      %s45 = ssub.s32 %s37, %s44
      %p46 = scmp.eq.s32.totalorder %s45, 0
      %s48 = sadd.s32 %s47, 1
      %s49 = scalar_select %p46, %s47, %s48
      %p52 = pneg %p46
      %p53 = scmp.eq.s32.totalorder %s37, 1
      %p54 = por %p52, %p53
      %p55 = scmp.ne.s32.totalorder %s47, %s50
      %p56 = scmp.eq.s32.totalorder %s37, 0
      %p57 = por %p55, %p56
      %p58 = scmp.ne.s32.totalorder %s47, %s50
      %p59 = scmp.eq.s32.totalorder %s42, 1
      %p60 = por %p58, %p59
      %p61 = scmp.ne.s32.totalorder %s50, %s51
      %p62 = scmp.eq.s32.totalorder %s42, 0
      %p63 = por %p61, %p62
      %p64 = scmp.ne.s32.totalorder %s50, %s51
      %p65 = scmp.eq.s32.totalorder %s43, 1
      %p66 = por %p64, %p65
      %p68 = scmp.ne.s32.totalorder %s51, %s67
      %p69 = scmp.eq.s32.totalorder %s43, 0
      %p70 = por %p68, %p69
      %s71 = ssub.s32 %s37, %s44
      %p72 = scmp.eq.s32.totalorder %s71, 0
      %s74 = sadd.s32 %s73, 1
      %s75 = scalar_select %p72, %s73, %s74
      %p78 = pneg %p72
      %p79 = scmp.eq.s32.totalorder %s37, 1
      %p80 = por %p78, %p79
      %p81 = scmp.ne.s32.totalorder %s73, %s76
      %p82 = scmp.eq.s32.totalorder %s37, 0
      %p83 = por %p81, %p82
      %p84 = scmp.ne.s32.totalorder %s73, %s76
      %p85 = scmp.eq.s32.totalorder %s42, 1
      %p86 = por %p84, %p85
      %p87 = scmp.ne.s32.totalorder %s76, %s77
      %p88 = scmp.eq.s32.totalorder %s42, 0
      %p89 = por %p87, %p88
      %p90 = scmp.ne.s32.totalorder %s76, %s77
      %p91 = scmp.eq.s32.totalorder %s43, 1
      %p92 = por %p90, %p91
      %p94 = scmp.ne.s32.totalorder %s77, %s93
      %p95 = scmp.eq.s32.totalorder %s43, 0
      %p96 = por %p94, %p95
      %s98 = sadd.s32 %s97, 1
      %p101 = scmp.eq.s32.totalorder %s37, 1
      %p102 = scmp.ne.s32.totalorder %s97, %s99
      %p103 = scmp.eq.s32.totalorder %s37, 0
      %p104 = por %p102, %p103
      %p105 = scmp.ne.s32.totalorder %s97, %s99
      %p106 = scmp.eq.s32.totalorder %s42, 1
      %p107 = por %p105, %p106
      %p108 = scmp.ne.s32.totalorder %s99, %s100
      %p109 = scmp.eq.s32.totalorder %s42, 0
      %p110 = por %p108, %p109
      %p111 = scmp.ne.s32.totalorder %s99, %s100
      %p112 = scmp.eq.s32.totalorder %s43, 1
      %p113 = por %p111, %p112
      %p115 = scmp.ne.s32.totalorder %s100, %s114
      %p116 = scmp.eq.s32.totalorder %s43, 0
      %p117 = por %p115, %p116
      %s119 = sadd.s32 %s118, 1
      %p122 = scmp.eq.s32.totalorder %s37, 1
      %p123 = scmp.ne.s32.totalorder %s118, %s120
      %p124 = scmp.eq.s32.totalorder %s37, 0
      %p125 = por %p123, %p124
      %p126 = scmp.ne.s32.totalorder %s118, %s120
      %p127 = scmp.eq.s32.totalorder %s42, 1
      %p128 = por %p126, %p127
      %p129 = scmp.ne.s32.totalorder %s120, %s121
      %p130 = scmp.eq.s32.totalorder %s42, 0
      %p131 = por %p129, %p130
      %p132 = scmp.ne.s32.totalorder %s120, %s121
      %p133 = scmp.eq.s32.totalorder %s43, 1
      %p134 = por %p132, %p133
      %p136 = scmp.ne.s32.totalorder %s121, %s135
      %p137 = scmp.eq.s32.totalorder %s43, 0
      %p138 = por %p136, %p137
      %s140 = sadd.s32 %s139, 1
      %p143 = scmp.eq.s32.totalorder %s37, 1
      %p144 = scmp.ne.s32.totalorder %s139, %s141
      %p145 = scmp.eq.s32.totalorder %s37, 0
      %p146 = por %p144, %p145
      %p147 = scmp.ne.s32.totalorder %s139, %s141
      %p148 = scmp.eq.s32.totalorder %s42, 1
      %p149 = por %p147, %p148
      %p150 = scmp.ne.s32.totalorder %s141, %s142
      %p151 = scmp.eq.s32.totalorder %s42, 0
      %p152 = por %p150, %p151
      %p153 = scmp.ne.s32.totalorder %s141, %s142
      %p154 = scmp.eq.s32.totalorder %s43, 1
      %p155 = por %p153, %p154
      %p157 = scmp.ne.s32.totalorder %s142, %s156
      %p158 = scmp.eq.s32.totalorder %s43, 0
      %p159 = por %p157, %p158
      %s161 = sadd.s32 %s160, 1
      %p164 = scmp.eq.s32.totalorder %s37, 1
      %p165 = scmp.ne.s32.totalorder %s160, %s162
      %p166 = scmp.eq.s32.totalorder %s37, 0
      %p167 = por %p165, %p166
      %p168 = scmp.ne.s32.totalorder %s160, %s162
      %p169 = scmp.eq.s32.totalorder %s42, 1
      %p170 = por %p168, %p169
      %p171 = scmp.ne.s32.totalorder %s162, %s163
      %p172 = scmp.eq.s32.totalorder %s42, 0
      %p173 = por %p171, %p172
      %p174 = scmp.ne.s32.totalorder %s162, %s163
      %p175 = scmp.eq.s32.totalorder %s43, 1
      %p176 = por %p174, %p175
      %p178 = scmp.ne.s32.totalorder %s163, %s177
      %p179 = scmp.eq.s32.totalorder %s43, 0
      %p180 = por %p178, %p179
      %s182 = sadd.s32 %s181, 1
      %p185 = scmp.eq.s32.totalorder %s37, 1
      %p186 = scmp.ne.s32.totalorder %s181, %s183
      %p187 = scmp.eq.s32.totalorder %s37, 0
      %p188 = por %p186, %p187
      %p189 = scmp.ne.s32.totalorder %s181, %s183
      %p190 = scmp.eq.s32.totalorder %s42, 1
      %p191 = por %p189, %p190
      %p192 = scmp.ne.s32.totalorder %s183, %s184
      %p193 = scmp.eq.s32.totalorder %s42, 0
      %p194 = por %p192, %p193
      %p195 = scmp.ne.s32.totalorder %s183, %s184
      %p196 = scmp.eq.s32.totalorder %s43, 1
      %p197 = por %p195, %p196
      %p199 = scmp.ne.s32.totalorder %s184, %s198
      %p200 = scmp.eq.s32.totalorder %s43, 0
      %p201 = por %p199, %p200
      %s203 = sadd.s32 %s202, 1
      %p206 = scmp.eq.s32.totalorder %s37, 1
      %p207 = scmp.ne.s32.totalorder %s202, %s204
      %p208 = scmp.eq.s32.totalorder %s37, 0
      %p209 = por %p207, %p208
      %p210 = scmp.ne.s32.totalorder %s202, %s204
      %p211 = scmp.eq.s32.totalorder %s42, 1
      %p212 = por %p210, %p211
      %p213 = scmp.ne.s32.totalorder %s204, %s205
      %p214 = scmp.eq.s32.totalorder %s42, 0
      %p215 = por %p213, %p214
      %p216 = scmp.ne.s32.totalorder %s204, %s205
      %p217 = scmp.eq.s32.totalorder %s43, 1
      %p218 = por %p216, %p217
      %p220 = scmp.ne.s32.totalorder %s205, %s219
      %p221 = scmp.eq.s32.totalorder %s43, 0
      %p222 = por %p220, %p221
      %s224 = sadd.s32 %s223, 1
      %p227 = scmp.eq.s32.totalorder %s37, 1
      %p228 = scmp.ne.s32.totalorder %s223, %s225
      %p229 = scmp.eq.s32.totalorder %s37, 0
      %p230 = por %p228, %p229
      %p231 = scmp.ne.s32.totalorder %s223, %s225
      %p232 = scmp.eq.s32.totalorder %s42, 1
      %p233 = por %p231, %p232
      %p234 = scmp.ne.s32.totalorder %s225, %s226
      %p235 = scmp.eq.s32.totalorder %s42, 0
      %p236 = por %p234, %p235
      %p237 = scmp.ne.s32.totalorder %s225, %s226
      %p238 = scmp.eq.s32.totalorder %s43, 1
      %p239 = por %p237, %p238
      %p241 = scmp.ne.s32.totalorder %s226, %s240
      %p242 = scmp.eq.s32.totalorder %s43, 0
      %p243 = por %p241, %p242
      %s245 = sadd.s32 %s244, 1
      %p248 = scmp.eq.s32.totalorder %s37, 1
      %p249 = scmp.ne.s32.totalorder %s244, %s246
      %p250 = scmp.eq.s32.totalorder %s37, 0
      %p251 = por %p249, %p250
      %p252 = scmp.ne.s32.totalorder %s244, %s246
      %p253 = scmp.eq.s32.totalorder %s42, 1
      %p254 = por %p252, %p253
      %p255 = scmp.ne.s32.totalorder %s246, %s247
      %p256 = scmp.eq.s32.totalorder %s42, 0
      %p257 = por %p255, %p256
      %p258 = scmp.ne.s32.totalorder %s246, %s247
      %p259 = scmp.eq.s32.totalorder %s43, 1
      %p260 = por %p258, %p259
      %p262 = scmp.ne.s32.totalorder %s247, %s261
      %p263 = scmp.eq.s32.totalorder %s43, 0
      %p264 = por %p262, %p263
      %s266 = sadd.s32 %s265, 1
      %p269 = scmp.eq.s32.totalorder %s37, 1
      %p270 = scmp.ne.s32.totalorder %s265, %s267
      %p271 = scmp.eq.s32.totalorder %s37, 0
      %p272 = por %p270, %p271
      %p273 = scmp.ne.s32.totalorder %s265, %s267
      %p274 = scmp.eq.s32.totalorder %s42, 1
      %p275 = por %p273, %p274
      %p276 = scmp.ne.s32.totalorder %s267, %s268
      %p277 = scmp.eq.s32.totalorder %s42, 0
      %p278 = por %p276, %p277
      %p279 = scmp.ne.s32.totalorder %s267, %s268
      %p280 = scmp.eq.s32.totalorder %s43, 1
      %p281 = por %p279, %p280
      %p283 = scmp.ne.s32.totalorder %s268, %s282
      %p284 = scmp.eq.s32.totalorder %s43, 0
      %p285 = por %p283, %p284
      %s287 = sadd.s32 %s286, 1
      %p290 = scmp.eq.s32.totalorder %s37, 1
      %p291 = scmp.ne.s32.totalorder %s286, %s288
      %p292 = scmp.eq.s32.totalorder %s37, 0
      %p293 = por %p291, %p292
      %p294 = scmp.ne.s32.totalorder %s286, %s288
      %p295 = scmp.eq.s32.totalorder %s42, 1
      %p296 = por %p294, %p295
      %p297 = scmp.ne.s32.totalorder %s288, %s289
      %p298 = scmp.eq.s32.totalorder %s42, 0
      %p299 = por %p297, %p298
      %p300 = scmp.ne.s32.totalorder %s288, %s289
      %p301 = scmp.eq.s32.totalorder %s43, 1
      %p302 = por %p300, %p301
      %p304 = scmp.ne.s32.totalorder %s289, %s303
      %p305 = scmp.eq.s32.totalorder %s43, 0
      %p306 = por %p304, %p305
      %s308 = sadd.s32 %s307, 1
      %p311 = scmp.eq.s32.totalorder %s37, 1
      %p312 = scmp.ne.s32.totalorder %s307, %s309
      %p313 = scmp.eq.s32.totalorder %s37, 0
      %p314 = por %p312, %p313
      %p315 = scmp.ne.s32.totalorder %s307, %s309
      %p316 = scmp.eq.s32.totalorder %s42, 1
      %p317 = por %p315, %p316
      %p318 = scmp.ne.s32.totalorder %s309, %s310
      %p319 = scmp.eq.s32.totalorder %s42, 0
      %p320 = por %p318, %p319
      %p321 = scmp.ne.s32.totalorder %s309, %s310
      %p322 = scmp.eq.s32.totalorder %s43, 1
      %p323 = por %p321, %p322
      %p325 = scmp.ne.s32.totalorder %s310, %s324
      %p326 = scmp.eq.s32.totalorder %s43, 0
      %p327 = por %p325, %p326
      %s329 = sadd.s32 %s328, 1
      %p332 = scmp.eq.s32.totalorder %s37, 1
      %p333 = scmp.ne.s32.totalorder %s328, %s330
      %p334 = scmp.eq.s32.totalorder %s37, 0
      %p335 = por %p333, %p334
      %p336 = scmp.ne.s32.totalorder %s328, %s330
      %p337 = scmp.eq.s32.totalorder %s42, 1
      %p338 = por %p336, %p337
      %p339 = scmp.ne.s32.totalorder %s330, %s331
      %p340 = scmp.eq.s32.totalorder %s42, 0
      %p341 = por %p339, %p340
      %p342 = scmp.ne.s32.totalorder %s330, %s331
      %p343 = scmp.eq.s32.totalorder %s43, 1
      %p344 = por %p342, %p343
      %p346 = scmp.ne.s32.totalorder %s331, %s345
      %p347 = scmp.eq.s32.totalorder %s43, 0
      %p348 = por %p346, %p347
      %s350 = sadd.s32 %s349, 1
      %p353 = scmp.eq.s32.totalorder %s37, 1
      %p354 = scmp.ne.s32.totalorder %s349, %s351
      %p355 = scmp.eq.s32.totalorder %s37, 0
      %p356 = por %p354, %p355
      %p357 = scmp.ne.s32.totalorder %s349, %s351
      %p358 = scmp.eq.s32.totalorder %s42, 1
      %p359 = por %p357, %p358
      %p360 = scmp.ne.s32.totalorder %s351, %s352
      %p361 = scmp.eq.s32.totalorder %s42, 0
      %p362 = por %p360, %p361
      %p363 = scmp.ne.s32.totalorder %s351, %s352
      %p364 = scmp.eq.s32.totalorder %s43, 1
      %p365 = por %p363, %p364
      %p367 = scmp.ne.s32.totalorder %s352, %s366
      %p368 = scmp.eq.s32.totalorder %s43, 0
      %p369 = por %p367, %p368
      %s371 = sadd.s32 %s370, 1
      %p374 = scmp.eq.s32.totalorder %s37, 1
      %p375 = scmp.ne.s32.totalorder %s370, %s372
      %p376 = scmp.eq.s32.totalorder %s37, 0
      %p377 = por %p375, %p376
      %p378 = scmp.ne.s32.totalorder %s370, %s372
      %p379 = scmp.eq.s32.totalorder %s42, 1
      %p380 = por %p378, %p379
      %p381 = scmp.ne.s32.totalorder %s372, %s373
      %p382 = scmp.eq.s32.totalorder %s42, 0
      %p383 = por %p381, %p382
      %p384 = scmp.ne.s32.totalorder %s372, %s373
      %p385 = scmp.eq.s32.totalorder %s43, 1
      %p386 = por %p384, %p385
      %p388 = scmp.ne.s32.totalorder %s373, %s387
      %p389 = scmp.eq.s32.totalorder %s43, 0
      %p390 = por %p388, %p389
      %s392 = sadd.s32 %s391, 1
      %p395 = scmp.eq.s32.totalorder %s37, 1
      %p396 = scmp.ne.s32.totalorder %s391, %s393
      %p397 = scmp.eq.s32.totalorder %s37, 0
      %p398 = por %p396, %p397
      %p399 = scmp.ne.s32.totalorder %s391, %s393
      %p400 = scmp.eq.s32.totalorder %s42, 1
      %p401 = por %p399, %p400
      %p402 = scmp.ne.s32.totalorder %s393, %s394
      %p403 = scmp.eq.s32.totalorder %s42, 0
      %p404 = por %p402, %p403
      %p405 = scmp.ne.s32.totalorder %s393, %s394
      %p406 = scmp.eq.s32.totalorder %s43, 1
      %p407 = por %p405, %p406
      %p409 = scmp.ne.s32.totalorder %s394, %s408
      %p410 = scmp.eq.s32.totalorder %s43, 0
      %p411 = por %p409, %p410
      %s412 = ssub.s32 %s37, %s44
      %p413 = scmp.eq.s32.totalorder %s412, 0
      %s415 = sadd.s32 %s414, 1
      %s416 = scalar_select %p413, %s414, %s415
      %p419 = pneg %p413
      %p420 = scmp.eq.s32.totalorder %s37, 1
      %p421 = por %p419, %p420
      %p422 = scmp.ne.s32.totalorder %s414, %s417
      %p423 = scmp.eq.s32.totalorder %s37, 0
      %p424 = por %p422, %p423
      %p425 = scmp.ne.s32.totalorder %s414, %s417
      %p426 = scmp.eq.s32.totalorder %s42, 1
      %p427 = por %p425, %p426
      %p428 = scmp.ne.s32.totalorder %s417, %s418
      %p429 = scmp.eq.s32.totalorder %s42, 0
      %p430 = por %p428, %p429
      %p431 = scmp.ne.s32.totalorder %s417, %s418
      %p432 = scmp.eq.s32.totalorder %s43, 1
      %p433 = por %p431, %p432
      %p435 = scmp.ne.s32.totalorder %s418, %s434
      %p436 = scmp.eq.s32.totalorder %s43, 0
      %p437 = por %p435, %p436
      %p438 = scmp.le.s32.totalorder 1, %s37
      %p439 = scmp.lt.s32.totalorder %s37, 3
      %p440 = pnand %p438, %p439
      %p441 = pneg %p440
      // Predicated region
      $region9: #{tpu_custom_call.1} parent=5 // pred_check
        _
      $region10: #{tpu_custom_call.1} parent=5 // pred_check_branch
        %443 = sbr.rel (%p440) target = $region12
      $region11: #{tpu_custom_call.1} parent=5 // pred_region
        %s444 = ssub.s32 %s37, 1
        // Predicated region
        $region13: #{tpu_custom_call.1} parent=11 // pred_check
          %p445 = pneg %p110
        $region14: #{tpu_custom_call.1} parent=11 // pred_check_branch
          %447 = sbr.rel (%p445) target = $region16
        $region15: #{tpu_custom_call.1} parent=11 // pred_region
          %449 = vsyncadd [#allocation7], 0
          %s450 = sshll.u32 %s2, 4
          %s451 = int_to_ptr.hbm [resolvable:$true] %s450
          %s452 = sshll.u32 [#allocation8], 4
          %s453 = int_to_ptr.vmem [resolvable:$true] %s452
          %458 = dma.hbm_to_vmem [thread:$0]  %s451, 3072, %s453, [#allocation7], 192, 192, 12
        $region16: #{tpu_custom_call.1} parent=11 // pred_fallthru
          _
        // Predicated region
        $region17: #{tpu_custom_call.1} parent=11 // pred_check
          %p459 = pneg %p131
        $region18: #{tpu_custom_call.1} parent=11 // pred_check_branch
          %461 = sbr.rel (%p459) target = $region20
        $region19: #{tpu_custom_call.1} parent=11 // pred_region
          _
        $region20: #{tpu_custom_call.1} parent=11 // pred_fallthru
          _
        // Predicated region
        $region21: #{tpu_custom_call.1} parent=11 // pred_check
          %p462 = pneg %p152
        $region22: #{tpu_custom_call.1} parent=11 // pred_check_branch
          %464 = sbr.rel (%p462) target = $region24
        $region23: #{tpu_custom_call.1} parent=11 // pred_region
          %466 = vsyncadd [#allocation10], 0
          %s467 = sshll.u32 %s4, 4
          %s468 = int_to_ptr.hbm [resolvable:$true] %s467
          %s469 = sshll.u32 [#allocation9], 4
          %s470 = int_to_ptr.vmem [resolvable:$true] %s469
          %475 = dma.hbm_to_vmem [thread:$0]  %s468, 1024, %s470, [#allocation10], 64, 64, 4
        $region24: #{tpu_custom_call.1} parent=11 // pred_fallthru
          _
        // Predicated region
        $region25: #{tpu_custom_call.1} parent=11 // pred_check
          %p476 = pneg %p173
        $region26: #{tpu_custom_call.1} parent=11 // pred_check_branch
          %478 = sbr.rel (%p476) target = $region28
        $region27: #{tpu_custom_call.1} parent=11 // pred_region
          %480 = vsyncadd [#allocation10], 0
          %s482 = sshll.u32 %s5, 4
          %s483 = int_to_ptr.hbm [resolvable:$true] %s482
          %s484 = sshll.u32 [#allocation11], 4
          %s485 = int_to_ptr.vmem [resolvable:$true] %s484
          %487 = dma.hbm_to_vmem [thread:$0]  %s483, 16, %s485, [#allocation10]
        $region28: #{tpu_custom_call.1} parent=11 // pred_fallthru
          _
        // Predicated region
        $region29: #{tpu_custom_call.1} parent=11 // pred_check
          %p488 = pneg %p194
        $region30: #{tpu_custom_call.1} parent=11 // pred_check_branch
          %490 = sbr.rel (%p488) target = $region32
        $region31: #{tpu_custom_call.1} parent=11 // pred_region
          %492 = vsyncadd [#allocation13], 0
          %s493 = sshll.u32 %s6, 4
          %s494 = int_to_ptr.hbm [resolvable:$true] %s493
          %s495 = sshll.u32 [#allocation12], 4
          %s496 = int_to_ptr.vmem [resolvable:$true] %s495
          %501 = dma.hbm_to_vmem [thread:$0]  %s494, 1024, %s496, [#allocation13], 64, 64, 4
        $region32: #{tpu_custom_call.1} parent=11 // pred_fallthru
          _
        // Predicated region
        $region33: #{tpu_custom_call.1} parent=11 // pred_check
          %p502 = pneg %p215
        $region34: #{tpu_custom_call.1} parent=11 // pred_check_branch
          %504 = sbr.rel (%p502) target = $region36
        $region35: #{tpu_custom_call.1} parent=11 // pred_region
          _
        $region36: #{tpu_custom_call.1} parent=11 // pred_fallthru
          _
        // Predicated region
        $region37: #{tpu_custom_call.1} parent=11 // pred_check
          %p505 = pneg %p236
        $region38: #{tpu_custom_call.1} parent=11 // pred_check_branch
          %507 = sbr.rel (%p505) target = $region40
        $region39: #{tpu_custom_call.1} parent=11 // pred_region
          %509 = vsyncadd [#allocation13], 0
          %s510 = sshll.u32 %s8, 4
          %s511 = int_to_ptr.hbm [resolvable:$true] %s510
          %s512 = sshll.u32 [#allocation14], 4
          %s513 = int_to_ptr.vmem [resolvable:$true] %s512
          %518 = dma.hbm_to_vmem [thread:$0]  %s511, 2048, %s513, [#allocation13], 128, 128, 8
        $region40: #{tpu_custom_call.1} parent=11 // pred_fallthru
          _
        // Predicated region
        $region41: #{tpu_custom_call.1} parent=11 // pred_check
          %p519 = pneg %p257
        $region42: #{tpu_custom_call.1} parent=11 // pred_check_branch
          %521 = sbr.rel (%p519) target = $region44
        $region43: #{tpu_custom_call.1} parent=11 // pred_region
          _
        $region44: #{tpu_custom_call.1} parent=11 // pred_fallthru
          _
        // Predicated region
        $region45: #{tpu_custom_call.1} parent=11 // pred_check
          %p522 = pneg %p278
        $region46: #{tpu_custom_call.1} parent=11 // pred_check_branch
          %524 = sbr.rel (%p522) target = $region48
        $region47: #{tpu_custom_call.1} parent=11 // pred_region
          %526 = vsyncadd [#allocation16], 0
          %s527 = sshll.u32 %s10, 4
          %s528 = int_to_ptr.hbm [resolvable:$true] %s527
          %s529 = sshll.u32 [#allocation15], 4
          %s530 = int_to_ptr.vmem [resolvable:$true] %s529
          %535 = dma.hbm_to_vmem [thread:$0]  %s528, 1024, %s530, [#allocation16], 64, 64, 4
        $region48: #{tpu_custom_call.1} parent=11 // pred_fallthru
          _
        // Predicated region
        $region49: #{tpu_custom_call.1} parent=11 // pred_check
          %p536 = pneg %p299
        $region50: #{tpu_custom_call.1} parent=11 // pred_check_branch
          %538 = sbr.rel (%p536) target = $region52
        $region51: #{tpu_custom_call.1} parent=11 // pred_region
          _
        $region52: #{tpu_custom_call.1} parent=11 // pred_fallthru
          _
        // Predicated region
        $region53: #{tpu_custom_call.1} parent=11 // pred_check
          %p539 = pneg %p320
        $region54: #{tpu_custom_call.1} parent=11 // pred_check_branch
          %541 = sbr.rel (%p539) target = $region56
        $region55: #{tpu_custom_call.1} parent=11 // pred_region
          %543 = vsyncadd [#allocation16], 0
          %s544 = sshll.u32 %s12, 4
          %s545 = int_to_ptr.hbm [resolvable:$true] %s544
          %s546 = sshll.u32 [#allocation17], 4
          %s547 = int_to_ptr.vmem [resolvable:$true] %s546
          %552 = dma.hbm_to_vmem [thread:$0]  %s545, 2048, %s547, [#allocation16], 128, 128, 8
        $region56: #{tpu_custom_call.1} parent=11 // pred_fallthru
          _
        // Predicated region
        $region57: #{tpu_custom_call.1} parent=11 // pred_check
          %p553 = pneg %p341
        $region58: #{tpu_custom_call.1} parent=11 // pred_check_branch
          %555 = sbr.rel (%p553) target = $region60
        $region59: #{tpu_custom_call.1} parent=11 // pred_region
          _
        $region60: #{tpu_custom_call.1} parent=11 // pred_fallthru
          _
        // Predicated region
        $region61: #{tpu_custom_call.1} parent=11 // pred_check
          %p556 = pneg %p362
        $region62: #{tpu_custom_call.1} parent=11 // pred_check_branch
          %558 = sbr.rel (%p556) target = $region64
        $region63: #{tpu_custom_call.1} parent=11 // pred_region
          %560 = vsyncadd [#allocation19], 0
          %s561 = sshll.u32 %s14, 4
          %s562 = int_to_ptr.hbm [resolvable:$true] %s561
          %s563 = sshll.u32 [#allocation18], 4
          %s564 = int_to_ptr.vmem [resolvable:$true] %s563
          %569 = dma.hbm_to_vmem [thread:$0]  %s562, 2048, %s564, [#allocation19], 64, 64, 4
        $region64: #{tpu_custom_call.1} parent=11 // pred_fallthru
          _
        // Predicated region
        $region65: #{tpu_custom_call.1} parent=11 // pred_check
          %p570 = pneg %p383
        $region66: #{tpu_custom_call.1} parent=11 // pred_check_branch
          %572 = sbr.rel (%p570) target = $region68
        $region67: #{tpu_custom_call.1} parent=11 // pred_region
          _
        $region68: #{tpu_custom_call.1} parent=11 // pred_fallthru
          _
        // Predicated region
        $region69: #{tpu_custom_call.1} parent=11 // pred_check
          %p573 = pneg %p404
        $region70: #{tpu_custom_call.1} parent=11 // pred_check_branch
          %575 = sbr.rel (%p573) target = $region72
        $region71: #{tpu_custom_call.1} parent=11 // pred_region
          _
        $region72: #{tpu_custom_call.1} parent=11 // pred_fallthru
          _
      $region12: #{tpu_custom_call.1} parent=5 // pred_fallthru
        _
      %p576 = scmp.lt.s32.totalorder %s37, 2
      // Predicated region
      $region73: #{tpu_custom_call.1} parent=5 // pred_check
        %p577 = pneg %p576
      $region74: #{tpu_custom_call.1} parent=5 // pred_check_branch
        %579 = sbr.rel (%p577) target = $region76
      $region75: #{tpu_custom_call.1} parent=5 // pred_region
        // Predicated region
        $region77: #{tpu_custom_call.1} parent=75 // pred_check
          %p580 = pneg %p57
        $region78: #{tpu_custom_call.1} parent=75 // pred_check_branch
          %582 = sbr.rel (%p580) target = $region80
        $region79: #{tpu_custom_call.1} parent=75 // pred_region
          %s583 = sand.u32 %s47, 1
          %s584 = scalar_lea.sflag [#allocation4], %s583
          %s585 = sand.u32 %s47, 1
          %s586 = smul.addr %s585, 64
          %s587 = scalar_lea.vmem [#allocation3], %s586
          %589 = vsyncadd %s584, 0
          %s590 = smul.addr %s37, 8
          %s591 = scalar_lea.hbm %s0, %s590
          %s592 = sshll.u32 %s591, 4
          %s593 = int_to_ptr.hbm [resolvable:$true] %s592
          %s594 = sshll.u32 %s587, 4
          %s595 = int_to_ptr.vmem [resolvable:$true] %s594
          %600 = dma.hbm_to_vmem [thread:$0]  %s593, 1024, %s595, %s584, 256, 128, 8
        $region80: #{tpu_custom_call.1} parent=75 // pred_fallthru
          _
        // Predicated region
        $region81: #{tpu_custom_call.1} parent=75 // pred_check
          %p601 = pneg %p83
        $region82: #{tpu_custom_call.1} parent=75 // pred_check_branch
          %603 = sbr.rel (%p601) target = $region84
        $region83: #{tpu_custom_call.1} parent=75 // pred_region
          %s604 = sand.u32 %s37, 1
          %s605 = scalar_lea.sflag [#allocation7], %s604
          %s606 = sand.u32 %s73, 1
          %s607 = smul.addr %s606, 128
          %s608 = scalar_lea.vmem [#allocation6], %s607
          %610 = vsyncadd %s605, 0
          %s611 = smul.addr %s37, 8
          %s612 = scalar_lea.hbm %s1, %s611
          %s613 = sshll.u32 %s612, 4
          %s614 = int_to_ptr.hbm [resolvable:$true] %s613
          %s615 = sshll.u32 %s608, 4
          %s616 = int_to_ptr.vmem [resolvable:$true] %s615
          %621 = dma.hbm_to_vmem [thread:$0]  %s614, 2048, %s616, %s605, 256, 128, 8
        $region84: #{tpu_custom_call.1} parent=75 // pred_fallthru
          _
      $region76: #{tpu_custom_call.1} parent=5 // pred_fallthru
        _
      %p622 = scmp.le.s32.totalorder 1, %s37
      %p623 = scmp.lt.s32.totalorder %s37, 3
      %p624 = pnand %p622, %p623
      %p625 = pneg %p624
      // Predicated region
      $region85: #{tpu_custom_call.1} parent=5 // pred_check
        _
      $region86: #{tpu_custom_call.1} parent=5 // pred_check_branch
        %627 = sbr.rel (%p624) target = $region88
      $region87: #{tpu_custom_call.1} parent=5 // pred_region
        %s628 = ssub.s32 %s37, 1
        %s629 = sand.u32 %s50, 1
        %s630 = scalar_lea.sflag [#allocation4], %s629
        %s631 = sand.u32 %s50, 1
        %s632 = smul.addr %s631, 64
        %s633 = scalar_lea.vmem [#allocation3], %s632
        // Predicated region
        $region89: #{tpu_custom_call.1} parent=87 // pred_check
          %p634 = pneg %p63
        $region90: #{tpu_custom_call.1} parent=87 // pred_check_branch
          %636 = sbr.rel (%p634) target = $region92
        $region91: #{tpu_custom_call.1} parent=87 // pred_region
          %638 = dma.done %s630, 1024
        $region92: #{tpu_custom_call.1} parent=87 // pred_fallthru
          _
        %s639 = sand.u32 %s42, 1
        %s640 = scalar_lea.sflag [#allocation7], %s639
        %s641 = sand.u32 %s76, 1
        %s642 = smul.addr %s641, 128
        %s643 = scalar_lea.vmem [#allocation6], %s642
        // Predicated region
        $region93: #{tpu_custom_call.1} parent=87 // pred_check
          %p644 = pneg %p89
        $region94: #{tpu_custom_call.1} parent=87 // pred_check_branch
          %646 = sbr.rel (%p644) target = $region96
        $region95: #{tpu_custom_call.1} parent=87 // pred_region
          %648 = dma.done %s640, 2048
        $region96: #{tpu_custom_call.1} parent=87 // pred_fallthru
          _
        // Predicated region
        $region97: #{tpu_custom_call.1} parent=87 // pred_check
          %p649 = pneg %p110
        $region98: #{tpu_custom_call.1} parent=87 // pred_check_branch
          %651 = sbr.rel (%p649) target = $region100
        $region99: #{tpu_custom_call.1} parent=87 // pred_region
          %653 = dma.done [#allocation7], 3072
        $region100: #{tpu_custom_call.1} parent=87 // pred_fallthru
          _
        // Predicated region
        $region101: #{tpu_custom_call.1} parent=87 // pred_check
          %p654 = pneg %p152
        $region102: #{tpu_custom_call.1} parent=87 // pred_check_branch
          %656 = sbr.rel (%p654) target = $region104
        $region103: #{tpu_custom_call.1} parent=87 // pred_region
          %658 = dma.done [#allocation10], 1024
        $region104: #{tpu_custom_call.1} parent=87 // pred_fallthru
          _
        // Predicated region
        $region105: #{tpu_custom_call.1} parent=87 // pred_check
          %p659 = pneg %p173
        $region106: #{tpu_custom_call.1} parent=87 // pred_check_branch
          %661 = sbr.rel (%p659) target = $region108
        $region107: #{tpu_custom_call.1} parent=87 // pred_region
          %663 = dma.done [#allocation10], 16
        $region108: #{tpu_custom_call.1} parent=87 // pred_fallthru
          _
        // Predicated region
        $region109: #{tpu_custom_call.1} parent=87 // pred_check
          %p664 = pneg %p194
        $region110: #{tpu_custom_call.1} parent=87 // pred_check_branch
          %666 = sbr.rel (%p664) target = $region112
        $region111: #{tpu_custom_call.1} parent=87 // pred_region
          %668 = dma.done [#allocation13], 1024
        $region112: #{tpu_custom_call.1} parent=87 // pred_fallthru
          _
        // Predicated region
        $region113: #{tpu_custom_call.1} parent=87 // pred_check
          %p669 = pneg %p236
        $region114: #{tpu_custom_call.1} parent=87 // pred_check_branch
          %671 = sbr.rel (%p669) target = $region116
        $region115: #{tpu_custom_call.1} parent=87 // pred_region
          %673 = dma.done [#allocation13], 2048
        $region116: #{tpu_custom_call.1} parent=87 // pred_fallthru
          _
        // Predicated region
        $region117: #{tpu_custom_call.1} parent=87 // pred_check
          %p674 = pneg %p278
        $region118: #{tpu_custom_call.1} parent=87 // pred_check_branch
          %676 = sbr.rel (%p674) target = $region120
        $region119: #{tpu_custom_call.1} parent=87 // pred_region
          %678 = dma.done [#allocation16], 1024
        $region120: #{tpu_custom_call.1} parent=87 // pred_fallthru
          _
        // Predicated region
        $region121: #{tpu_custom_call.1} parent=87 // pred_check
          %p679 = pneg %p320
        $region122: #{tpu_custom_call.1} parent=87 // pred_check_branch
          %681 = sbr.rel (%p679) target = $region124
        $region123: #{tpu_custom_call.1} parent=87 // pred_region
          %683 = dma.done [#allocation16], 2048
        $region124: #{tpu_custom_call.1} parent=87 // pred_fallthru
          _
        // Predicated region
        $region125: #{tpu_custom_call.1} parent=87 // pred_check
          %p684 = pneg %p362
        $region126: #{tpu_custom_call.1} parent=87 // pred_check_branch
          %686 = sbr.rel (%p684) target = $region128
        $region127: #{tpu_custom_call.1} parent=87 // pred_region
          %688 = dma.done [#allocation19], 2048
        $region128: #{tpu_custom_call.1} parent=87 // pred_fallthru
          _
        %s689 = sand.u32 %s50, 1
        %s690 = scalar_lea.sflag [#allocation4], %s689
        %s691 = sand.u32 %s50, 1
        %s692 = smul.addr %s691, 64
        %s693 = scalar_lea.vmem [#allocation3], %s692
        %p694 = pneg %p63
        %p695 = pneg %p60
        %s696 = sand.u32 %s42, 1
        %s697 = scalar_lea.sflag [#allocation7], %s696
        %s698 = sand.u32 %s76, 1
        %s699 = smul.addr %s698, 128
        %s700 = scalar_lea.vmem [#allocation6], %s699
        %p701 = pneg %p89
        %p702 = pneg %p86
        %p703 = pneg %p110
        %p704 = pneg %p107
        %p705 = pneg %p131
        %p706 = pneg %p128
        %p707 = pneg %p152
        %p708 = pneg %p149
        %p709 = pneg %p173
        %p710 = pneg %p170
        %p711 = pneg %p194
        %p712 = pneg %p191
        %p713 = pneg %p215
        %p714 = pneg %p212
        %p715 = pneg %p236
        %p716 = pneg %p233
        %p717 = pneg %p257
        %p718 = pneg %p254
        %p719 = pneg %p278
        %p720 = pneg %p275
        %p721 = pneg %p299
        %p722 = pneg %p296
        %p723 = pneg %p320
        %p724 = pneg %p317
        %p725 = pneg %p341
        %p726 = pneg %p338
        %p727 = pneg %p362
        %p728 = pneg %p359
        %p729 = pneg %p383
        %p730 = pneg %p380
        %p731 = pneg %p404
        %p732 = pneg %p401
        %p733 = pneg %p430
        %p734 = pneg %p427
        %s735 = sand.u32 %s417, 1
        %s736 = scalar_lea.sflag [#allocation5], %s735
        %s737 = sand.u32 %s417, 1
        %s738 = smul.addr %s737, 64
        %s739 = scalar_lea.vmem [#allocation20], %s738
        %v741 = vld [vmem:[%s633] sm:$0x1]
        %v742 = vld [vmem:[%s633 + $0x8] sm:$0x1]
        %v743 = vld [vmem:[%s633 + $0x10] sm:$0x1]
        %v744 = vld [vmem:[%s633 + $0x18] sm:$0x1]
        %v745 = vld [vmem:[%s633 + $0x20] sm:$0x1]
        %v746 = vld [vmem:[%s633 + $0x28] sm:$0x1]
        %v747 = vld [vmem:[%s633 + $0x30] sm:$0x1]
        %v748 = vld [vmem:[%s633 + $0x38] sm:$0x1]
        %v749 = vld [vmem:[%s633 + $0x1] sm:$0x1]
        %v750 = vld [vmem:[%s633 + $0x9] sm:$0x1]
        %v751 = vld [vmem:[%s633 + $0x11] sm:$0x1]
        %v752 = vld [vmem:[%s633 + $0x19] sm:$0x1]
        %v753 = vld [vmem:[%s633 + $0x21] sm:$0x1]
        %v754 = vld [vmem:[%s633 + $0x29] sm:$0x1]
        %v755 = vld [vmem:[%s633 + $0x31] sm:$0x1]
        %v756 = vld [vmem:[%s633 + $0x39] sm:$0x1]
        %v757 = vld [vmem:[%s633 + $0x2] sm:$0x1]
        %v758 = vld [vmem:[%s633 + $0xa] sm:$0x1]
        %v759 = vld [vmem:[%s633 + $0x12] sm:$0x1]
        %v760 = vld [vmem:[%s633 + $0x1a] sm:$0x1]
        %v761 = vld [vmem:[%s633 + $0x22] sm:$0x1]
        %v762 = vld [vmem:[%s633 + $0x2a] sm:$0x1]
        %v763 = vld [vmem:[%s633 + $0x32] sm:$0x1]
        %v764 = vld [vmem:[%s633 + $0x3a] sm:$0x1]
        %v765 = vld [vmem:[%s633 + $0x3] sm:$0x1]
        %v766 = vld [vmem:[%s633 + $0xb] sm:$0x1]
        %v767 = vld [vmem:[%s633 + $0x13] sm:$0x1]
        %v768 = vld [vmem:[%s633 + $0x1b] sm:$0x1]
        %v769 = vld [vmem:[%s633 + $0x23] sm:$0x1]
        %v770 = vld [vmem:[%s633 + $0x2b] sm:$0x1]
        %v771 = vld [vmem:[%s633 + $0x33] sm:$0x1]
        %v772 = vld [vmem:[%s633 + $0x3b] sm:$0x1]
        %v773 = vld [vmem:[%s633 + $0x4] sm:$0x1]
        %v774 = vld [vmem:[%s633 + $0xc] sm:$0x1]
        %v775 = vld [vmem:[%s633 + $0x14] sm:$0x1]
        %v776 = vld [vmem:[%s633 + $0x1c] sm:$0x1]
        %v777 = vld [vmem:[%s633 + $0x24] sm:$0x1]
        %v778 = vld [vmem:[%s633 + $0x2c] sm:$0x1]
        %v779 = vld [vmem:[%s633 + $0x34] sm:$0x1]
        %v780 = vld [vmem:[%s633 + $0x3c] sm:$0x1]
        %v781 = vld [vmem:[%s633 + $0x5] sm:$0x1]
        %v782 = vld [vmem:[%s633 + $0xd] sm:$0x1]
        %v783 = vld [vmem:[%s633 + $0x15] sm:$0x1]
        %v784 = vld [vmem:[%s633 + $0x1d] sm:$0x1]
        %v785 = vld [vmem:[%s633 + $0x25] sm:$0x1]
        %v786 = vld [vmem:[%s633 + $0x2d] sm:$0x1]
        %v787 = vld [vmem:[%s633 + $0x35] sm:$0x1]
        %v788 = vld [vmem:[%s633 + $0x3d] sm:$0x1]
        %v789 = vld [vmem:[%s633 + $0x6] sm:$0x1]
        %v790 = vld [vmem:[%s633 + $0xe] sm:$0x1]
        %v791 = vld [vmem:[%s633 + $0x16] sm:$0x1]
        %v792 = vld [vmem:[%s633 + $0x1e] sm:$0x1]
        %v793 = vld [vmem:[%s633 + $0x26] sm:$0x1]
        %v794 = vld [vmem:[%s633 + $0x2e] sm:$0x1]
        %v795 = vld [vmem:[%s633 + $0x36] sm:$0x1]
        %v796 = vld [vmem:[%s633 + $0x3e] sm:$0x1]
        %v797 = vld [vmem:[%s633 + $0x7] sm:$0x1]
        %v798 = vld [vmem:[%s633 + $0xf] sm:$0x1]
        %v799 = vld [vmem:[%s633 + $0x17] sm:$0x1]
        %v800 = vld [vmem:[%s633 + $0x1f] sm:$0x1]
        %v801 = vld [vmem:[%s633 + $0x27] sm:$0x1]
        %v802 = vld [vmem:[%s633 + $0x2f] sm:$0x1]
        %v803 = vld [vmem:[%s633 + $0x37] sm:$0x1]
        %v804 = vld [vmem:[%s633 + $0x3f] sm:$0x1]
        %v813 = vrot.slane %v742, 7
        %vm814 = vcmask 1041409
        %v815 = vsel %vm814, %v813, %v741
        %v816 = vrot.slane %v743, 6
        %vm817 = vcmask 1042434
        %v818 = vsel %vm817, %v816, %v815
        %v819 = vrot.slane %v744, 5
        %vm820 = vcmask 1043459
        %v821 = vsel %vm820, %v819, %v818
        %v822 = vrot.slane %v745, 4
        %vm823 = vcmask 1044484
        %v824 = vsel %vm823, %v822, %v821
        %v825 = vrot.slane %v746, 3
        %vm826 = vcmask 1045509
        %v827 = vsel %vm826, %v825, %v824
        %v828 = vrot.slane %v747, 2
        %vm829 = vcmask 1046534
        %v830 = vsel %vm829, %v828, %v827
        %v831 = vrot.slane %v748, 1
        %vm832 = vcmask 1047559
        %v833 = vsel %vm832, %v831, %v830
        %v843 = vrot.slane %v750, 7
        %v844 = vsel %vm814, %v843, %v749
        %v845 = vrot.slane %v751, 6
        %v846 = vsel %vm817, %v845, %v844
        %v847 = vrot.slane %v752, 5
        %v848 = vsel %vm820, %v847, %v846
        %v849 = vrot.slane %v753, 4
        %v850 = vsel %vm823, %v849, %v848
        %v851 = vrot.slane %v754, 3
        %v852 = vsel %vm826, %v851, %v850
        %v853 = vrot.slane %v755, 2
        %v854 = vsel %vm829, %v853, %v852
        %v855 = vrot.slane %v756, 1
        %v856 = vsel %vm832, %v855, %v854
        %v866 = vrot.slane %v758, 7
        %v867 = vsel %vm814, %v866, %v757
        %v868 = vrot.slane %v759, 6
        %v869 = vsel %vm817, %v868, %v867
        %v870 = vrot.slane %v760, 5
        %v871 = vsel %vm820, %v870, %v869
        %v872 = vrot.slane %v761, 4
        %v873 = vsel %vm823, %v872, %v871
        %v874 = vrot.slane %v762, 3
        %v875 = vsel %vm826, %v874, %v873
        %v876 = vrot.slane %v763, 2
        %v877 = vsel %vm829, %v876, %v875
        %v878 = vrot.slane %v764, 1
        %v879 = vsel %vm832, %v878, %v877
        %v889 = vrot.slane %v766, 7
        %v890 = vsel %vm814, %v889, %v765
        %v891 = vrot.slane %v767, 6
        %v892 = vsel %vm817, %v891, %v890
        %v893 = vrot.slane %v768, 5
        %v894 = vsel %vm820, %v893, %v892
        %v895 = vrot.slane %v769, 4
        %v896 = vsel %vm823, %v895, %v894
        %v897 = vrot.slane %v770, 3
        %v898 = vsel %vm826, %v897, %v896
        %v899 = vrot.slane %v771, 2
        %v900 = vsel %vm829, %v899, %v898
        %v901 = vrot.slane %v772, 1
        %v902 = vsel %vm832, %v901, %v900
        %v912 = vrot.slane %v774, 7
        %v913 = vsel %vm814, %v912, %v773
        %v914 = vrot.slane %v775, 6
        %v915 = vsel %vm817, %v914, %v913
        %v916 = vrot.slane %v776, 5
        %v917 = vsel %vm820, %v916, %v915
        %v918 = vrot.slane %v777, 4
        %v919 = vsel %vm823, %v918, %v917
        %v920 = vrot.slane %v778, 3
        %v921 = vsel %vm826, %v920, %v919
        %v922 = vrot.slane %v779, 2
        %v923 = vsel %vm829, %v922, %v921
        %v924 = vrot.slane %v780, 1
        %v925 = vsel %vm832, %v924, %v923
        %v935 = vrot.slane %v782, 7
        %v936 = vsel %vm814, %v935, %v781
        %v937 = vrot.slane %v783, 6
        %v938 = vsel %vm817, %v937, %v936
        %v939 = vrot.slane %v784, 5
        %v940 = vsel %vm820, %v939, %v938
        %v941 = vrot.slane %v785, 4
        %v942 = vsel %vm823, %v941, %v940
        %v943 = vrot.slane %v786, 3
        %v944 = vsel %vm826, %v943, %v942
        %v945 = vrot.slane %v787, 2
        %v946 = vsel %vm829, %v945, %v944
        %v947 = vrot.slane %v788, 1
        %v948 = vsel %vm832, %v947, %v946
        %v958 = vrot.slane %v790, 7
        %v959 = vsel %vm814, %v958, %v789
        %v960 = vrot.slane %v791, 6
        %v961 = vsel %vm817, %v960, %v959
        %v962 = vrot.slane %v792, 5
        %v963 = vsel %vm820, %v962, %v961
        %v964 = vrot.slane %v793, 4
        %v965 = vsel %vm823, %v964, %v963
        %v966 = vrot.slane %v794, 3
        %v967 = vsel %vm826, %v966, %v965
        %v968 = vrot.slane %v795, 2
        %v969 = vsel %vm829, %v968, %v967
        %v970 = vrot.slane %v796, 1
        %v971 = vsel %vm832, %v970, %v969
        %v981 = vrot.slane %v798, 7
        %v982 = vsel %vm814, %v981, %v797
        %v983 = vrot.slane %v799, 6
        %v984 = vsel %vm817, %v983, %v982
        %v985 = vrot.slane %v800, 5
        %v986 = vsel %vm820, %v985, %v984
        %v987 = vrot.slane %v801, 4
        %v988 = vsel %vm823, %v987, %v986
        %v989 = vrot.slane %v802, 3
        %v990 = vsel %vm826, %v989, %v988
        %v991 = vrot.slane %v803, 2
        %v992 = vsel %vm829, %v991, %v990
        %v993 = vrot.slane %v804, 1
        %v994 = vsel %vm832, %v993, %v992
        %v996 = vld [vmem:[%s643] sm:$0x1]
        %v997 = vld [vmem:[%s643 + $0x8] sm:$0x1]
        %v998 = vld [vmem:[%s643 + $0x10] sm:$0x1]
        %v999 = vld [vmem:[%s643 + $0x18] sm:$0x1]
        %v1000 = vld [vmem:[%s643 + $0x20] sm:$0x1]
        %v1001 = vld [vmem:[%s643 + $0x28] sm:$0x1]
        %v1002 = vld [vmem:[%s643 + $0x30] sm:$0x1]
        %v1003 = vld [vmem:[%s643 + $0x38] sm:$0x1]
        %v1004 = vld [vmem:[%s643 + $0x40] sm:$0x1]
        %v1005 = vld [vmem:[%s643 + $0x48] sm:$0x1]
        %v1006 = vld [vmem:[%s643 + $0x50] sm:$0x1]
        %v1007 = vld [vmem:[%s643 + $0x58] sm:$0x1]
        %v1008 = vld [vmem:[%s643 + $0x60] sm:$0x1]
        %v1009 = vld [vmem:[%s643 + $0x68] sm:$0x1]
        %v1010 = vld [vmem:[%s643 + $0x70] sm:$0x1]
        %v1011 = vld [vmem:[%s643 + $0x78] sm:$0x1]
        %v1012 = vld [vmem:[%s643 + $0x1] sm:$0x1]
        %v1013 = vld [vmem:[%s643 + $0x9] sm:$0x1]
        %v1014 = vld [vmem:[%s643 + $0x11] sm:$0x1]
        %v1015 = vld [vmem:[%s643 + $0x19] sm:$0x1]
        %v1016 = vld [vmem:[%s643 + $0x21] sm:$0x1]
        %v1017 = vld [vmem:[%s643 + $0x29] sm:$0x1]
        %v1018 = vld [vmem:[%s643 + $0x31] sm:$0x1]
        %v1019 = vld [vmem:[%s643 + $0x39] sm:$0x1]
        %v1020 = vld [vmem:[%s643 + $0x41] sm:$0x1]
        %v1021 = vld [vmem:[%s643 + $0x49] sm:$0x1]
        %v1022 = vld [vmem:[%s643 + $0x51] sm:$0x1]
        %v1023 = vld [vmem:[%s643 + $0x59] sm:$0x1]
        %v1024 = vld [vmem:[%s643 + $0x61] sm:$0x1]
        %v1025 = vld [vmem:[%s643 + $0x69] sm:$0x1]
        %v1026 = vld [vmem:[%s643 + $0x71] sm:$0x1]
        %v1027 = vld [vmem:[%s643 + $0x79] sm:$0x1]
        %v1028 = vld [vmem:[%s643 + $0x2] sm:$0x1]
        %v1029 = vld [vmem:[%s643 + $0xa] sm:$0x1]
        %v1030 = vld [vmem:[%s643 + $0x12] sm:$0x1]
        %v1031 = vld [vmem:[%s643 + $0x1a] sm:$0x1]
        %v1032 = vld [vmem:[%s643 + $0x22] sm:$0x1]
        %v1033 = vld [vmem:[%s643 + $0x2a] sm:$0x1]
        %v1034 = vld [vmem:[%s643 + $0x32] sm:$0x1]
        %v1035 = vld [vmem:[%s643 + $0x3a] sm:$0x1]
        %v1036 = vld [vmem:[%s643 + $0x42] sm:$0x1]
        %v1037 = vld [vmem:[%s643 + $0x4a] sm:$0x1]
        %v1038 = vld [vmem:[%s643 + $0x52] sm:$0x1]
        %v1039 = vld [vmem:[%s643 + $0x5a] sm:$0x1]
        %v1040 = vld [vmem:[%s643 + $0x62] sm:$0x1]
        %v1041 = vld [vmem:[%s643 + $0x6a] sm:$0x1]
        %v1042 = vld [vmem:[%s643 + $0x72] sm:$0x1]
        %v1043 = vld [vmem:[%s643 + $0x7a] sm:$0x1]
        %v1044 = vld [vmem:[%s643 + $0x3] sm:$0x1]
        %v1045 = vld [vmem:[%s643 + $0xb] sm:$0x1]
        %v1046 = vld [vmem:[%s643 + $0x13] sm:$0x1]
        %v1047 = vld [vmem:[%s643 + $0x1b] sm:$0x1]
        %v1048 = vld [vmem:[%s643 + $0x23] sm:$0x1]
        %v1049 = vld [vmem:[%s643 + $0x2b] sm:$0x1]
        %v1050 = vld [vmem:[%s643 + $0x33] sm:$0x1]
        %v1051 = vld [vmem:[%s643 + $0x3b] sm:$0x1]
        %v1052 = vld [vmem:[%s643 + $0x43] sm:$0x1]
        %v1053 = vld [vmem:[%s643 + $0x4b] sm:$0x1]
        %v1054 = vld [vmem:[%s643 + $0x53] sm:$0x1]
        %v1055 = vld [vmem:[%s643 + $0x5b] sm:$0x1]
        %v1056 = vld [vmem:[%s643 + $0x63] sm:$0x1]
        %v1057 = vld [vmem:[%s643 + $0x6b] sm:$0x1]
        %v1058 = vld [vmem:[%s643 + $0x73] sm:$0x1]
        %v1059 = vld [vmem:[%s643 + $0x7b] sm:$0x1]
        %v1060 = vld [vmem:[%s643 + $0x4] sm:$0x1]
        %v1061 = vld [vmem:[%s643 + $0xc] sm:$0x1]
        %v1062 = vld [vmem:[%s643 + $0x14] sm:$0x1]
        %v1063 = vld [vmem:[%s643 + $0x1c] sm:$0x1]
        %v1064 = vld [vmem:[%s643 + $0x24] sm:$0x1]
        %v1065 = vld [vmem:[%s643 + $0x2c] sm:$0x1]
        %v1066 = vld [vmem:[%s643 + $0x34] sm:$0x1]
        %v1067 = vld [vmem:[%s643 + $0x3c] sm:$0x1]
        %v1068 = vld [vmem:[%s643 + $0x44] sm:$0x1]
        %v1069 = vld [vmem:[%s643 + $0x4c] sm:$0x1]
        %v1070 = vld [vmem:[%s643 + $0x54] sm:$0x1]
        %v1071 = vld [vmem:[%s643 + $0x5c] sm:$0x1]
        %v1072 = vld [vmem:[%s643 + $0x64] sm:$0x1]
        %v1073 = vld [vmem:[%s643 + $0x6c] sm:$0x1]
        %v1074 = vld [vmem:[%s643 + $0x74] sm:$0x1]
        %v1075 = vld [vmem:[%s643 + $0x7c] sm:$0x1]
        %v1076 = vld [vmem:[%s643 + $0x5] sm:$0x1]
        %v1077 = vld [vmem:[%s643 + $0xd] sm:$0x1]
        %v1078 = vld [vmem:[%s643 + $0x15] sm:$0x1]
        %v1079 = vld [vmem:[%s643 + $0x1d] sm:$0x1]
        %v1080 = vld [vmem:[%s643 + $0x25] sm:$0x1]
        %v1081 = vld [vmem:[%s643 + $0x2d] sm:$0x1]
        %v1082 = vld [vmem:[%s643 + $0x35] sm:$0x1]
        %v1083 = vld [vmem:[%s643 + $0x3d] sm:$0x1]
        %v1084 = vld [vmem:[%s643 + $0x45] sm:$0x1]
        %v1085 = vld [vmem:[%s643 + $0x4d] sm:$0x1]
        %v1086 = vld [vmem:[%s643 + $0x55] sm:$0x1]
        %v1087 = vld [vmem:[%s643 + $0x5d] sm:$0x1]
        %v1088 = vld [vmem:[%s643 + $0x65] sm:$0x1]
        %v1089 = vld [vmem:[%s643 + $0x6d] sm:$0x1]
        %v1090 = vld [vmem:[%s643 + $0x75] sm:$0x1]
        %v1091 = vld [vmem:[%s643 + $0x7d] sm:$0x1]
        %v1092 = vld [vmem:[%s643 + $0x6] sm:$0x1]
        %v1093 = vld [vmem:[%s643 + $0xe] sm:$0x1]
        %v1094 = vld [vmem:[%s643 + $0x16] sm:$0x1]
        %v1095 = vld [vmem:[%s643 + $0x1e] sm:$0x1]
        %v1096 = vld [vmem:[%s643 + $0x26] sm:$0x1]
        %v1097 = vld [vmem:[%s643 + $0x2e] sm:$0x1]
        %v1098 = vld [vmem:[%s643 + $0x36] sm:$0x1]
        %v1099 = vld [vmem:[%s643 + $0x3e] sm:$0x1]
        %v1100 = vld [vmem:[%s643 + $0x46] sm:$0x1]
        %v1101 = vld [vmem:[%s643 + $0x4e] sm:$0x1]
        %v1102 = vld [vmem:[%s643 + $0x56] sm:$0x1]
        %v1103 = vld [vmem:[%s643 + $0x5e] sm:$0x1]
        %v1104 = vld [vmem:[%s643 + $0x66] sm:$0x1]
        %v1105 = vld [vmem:[%s643 + $0x6e] sm:$0x1]
        %v1106 = vld [vmem:[%s643 + $0x76] sm:$0x1]
        %v1107 = vld [vmem:[%s643 + $0x7e] sm:$0x1]
        %v1108 = vld [vmem:[%s643 + $0x7] sm:$0x1]
        %v1109 = vld [vmem:[%s643 + $0xf] sm:$0x1]
        %v1110 = vld [vmem:[%s643 + $0x17] sm:$0x1]
        %v1111 = vld [vmem:[%s643 + $0x1f] sm:$0x1]
        %v1112 = vld [vmem:[%s643 + $0x27] sm:$0x1]
        %v1113 = vld [vmem:[%s643 + $0x2f] sm:$0x1]
        %v1114 = vld [vmem:[%s643 + $0x37] sm:$0x1]
        %v1115 = vld [vmem:[%s643 + $0x3f] sm:$0x1]
        %v1116 = vld [vmem:[%s643 + $0x47] sm:$0x1]
        %v1117 = vld [vmem:[%s643 + $0x4f] sm:$0x1]
        %v1118 = vld [vmem:[%s643 + $0x57] sm:$0x1]
        %v1119 = vld [vmem:[%s643 + $0x5f] sm:$0x1]
        %v1120 = vld [vmem:[%s643 + $0x67] sm:$0x1]
        %v1121 = vld [vmem:[%s643 + $0x6f] sm:$0x1]
        %v1122 = vld [vmem:[%s643 + $0x77] sm:$0x1]
        %v1123 = vld [vmem:[%s643 + $0x7f] sm:$0x1]
        %v1140 = vrot.slane %v997, 7
        %v1141 = vsel %vm814, %v1140, %v996
        %v1142 = vrot.slane %v998, 6
        %v1143 = vsel %vm817, %v1142, %v1141
        %v1144 = vrot.slane %v999, 5
        %v1145 = vsel %vm820, %v1144, %v1143
        %v1146 = vrot.slane %v1000, 4
        %v1147 = vsel %vm823, %v1146, %v1145
        %v1148 = vrot.slane %v1001, 3
        %v1149 = vsel %vm826, %v1148, %v1147
        %v1150 = vrot.slane %v1002, 2
        %v1151 = vsel %vm829, %v1150, %v1149
        %v1152 = vrot.slane %v1003, 1
        %v1153 = vsel %vm832, %v1152, %v1151
        %v1154 = vrot.slane %v1005, 7
        %v1155 = vsel %vm814, %v1154, %v1004
        %v1156 = vrot.slane %v1006, 6
        %v1157 = vsel %vm817, %v1156, %v1155
        %v1158 = vrot.slane %v1007, 5
        %v1159 = vsel %vm820, %v1158, %v1157
        %v1160 = vrot.slane %v1008, 4
        %v1161 = vsel %vm823, %v1160, %v1159
        %v1162 = vrot.slane %v1009, 3
        %v1163 = vsel %vm826, %v1162, %v1161
        %v1164 = vrot.slane %v1010, 2
        %v1165 = vsel %vm829, %v1164, %v1163
        %v1166 = vrot.slane %v1011, 1
        %v1167 = vsel %vm832, %v1166, %v1165
        %v1186 = vrot.slane %v1013, 7
        %v1187 = vsel %vm814, %v1186, %v1012
        %v1188 = vrot.slane %v1014, 6
        %v1189 = vsel %vm817, %v1188, %v1187
        %v1190 = vrot.slane %v1015, 5
        %v1191 = vsel %vm820, %v1190, %v1189
        %v1192 = vrot.slane %v1016, 4
        %v1193 = vsel %vm823, %v1192, %v1191
        %v1194 = vrot.slane %v1017, 3
        %v1195 = vsel %vm826, %v1194, %v1193
        %v1196 = vrot.slane %v1018, 2
        %v1197 = vsel %vm829, %v1196, %v1195
        %v1198 = vrot.slane %v1019, 1
        %v1199 = vsel %vm832, %v1198, %v1197
        %v1200 = vrot.slane %v1021, 7
        %v1201 = vsel %vm814, %v1200, %v1020
        %v1202 = vrot.slane %v1022, 6
        %v1203 = vsel %vm817, %v1202, %v1201
        %v1204 = vrot.slane %v1023, 5
        %v1205 = vsel %vm820, %v1204, %v1203
        %v1206 = vrot.slane %v1024, 4
        %v1207 = vsel %vm823, %v1206, %v1205
        %v1208 = vrot.slane %v1025, 3
        %v1209 = vsel %vm826, %v1208, %v1207
        %v1210 = vrot.slane %v1026, 2
        %v1211 = vsel %vm829, %v1210, %v1209
        %v1212 = vrot.slane %v1027, 1
        %v1213 = vsel %vm832, %v1212, %v1211
        %v1232 = vrot.slane %v1029, 7
        %v1233 = vsel %vm814, %v1232, %v1028
        %v1234 = vrot.slane %v1030, 6
        %v1235 = vsel %vm817, %v1234, %v1233
        %v1236 = vrot.slane %v1031, 5
        %v1237 = vsel %vm820, %v1236, %v1235
        %v1238 = vrot.slane %v1032, 4
        %v1239 = vsel %vm823, %v1238, %v1237
        %v1240 = vrot.slane %v1033, 3
        %v1241 = vsel %vm826, %v1240, %v1239
        %v1242 = vrot.slane %v1034, 2
        %v1243 = vsel %vm829, %v1242, %v1241
        %v1244 = vrot.slane %v1035, 1
        %v1245 = vsel %vm832, %v1244, %v1243
        %v1246 = vrot.slane %v1037, 7
        %v1247 = vsel %vm814, %v1246, %v1036
        %v1248 = vrot.slane %v1038, 6
        %v1249 = vsel %vm817, %v1248, %v1247
        %v1250 = vrot.slane %v1039, 5
        %v1251 = vsel %vm820, %v1250, %v1249
        %v1252 = vrot.slane %v1040, 4
        %v1253 = vsel %vm823, %v1252, %v1251
        %v1254 = vrot.slane %v1041, 3
        %v1255 = vsel %vm826, %v1254, %v1253
        %v1256 = vrot.slane %v1042, 2
        %v1257 = vsel %vm829, %v1256, %v1255
        %v1258 = vrot.slane %v1043, 1
        %v1259 = vsel %vm832, %v1258, %v1257
        %v1278 = vrot.slane %v1045, 7
        %v1279 = vsel %vm814, %v1278, %v1044
        %v1280 = vrot.slane %v1046, 6
        %v1281 = vsel %vm817, %v1280, %v1279
        %v1282 = vrot.slane %v1047, 5
        %v1283 = vsel %vm820, %v1282, %v1281
        %v1284 = vrot.slane %v1048, 4
        %v1285 = vsel %vm823, %v1284, %v1283
        %v1286 = vrot.slane %v1049, 3
        %v1287 = vsel %vm826, %v1286, %v1285
        %v1288 = vrot.slane %v1050, 2
        %v1289 = vsel %vm829, %v1288, %v1287
        %v1290 = vrot.slane %v1051, 1
        %v1291 = vsel %vm832, %v1290, %v1289
        %v1292 = vrot.slane %v1053, 7
        %v1293 = vsel %vm814, %v1292, %v1052
        %v1294 = vrot.slane %v1054, 6
        %v1295 = vsel %vm817, %v1294, %v1293
        %v1296 = vrot.slane %v1055, 5
        %v1297 = vsel %vm820, %v1296, %v1295
        %v1298 = vrot.slane %v1056, 4
        %v1299 = vsel %vm823, %v1298, %v1297
        %v1300 = vrot.slane %v1057, 3
        %v1301 = vsel %vm826, %v1300, %v1299
        %v1302 = vrot.slane %v1058, 2
        %v1303 = vsel %vm829, %v1302, %v1301
        %v1304 = vrot.slane %v1059, 1
        %v1305 = vsel %vm832, %v1304, %v1303
        %v1324 = vrot.slane %v1061, 7
        %v1325 = vsel %vm814, %v1324, %v1060
        %v1326 = vrot.slane %v1062, 6
        %v1327 = vsel %vm817, %v1326, %v1325
        %v1328 = vrot.slane %v1063, 5
        %v1329 = vsel %vm820, %v1328, %v1327
        %v1330 = vrot.slane %v1064, 4
        %v1331 = vsel %vm823, %v1330, %v1329
        %v1332 = vrot.slane %v1065, 3
        %v1333 = vsel %vm826, %v1332, %v1331
        %v1334 = vrot.slane %v1066, 2
        %v1335 = vsel %vm829, %v1334, %v1333
        %v1336 = vrot.slane %v1067, 1
        %v1337 = vsel %vm832, %v1336, %v1335
        %v1338 = vrot.slane %v1069, 7
        %v1339 = vsel %vm814, %v1338, %v1068
        %v1340 = vrot.slane %v1070, 6
        %v1341 = vsel %vm817, %v1340, %v1339
        %v1342 = vrot.slane %v1071, 5
        %v1343 = vsel %vm820, %v1342, %v1341
        %v1344 = vrot.slane %v1072, 4
        %v1345 = vsel %vm823, %v1344, %v1343
        %v1346 = vrot.slane %v1073, 3
        %v1347 = vsel %vm826, %v1346, %v1345
        %v1348 = vrot.slane %v1074, 2
        %v1349 = vsel %vm829, %v1348, %v1347
        %v1350 = vrot.slane %v1075, 1
        %v1351 = vsel %vm832, %v1350, %v1349
        %v1370 = vrot.slane %v1077, 7
        %v1371 = vsel %vm814, %v1370, %v1076
        %v1372 = vrot.slane %v1078, 6
        %v1373 = vsel %vm817, %v1372, %v1371
        %v1374 = vrot.slane %v1079, 5
        %v1375 = vsel %vm820, %v1374, %v1373
        %v1376 = vrot.slane %v1080, 4
        %v1377 = vsel %vm823, %v1376, %v1375
        %v1378 = vrot.slane %v1081, 3
        %v1379 = vsel %vm826, %v1378, %v1377
        %v1380 = vrot.slane %v1082, 2
        %v1381 = vsel %vm829, %v1380, %v1379
        %v1382 = vrot.slane %v1083, 1
        %v1383 = vsel %vm832, %v1382, %v1381
        %v1384 = vrot.slane %v1085, 7
        %v1385 = vsel %vm814, %v1384, %v1084
        %v1386 = vrot.slane %v1086, 6
        %v1387 = vsel %vm817, %v1386, %v1385
        %v1388 = vrot.slane %v1087, 5
        %v1389 = vsel %vm820, %v1388, %v1387
        %v1390 = vrot.slane %v1088, 4
        %v1391 = vsel %vm823, %v1390, %v1389
        %v1392 = vrot.slane %v1089, 3
        %v1393 = vsel %vm826, %v1392, %v1391
        %v1394 = vrot.slane %v1090, 2
        %v1395 = vsel %vm829, %v1394, %v1393
        %v1396 = vrot.slane %v1091, 1
        %v1397 = vsel %vm832, %v1396, %v1395
        %v1416 = vrot.slane %v1093, 7
        %v1417 = vsel %vm814, %v1416, %v1092
        %v1418 = vrot.slane %v1094, 6
        %v1419 = vsel %vm817, %v1418, %v1417
        %v1420 = vrot.slane %v1095, 5
        %v1421 = vsel %vm820, %v1420, %v1419
        %v1422 = vrot.slane %v1096, 4
        %v1423 = vsel %vm823, %v1422, %v1421
        %v1424 = vrot.slane %v1097, 3
        %v1425 = vsel %vm826, %v1424, %v1423
        %v1426 = vrot.slane %v1098, 2
        %v1427 = vsel %vm829, %v1426, %v1425
        %v1428 = vrot.slane %v1099, 1
        %v1429 = vsel %vm832, %v1428, %v1427
        %v1430 = vrot.slane %v1101, 7
        %v1431 = vsel %vm814, %v1430, %v1100
        %v1432 = vrot.slane %v1102, 6
        %v1433 = vsel %vm817, %v1432, %v1431
        %v1434 = vrot.slane %v1103, 5
        %v1435 = vsel %vm820, %v1434, %v1433
        %v1436 = vrot.slane %v1104, 4
        %v1437 = vsel %vm823, %v1436, %v1435
        %v1438 = vrot.slane %v1105, 3
        %v1439 = vsel %vm826, %v1438, %v1437
        %v1440 = vrot.slane %v1106, 2
        %v1441 = vsel %vm829, %v1440, %v1439
        %v1442 = vrot.slane %v1107, 1
        %v1443 = vsel %vm832, %v1442, %v1441
        %v1462 = vrot.slane %v1109, 7
        %v1463 = vsel %vm814, %v1462, %v1108
        %v1464 = vrot.slane %v1110, 6
        %v1465 = vsel %vm817, %v1464, %v1463
        %v1466 = vrot.slane %v1111, 5
        %v1467 = vsel %vm820, %v1466, %v1465
        %v1468 = vrot.slane %v1112, 4
        %v1469 = vsel %vm823, %v1468, %v1467
        %v1470 = vrot.slane %v1113, 3
        %v1471 = vsel %vm826, %v1470, %v1469
        %v1472 = vrot.slane %v1114, 2
        %v1473 = vsel %vm829, %v1472, %v1471
        %v1474 = vrot.slane %v1115, 1
        %v1475 = vsel %vm832, %v1474, %v1473
        %v1476 = vrot.slane %v1117, 7
        %v1477 = vsel %vm814, %v1476, %v1116
        %v1478 = vrot.slane %v1118, 6
        %v1479 = vsel %vm817, %v1478, %v1477
        %v1480 = vrot.slane %v1119, 5
        %v1481 = vsel %vm820, %v1480, %v1479
        %v1482 = vrot.slane %v1120, 4
        %v1483 = vsel %vm823, %v1482, %v1481
        %v1484 = vrot.slane %v1121, 3
        %v1485 = vsel %vm826, %v1484, %v1483
        %v1486 = vrot.slane %v1122, 2
        %v1487 = vsel %vm829, %v1486, %v1485
        %v1488 = vrot.slane %v1123, 1
        %v1489 = vsel %vm832, %v1488, %v1487
        %v1492 = vpack.c.bf16 %v856, %v833
        %v1493 = vpack.c.bf16 %v902, %v879
        %v1494 = vpack.c.bf16 %v948, %v925
        %v1495 = vpack.c.bf16 %v994, %v971
        %v1496 = vld [vmem:[#allocation8] sm:$0xff]
        %v1497 = vld [vmem:[#allocation8 + $0x8] sm:$0xf]
        %v1498 = vld [vmem:[#allocation8 + $0xc] sm:$0xff]
        %v1499 = vld [vmem:[#allocation8 + $0x14] sm:$0xf]
        %v1500 = vld [vmem:[#allocation8 + $0x18] sm:$0xff]
        %v1501 = vld [vmem:[#allocation8 + $0x20] sm:$0xf]
        %v1502 = vld [vmem:[#allocation8 + $0x24] sm:$0xff]
        %v1503 = vld [vmem:[#allocation8 + $0x2c] sm:$0xf]
        %v1504 = vld [vmem:[#allocation8 + $0x30] sm:$0xff]
        %v1505 = vld [vmem:[#allocation8 + $0x38] sm:$0xf]
        %v1506 = vld [vmem:[#allocation8 + $0x3c] sm:$0xff]
        %v1507 = vld [vmem:[#allocation8 + $0x44] sm:$0xf]
        %v1508 = vld [vmem:[#allocation8 + $0x48] sm:$0xff]
        %v1509 = vld [vmem:[#allocation8 + $0x50] sm:$0xf]
        %v1510 = vld [vmem:[#allocation8 + $0x54] sm:$0xff]
        %v1511 = vld [vmem:[#allocation8 + $0x5c] sm:$0xf]
        %v1512 = vld [vmem:[#allocation8 + $0x60] sm:$0xff]
        %v1513 = vld [vmem:[#allocation8 + $0x68] sm:$0xf]
        %v1514 = vld [vmem:[#allocation8 + $0x6c] sm:$0xff]
        %v1515 = vld [vmem:[#allocation8 + $0x74] sm:$0xf]
        %v1516 = vld [vmem:[#allocation8 + $0x78] sm:$0xff]
        %v1517 = vld [vmem:[#allocation8 + $0x80] sm:$0xf]
        %v1518 = vld [vmem:[#allocation8 + $0x84] sm:$0xff]
        %v1519 = vld [vmem:[#allocation8 + $0x8c] sm:$0xf]
        %v1520 = vld [vmem:[#allocation8 + $0x90] sm:$0xff]
        %v1521 = vld [vmem:[#allocation8 + $0x98] sm:$0xf]
        %v1522 = vld [vmem:[#allocation8 + $0x9c] sm:$0xff]
        %v1523 = vld [vmem:[#allocation8 + $0xa4] sm:$0xf]
        %v1524 = vld [vmem:[#allocation8 + $0xa8] sm:$0xff]
        %v1525 = vld [vmem:[#allocation8 + $0xb0] sm:$0xf]
        %v1526 = vld [vmem:[#allocation8 + $0xb4] sm:$0xff]
        %v1527 = vld [vmem:[#allocation8 + $0xbc] sm:$0xf]
        %v1528 = vld [vmem:[%s3] sm:$0x7]
        %v1530 = vperm.slane %v1528, 0
        %v1531 = vperm.slane %v1528, 1
        %v1532 = vperm.slane %v1528, 2
        %v1568 = vunpack.c.l.b16 %v1496
        %v1569 = vunpack.c.h.b16 %v1496
        %v1570 = vunpack.c.l.b16 %v1497
        %v1571 = vunpack.c.l.b16 %v1498
        %v1572 = vunpack.c.h.b16 %v1498
        %v1573 = vunpack.c.l.b16 %v1499
        %v1574 = vunpack.c.l.b16 %v1500
        %v1575 = vunpack.c.h.b16 %v1500
        %v1576 = vunpack.c.l.b16 %v1501
        %v1577 = vunpack.c.l.b16 %v1502
        %v1578 = vunpack.c.h.b16 %v1502
        %v1579 = vunpack.c.l.b16 %v1503
        %v1580 = vunpack.c.l.b16 %v1504
        %v1581 = vunpack.c.h.b16 %v1504
        %v1582 = vunpack.c.l.b16 %v1505
        %v1583 = vunpack.c.l.b16 %v1506
        %v1584 = vunpack.c.h.b16 %v1506
        %v1585 = vunpack.c.l.b16 %v1507
        %v1586 = vunpack.c.l.b16 %v1508
        %v1587 = vunpack.c.h.b16 %v1508
        %v1588 = vunpack.c.l.b16 %v1509
        %v1589 = vunpack.c.l.b16 %v1510
        %v1590 = vunpack.c.h.b16 %v1510
        %v1591 = vunpack.c.l.b16 %v1511
        %v1592 = vunpack.c.l.b16 %v1512
        %v1593 = vunpack.c.h.b16 %v1512
        %v1594 = vunpack.c.l.b16 %v1513
        %v1595 = vunpack.c.l.b16 %v1514
        %v1596 = vunpack.c.h.b16 %v1514
        %v1597 = vunpack.c.l.b16 %v1515
        %v1598 = vunpack.c.l.b16 %v1516
        %v1599 = vunpack.c.h.b16 %v1516
        %v1600 = vunpack.c.l.b16 %v1517
        %v1601 = vunpack.c.l.b16 %v1518
        %v1602 = vunpack.c.h.b16 %v1518
        %v1603 = vunpack.c.l.b16 %v1519
        %v1604 = vunpack.c.l.b16 %v1520
        %v1605 = vunpack.c.h.b16 %v1520
        %v1606 = vunpack.c.l.b16 %v1521
        %v1607 = vunpack.c.l.b16 %v1522
        %v1608 = vunpack.c.h.b16 %v1522
        %v1609 = vunpack.c.l.b16 %v1523
        %v1610 = vunpack.c.l.b16 %v1524
        %v1611 = vunpack.c.h.b16 %v1524
        %v1612 = vunpack.c.l.b16 %v1525
        %v1613 = vunpack.c.l.b16 %v1526
        %v1614 = vunpack.c.h.b16 %v1526
        %v1615 = vunpack.c.l.b16 %v1527
        %v1616 = vpack.c.b16 %v1571, %v1568
        %v1617 = vpack.c.b16 %v1572, %v1569
        %v1618 = vpack.c.b16 %v1573, %v1570
        %v1619 = vpack.c.b16 %v1577, %v1574
        %v1620 = vpack.c.b16 %v1578, %v1575
        %v1621 = vpack.c.b16 %v1579, %v1576
        %v1622 = vpack.c.b16 %v1583, %v1580
        %v1623 = vpack.c.b16 %v1584, %v1581
        %v1624 = vpack.c.b16 %v1585, %v1582
        %v1625 = vpack.c.b16 %v1589, %v1586
        %v1626 = vpack.c.b16 %v1590, %v1587
        %v1627 = vpack.c.b16 %v1591, %v1588
        %v1628 = vpack.c.b16 %v1595, %v1592
        %v1629 = vpack.c.b16 %v1596, %v1593
        %v1630 = vpack.c.b16 %v1597, %v1594
        %v1631 = vpack.c.b16 %v1601, %v1598
        %v1632 = vpack.c.b16 %v1602, %v1599
        %v1633 = vpack.c.b16 %v1603, %v1600
        %v1634 = vpack.c.b16 %v1607, %v1604
        %v1635 = vpack.c.b16 %v1608, %v1605
        %v1636 = vpack.c.b16 %v1609, %v1606
        %v1637 = vpack.c.b16 %v1613, %v1610
        %v1638 = vpack.c.b16 %v1614, %v1611
        %v1639 = vpack.c.b16 %v1615, %v1612
        %1664 = vmatpush.bf16.msra.mxu0 %v1637
        %1665 = vmatpush.bf16.msra.mxu0 %v1634
        %1666 = vmatpush.bf16.msra.mxu0 %v1631
        %1667 = vmatpush.bf16.msra.mxu0 %v1628
        %1668 = vmatpush.bf16.msra.mxu0 %v1625
        %1669 = vmatpush.bf16.msra.mxu0 %v1622
        %1670 = vmatpush.bf16.msra.mxu0 %v1619
        %1671 = vmatpush.bf16.msra.mxu0 %v1616
        %1672 = vmatmul.bf16.gmra.mxu0 %v1492
        %v1673 = vpop.f32.mrf.mxu0
        %v1674 = vadd.f32 %v1530, %v1673
        %v1675 = vpop.f32.mrf.mxu0
        %v1676 = vadd.f32 %v1530, %v1675
        %1677 = vmatmul.bf16.gmra.mxu0 %v1493
        %v1678 = vpop.f32.mrf.mxu0
        %v1679 = vadd.f32 %v1530, %v1678
        %v1680 = vpop.f32.mrf.mxu0
        %v1681 = vadd.f32 %v1530, %v1680
        %1682 = vmatmul.bf16.gmra.mxu0 %v1494
        %v1683 = vpop.f32.mrf.mxu0
        %v1684 = vadd.f32 %v1530, %v1683
        %v1685 = vpop.f32.mrf.mxu0
        %v1686 = vadd.f32 %v1530, %v1685
        %1687 = vmatmul.bf16.gmra.mxu0 %v1495
        %v1688 = vpop.f32.mrf.mxu0
        %v1689 = vadd.f32 %v1530, %v1688
        %v1690 = vpop.f32.mrf.mxu0
        %v1691 = vadd.f32 %v1530, %v1690
        %1692 = vdwg.mxu0
        %1693 = vmatpush.bf16.msra.mxu0 %v1638
        %1694 = vmatpush.bf16.msra.mxu0 %v1635
        %1695 = vmatpush.bf16.msra.mxu0 %v1632
        %1696 = vmatpush.bf16.msra.mxu0 %v1629
        %1697 = vmatpush.bf16.msra.mxu0 %v1626
        %1698 = vmatpush.bf16.msra.mxu0 %v1623
        %1699 = vmatpush.bf16.msra.mxu0 %v1620
        %1700 = vmatpush.bf16.msra.mxu0 %v1617
        %1701 = vmatmul.bf16.gmra.mxu0 %v1492
        %v1702 = vpop.f32.mrf.mxu0
        %v1703 = vadd.f32 %v1531, %v1702
        %v1704 = vpop.f32.mrf.mxu0
        %v1705 = vadd.f32 %v1531, %v1704
        %1706 = vmatmul.bf16.gmra.mxu0 %v1493
        %v1707 = vpop.f32.mrf.mxu0
        %v1708 = vadd.f32 %v1531, %v1707
        %v1709 = vpop.f32.mrf.mxu0
        %v1710 = vadd.f32 %v1531, %v1709
        %1711 = vmatmul.bf16.gmra.mxu0 %v1494
        %v1712 = vpop.f32.mrf.mxu0
        %v1713 = vadd.f32 %v1531, %v1712
        %v1714 = vpop.f32.mrf.mxu0
        %v1715 = vadd.f32 %v1531, %v1714
        %1716 = vmatmul.bf16.gmra.mxu0 %v1495
        %v1717 = vpop.f32.mrf.mxu0
        %v1718 = vadd.f32 %v1531, %v1717
        %v1719 = vpop.f32.mrf.mxu0
        %v1720 = vadd.f32 %v1531, %v1719
        %1721 = vdwg.mxu0
        %1722 = vmatpush.bf16.msra.mxu0 %v1639
        %1723 = vmatpush.bf16.msra.mxu0 %v1636
        %1724 = vmatpush.bf16.msra.mxu0 %v1633
        %1725 = vmatpush.bf16.msra.mxu0 %v1630
        %1726 = vmatpush.bf16.msra.mxu0 %v1627
        %1727 = vmatpush.bf16.msra.mxu0 %v1624
        %1728 = vmatpush.bf16.msra.mxu0 %v1621
        %1729 = vmatpush.bf16.msra.mxu0 %v1618
        %1730 = vmatmul.bf16.gmra.mxu0 %v1492
        %v1731 = vpop.f32.mrf.mxu0
        %v1732 = vadd.f32 %v1532, %v1731
        %v1733 = vpop.f32.mrf.mxu0
        %v1734 = vadd.f32 %v1532, %v1733
        %1735 = vmatmul.bf16.gmra.mxu0 %v1493
        %v1736 = vpop.f32.mrf.mxu0
        %v1737 = vadd.f32 %v1532, %v1736
        %v1738 = vpop.f32.mrf.mxu0
        %v1739 = vadd.f32 %v1532, %v1738
        %1740 = vmatmul.bf16.gmra.mxu0 %v1494
        %v1741 = vpop.f32.mrf.mxu0
        %v1742 = vadd.f32 %v1532, %v1741
        %v1743 = vpop.f32.mrf.mxu0
        %v1744 = vadd.f32 %v1532, %v1743
        %1745 = vmatmul.bf16.gmra.mxu0 %v1495
        %v1746 = vpop.f32.mrf.mxu0
        %v1747 = vadd.f32 %v1532, %v1746
        %v1748 = vpop.f32.mrf.mxu0
        %v1749 = vadd.f32 %v1532, %v1748
        %1750 = vdwg.mxu0
        %v1751 = vpack.c.bf16 %v1674, %v1674
        %v1752 = vpack.c.bf16 %v1676, %v1676
        %v1753 = vpack.c.bf16 %v1679, %v1679
        %v1754 = vpack.c.bf16 %v1681, %v1681
        %v1755 = vpack.c.bf16 %v1684, %v1684
        %v1756 = vpack.c.bf16 %v1686, %v1686
        %v1757 = vpack.c.bf16 %v1689, %v1689
        %v1758 = vpack.c.bf16 %v1691, %v1691
        %v1759 = vpack.c.bf16 %v1703, %v1703
        %v1760 = vpack.c.bf16 %v1705, %v1705
        %v1761 = vpack.c.bf16 %v1708, %v1708
        %v1762 = vpack.c.bf16 %v1710, %v1710
        %v1763 = vpack.c.bf16 %v1713, %v1713
        %v1764 = vpack.c.bf16 %v1715, %v1715
        %v1765 = vpack.c.bf16 %v1718, %v1718
        %v1766 = vpack.c.bf16 %v1720, %v1720
        %v1767 = vpack.c.bf16 %v1732, %v1732
        %v1768 = vpack.c.bf16 %v1734, %v1734
        %v1769 = vpack.c.bf16 %v1737, %v1737
        %v1770 = vpack.c.bf16 %v1739, %v1739
        %v1771 = vpack.c.bf16 %v1742, %v1742
        %v1772 = vpack.c.bf16 %v1744, %v1744
        %v1773 = vpack.c.bf16 %v1747, %v1747
        %v1774 = vpack.c.bf16 %v1749, %v1749
        %vm1775 = vcmask 261120
        %v1777 = vsel %vm1775, %v1751, 0
        %v1780 = vsel %vm1775, %v1759, 0
        %1782 = vmatpush.bf16.xpose.msra.mxu0 0
        %1783 = vmatpush.bf16.xpose.msra.mxu0 0
        %1784 = vmatpush.bf16.xpose.msra.mxu0 0
        %1785 = vmatpush.bf16.xpose.msra.mxu0 0
        %1786 = vmatpush.bf16.xpose.msra.mxu0 0
        %1787 = vmatpush.bf16.xpose.msra.mxu0 0
        %1788 = vmatpush.bf16.xpose.msra.mxu0 0
        %1789 = vmatpush.bf16.xpose.msra.mxu0 %v1780
        %1790 = vmatmul.bf16.gmra.mxu0 %v1777
        %v1791 = vpop.f32.mrf.mxu0
        %v1792 = vadd.f32 0.0, %v1791
        %v1793 = vpop.f32.mrf.mxu0
        %1794 = vdwg.mxu0
        %v1796 = vsel %vm1775, %v1752, 0
        %v1799 = vsel %vm1775, %v1760, 0
        %1801 = vmatpush.bf16.xpose.msra.mxu0 0
        %1802 = vmatpush.bf16.xpose.msra.mxu0 0
        %1803 = vmatpush.bf16.xpose.msra.mxu0 0
        %1804 = vmatpush.bf16.xpose.msra.mxu0 0
        %1805 = vmatpush.bf16.xpose.msra.mxu0 0
        %1806 = vmatpush.bf16.xpose.msra.mxu0 0
        %1807 = vmatpush.bf16.xpose.msra.mxu0 0
        %1808 = vmatpush.bf16.xpose.msra.mxu0 %v1799
        %1809 = vmatmul.bf16.gmra.mxu0 %v1796
        %v1810 = vpop.f32.mrf.mxu0
        %v1811 = vadd.f32 0.0, %v1810
        %v1812 = vpop.f32.mrf.mxu0
        %1813 = vdwg.mxu0
        %v1815 = vsel %vm1775, %v1753, 0
        %v1818 = vsel %vm1775, %v1761, 0
        %1820 = vmatpush.bf16.xpose.msra.mxu0 0
        %1821 = vmatpush.bf16.xpose.msra.mxu0 0
        %1822 = vmatpush.bf16.xpose.msra.mxu0 0
        %1823 = vmatpush.bf16.xpose.msra.mxu0 0
        %1824 = vmatpush.bf16.xpose.msra.mxu0 0
        %1825 = vmatpush.bf16.xpose.msra.mxu0 0
        %1826 = vmatpush.bf16.xpose.msra.mxu0 0
        %1827 = vmatpush.bf16.xpose.msra.mxu0 %v1818
        %1828 = vmatmul.bf16.gmra.mxu0 %v1815
        %v1829 = vpop.f32.mrf.mxu0
        %v1830 = vadd.f32 0.0, %v1829
        %v1831 = vpop.f32.mrf.mxu0
        %1832 = vdwg.mxu0
        %v1834 = vsel %vm1775, %v1754, 0
        %v1837 = vsel %vm1775, %v1762, 0
        %1839 = vmatpush.bf16.xpose.msra.mxu0 0
        %1840 = vmatpush.bf16.xpose.msra.mxu0 0
        %1841 = vmatpush.bf16.xpose.msra.mxu0 0
        %1842 = vmatpush.bf16.xpose.msra.mxu0 0
        %1843 = vmatpush.bf16.xpose.msra.mxu0 0
        %1844 = vmatpush.bf16.xpose.msra.mxu0 0
        %1845 = vmatpush.bf16.xpose.msra.mxu0 0
        %1846 = vmatpush.bf16.xpose.msra.mxu0 %v1837
        %1847 = vmatmul.bf16.gmra.mxu0 %v1834
        %v1848 = vpop.f32.mrf.mxu0
        %v1849 = vadd.f32 0.0, %v1848
        %v1850 = vpop.f32.mrf.mxu0
        %1851 = vdwg.mxu0
        %v1853 = vsel %vm1775, %v1755, 0
        %v1856 = vsel %vm1775, %v1763, 0
        %1858 = vmatpush.bf16.xpose.msra.mxu0 0
        %1859 = vmatpush.bf16.xpose.msra.mxu0 0
        %1860 = vmatpush.bf16.xpose.msra.mxu0 0
        %1861 = vmatpush.bf16.xpose.msra.mxu0 0
        %1862 = vmatpush.bf16.xpose.msra.mxu0 0
        %1863 = vmatpush.bf16.xpose.msra.mxu0 0
        %1864 = vmatpush.bf16.xpose.msra.mxu0 0
        %1865 = vmatpush.bf16.xpose.msra.mxu0 %v1856
        %1866 = vmatmul.bf16.gmra.mxu0 %v1853
        %v1867 = vpop.f32.mrf.mxu0
        %v1868 = vadd.f32 0.0, %v1867
        %v1869 = vpop.f32.mrf.mxu0
        %1870 = vdwg.mxu0
        %v1872 = vsel %vm1775, %v1756, 0
        %v1875 = vsel %vm1775, %v1764, 0
        %1877 = vmatpush.bf16.xpose.msra.mxu0 0
        %1878 = vmatpush.bf16.xpose.msra.mxu0 0
        %1879 = vmatpush.bf16.xpose.msra.mxu0 0
        %1880 = vmatpush.bf16.xpose.msra.mxu0 0
        %1881 = vmatpush.bf16.xpose.msra.mxu0 0
        %1882 = vmatpush.bf16.xpose.msra.mxu0 0
        %1883 = vmatpush.bf16.xpose.msra.mxu0 0
        %1884 = vmatpush.bf16.xpose.msra.mxu0 %v1875
        %1885 = vmatmul.bf16.gmra.mxu0 %v1872
        %v1886 = vpop.f32.mrf.mxu0
        %v1887 = vadd.f32 0.0, %v1886
        %v1888 = vpop.f32.mrf.mxu0
        %1889 = vdwg.mxu0
        %v1891 = vsel %vm1775, %v1757, 0
        %v1894 = vsel %vm1775, %v1765, 0
        %1896 = vmatpush.bf16.xpose.msra.mxu0 0
        %1897 = vmatpush.bf16.xpose.msra.mxu0 0
        %1898 = vmatpush.bf16.xpose.msra.mxu0 0
        %1899 = vmatpush.bf16.xpose.msra.mxu0 0
        %1900 = vmatpush.bf16.xpose.msra.mxu0 0
        %1901 = vmatpush.bf16.xpose.msra.mxu0 0
        %1902 = vmatpush.bf16.xpose.msra.mxu0 0
        %1903 = vmatpush.bf16.xpose.msra.mxu0 %v1894
        %1904 = vmatmul.bf16.gmra.mxu0 %v1891
        %v1905 = vpop.f32.mrf.mxu0
        %v1906 = vadd.f32 0.0, %v1905
        %v1907 = vpop.f32.mrf.mxu0
        %1908 = vdwg.mxu0
        %v1910 = vsel %vm1775, %v1758, 0
        %v1913 = vsel %vm1775, %v1766, 0
        %1915 = vmatpush.bf16.xpose.msra.mxu0 0
        %1916 = vmatpush.bf16.xpose.msra.mxu0 0
        %1917 = vmatpush.bf16.xpose.msra.mxu0 0
        %1918 = vmatpush.bf16.xpose.msra.mxu0 0
        %1919 = vmatpush.bf16.xpose.msra.mxu0 0
        %1920 = vmatpush.bf16.xpose.msra.mxu0 0
        %1921 = vmatpush.bf16.xpose.msra.mxu0 0
        %1922 = vmatpush.bf16.xpose.msra.mxu0 %v1913
        %1923 = vmatmul.bf16.gmra.mxu0 %v1910
        %v1924 = vpop.f32.mrf.mxu0
        %v1925 = vadd.f32 0.0, %v1924
        %v1926 = vpop.f32.mrf.mxu0
        %1927 = vdwg.mxu0
        %vm1928 = vcmask 64512
        %v1929 = vsel %vm1928, %v1792, -inf
        %1930 = vmax.xlane.f32.xlu0 %v1929
        %v1931 = vpop.xlane.xlu0 %1930
        %v1932 = vsel %vm1928, %v1811, -inf
        %1933 = vmax.xlane.f32.xlu0 %v1932
        %v1934 = vpop.xlane.xlu0 %1933
        %v1935 = vsel %vm1928, %v1830, -inf
        %1936 = vmax.xlane.f32.xlu0 %v1935
        %v1937 = vpop.xlane.xlu0 %1936
        %v1938 = vsel %vm1928, %v1849, -inf
        %1939 = vmax.xlane.f32.xlu0 %v1938
        %v1940 = vpop.xlane.xlu0 %1939
        %v1941 = vsel %vm1928, %v1868, -inf
        %1942 = vmax.xlane.f32.xlu0 %v1941
        %v1943 = vpop.xlane.xlu0 %1942
        %v1944 = vsel %vm1928, %v1887, -inf
        %1945 = vmax.xlane.f32.xlu0 %v1944
        %v1946 = vpop.xlane.xlu0 %1945
        %v1947 = vsel %vm1928, %v1906, -inf
        %1948 = vmax.xlane.f32.xlu0 %v1947
        %v1949 = vpop.xlane.xlu0 %1948
        %v1950 = vsel %vm1928, %v1925, -inf
        %1951 = vmax.xlane.f32.xlu0 %v1950
        %v1952 = vpop.xlane.xlu0 %1951
        %v1953 = vsub.f32 %v1792, %v1931
        %v1954 = vsub.f32 %v1811, %v1934
        %v1955 = vsub.f32 %v1830, %v1937
        %v1956 = vsub.f32 %v1849, %v1940
        %v1957 = vsub.f32 %v1868, %v1943
        %v1958 = vsub.f32 %v1887, %v1946
        %v1959 = vsub.f32 %v1906, %v1949
        %v1960 = vsub.f32 %v1925, %v1952
        %v1961 = vmul.f32 %v1953, 1.442695
        %v1962 = vpow.pop %v1961
        %v1963 = vmul.f32 %v1954, 1.442695
        %v1964 = vpow.pop %v1963
        %v1965 = vmul.f32 %v1955, 1.442695
        %v1966 = vpow.pop %v1965
        %v1967 = vmul.f32 %v1956, 1.442695
        %v1968 = vpow.pop %v1967
        %v1969 = vmul.f32 %v1957, 1.442695
        %v1970 = vpow.pop %v1969
        %v1971 = vmul.f32 %v1958, 1.442695
        %v1972 = vpow.pop %v1971
        %v1973 = vmul.f32 %v1959, 1.442695
        %v1974 = vpow.pop %v1973
        %v1975 = vmul.f32 %v1960, 1.442695
        %v1976 = vpow.pop %v1975
        %v1977 = vsel %vm1928, %v1962, 0.0
        %1978 = vadd.xlane.f32.xlu0 %v1977
        %v1979 = vpop.xlane.xlu0 %1978
        %v1980 = vsel %vm1928, %v1964, 0.0
        %1981 = vadd.xlane.f32.xlu0 %v1980
        %v1982 = vpop.xlane.xlu0 %1981
        %v1983 = vsel %vm1928, %v1966, 0.0
        %1984 = vadd.xlane.f32.xlu0 %v1983
        %v1985 = vpop.xlane.xlu0 %1984
        %v1986 = vsel %vm1928, %v1968, 0.0
        %1987 = vadd.xlane.f32.xlu0 %v1986
        %v1988 = vpop.xlane.xlu0 %1987
        %v1989 = vsel %vm1928, %v1970, 0.0
        %1990 = vadd.xlane.f32.xlu0 %v1989
        %v1991 = vpop.xlane.xlu0 %1990
        %v1992 = vsel %vm1928, %v1972, 0.0
        %1993 = vadd.xlane.f32.xlu0 %v1992
        %v1994 = vpop.xlane.xlu0 %1993
        %v1995 = vsel %vm1928, %v1974, 0.0
        %1996 = vadd.xlane.f32.xlu0 %v1995
        %v1997 = vpop.xlane.xlu0 %1996
        %v1998 = vsel %vm1928, %v1976, 0.0
        %1999 = vadd.xlane.f32.xlu0 %v1998
        %v2000 = vpop.xlane.xlu0 %1999
        %v2001 = vrcp.pop %v1979
        %v2002 = vrcp.pop %v1982
        %v2003 = vrcp.pop %v1985
        %v2004 = vrcp.pop %v1988
        %v2005 = vrcp.pop %v1991
        %v2006 = vrcp.pop %v1994
        %v2007 = vrcp.pop %v1997
        %v2008 = vrcp.pop %v2000
        %v2009 = vmul.f32 %v1962, %v2001
        %v2010 = vmul.f32 %v1964, %v2002
        %v2011 = vmul.f32 %v1966, %v2003
        %v2012 = vmul.f32 %v1968, %v2004
        %v2013 = vmul.f32 %v1970, %v2005
        %v2014 = vmul.f32 %v1972, %v2006
        %v2015 = vmul.f32 %v1974, %v2007
        %v2016 = vmul.f32 %v1976, %v2008
        %v2017 = vpack.c.bf16 %v2009, %v2009
        %v2018 = vpack.c.bf16 %v2010, %v2010
        %v2019 = vpack.c.bf16 %v2011, %v2011
        %v2020 = vpack.c.bf16 %v2012, %v2012
        %v2021 = vpack.c.bf16 %v2013, %v2013
        %v2022 = vpack.c.bf16 %v2014, %v2014
        %v2023 = vpack.c.bf16 %v2015, %v2015
        %v2024 = vpack.c.bf16 %v2016, %v2016
        %v2026 = vsel %vm1928, %v2017, 0
        %vm2028 = vcmask 1043456
        %v2030 = vsel %vm2028, %v1767, 0
        %2032 = vmatpush.bf16.msra.mxu0 0
        %2033 = vmatpush.bf16.msra.mxu0 0
        %2034 = vmatpush.bf16.msra.mxu0 0
        %2035 = vmatpush.bf16.msra.mxu0 0
        %2036 = vmatpush.bf16.msra.mxu0 0
        %2037 = vmatpush.bf16.msra.mxu0 0
        %2038 = vmatpush.bf16.msra.mxu0 0
        %2039 = vmatpush.bf16.msra.mxu0 %v2030
        %2040 = vmatmul.bf16.gmra.mxu0 %v2026
        %v2041 = vpop.f32.mrf.mxu0
        %v2042 = vadd.f32 0.0, %v2041
        %v2043 = vpop.f32.mrf.mxu0
        %2044 = vdwg.mxu0
        %v2046 = vsel %vm1928, %v2018, 0
        %v2049 = vsel %vm2028, %v1768, 0
        %2051 = vmatpush.bf16.msra.mxu0 0
        %2052 = vmatpush.bf16.msra.mxu0 0
        %2053 = vmatpush.bf16.msra.mxu0 0
        %2054 = vmatpush.bf16.msra.mxu0 0
        %2055 = vmatpush.bf16.msra.mxu0 0
        %2056 = vmatpush.bf16.msra.mxu0 0
        %2057 = vmatpush.bf16.msra.mxu0 0
        %2058 = vmatpush.bf16.msra.mxu0 %v2049
        %2059 = vmatmul.bf16.gmra.mxu0 %v2046
        %v2060 = vpop.f32.mrf.mxu0
        %v2061 = vadd.f32 0.0, %v2060
        %v2062 = vpop.f32.mrf.mxu0
        %2063 = vdwg.mxu0
        %v2065 = vsel %vm1928, %v2019, 0
        %v2068 = vsel %vm2028, %v1769, 0
        %2070 = vmatpush.bf16.msra.mxu0 0
        %2071 = vmatpush.bf16.msra.mxu0 0
        %2072 = vmatpush.bf16.msra.mxu0 0
        %2073 = vmatpush.bf16.msra.mxu0 0
        %2074 = vmatpush.bf16.msra.mxu0 0
        %2075 = vmatpush.bf16.msra.mxu0 0
        %2076 = vmatpush.bf16.msra.mxu0 0
        %2077 = vmatpush.bf16.msra.mxu0 %v2068
        %2078 = vmatmul.bf16.gmra.mxu0 %v2065
        %v2079 = vpop.f32.mrf.mxu0
        %v2080 = vadd.f32 0.0, %v2079
        %v2081 = vpop.f32.mrf.mxu0
        %2082 = vdwg.mxu0
        %v2084 = vsel %vm1928, %v2020, 0
        %v2087 = vsel %vm2028, %v1770, 0
        %2089 = vmatpush.bf16.msra.mxu0 0
        %2090 = vmatpush.bf16.msra.mxu0 0
        %2091 = vmatpush.bf16.msra.mxu0 0
        %2092 = vmatpush.bf16.msra.mxu0 0
        %2093 = vmatpush.bf16.msra.mxu0 0
        %2094 = vmatpush.bf16.msra.mxu0 0
        %2095 = vmatpush.bf16.msra.mxu0 0
        %2096 = vmatpush.bf16.msra.mxu0 %v2087
        %2097 = vmatmul.bf16.gmra.mxu0 %v2084
        %v2098 = vpop.f32.mrf.mxu0
        %v2099 = vadd.f32 0.0, %v2098
        %v2100 = vpop.f32.mrf.mxu0
        %2101 = vdwg.mxu0
        %v2103 = vsel %vm1928, %v2021, 0
        %v2106 = vsel %vm2028, %v1771, 0
        %2108 = vmatpush.bf16.msra.mxu0 0
        %2109 = vmatpush.bf16.msra.mxu0 0
        %2110 = vmatpush.bf16.msra.mxu0 0
        %2111 = vmatpush.bf16.msra.mxu0 0
        %2112 = vmatpush.bf16.msra.mxu0 0
        %2113 = vmatpush.bf16.msra.mxu0 0
        %2114 = vmatpush.bf16.msra.mxu0 0
        %2115 = vmatpush.bf16.msra.mxu0 %v2106
        %2116 = vmatmul.bf16.gmra.mxu0 %v2103
        %v2117 = vpop.f32.mrf.mxu0
        %v2118 = vadd.f32 0.0, %v2117
        %v2119 = vpop.f32.mrf.mxu0
        %2120 = vdwg.mxu0
        %v2122 = vsel %vm1928, %v2022, 0
        %v2125 = vsel %vm2028, %v1772, 0
        %2127 = vmatpush.bf16.msra.mxu0 0
        %2128 = vmatpush.bf16.msra.mxu0 0
        %2129 = vmatpush.bf16.msra.mxu0 0
        %2130 = vmatpush.bf16.msra.mxu0 0
        %2131 = vmatpush.bf16.msra.mxu0 0
        %2132 = vmatpush.bf16.msra.mxu0 0
        %2133 = vmatpush.bf16.msra.mxu0 0
        %2134 = vmatpush.bf16.msra.mxu0 %v2125
        %2135 = vmatmul.bf16.gmra.mxu0 %v2122
        %v2136 = vpop.f32.mrf.mxu0
        %v2137 = vadd.f32 0.0, %v2136
        %v2138 = vpop.f32.mrf.mxu0
        %2139 = vdwg.mxu0
        %v2141 = vsel %vm1928, %v2023, 0
        %v2144 = vsel %vm2028, %v1773, 0
        %2146 = vmatpush.bf16.msra.mxu0 0
        %2147 = vmatpush.bf16.msra.mxu0 0
        %2148 = vmatpush.bf16.msra.mxu0 0
        %2149 = vmatpush.bf16.msra.mxu0 0
        %2150 = vmatpush.bf16.msra.mxu0 0
        %2151 = vmatpush.bf16.msra.mxu0 0
        %2152 = vmatpush.bf16.msra.mxu0 0
        %2153 = vmatpush.bf16.msra.mxu0 %v2144
        %2154 = vmatmul.bf16.gmra.mxu0 %v2141
        %v2155 = vpop.f32.mrf.mxu0
        %v2156 = vadd.f32 0.0, %v2155
        %v2157 = vpop.f32.mrf.mxu0
        %2158 = vdwg.mxu0
        %v2160 = vsel %vm1928, %v2024, 0
        %v2163 = vsel %vm2028, %v1774, 0
        %2165 = vmatpush.bf16.msra.mxu0 0
        %2166 = vmatpush.bf16.msra.mxu0 0
        %2167 = vmatpush.bf16.msra.mxu0 0
        %2168 = vmatpush.bf16.msra.mxu0 0
        %2169 = vmatpush.bf16.msra.mxu0 0
        %2170 = vmatpush.bf16.msra.mxu0 0
        %2171 = vmatpush.bf16.msra.mxu0 0
        %2172 = vmatpush.bf16.msra.mxu0 %v2163
        %2173 = vmatmul.bf16.gmra.mxu0 %v2160
        %v2174 = vpop.f32.mrf.mxu0
        %v2175 = vadd.f32 0.0, %v2174
        %v2176 = vpop.f32.mrf.mxu0
        %2177 = vdwg.mxu0
        %v2178 = vpack.c.bf16 %v2042, %v2042
        %v2179 = vpack.c.bf16 %v2061, %v2061
        %v2180 = vpack.c.bf16 %v2080, %v2080
        %v2181 = vpack.c.bf16 %v2099, %v2099
        %v2182 = vpack.c.bf16 %v2118, %v2118
        %v2183 = vpack.c.bf16 %v2137, %v2137
        %v2184 = vpack.c.bf16 %v2156, %v2156
        %v2185 = vpack.c.bf16 %v2175, %v2175
        %v2187 = vunpack.c.l.b16 %v1751
        %v2188 = vpack.c.b16 %v2187, %v2187
        %2189 = vrot.lane.b32.xlu0 %v2188, 96
        %v2190 = vpop.permute.xlu0 %2189
        %v2192 = vunpack.c.l.b16 %v1759
        %v2193 = vpack.c.b16 %v2192, %v2192
        %2194 = vrot.lane.b32.xlu0 %v2193, 96
        %v2195 = vpop.permute.xlu0 %2194
        %v2197 = vsel %vm1775, %v2190, 0
        %v2200 = vsel %vm1775, %v2195, 0
        %2202 = vmatpush.bf16.xpose.msra.mxu0 0
        %2203 = vmatpush.bf16.xpose.msra.mxu0 0
        %2204 = vmatpush.bf16.xpose.msra.mxu0 0
        %2205 = vmatpush.bf16.xpose.msra.mxu0 0
        %2206 = vmatpush.bf16.xpose.msra.mxu0 0
        %2207 = vmatpush.bf16.xpose.msra.mxu0 0
        %2208 = vmatpush.bf16.xpose.msra.mxu0 0
        %2209 = vmatpush.bf16.xpose.msra.mxu0 %v2200
        %2210 = vmatmul.bf16.gmra.mxu0 %v2197
        %v2211 = vpop.f32.mrf.mxu0
        %v2212 = vadd.f32 0.0, %v2211
        %v2213 = vpop.f32.mrf.mxu0
        %2214 = vdwg.mxu0
        %v2216 = vunpack.c.l.b16 %v1752
        %v2217 = vpack.c.b16 %v2216, %v2216
        %2218 = vrot.lane.b32.xlu0 %v2217, 96
        %v2219 = vpop.permute.xlu0 %2218
        %v2221 = vunpack.c.l.b16 %v1760
        %v2222 = vpack.c.b16 %v2221, %v2221
        %2223 = vrot.lane.b32.xlu0 %v2222, 96
        %v2224 = vpop.permute.xlu0 %2223
        %v2226 = vsel %vm1775, %v2219, 0
        %v2229 = vsel %vm1775, %v2224, 0
        %2231 = vmatpush.bf16.xpose.msra.mxu0 0
        %2232 = vmatpush.bf16.xpose.msra.mxu0 0
        %2233 = vmatpush.bf16.xpose.msra.mxu0 0
        %2234 = vmatpush.bf16.xpose.msra.mxu0 0
        %2235 = vmatpush.bf16.xpose.msra.mxu0 0
        %2236 = vmatpush.bf16.xpose.msra.mxu0 0
        %2237 = vmatpush.bf16.xpose.msra.mxu0 0
        %2238 = vmatpush.bf16.xpose.msra.mxu0 %v2229
        %2239 = vmatmul.bf16.gmra.mxu0 %v2226
        %v2240 = vpop.f32.mrf.mxu0
        %v2241 = vadd.f32 0.0, %v2240
        %v2242 = vpop.f32.mrf.mxu0
        %2243 = vdwg.mxu0
        %v2245 = vunpack.c.l.b16 %v1753
        %v2246 = vpack.c.b16 %v2245, %v2245
        %2247 = vrot.lane.b32.xlu0 %v2246, 96
        %v2248 = vpop.permute.xlu0 %2247
        %v2250 = vunpack.c.l.b16 %v1761
        %v2251 = vpack.c.b16 %v2250, %v2250
        %2252 = vrot.lane.b32.xlu0 %v2251, 96
        %v2253 = vpop.permute.xlu0 %2252
        %v2255 = vsel %vm1775, %v2248, 0
        %v2258 = vsel %vm1775, %v2253, 0
        %2260 = vmatpush.bf16.xpose.msra.mxu0 0
        %2261 = vmatpush.bf16.xpose.msra.mxu0 0
        %2262 = vmatpush.bf16.xpose.msra.mxu0 0
        %2263 = vmatpush.bf16.xpose.msra.mxu0 0
        %2264 = vmatpush.bf16.xpose.msra.mxu0 0
        %2265 = vmatpush.bf16.xpose.msra.mxu0 0
        %2266 = vmatpush.bf16.xpose.msra.mxu0 0
        %2267 = vmatpush.bf16.xpose.msra.mxu0 %v2258
        %2268 = vmatmul.bf16.gmra.mxu0 %v2255
        %v2269 = vpop.f32.mrf.mxu0
        %v2270 = vadd.f32 0.0, %v2269
        %v2271 = vpop.f32.mrf.mxu0
        %2272 = vdwg.mxu0
        %v2274 = vunpack.c.l.b16 %v1754
        %v2275 = vpack.c.b16 %v2274, %v2274
        %2276 = vrot.lane.b32.xlu0 %v2275, 96
        %v2277 = vpop.permute.xlu0 %2276
        %v2279 = vunpack.c.l.b16 %v1762
        %v2280 = vpack.c.b16 %v2279, %v2279
        %2281 = vrot.lane.b32.xlu0 %v2280, 96
        %v2282 = vpop.permute.xlu0 %2281
        %v2284 = vsel %vm1775, %v2277, 0
        %v2287 = vsel %vm1775, %v2282, 0
        %2289 = vmatpush.bf16.xpose.msra.mxu0 0
        %2290 = vmatpush.bf16.xpose.msra.mxu0 0
        %2291 = vmatpush.bf16.xpose.msra.mxu0 0
        %2292 = vmatpush.bf16.xpose.msra.mxu0 0
        %2293 = vmatpush.bf16.xpose.msra.mxu0 0
        %2294 = vmatpush.bf16.xpose.msra.mxu0 0
        %2295 = vmatpush.bf16.xpose.msra.mxu0 0
        %2296 = vmatpush.bf16.xpose.msra.mxu0 %v2287
        %2297 = vmatmul.bf16.gmra.mxu0 %v2284
        %v2298 = vpop.f32.mrf.mxu0
        %v2299 = vadd.f32 0.0, %v2298
        %v2300 = vpop.f32.mrf.mxu0
        %2301 = vdwg.mxu0
        %v2303 = vunpack.c.l.b16 %v1755
        %v2304 = vpack.c.b16 %v2303, %v2303
        %2305 = vrot.lane.b32.xlu0 %v2304, 96
        %v2306 = vpop.permute.xlu0 %2305
        %v2308 = vunpack.c.l.b16 %v1763
        %v2309 = vpack.c.b16 %v2308, %v2308
        %2310 = vrot.lane.b32.xlu0 %v2309, 96
        %v2311 = vpop.permute.xlu0 %2310
        %v2313 = vsel %vm1775, %v2306, 0
        %v2316 = vsel %vm1775, %v2311, 0
        %2318 = vmatpush.bf16.xpose.msra.mxu0 0
        %2319 = vmatpush.bf16.xpose.msra.mxu0 0
        %2320 = vmatpush.bf16.xpose.msra.mxu0 0
        %2321 = vmatpush.bf16.xpose.msra.mxu0 0
        %2322 = vmatpush.bf16.xpose.msra.mxu0 0
        %2323 = vmatpush.bf16.xpose.msra.mxu0 0
        %2324 = vmatpush.bf16.xpose.msra.mxu0 0
        %2325 = vmatpush.bf16.xpose.msra.mxu0 %v2316
        %2326 = vmatmul.bf16.gmra.mxu0 %v2313
        %v2327 = vpop.f32.mrf.mxu0
        %v2328 = vadd.f32 0.0, %v2327
        %v2329 = vpop.f32.mrf.mxu0
        %2330 = vdwg.mxu0
        %v2332 = vunpack.c.l.b16 %v1756
        %v2333 = vpack.c.b16 %v2332, %v2332
        %2334 = vrot.lane.b32.xlu0 %v2333, 96
        %v2335 = vpop.permute.xlu0 %2334
        %v2337 = vunpack.c.l.b16 %v1764
        %v2338 = vpack.c.b16 %v2337, %v2337
        %2339 = vrot.lane.b32.xlu0 %v2338, 96
        %v2340 = vpop.permute.xlu0 %2339
        %v2342 = vsel %vm1775, %v2335, 0
        %v2345 = vsel %vm1775, %v2340, 0
        %2347 = vmatpush.bf16.xpose.msra.mxu0 0
        %2348 = vmatpush.bf16.xpose.msra.mxu0 0
        %2349 = vmatpush.bf16.xpose.msra.mxu0 0
        %2350 = vmatpush.bf16.xpose.msra.mxu0 0
        %2351 = vmatpush.bf16.xpose.msra.mxu0 0
        %2352 = vmatpush.bf16.xpose.msra.mxu0 0
        %2353 = vmatpush.bf16.xpose.msra.mxu0 0
        %2354 = vmatpush.bf16.xpose.msra.mxu0 %v2345
        %2355 = vmatmul.bf16.gmra.mxu0 %v2342
        %v2356 = vpop.f32.mrf.mxu0
        %v2357 = vadd.f32 0.0, %v2356
        %v2358 = vpop.f32.mrf.mxu0
        %2359 = vdwg.mxu0
        %v2361 = vunpack.c.l.b16 %v1757
        %v2362 = vpack.c.b16 %v2361, %v2361
        %2363 = vrot.lane.b32.xlu0 %v2362, 96
        %v2364 = vpop.permute.xlu0 %2363
        %v2366 = vunpack.c.l.b16 %v1765
        %v2367 = vpack.c.b16 %v2366, %v2366
        %2368 = vrot.lane.b32.xlu0 %v2367, 96
        %v2369 = vpop.permute.xlu0 %2368
        %v2371 = vsel %vm1775, %v2364, 0
        %v2374 = vsel %vm1775, %v2369, 0
        %2376 = vmatpush.bf16.xpose.msra.mxu0 0
        %2377 = vmatpush.bf16.xpose.msra.mxu0 0
        %2378 = vmatpush.bf16.xpose.msra.mxu0 0
        %2379 = vmatpush.bf16.xpose.msra.mxu0 0
        %2380 = vmatpush.bf16.xpose.msra.mxu0 0
        %2381 = vmatpush.bf16.xpose.msra.mxu0 0
        %2382 = vmatpush.bf16.xpose.msra.mxu0 0
        %2383 = vmatpush.bf16.xpose.msra.mxu0 %v2374
        %2384 = vmatmul.bf16.gmra.mxu0 %v2371
        %v2385 = vpop.f32.mrf.mxu0
        %v2386 = vadd.f32 0.0, %v2385
        %v2387 = vpop.f32.mrf.mxu0
        %2388 = vdwg.mxu0
        %v2390 = vunpack.c.l.b16 %v1758
        %v2391 = vpack.c.b16 %v2390, %v2390
        %2392 = vrot.lane.b32.xlu0 %v2391, 96
        %v2393 = vpop.permute.xlu0 %2392
        %v2395 = vunpack.c.l.b16 %v1766
        %v2396 = vpack.c.b16 %v2395, %v2395
        %2397 = vrot.lane.b32.xlu0 %v2396, 96
        %v2398 = vpop.permute.xlu0 %2397
        %v2400 = vsel %vm1775, %v2393, 0
        %v2403 = vsel %vm1775, %v2398, 0
        %2405 = vmatpush.bf16.xpose.msra.mxu0 0
        %2406 = vmatpush.bf16.xpose.msra.mxu0 0
        %2407 = vmatpush.bf16.xpose.msra.mxu0 0
        %2408 = vmatpush.bf16.xpose.msra.mxu0 0
        %2409 = vmatpush.bf16.xpose.msra.mxu0 0
        %2410 = vmatpush.bf16.xpose.msra.mxu0 0
        %2411 = vmatpush.bf16.xpose.msra.mxu0 0
        %2412 = vmatpush.bf16.xpose.msra.mxu0 %v2403
        %2413 = vmatmul.bf16.gmra.mxu0 %v2400
        %v2414 = vpop.f32.mrf.mxu0
        %v2415 = vadd.f32 0.0, %v2414
        %v2416 = vpop.f32.mrf.mxu0
        %2417 = vdwg.mxu0
        %v2418 = vsel %vm1928, %v2212, -inf
        %2419 = vmax.xlane.f32.xlu0 %v2418
        %v2420 = vpop.xlane.xlu0 %2419
        %v2421 = vsel %vm1928, %v2241, -inf
        %2422 = vmax.xlane.f32.xlu0 %v2421
        %v2423 = vpop.xlane.xlu0 %2422
        %v2424 = vsel %vm1928, %v2270, -inf
        %2425 = vmax.xlane.f32.xlu0 %v2424
        %v2426 = vpop.xlane.xlu0 %2425
        %v2427 = vsel %vm1928, %v2299, -inf
        %2428 = vmax.xlane.f32.xlu0 %v2427
        %v2429 = vpop.xlane.xlu0 %2428
        %v2430 = vsel %vm1928, %v2328, -inf
        %2431 = vmax.xlane.f32.xlu0 %v2430
        %v2432 = vpop.xlane.xlu0 %2431
        %v2433 = vsel %vm1928, %v2357, -inf
        %2434 = vmax.xlane.f32.xlu0 %v2433
        %v2435 = vpop.xlane.xlu0 %2434
        %v2436 = vsel %vm1928, %v2386, -inf
        %2437 = vmax.xlane.f32.xlu0 %v2436
        %v2438 = vpop.xlane.xlu0 %2437
        %v2439 = vsel %vm1928, %v2415, -inf
        %2440 = vmax.xlane.f32.xlu0 %v2439
        %v2441 = vpop.xlane.xlu0 %2440
        %v2442 = vsub.f32 %v2212, %v2420
        %v2443 = vsub.f32 %v2241, %v2423
        %v2444 = vsub.f32 %v2270, %v2426
        %v2445 = vsub.f32 %v2299, %v2429
        %v2446 = vsub.f32 %v2328, %v2432
        %v2447 = vsub.f32 %v2357, %v2435
        %v2448 = vsub.f32 %v2386, %v2438
        %v2449 = vsub.f32 %v2415, %v2441
        %v2450 = vmul.f32 %v2442, 1.442695
        %v2451 = vpow.pop %v2450
        %v2452 = vmul.f32 %v2443, 1.442695
        %v2453 = vpow.pop %v2452
        %v2454 = vmul.f32 %v2444, 1.442695
        %v2455 = vpow.pop %v2454
        %v2456 = vmul.f32 %v2445, 1.442695
        %v2457 = vpow.pop %v2456
        %v2458 = vmul.f32 %v2446, 1.442695
        %v2459 = vpow.pop %v2458
        %v2460 = vmul.f32 %v2447, 1.442695
        %v2461 = vpow.pop %v2460
        %v2462 = vmul.f32 %v2448, 1.442695
        %v2463 = vpow.pop %v2462
        %v2464 = vmul.f32 %v2449, 1.442695
        %v2465 = vpow.pop %v2464
        %v2466 = vsel %vm1928, %v2451, 0.0
        %2467 = vadd.xlane.f32.xlu0 %v2466
        %v2468 = vpop.xlane.xlu0 %2467
        %v2469 = vsel %vm1928, %v2453, 0.0
        %2470 = vadd.xlane.f32.xlu0 %v2469
        %v2471 = vpop.xlane.xlu0 %2470
        %v2472 = vsel %vm1928, %v2455, 0.0
        %2473 = vadd.xlane.f32.xlu0 %v2472
        %v2474 = vpop.xlane.xlu0 %2473
        %v2475 = vsel %vm1928, %v2457, 0.0
        %2476 = vadd.xlane.f32.xlu0 %v2475
        %v2477 = vpop.xlane.xlu0 %2476
        %v2478 = vsel %vm1928, %v2459, 0.0
        %2479 = vadd.xlane.f32.xlu0 %v2478
        %v2480 = vpop.xlane.xlu0 %2479
        %v2481 = vsel %vm1928, %v2461, 0.0
        %2482 = vadd.xlane.f32.xlu0 %v2481
        %v2483 = vpop.xlane.xlu0 %2482
        %v2484 = vsel %vm1928, %v2463, 0.0
        %2485 = vadd.xlane.f32.xlu0 %v2484
        %v2486 = vpop.xlane.xlu0 %2485
        %v2487 = vsel %vm1928, %v2465, 0.0
        %2488 = vadd.xlane.f32.xlu0 %v2487
        %v2489 = vpop.xlane.xlu0 %2488
        %v2490 = vrcp.pop %v2468
        %v2491 = vrcp.pop %v2471
        %v2492 = vrcp.pop %v2474
        %v2493 = vrcp.pop %v2477
        %v2494 = vrcp.pop %v2480
        %v2495 = vrcp.pop %v2483
        %v2496 = vrcp.pop %v2486
        %v2497 = vrcp.pop %v2489
        %v2498 = vmul.f32 %v2451, %v2490
        %v2499 = vmul.f32 %v2453, %v2491
        %v2500 = vmul.f32 %v2455, %v2492
        %v2501 = vmul.f32 %v2457, %v2493
        %v2502 = vmul.f32 %v2459, %v2494
        %v2503 = vmul.f32 %v2461, %v2495
        %v2504 = vmul.f32 %v2463, %v2496
        %v2505 = vmul.f32 %v2465, %v2497
        %v2506 = vpack.c.bf16 %v2498, %v2498
        %v2507 = vpack.c.bf16 %v2499, %v2499
        %v2508 = vpack.c.bf16 %v2500, %v2500
        %v2509 = vpack.c.bf16 %v2501, %v2501
        %v2510 = vpack.c.bf16 %v2502, %v2502
        %v2511 = vpack.c.bf16 %v2503, %v2503
        %v2512 = vpack.c.bf16 %v2504, %v2504
        %v2513 = vpack.c.bf16 %v2505, %v2505
        %v2515 = vunpack.c.l.b16 %v1767
        %v2516 = vpack.c.b16 %v2515, %v2515
        %2517 = vrot.lane.b32.xlu0 %v2516, 96
        %v2518 = vpop.permute.xlu0 %2517
        %v2520 = vsel %vm1928, %v2506, 0
        %v2523 = vsel %vm2028, %v2518, 0
        %2525 = vmatpush.bf16.msra.mxu0 0
        %2526 = vmatpush.bf16.msra.mxu0 0
        %2527 = vmatpush.bf16.msra.mxu0 0
        %2528 = vmatpush.bf16.msra.mxu0 0
        %2529 = vmatpush.bf16.msra.mxu0 0
        %2530 = vmatpush.bf16.msra.mxu0 0
        %2531 = vmatpush.bf16.msra.mxu0 0
        %2532 = vmatpush.bf16.msra.mxu0 %v2523
        %2533 = vmatmul.bf16.gmra.mxu0 %v2520
        %v2534 = vpop.f32.mrf.mxu0
        %v2535 = vadd.f32 0.0, %v2534
        %v2536 = vpop.f32.mrf.mxu0
        %2537 = vdwg.mxu0
        %v2539 = vunpack.c.l.b16 %v1768
        %v2540 = vpack.c.b16 %v2539, %v2539
        %2541 = vrot.lane.b32.xlu0 %v2540, 96
        %v2542 = vpop.permute.xlu0 %2541
        %v2544 = vsel %vm1928, %v2507, 0
        %v2547 = vsel %vm2028, %v2542, 0
        %2549 = vmatpush.bf16.msra.mxu0 0
        %2550 = vmatpush.bf16.msra.mxu0 0
        %2551 = vmatpush.bf16.msra.mxu0 0
        %2552 = vmatpush.bf16.msra.mxu0 0
        %2553 = vmatpush.bf16.msra.mxu0 0
        %2554 = vmatpush.bf16.msra.mxu0 0
        %2555 = vmatpush.bf16.msra.mxu0 0
        %2556 = vmatpush.bf16.msra.mxu0 %v2547
        %2557 = vmatmul.bf16.gmra.mxu0 %v2544
        %v2558 = vpop.f32.mrf.mxu0
        %v2559 = vadd.f32 0.0, %v2558
        %v2560 = vpop.f32.mrf.mxu0
        %2561 = vdwg.mxu0
        %v2563 = vunpack.c.l.b16 %v1769
        %v2564 = vpack.c.b16 %v2563, %v2563
        %2565 = vrot.lane.b32.xlu0 %v2564, 96
        %v2566 = vpop.permute.xlu0 %2565
        %v2568 = vsel %vm1928, %v2508, 0
        %v2571 = vsel %vm2028, %v2566, 0
        %2573 = vmatpush.bf16.msra.mxu0 0
        %2574 = vmatpush.bf16.msra.mxu0 0
        %2575 = vmatpush.bf16.msra.mxu0 0
        %2576 = vmatpush.bf16.msra.mxu0 0
        %2577 = vmatpush.bf16.msra.mxu0 0
        %2578 = vmatpush.bf16.msra.mxu0 0
        %2579 = vmatpush.bf16.msra.mxu0 0
        %2580 = vmatpush.bf16.msra.mxu0 %v2571
        %2581 = vmatmul.bf16.gmra.mxu0 %v2568
        %v2582 = vpop.f32.mrf.mxu0
        %v2583 = vadd.f32 0.0, %v2582
        %v2584 = vpop.f32.mrf.mxu0
        %2585 = vdwg.mxu0
        %v2587 = vunpack.c.l.b16 %v1770
        %v2588 = vpack.c.b16 %v2587, %v2587
        %2589 = vrot.lane.b32.xlu0 %v2588, 96
        %v2590 = vpop.permute.xlu0 %2589
        %v2592 = vsel %vm1928, %v2509, 0
        %v2595 = vsel %vm2028, %v2590, 0
        %2597 = vmatpush.bf16.msra.mxu0 0
        %2598 = vmatpush.bf16.msra.mxu0 0
        %2599 = vmatpush.bf16.msra.mxu0 0
        %2600 = vmatpush.bf16.msra.mxu0 0
        %2601 = vmatpush.bf16.msra.mxu0 0
        %2602 = vmatpush.bf16.msra.mxu0 0
        %2603 = vmatpush.bf16.msra.mxu0 0
        %2604 = vmatpush.bf16.msra.mxu0 %v2595
        %2605 = vmatmul.bf16.gmra.mxu0 %v2592
        %v2606 = vpop.f32.mrf.mxu0
        %v2607 = vadd.f32 0.0, %v2606
        %v2608 = vpop.f32.mrf.mxu0
        %2609 = vdwg.mxu0
        %v2611 = vunpack.c.l.b16 %v1771
        %v2612 = vpack.c.b16 %v2611, %v2611
        %2613 = vrot.lane.b32.xlu0 %v2612, 96
        %v2614 = vpop.permute.xlu0 %2613
        %v2616 = vsel %vm1928, %v2510, 0
        %v2619 = vsel %vm2028, %v2614, 0
        %2621 = vmatpush.bf16.msra.mxu0 0
        %2622 = vmatpush.bf16.msra.mxu0 0
        %2623 = vmatpush.bf16.msra.mxu0 0
        %2624 = vmatpush.bf16.msra.mxu0 0
        %2625 = vmatpush.bf16.msra.mxu0 0
        %2626 = vmatpush.bf16.msra.mxu0 0
        %2627 = vmatpush.bf16.msra.mxu0 0
        %2628 = vmatpush.bf16.msra.mxu0 %v2619
        %2629 = vmatmul.bf16.gmra.mxu0 %v2616
        %v2630 = vpop.f32.mrf.mxu0
        %v2631 = vadd.f32 0.0, %v2630
        %v2632 = vpop.f32.mrf.mxu0
        %2633 = vdwg.mxu0
        %v2635 = vunpack.c.l.b16 %v1772
        %v2636 = vpack.c.b16 %v2635, %v2635
        %2637 = vrot.lane.b32.xlu0 %v2636, 96
        %v2638 = vpop.permute.xlu0 %2637
        %v2640 = vsel %vm1928, %v2511, 0
        %v2643 = vsel %vm2028, %v2638, 0
        %2645 = vmatpush.bf16.msra.mxu0 0
        %2646 = vmatpush.bf16.msra.mxu0 0
        %2647 = vmatpush.bf16.msra.mxu0 0
        %2648 = vmatpush.bf16.msra.mxu0 0
        %2649 = vmatpush.bf16.msra.mxu0 0
        %2650 = vmatpush.bf16.msra.mxu0 0
        %2651 = vmatpush.bf16.msra.mxu0 0
        %2652 = vmatpush.bf16.msra.mxu0 %v2643
        %2653 = vmatmul.bf16.gmra.mxu0 %v2640
        %v2654 = vpop.f32.mrf.mxu0
        %v2655 = vadd.f32 0.0, %v2654
        %v2656 = vpop.f32.mrf.mxu0
        %2657 = vdwg.mxu0
        %v2659 = vunpack.c.l.b16 %v1773
        %v2660 = vpack.c.b16 %v2659, %v2659
        %2661 = vrot.lane.b32.xlu0 %v2660, 96
        %v2662 = vpop.permute.xlu0 %2661
        %v2664 = vsel %vm1928, %v2512, 0
        %v2667 = vsel %vm2028, %v2662, 0
        %2669 = vmatpush.bf16.msra.mxu0 0
        %2670 = vmatpush.bf16.msra.mxu0 0
        %2671 = vmatpush.bf16.msra.mxu0 0
        %2672 = vmatpush.bf16.msra.mxu0 0
        %2673 = vmatpush.bf16.msra.mxu0 0
        %2674 = vmatpush.bf16.msra.mxu0 0
        %2675 = vmatpush.bf16.msra.mxu0 0
        %2676 = vmatpush.bf16.msra.mxu0 %v2667
        %2677 = vmatmul.bf16.gmra.mxu0 %v2664
        %v2678 = vpop.f32.mrf.mxu0
        %v2679 = vadd.f32 0.0, %v2678
        %v2680 = vpop.f32.mrf.mxu0
        %2681 = vdwg.mxu0
        %v2683 = vunpack.c.l.b16 %v1774
        %v2684 = vpack.c.b16 %v2683, %v2683
        %2685 = vrot.lane.b32.xlu0 %v2684, 96
        %v2686 = vpop.permute.xlu0 %2685
        %v2688 = vsel %vm1928, %v2513, 0
        %v2691 = vsel %vm2028, %v2686, 0
        %2693 = vmatpush.bf16.msra.mxu0 0
        %2694 = vmatpush.bf16.msra.mxu0 0
        %2695 = vmatpush.bf16.msra.mxu0 0
        %2696 = vmatpush.bf16.msra.mxu0 0
        %2697 = vmatpush.bf16.msra.mxu0 0
        %2698 = vmatpush.bf16.msra.mxu0 0
        %2699 = vmatpush.bf16.msra.mxu0 0
        %2700 = vmatpush.bf16.msra.mxu0 %v2691
        %2701 = vmatmul.bf16.gmra.mxu0 %v2688
        %v2702 = vpop.f32.mrf.mxu0
        %v2703 = vadd.f32 0.0, %v2702
        %v2704 = vpop.f32.mrf.mxu0
        %2705 = vdwg.mxu0
        %v2706 = vpack.c.bf16 %v2535, %v2535
        %v2707 = vpack.c.bf16 %v2559, %v2559
        %v2708 = vpack.c.bf16 %v2583, %v2583
        %v2709 = vpack.c.bf16 %v2607, %v2607
        %v2710 = vpack.c.bf16 %v2631, %v2631
        %v2711 = vpack.c.bf16 %v2655, %v2655
        %v2712 = vpack.c.bf16 %v2679, %v2679
        %v2713 = vpack.c.bf16 %v2703, %v2703
        %2714 = vrot.lane.b32.xlu0 %v2188, 64
        %v2715 = vpop.permute.xlu0 %2714
        %2716 = vrot.lane.b32.xlu0 %v2193, 64
        %v2717 = vpop.permute.xlu0 %2716
        %v2719 = vsel %vm1775, %v2715, 0
        %v2722 = vsel %vm1775, %v2717, 0
        %2724 = vmatpush.bf16.xpose.msra.mxu0 0
        %2725 = vmatpush.bf16.xpose.msra.mxu0 0
        %2726 = vmatpush.bf16.xpose.msra.mxu0 0
        %2727 = vmatpush.bf16.xpose.msra.mxu0 0
        %2728 = vmatpush.bf16.xpose.msra.mxu0 0
        %2729 = vmatpush.bf16.xpose.msra.mxu0 0
        %2730 = vmatpush.bf16.xpose.msra.mxu0 0
        %2731 = vmatpush.bf16.xpose.msra.mxu0 %v2722
        %2732 = vmatmul.bf16.gmra.mxu0 %v2719
        %v2733 = vpop.f32.mrf.mxu0
        %v2734 = vadd.f32 0.0, %v2733
        %v2735 = vpop.f32.mrf.mxu0
        %2736 = vdwg.mxu0
        %2737 = vrot.lane.b32.xlu0 %v2217, 64
        %v2738 = vpop.permute.xlu0 %2737
        %2739 = vrot.lane.b32.xlu0 %v2222, 64
        %v2740 = vpop.permute.xlu0 %2739
        %v2742 = vsel %vm1775, %v2738, 0
        %v2745 = vsel %vm1775, %v2740, 0
        %2747 = vmatpush.bf16.xpose.msra.mxu0 0
        %2748 = vmatpush.bf16.xpose.msra.mxu0 0
        %2749 = vmatpush.bf16.xpose.msra.mxu0 0
        %2750 = vmatpush.bf16.xpose.msra.mxu0 0
        %2751 = vmatpush.bf16.xpose.msra.mxu0 0
        %2752 = vmatpush.bf16.xpose.msra.mxu0 0
        %2753 = vmatpush.bf16.xpose.msra.mxu0 0
        %2754 = vmatpush.bf16.xpose.msra.mxu0 %v2745
        %2755 = vmatmul.bf16.gmra.mxu0 %v2742
        %v2756 = vpop.f32.mrf.mxu0
        %v2757 = vadd.f32 0.0, %v2756
        %v2758 = vpop.f32.mrf.mxu0
        %2759 = vdwg.mxu0
        %2760 = vrot.lane.b32.xlu0 %v2246, 64
        %v2761 = vpop.permute.xlu0 %2760
        %2762 = vrot.lane.b32.xlu0 %v2251, 64
        %v2763 = vpop.permute.xlu0 %2762
        %v2765 = vsel %vm1775, %v2761, 0
        %v2768 = vsel %vm1775, %v2763, 0
        %2770 = vmatpush.bf16.xpose.msra.mxu0 0
        %2771 = vmatpush.bf16.xpose.msra.mxu0 0
        %2772 = vmatpush.bf16.xpose.msra.mxu0 0
        %2773 = vmatpush.bf16.xpose.msra.mxu0 0
        %2774 = vmatpush.bf16.xpose.msra.mxu0 0
        %2775 = vmatpush.bf16.xpose.msra.mxu0 0
        %2776 = vmatpush.bf16.xpose.msra.mxu0 0
        %2777 = vmatpush.bf16.xpose.msra.mxu0 %v2768
        %2778 = vmatmul.bf16.gmra.mxu0 %v2765
        %v2779 = vpop.f32.mrf.mxu0
        %v2780 = vadd.f32 0.0, %v2779
        %v2781 = vpop.f32.mrf.mxu0
        %2782 = vdwg.mxu0
        %2783 = vrot.lane.b32.xlu0 %v2275, 64
        %v2784 = vpop.permute.xlu0 %2783
        %2785 = vrot.lane.b32.xlu0 %v2280, 64
        %v2786 = vpop.permute.xlu0 %2785
        %v2788 = vsel %vm1775, %v2784, 0
        %v2791 = vsel %vm1775, %v2786, 0
        %2793 = vmatpush.bf16.xpose.msra.mxu0 0
        %2794 = vmatpush.bf16.xpose.msra.mxu0 0
        %2795 = vmatpush.bf16.xpose.msra.mxu0 0
        %2796 = vmatpush.bf16.xpose.msra.mxu0 0
        %2797 = vmatpush.bf16.xpose.msra.mxu0 0
        %2798 = vmatpush.bf16.xpose.msra.mxu0 0
        %2799 = vmatpush.bf16.xpose.msra.mxu0 0
        %2800 = vmatpush.bf16.xpose.msra.mxu0 %v2791
        %2801 = vmatmul.bf16.gmra.mxu0 %v2788
        %v2802 = vpop.f32.mrf.mxu0
        %v2803 = vadd.f32 0.0, %v2802
        %v2804 = vpop.f32.mrf.mxu0
        %2805 = vdwg.mxu0
        %2806 = vrot.lane.b32.xlu0 %v2304, 64
        %v2807 = vpop.permute.xlu0 %2806
        %2808 = vrot.lane.b32.xlu0 %v2309, 64
        %v2809 = vpop.permute.xlu0 %2808
        %v2811 = vsel %vm1775, %v2807, 0
        %v2814 = vsel %vm1775, %v2809, 0
        %2816 = vmatpush.bf16.xpose.msra.mxu0 0
        %2817 = vmatpush.bf16.xpose.msra.mxu0 0
        %2818 = vmatpush.bf16.xpose.msra.mxu0 0
        %2819 = vmatpush.bf16.xpose.msra.mxu0 0
        %2820 = vmatpush.bf16.xpose.msra.mxu0 0
        %2821 = vmatpush.bf16.xpose.msra.mxu0 0
        %2822 = vmatpush.bf16.xpose.msra.mxu0 0
        %2823 = vmatpush.bf16.xpose.msra.mxu0 %v2814
        %2824 = vmatmul.bf16.gmra.mxu0 %v2811
        %v2825 = vpop.f32.mrf.mxu0
        %v2826 = vadd.f32 0.0, %v2825
        %v2827 = vpop.f32.mrf.mxu0
        %2828 = vdwg.mxu0
        %2829 = vrot.lane.b32.xlu0 %v2333, 64
        %v2830 = vpop.permute.xlu0 %2829
        %2831 = vrot.lane.b32.xlu0 %v2338, 64
        %v2832 = vpop.permute.xlu0 %2831
        %v2834 = vsel %vm1775, %v2830, 0
        %v2837 = vsel %vm1775, %v2832, 0
        %2839 = vmatpush.bf16.xpose.msra.mxu0 0
        %2840 = vmatpush.bf16.xpose.msra.mxu0 0
        %2841 = vmatpush.bf16.xpose.msra.mxu0 0
        %2842 = vmatpush.bf16.xpose.msra.mxu0 0
        %2843 = vmatpush.bf16.xpose.msra.mxu0 0
        %2844 = vmatpush.bf16.xpose.msra.mxu0 0
        %2845 = vmatpush.bf16.xpose.msra.mxu0 0
        %2846 = vmatpush.bf16.xpose.msra.mxu0 %v2837
        %2847 = vmatmul.bf16.gmra.mxu0 %v2834
        %v2848 = vpop.f32.mrf.mxu0
        %v2849 = vadd.f32 0.0, %v2848
        %v2850 = vpop.f32.mrf.mxu0
        %2851 = vdwg.mxu0
        %2852 = vrot.lane.b32.xlu0 %v2362, 64
        %v2853 = vpop.permute.xlu0 %2852
        %2854 = vrot.lane.b32.xlu0 %v2367, 64
        %v2855 = vpop.permute.xlu0 %2854
        %v2857 = vsel %vm1775, %v2853, 0
        %v2860 = vsel %vm1775, %v2855, 0
        %2862 = vmatpush.bf16.xpose.msra.mxu0 0
        %2863 = vmatpush.bf16.xpose.msra.mxu0 0
        %2864 = vmatpush.bf16.xpose.msra.mxu0 0
        %2865 = vmatpush.bf16.xpose.msra.mxu0 0
        %2866 = vmatpush.bf16.xpose.msra.mxu0 0
        %2867 = vmatpush.bf16.xpose.msra.mxu0 0
        %2868 = vmatpush.bf16.xpose.msra.mxu0 0
        %2869 = vmatpush.bf16.xpose.msra.mxu0 %v2860
        %2870 = vmatmul.bf16.gmra.mxu0 %v2857
        %v2871 = vpop.f32.mrf.mxu0
        %v2872 = vadd.f32 0.0, %v2871
        %v2873 = vpop.f32.mrf.mxu0
        %2874 = vdwg.mxu0
        %2875 = vrot.lane.b32.xlu0 %v2391, 64
        %v2876 = vpop.permute.xlu0 %2875
        %2877 = vrot.lane.b32.xlu0 %v2396, 64
        %v2878 = vpop.permute.xlu0 %2877
        %v2880 = vsel %vm1775, %v2876, 0
        %v2883 = vsel %vm1775, %v2878, 0
        %2885 = vmatpush.bf16.xpose.msra.mxu0 0
        %2886 = vmatpush.bf16.xpose.msra.mxu0 0
        %2887 = vmatpush.bf16.xpose.msra.mxu0 0
        %2888 = vmatpush.bf16.xpose.msra.mxu0 0
        %2889 = vmatpush.bf16.xpose.msra.mxu0 0
        %2890 = vmatpush.bf16.xpose.msra.mxu0 0
        %2891 = vmatpush.bf16.xpose.msra.mxu0 0
        %2892 = vmatpush.bf16.xpose.msra.mxu0 %v2883
        %2893 = vmatmul.bf16.gmra.mxu0 %v2880
        %v2894 = vpop.f32.mrf.mxu0
        %v2895 = vadd.f32 0.0, %v2894
        %v2896 = vpop.f32.mrf.mxu0
        %2897 = vdwg.mxu0
        %v2898 = vsel %vm1928, %v2734, -inf
        %2899 = vmax.xlane.f32.xlu0 %v2898
        %v2900 = vpop.xlane.xlu0 %2899
        %v2901 = vsel %vm1928, %v2757, -inf
        %2902 = vmax.xlane.f32.xlu0 %v2901
        %v2903 = vpop.xlane.xlu0 %2902
        %v2904 = vsel %vm1928, %v2780, -inf
        %2905 = vmax.xlane.f32.xlu0 %v2904
        %v2906 = vpop.xlane.xlu0 %2905
        %v2907 = vsel %vm1928, %v2803, -inf
        %2908 = vmax.xlane.f32.xlu0 %v2907
        %v2909 = vpop.xlane.xlu0 %2908
        %v2910 = vsel %vm1928, %v2826, -inf
        %2911 = vmax.xlane.f32.xlu0 %v2910
        %v2912 = vpop.xlane.xlu0 %2911
        %v2913 = vsel %vm1928, %v2849, -inf
        %2914 = vmax.xlane.f32.xlu0 %v2913
        %v2915 = vpop.xlane.xlu0 %2914
        %v2916 = vsel %vm1928, %v2872, -inf
        %2917 = vmax.xlane.f32.xlu0 %v2916
        %v2918 = vpop.xlane.xlu0 %2917
        %v2919 = vsel %vm1928, %v2895, -inf
        %2920 = vmax.xlane.f32.xlu0 %v2919
        %v2921 = vpop.xlane.xlu0 %2920
        %v2922 = vsub.f32 %v2734, %v2900
        %v2923 = vsub.f32 %v2757, %v2903
        %v2924 = vsub.f32 %v2780, %v2906
        %v2925 = vsub.f32 %v2803, %v2909
        %v2926 = vsub.f32 %v2826, %v2912
        %v2927 = vsub.f32 %v2849, %v2915
        %v2928 = vsub.f32 %v2872, %v2918
        %v2929 = vsub.f32 %v2895, %v2921
        %v2930 = vmul.f32 %v2922, 1.442695
        %v2931 = vpow.pop %v2930
        %v2932 = vmul.f32 %v2923, 1.442695
        %v2933 = vpow.pop %v2932
        %v2934 = vmul.f32 %v2924, 1.442695
        %v2935 = vpow.pop %v2934
        %v2936 = vmul.f32 %v2925, 1.442695
        %v2937 = vpow.pop %v2936
        %v2938 = vmul.f32 %v2926, 1.442695
        %v2939 = vpow.pop %v2938
        %v2940 = vmul.f32 %v2927, 1.442695
        %v2941 = vpow.pop %v2940
        %v2942 = vmul.f32 %v2928, 1.442695
        %v2943 = vpow.pop %v2942
        %v2944 = vmul.f32 %v2929, 1.442695
        %v2945 = vpow.pop %v2944
        %v2946 = vsel %vm1928, %v2931, 0.0
        %2947 = vadd.xlane.f32.xlu0 %v2946
        %v2948 = vpop.xlane.xlu0 %2947
        %v2949 = vsel %vm1928, %v2933, 0.0
        %2950 = vadd.xlane.f32.xlu0 %v2949
        %v2951 = vpop.xlane.xlu0 %2950
        %v2952 = vsel %vm1928, %v2935, 0.0
        %2953 = vadd.xlane.f32.xlu0 %v2952
        %v2954 = vpop.xlane.xlu0 %2953
        %v2955 = vsel %vm1928, %v2937, 0.0
        %2956 = vadd.xlane.f32.xlu0 %v2955
        %v2957 = vpop.xlane.xlu0 %2956
        %v2958 = vsel %vm1928, %v2939, 0.0
        %2959 = vadd.xlane.f32.xlu0 %v2958
        %v2960 = vpop.xlane.xlu0 %2959
        %v2961 = vsel %vm1928, %v2941, 0.0
        %2962 = vadd.xlane.f32.xlu0 %v2961
        %v2963 = vpop.xlane.xlu0 %2962
        %v2964 = vsel %vm1928, %v2943, 0.0
        %2965 = vadd.xlane.f32.xlu0 %v2964
        %v2966 = vpop.xlane.xlu0 %2965
        %v2967 = vsel %vm1928, %v2945, 0.0
        %2968 = vadd.xlane.f32.xlu0 %v2967
        %v2969 = vpop.xlane.xlu0 %2968
        %v2970 = vrcp.pop %v2948
        %v2971 = vrcp.pop %v2951
        %v2972 = vrcp.pop %v2954
        %v2973 = vrcp.pop %v2957
        %v2974 = vrcp.pop %v2960
        %v2975 = vrcp.pop %v2963
        %v2976 = vrcp.pop %v2966
        %v2977 = vrcp.pop %v2969
        %v2978 = vmul.f32 %v2931, %v2970
        %v2979 = vmul.f32 %v2933, %v2971
        %v2980 = vmul.f32 %v2935, %v2972
        %v2981 = vmul.f32 %v2937, %v2973
        %v2982 = vmul.f32 %v2939, %v2974
        %v2983 = vmul.f32 %v2941, %v2975
        %v2984 = vmul.f32 %v2943, %v2976
        %v2985 = vmul.f32 %v2945, %v2977
        %v2986 = vpack.c.bf16 %v2978, %v2978
        %v2987 = vpack.c.bf16 %v2979, %v2979
        %v2988 = vpack.c.bf16 %v2980, %v2980
        %v2989 = vpack.c.bf16 %v2981, %v2981
        %v2990 = vpack.c.bf16 %v2982, %v2982
        %v2991 = vpack.c.bf16 %v2983, %v2983
        %v2992 = vpack.c.bf16 %v2984, %v2984
        %v2993 = vpack.c.bf16 %v2985, %v2985
        %2994 = vrot.lane.b32.xlu0 %v2516, 64
        %v2995 = vpop.permute.xlu0 %2994
        %v2997 = vsel %vm1928, %v2986, 0
        %v3000 = vsel %vm2028, %v2995, 0
        %3002 = vmatpush.bf16.msra.mxu0 0
        %3003 = vmatpush.bf16.msra.mxu0 0
        %3004 = vmatpush.bf16.msra.mxu0 0
        %3005 = vmatpush.bf16.msra.mxu0 0
        %3006 = vmatpush.bf16.msra.mxu0 0
        %3007 = vmatpush.bf16.msra.mxu0 0
        %3008 = vmatpush.bf16.msra.mxu0 0
        %3009 = vmatpush.bf16.msra.mxu0 %v3000
        %3010 = vmatmul.bf16.gmra.mxu0 %v2997
        %v3011 = vpop.f32.mrf.mxu0
        %v3012 = vadd.f32 0.0, %v3011
        %v3013 = vpop.f32.mrf.mxu0
        %3014 = vdwg.mxu0
        %3015 = vrot.lane.b32.xlu0 %v2540, 64
        %v3016 = vpop.permute.xlu0 %3015
        %v3018 = vsel %vm1928, %v2987, 0
        %v3021 = vsel %vm2028, %v3016, 0
        %3023 = vmatpush.bf16.msra.mxu0 0
        %3024 = vmatpush.bf16.msra.mxu0 0
        %3025 = vmatpush.bf16.msra.mxu0 0
        %3026 = vmatpush.bf16.msra.mxu0 0
        %3027 = vmatpush.bf16.msra.mxu0 0
        %3028 = vmatpush.bf16.msra.mxu0 0
        %3029 = vmatpush.bf16.msra.mxu0 0
        %3030 = vmatpush.bf16.msra.mxu0 %v3021
        %3031 = vmatmul.bf16.gmra.mxu0 %v3018
        %v3032 = vpop.f32.mrf.mxu0
        %v3033 = vadd.f32 0.0, %v3032
        %v3034 = vpop.f32.mrf.mxu0
        %3035 = vdwg.mxu0
        %3036 = vrot.lane.b32.xlu0 %v2564, 64
        %v3037 = vpop.permute.xlu0 %3036
        %v3039 = vsel %vm1928, %v2988, 0
        %v3042 = vsel %vm2028, %v3037, 0
        %3044 = vmatpush.bf16.msra.mxu0 0
        %3045 = vmatpush.bf16.msra.mxu0 0
        %3046 = vmatpush.bf16.msra.mxu0 0
        %3047 = vmatpush.bf16.msra.mxu0 0
        %3048 = vmatpush.bf16.msra.mxu0 0
        %3049 = vmatpush.bf16.msra.mxu0 0
        %3050 = vmatpush.bf16.msra.mxu0 0
        %3051 = vmatpush.bf16.msra.mxu0 %v3042
        %3052 = vmatmul.bf16.gmra.mxu0 %v3039
        %v3053 = vpop.f32.mrf.mxu0
        %v3054 = vadd.f32 0.0, %v3053
        %v3055 = vpop.f32.mrf.mxu0
        %3056 = vdwg.mxu0
        %3057 = vrot.lane.b32.xlu0 %v2588, 64
        %v3058 = vpop.permute.xlu0 %3057
        %v3060 = vsel %vm1928, %v2989, 0
        %v3063 = vsel %vm2028, %v3058, 0
        %3065 = vmatpush.bf16.msra.mxu0 0
        %3066 = vmatpush.bf16.msra.mxu0 0
        %3067 = vmatpush.bf16.msra.mxu0 0
        %3068 = vmatpush.bf16.msra.mxu0 0
        %3069 = vmatpush.bf16.msra.mxu0 0
        %3070 = vmatpush.bf16.msra.mxu0 0
        %3071 = vmatpush.bf16.msra.mxu0 0
        %3072 = vmatpush.bf16.msra.mxu0 %v3063
        %3073 = vmatmul.bf16.gmra.mxu0 %v3060
        %v3074 = vpop.f32.mrf.mxu0
        %v3075 = vadd.f32 0.0, %v3074
        %v3076 = vpop.f32.mrf.mxu0
        %3077 = vdwg.mxu0
        %3078 = vrot.lane.b32.xlu0 %v2612, 64
        %v3079 = vpop.permute.xlu0 %3078
        %v3081 = vsel %vm1928, %v2990, 0
        %v3084 = vsel %vm2028, %v3079, 0
        %3086 = vmatpush.bf16.msra.mxu0 0
        %3087 = vmatpush.bf16.msra.mxu0 0
        %3088 = vmatpush.bf16.msra.mxu0 0
        %3089 = vmatpush.bf16.msra.mxu0 0
        %3090 = vmatpush.bf16.msra.mxu0 0
        %3091 = vmatpush.bf16.msra.mxu0 0
        %3092 = vmatpush.bf16.msra.mxu0 0
        %3093 = vmatpush.bf16.msra.mxu0 %v3084
        %3094 = vmatmul.bf16.gmra.mxu0 %v3081
        %v3095 = vpop.f32.mrf.mxu0
        %v3096 = vadd.f32 0.0, %v3095
        %v3097 = vpop.f32.mrf.mxu0
        %3098 = vdwg.mxu0
        %3099 = vrot.lane.b32.xlu0 %v2636, 64
        %v3100 = vpop.permute.xlu0 %3099
        %v3102 = vsel %vm1928, %v2991, 0
        %v3105 = vsel %vm2028, %v3100, 0
        %3107 = vmatpush.bf16.msra.mxu0 0
        %3108 = vmatpush.bf16.msra.mxu0 0
        %3109 = vmatpush.bf16.msra.mxu0 0
        %3110 = vmatpush.bf16.msra.mxu0 0
        %3111 = vmatpush.bf16.msra.mxu0 0
        %3112 = vmatpush.bf16.msra.mxu0 0
        %3113 = vmatpush.bf16.msra.mxu0 0
        %3114 = vmatpush.bf16.msra.mxu0 %v3105
        %3115 = vmatmul.bf16.gmra.mxu0 %v3102
        %v3116 = vpop.f32.mrf.mxu0
        %v3117 = vadd.f32 0.0, %v3116
        %v3118 = vpop.f32.mrf.mxu0
        %3119 = vdwg.mxu0
        %3120 = vrot.lane.b32.xlu0 %v2660, 64
        %v3121 = vpop.permute.xlu0 %3120
        %v3123 = vsel %vm1928, %v2992, 0
        %v3126 = vsel %vm2028, %v3121, 0
        %3128 = vmatpush.bf16.msra.mxu0 0
        %3129 = vmatpush.bf16.msra.mxu0 0
        %3130 = vmatpush.bf16.msra.mxu0 0
        %3131 = vmatpush.bf16.msra.mxu0 0
        %3132 = vmatpush.bf16.msra.mxu0 0
        %3133 = vmatpush.bf16.msra.mxu0 0
        %3134 = vmatpush.bf16.msra.mxu0 0
        %3135 = vmatpush.bf16.msra.mxu0 %v3126
        %3136 = vmatmul.bf16.gmra.mxu0 %v3123
        %v3137 = vpop.f32.mrf.mxu0
        %v3138 = vadd.f32 0.0, %v3137
        %v3139 = vpop.f32.mrf.mxu0
        %3140 = vdwg.mxu0
        %3141 = vrot.lane.b32.xlu0 %v2684, 64
        %v3142 = vpop.permute.xlu0 %3141
        %v3144 = vsel %vm1928, %v2993, 0
        %v3147 = vsel %vm2028, %v3142, 0
        %3149 = vmatpush.bf16.msra.mxu0 0
        %3150 = vmatpush.bf16.msra.mxu0 0
        %3151 = vmatpush.bf16.msra.mxu0 0
        %3152 = vmatpush.bf16.msra.mxu0 0
        %3153 = vmatpush.bf16.msra.mxu0 0
        %3154 = vmatpush.bf16.msra.mxu0 0
        %3155 = vmatpush.bf16.msra.mxu0 0
        %3156 = vmatpush.bf16.msra.mxu0 %v3147
        %3157 = vmatmul.bf16.gmra.mxu0 %v3144
        %v3158 = vpop.f32.mrf.mxu0
        %v3159 = vadd.f32 0.0, %v3158
        %v3160 = vpop.f32.mrf.mxu0
        %3161 = vdwg.mxu0
        %v3162 = vpack.c.bf16 %v3012, %v3012
        %v3163 = vpack.c.bf16 %v3033, %v3033
        %v3164 = vpack.c.bf16 %v3054, %v3054
        %v3165 = vpack.c.bf16 %v3075, %v3075
        %v3166 = vpack.c.bf16 %v3096, %v3096
        %v3167 = vpack.c.bf16 %v3117, %v3117
        %v3168 = vpack.c.bf16 %v3138, %v3138
        %v3169 = vpack.c.bf16 %v3159, %v3159
        %3170 = vrot.lane.b32.xlu0 %v2188, 32
        %v3171 = vpop.permute.xlu0 %3170
        %3172 = vrot.lane.b32.xlu0 %v2193, 32
        %v3173 = vpop.permute.xlu0 %3172
        %v3175 = vsel %vm1775, %v3171, 0
        %v3178 = vsel %vm1775, %v3173, 0
        %3180 = vmatpush.bf16.xpose.msra.mxu0 0
        %3181 = vmatpush.bf16.xpose.msra.mxu0 0
        %3182 = vmatpush.bf16.xpose.msra.mxu0 0
        %3183 = vmatpush.bf16.xpose.msra.mxu0 0
        %3184 = vmatpush.bf16.xpose.msra.mxu0 0
        %3185 = vmatpush.bf16.xpose.msra.mxu0 0
        %3186 = vmatpush.bf16.xpose.msra.mxu0 0
        %3187 = vmatpush.bf16.xpose.msra.mxu0 %v3178
        %3188 = vmatmul.bf16.gmra.mxu0 %v3175
        %v3189 = vpop.f32.mrf.mxu0
        %v3190 = vadd.f32 0.0, %v3189
        %v3191 = vpop.f32.mrf.mxu0
        %3192 = vdwg.mxu0
        %3193 = vrot.lane.b32.xlu0 %v2217, 32
        %v3194 = vpop.permute.xlu0 %3193
        %3195 = vrot.lane.b32.xlu0 %v2222, 32
        %v3196 = vpop.permute.xlu0 %3195
        %v3198 = vsel %vm1775, %v3194, 0
        %v3201 = vsel %vm1775, %v3196, 0
        %3203 = vmatpush.bf16.xpose.msra.mxu0 0
        %3204 = vmatpush.bf16.xpose.msra.mxu0 0
        %3205 = vmatpush.bf16.xpose.msra.mxu0 0
        %3206 = vmatpush.bf16.xpose.msra.mxu0 0
        %3207 = vmatpush.bf16.xpose.msra.mxu0 0
        %3208 = vmatpush.bf16.xpose.msra.mxu0 0
        %3209 = vmatpush.bf16.xpose.msra.mxu0 0
        %3210 = vmatpush.bf16.xpose.msra.mxu0 %v3201
        %3211 = vmatmul.bf16.gmra.mxu0 %v3198
        %v3212 = vpop.f32.mrf.mxu0
        %v3213 = vadd.f32 0.0, %v3212
        %v3214 = vpop.f32.mrf.mxu0
        %3215 = vdwg.mxu0
        %3216 = vrot.lane.b32.xlu0 %v2246, 32
        %v3217 = vpop.permute.xlu0 %3216
        %3218 = vrot.lane.b32.xlu0 %v2251, 32
        %v3219 = vpop.permute.xlu0 %3218
        %v3221 = vsel %vm1775, %v3217, 0
        %v3224 = vsel %vm1775, %v3219, 0
        %3226 = vmatpush.bf16.xpose.msra.mxu0 0
        %3227 = vmatpush.bf16.xpose.msra.mxu0 0
        %3228 = vmatpush.bf16.xpose.msra.mxu0 0
        %3229 = vmatpush.bf16.xpose.msra.mxu0 0
        %3230 = vmatpush.bf16.xpose.msra.mxu0 0
        %3231 = vmatpush.bf16.xpose.msra.mxu0 0
        %3232 = vmatpush.bf16.xpose.msra.mxu0 0
        %3233 = vmatpush.bf16.xpose.msra.mxu0 %v3224
        %3234 = vmatmul.bf16.gmra.mxu0 %v3221
        %v3235 = vpop.f32.mrf.mxu0
        %v3236 = vadd.f32 0.0, %v3235
        %v3237 = vpop.f32.mrf.mxu0
        %3238 = vdwg.mxu0
        %3239 = vrot.lane.b32.xlu0 %v2275, 32
        %v3240 = vpop.permute.xlu0 %3239
        %3241 = vrot.lane.b32.xlu0 %v2280, 32
        %v3242 = vpop.permute.xlu0 %3241
        %v3244 = vsel %vm1775, %v3240, 0
        %v3247 = vsel %vm1775, %v3242, 0
        %3249 = vmatpush.bf16.xpose.msra.mxu0 0
        %3250 = vmatpush.bf16.xpose.msra.mxu0 0
        %3251 = vmatpush.bf16.xpose.msra.mxu0 0
        %3252 = vmatpush.bf16.xpose.msra.mxu0 0
        %3253 = vmatpush.bf16.xpose.msra.mxu0 0
        %3254 = vmatpush.bf16.xpose.msra.mxu0 0
        %3255 = vmatpush.bf16.xpose.msra.mxu0 0
        %3256 = vmatpush.bf16.xpose.msra.mxu0 %v3247
        %3257 = vmatmul.bf16.gmra.mxu0 %v3244
        %v3258 = vpop.f32.mrf.mxu0
        %v3259 = vadd.f32 0.0, %v3258
        %v3260 = vpop.f32.mrf.mxu0
        %3261 = vdwg.mxu0
        %3262 = vrot.lane.b32.xlu0 %v2304, 32
        %v3263 = vpop.permute.xlu0 %3262
        %3264 = vrot.lane.b32.xlu0 %v2309, 32
        %v3265 = vpop.permute.xlu0 %3264
        %v3267 = vsel %vm1775, %v3263, 0
        %v3270 = vsel %vm1775, %v3265, 0
        %3272 = vmatpush.bf16.xpose.msra.mxu0 0
        %3273 = vmatpush.bf16.xpose.msra.mxu0 0
        %3274 = vmatpush.bf16.xpose.msra.mxu0 0
        %3275 = vmatpush.bf16.xpose.msra.mxu0 0
        %3276 = vmatpush.bf16.xpose.msra.mxu0 0
        %3277 = vmatpush.bf16.xpose.msra.mxu0 0
        %3278 = vmatpush.bf16.xpose.msra.mxu0 0
        %3279 = vmatpush.bf16.xpose.msra.mxu0 %v3270
        %3280 = vmatmul.bf16.gmra.mxu0 %v3267
        %v3281 = vpop.f32.mrf.mxu0
        %v3282 = vadd.f32 0.0, %v3281
        %v3283 = vpop.f32.mrf.mxu0
        %3284 = vdwg.mxu0
        %3285 = vrot.lane.b32.xlu0 %v2333, 32
        %v3286 = vpop.permute.xlu0 %3285
        %3287 = vrot.lane.b32.xlu0 %v2338, 32
        %v3288 = vpop.permute.xlu0 %3287
        %v3290 = vsel %vm1775, %v3286, 0
        %v3293 = vsel %vm1775, %v3288, 0
        %3295 = vmatpush.bf16.xpose.msra.mxu0 0
        %3296 = vmatpush.bf16.xpose.msra.mxu0 0
        %3297 = vmatpush.bf16.xpose.msra.mxu0 0
        %3298 = vmatpush.bf16.xpose.msra.mxu0 0
        %3299 = vmatpush.bf16.xpose.msra.mxu0 0
        %3300 = vmatpush.bf16.xpose.msra.mxu0 0
        %3301 = vmatpush.bf16.xpose.msra.mxu0 0
        %3302 = vmatpush.bf16.xpose.msra.mxu0 %v3293
        %3303 = vmatmul.bf16.gmra.mxu0 %v3290
        %v3304 = vpop.f32.mrf.mxu0
        %v3305 = vadd.f32 0.0, %v3304
        %v3306 = vpop.f32.mrf.mxu0
        %3307 = vdwg.mxu0
        %3308 = vrot.lane.b32.xlu0 %v2362, 32
        %v3309 = vpop.permute.xlu0 %3308
        %3310 = vrot.lane.b32.xlu0 %v2367, 32
        %v3311 = vpop.permute.xlu0 %3310
        %v3313 = vsel %vm1775, %v3309, 0
        %v3316 = vsel %vm1775, %v3311, 0
        %3318 = vmatpush.bf16.xpose.msra.mxu0 0
        %3319 = vmatpush.bf16.xpose.msra.mxu0 0
        %3320 = vmatpush.bf16.xpose.msra.mxu0 0
        %3321 = vmatpush.bf16.xpose.msra.mxu0 0
        %3322 = vmatpush.bf16.xpose.msra.mxu0 0
        %3323 = vmatpush.bf16.xpose.msra.mxu0 0
        %3324 = vmatpush.bf16.xpose.msra.mxu0 0
        %3325 = vmatpush.bf16.xpose.msra.mxu0 %v3316
        %3326 = vmatmul.bf16.gmra.mxu0 %v3313
        %v3327 = vpop.f32.mrf.mxu0
        %v3328 = vadd.f32 0.0, %v3327
        %v3329 = vpop.f32.mrf.mxu0
        %3330 = vdwg.mxu0
        %3331 = vrot.lane.b32.xlu0 %v2391, 32
        %v3332 = vpop.permute.xlu0 %3331
        %3333 = vrot.lane.b32.xlu0 %v2396, 32
        %v3334 = vpop.permute.xlu0 %3333
        %v3336 = vsel %vm1775, %v3332, 0
        %v3339 = vsel %vm1775, %v3334, 0
        %3341 = vmatpush.bf16.xpose.msra.mxu0 0
        %3342 = vmatpush.bf16.xpose.msra.mxu0 0
        %3343 = vmatpush.bf16.xpose.msra.mxu0 0
        %3344 = vmatpush.bf16.xpose.msra.mxu0 0
        %3345 = vmatpush.bf16.xpose.msra.mxu0 0
        %3346 = vmatpush.bf16.xpose.msra.mxu0 0
        %3347 = vmatpush.bf16.xpose.msra.mxu0 0
        %3348 = vmatpush.bf16.xpose.msra.mxu0 %v3339
        %3349 = vmatmul.bf16.gmra.mxu0 %v3336
        %v3350 = vpop.f32.mrf.mxu0
        %v3351 = vadd.f32 0.0, %v3350
        %v3352 = vpop.f32.mrf.mxu0
        %3353 = vdwg.mxu0
        %v3354 = vsel %vm1928, %v3190, -inf
        %3355 = vmax.xlane.f32.xlu0 %v3354
        %v3356 = vpop.xlane.xlu0 %3355
        %v3357 = vsel %vm1928, %v3213, -inf
        %3358 = vmax.xlane.f32.xlu0 %v3357
        %v3359 = vpop.xlane.xlu0 %3358
        %v3360 = vsel %vm1928, %v3236, -inf
        %3361 = vmax.xlane.f32.xlu0 %v3360
        %v3362 = vpop.xlane.xlu0 %3361
        %v3363 = vsel %vm1928, %v3259, -inf
        %3364 = vmax.xlane.f32.xlu0 %v3363
        %v3365 = vpop.xlane.xlu0 %3364
        %v3366 = vsel %vm1928, %v3282, -inf
        %3367 = vmax.xlane.f32.xlu0 %v3366
        %v3368 = vpop.xlane.xlu0 %3367
        %v3369 = vsel %vm1928, %v3305, -inf
        %3370 = vmax.xlane.f32.xlu0 %v3369
        %v3371 = vpop.xlane.xlu0 %3370
        %v3372 = vsel %vm1928, %v3328, -inf
        %3373 = vmax.xlane.f32.xlu0 %v3372
        %v3374 = vpop.xlane.xlu0 %3373
        %v3375 = vsel %vm1928, %v3351, -inf
        %3376 = vmax.xlane.f32.xlu0 %v3375
        %v3377 = vpop.xlane.xlu0 %3376
        %v3378 = vsub.f32 %v3190, %v3356
        %v3379 = vsub.f32 %v3213, %v3359
        %v3380 = vsub.f32 %v3236, %v3362
        %v3381 = vsub.f32 %v3259, %v3365
        %v3382 = vsub.f32 %v3282, %v3368
        %v3383 = vsub.f32 %v3305, %v3371
        %v3384 = vsub.f32 %v3328, %v3374
        %v3385 = vsub.f32 %v3351, %v3377
        %v3386 = vmul.f32 %v3378, 1.442695
        %v3387 = vpow.pop %v3386
        %v3388 = vmul.f32 %v3379, 1.442695
        %v3389 = vpow.pop %v3388
        %v3390 = vmul.f32 %v3380, 1.442695
        %v3391 = vpow.pop %v3390
        %v3392 = vmul.f32 %v3381, 1.442695
        %v3393 = vpow.pop %v3392
        %v3394 = vmul.f32 %v3382, 1.442695
        %v3395 = vpow.pop %v3394
        %v3396 = vmul.f32 %v3383, 1.442695
        %v3397 = vpow.pop %v3396
        %v3398 = vmul.f32 %v3384, 1.442695
        %v3399 = vpow.pop %v3398
        %v3400 = vmul.f32 %v3385, 1.442695
        %v3401 = vpow.pop %v3400
        %v3402 = vsel %vm1928, %v3387, 0.0
        %3403 = vadd.xlane.f32.xlu0 %v3402
        %v3404 = vpop.xlane.xlu0 %3403
        %v3405 = vsel %vm1928, %v3389, 0.0
        %3406 = vadd.xlane.f32.xlu0 %v3405
        %v3407 = vpop.xlane.xlu0 %3406
        %v3408 = vsel %vm1928, %v3391, 0.0
        %3409 = vadd.xlane.f32.xlu0 %v3408
        %v3410 = vpop.xlane.xlu0 %3409
        %v3411 = vsel %vm1928, %v3393, 0.0
        %3412 = vadd.xlane.f32.xlu0 %v3411
        %v3413 = vpop.xlane.xlu0 %3412
        %v3414 = vsel %vm1928, %v3395, 0.0
        %3415 = vadd.xlane.f32.xlu0 %v3414
        %v3416 = vpop.xlane.xlu0 %3415
        %v3417 = vsel %vm1928, %v3397, 0.0
        %3418 = vadd.xlane.f32.xlu0 %v3417
        %v3419 = vpop.xlane.xlu0 %3418
        %v3420 = vsel %vm1928, %v3399, 0.0
        %3421 = vadd.xlane.f32.xlu0 %v3420
        %v3422 = vpop.xlane.xlu0 %3421
        %v3423 = vsel %vm1928, %v3401, 0.0
        %3424 = vadd.xlane.f32.xlu0 %v3423
        %v3425 = vpop.xlane.xlu0 %3424
        %v3426 = vrcp.pop %v3404
        %v3427 = vrcp.pop %v3407
        %v3428 = vrcp.pop %v3410
        %v3429 = vrcp.pop %v3413
        %v3430 = vrcp.pop %v3416
        %v3431 = vrcp.pop %v3419
        %v3432 = vrcp.pop %v3422
        %v3433 = vrcp.pop %v3425
        %v3434 = vmul.f32 %v3387, %v3426
        %v3435 = vmul.f32 %v3389, %v3427
        %v3436 = vmul.f32 %v3391, %v3428
        %v3437 = vmul.f32 %v3393, %v3429
        %v3438 = vmul.f32 %v3395, %v3430
        %v3439 = vmul.f32 %v3397, %v3431
        %v3440 = vmul.f32 %v3399, %v3432
        %v3441 = vmul.f32 %v3401, %v3433
        %v3442 = vpack.c.bf16 %v3434, %v3434
        %v3443 = vpack.c.bf16 %v3435, %v3435
        %v3444 = vpack.c.bf16 %v3436, %v3436
        %v3445 = vpack.c.bf16 %v3437, %v3437
        %v3446 = vpack.c.bf16 %v3438, %v3438
        %v3447 = vpack.c.bf16 %v3439, %v3439
        %v3448 = vpack.c.bf16 %v3440, %v3440
        %v3449 = vpack.c.bf16 %v3441, %v3441
        %3450 = vrot.lane.b32.xlu0 %v2516, 32
        %v3451 = vpop.permute.xlu0 %3450
        %v3453 = vsel %vm1928, %v3442, 0
        %v3456 = vsel %vm2028, %v3451, 0
        %3458 = vmatpush.bf16.msra.mxu0 0
        %3459 = vmatpush.bf16.msra.mxu0 0
        %3460 = vmatpush.bf16.msra.mxu0 0
        %3461 = vmatpush.bf16.msra.mxu0 0
        %3462 = vmatpush.bf16.msra.mxu0 0
        %3463 = vmatpush.bf16.msra.mxu0 0
        %3464 = vmatpush.bf16.msra.mxu0 0
        %3465 = vmatpush.bf16.msra.mxu0 %v3456
        %3466 = vmatmul.bf16.gmra.mxu0 %v3453
        %v3467 = vpop.f32.mrf.mxu0
        %v3468 = vadd.f32 0.0, %v3467
        %v3469 = vpop.f32.mrf.mxu0
        %3470 = vdwg.mxu0
        %3471 = vrot.lane.b32.xlu0 %v2540, 32
        %v3472 = vpop.permute.xlu0 %3471
        %v3474 = vsel %vm1928, %v3443, 0
        %v3477 = vsel %vm2028, %v3472, 0
        %3479 = vmatpush.bf16.msra.mxu0 0
        %3480 = vmatpush.bf16.msra.mxu0 0
        %3481 = vmatpush.bf16.msra.mxu0 0
        %3482 = vmatpush.bf16.msra.mxu0 0
        %3483 = vmatpush.bf16.msra.mxu0 0
        %3484 = vmatpush.bf16.msra.mxu0 0
        %3485 = vmatpush.bf16.msra.mxu0 0
        %3486 = vmatpush.bf16.msra.mxu0 %v3477
        %3487 = vmatmul.bf16.gmra.mxu0 %v3474
        %v3488 = vpop.f32.mrf.mxu0
        %v3489 = vadd.f32 0.0, %v3488
        %v3490 = vpop.f32.mrf.mxu0
        %3491 = vdwg.mxu0
        %3492 = vrot.lane.b32.xlu0 %v2564, 32
        %v3493 = vpop.permute.xlu0 %3492
        %v3495 = vsel %vm1928, %v3444, 0
        %v3498 = vsel %vm2028, %v3493, 0
        %3500 = vmatpush.bf16.msra.mxu0 0
        %3501 = vmatpush.bf16.msra.mxu0 0
        %3502 = vmatpush.bf16.msra.mxu0 0
        %3503 = vmatpush.bf16.msra.mxu0 0
        %3504 = vmatpush.bf16.msra.mxu0 0
        %3505 = vmatpush.bf16.msra.mxu0 0
        %3506 = vmatpush.bf16.msra.mxu0 0
        %3507 = vmatpush.bf16.msra.mxu0 %v3498
        %3508 = vmatmul.bf16.gmra.mxu0 %v3495
        %v3509 = vpop.f32.mrf.mxu0
        %v3510 = vadd.f32 0.0, %v3509
        %v3511 = vpop.f32.mrf.mxu0
        %3512 = vdwg.mxu0
        %3513 = vrot.lane.b32.xlu0 %v2588, 32
        %v3514 = vpop.permute.xlu0 %3513
        %v3516 = vsel %vm1928, %v3445, 0
        %v3519 = vsel %vm2028, %v3514, 0
        %3521 = vmatpush.bf16.msra.mxu0 0
        %3522 = vmatpush.bf16.msra.mxu0 0
        %3523 = vmatpush.bf16.msra.mxu0 0
        %3524 = vmatpush.bf16.msra.mxu0 0
        %3525 = vmatpush.bf16.msra.mxu0 0
        %3526 = vmatpush.bf16.msra.mxu0 0
        %3527 = vmatpush.bf16.msra.mxu0 0
        %3528 = vmatpush.bf16.msra.mxu0 %v3519
        %3529 = vmatmul.bf16.gmra.mxu0 %v3516
        %v3530 = vpop.f32.mrf.mxu0
        %v3531 = vadd.f32 0.0, %v3530
        %v3532 = vpop.f32.mrf.mxu0
        %3533 = vdwg.mxu0
        %3534 = vrot.lane.b32.xlu0 %v2612, 32
        %v3535 = vpop.permute.xlu0 %3534
        %v3537 = vsel %vm1928, %v3446, 0
        %v3540 = vsel %vm2028, %v3535, 0
        %3542 = vmatpush.bf16.msra.mxu0 0
        %3543 = vmatpush.bf16.msra.mxu0 0
        %3544 = vmatpush.bf16.msra.mxu0 0
        %3545 = vmatpush.bf16.msra.mxu0 0
        %3546 = vmatpush.bf16.msra.mxu0 0
        %3547 = vmatpush.bf16.msra.mxu0 0
        %3548 = vmatpush.bf16.msra.mxu0 0
        %3549 = vmatpush.bf16.msra.mxu0 %v3540
        %3550 = vmatmul.bf16.gmra.mxu0 %v3537
        %v3551 = vpop.f32.mrf.mxu0
        %v3552 = vadd.f32 0.0, %v3551
        %v3553 = vpop.f32.mrf.mxu0
        %3554 = vdwg.mxu0
        %3555 = vrot.lane.b32.xlu0 %v2636, 32
        %v3556 = vpop.permute.xlu0 %3555
        %v3558 = vsel %vm1928, %v3447, 0
        %v3561 = vsel %vm2028, %v3556, 0
        %3563 = vmatpush.bf16.msra.mxu0 0
        %3564 = vmatpush.bf16.msra.mxu0 0
        %3565 = vmatpush.bf16.msra.mxu0 0
        %3566 = vmatpush.bf16.msra.mxu0 0
        %3567 = vmatpush.bf16.msra.mxu0 0
        %3568 = vmatpush.bf16.msra.mxu0 0
        %3569 = vmatpush.bf16.msra.mxu0 0
        %3570 = vmatpush.bf16.msra.mxu0 %v3561
        %3571 = vmatmul.bf16.gmra.mxu0 %v3558
        %v3572 = vpop.f32.mrf.mxu0
        %v3573 = vadd.f32 0.0, %v3572
        %v3574 = vpop.f32.mrf.mxu0
        %3575 = vdwg.mxu0
        %3576 = vrot.lane.b32.xlu0 %v2660, 32
        %v3577 = vpop.permute.xlu0 %3576
        %v3579 = vsel %vm1928, %v3448, 0
        %v3582 = vsel %vm2028, %v3577, 0
        %3584 = vmatpush.bf16.msra.mxu0 0
        %3585 = vmatpush.bf16.msra.mxu0 0
        %3586 = vmatpush.bf16.msra.mxu0 0
        %3587 = vmatpush.bf16.msra.mxu0 0
        %3588 = vmatpush.bf16.msra.mxu0 0
        %3589 = vmatpush.bf16.msra.mxu0 0
        %3590 = vmatpush.bf16.msra.mxu0 0
        %3591 = vmatpush.bf16.msra.mxu0 %v3582
        %3592 = vmatmul.bf16.gmra.mxu0 %v3579
        %v3593 = vpop.f32.mrf.mxu0
        %v3594 = vadd.f32 0.0, %v3593
        %v3595 = vpop.f32.mrf.mxu0
        %3596 = vdwg.mxu0
        %3597 = vrot.lane.b32.xlu0 %v2684, 32
        %v3598 = vpop.permute.xlu0 %3597
        %v3600 = vsel %vm1928, %v3449, 0
        %v3603 = vsel %vm2028, %v3598, 0
        %3605 = vmatpush.bf16.msra.mxu0 0
        %3606 = vmatpush.bf16.msra.mxu0 0
        %3607 = vmatpush.bf16.msra.mxu0 0
        %3608 = vmatpush.bf16.msra.mxu0 0
        %3609 = vmatpush.bf16.msra.mxu0 0
        %3610 = vmatpush.bf16.msra.mxu0 0
        %3611 = vmatpush.bf16.msra.mxu0 0
        %3612 = vmatpush.bf16.msra.mxu0 %v3603
        %3613 = vmatmul.bf16.gmra.mxu0 %v3600
        %v3614 = vpop.f32.mrf.mxu0
        %v3615 = vadd.f32 0.0, %v3614
        %v3616 = vpop.f32.mrf.mxu0
        %3617 = vdwg.mxu0
        %v3618 = vpack.c.bf16 %v3468, %v3468
        %v3619 = vpack.c.bf16 %v3489, %v3489
        %v3620 = vpack.c.bf16 %v3510, %v3510
        %v3621 = vpack.c.bf16 %v3531, %v3531
        %v3622 = vpack.c.bf16 %v3552, %v3552
        %v3623 = vpack.c.bf16 %v3573, %v3573
        %v3624 = vpack.c.bf16 %v3594, %v3594
        %v3625 = vpack.c.bf16 %v3615, %v3615
        %v3634 = vunpack.c.l.b16 %v2706
        %v3635 = vunpack.c.l.b16 %v2707
        %v3636 = vunpack.c.l.b16 %v2708
        %v3637 = vunpack.c.l.b16 %v2709
        %v3638 = vunpack.c.l.b16 %v2710
        %v3639 = vunpack.c.l.b16 %v2711
        %v3640 = vunpack.c.l.b16 %v2712
        %v3641 = vunpack.c.l.b16 %v2713
        %v3642 = vpack.c.b16 %v3634, %v3634
        %v3643 = vpack.c.b16 %v3635, %v3635
        %v3644 = vpack.c.b16 %v3636, %v3636
        %v3645 = vpack.c.b16 %v3637, %v3637
        %v3646 = vpack.c.b16 %v3638, %v3638
        %v3647 = vpack.c.b16 %v3639, %v3639
        %v3648 = vpack.c.b16 %v3640, %v3640
        %v3649 = vpack.c.b16 %v3641, %v3641
        %3650 = vrot.lane.b32.xlu0 %v3642, 32
        %v3651 = vpop.permute.xlu0 %3650
        %3652 = vrot.lane.b32.xlu0 %v3643, 32
        %v3653 = vpop.permute.xlu0 %3652
        %3654 = vrot.lane.b32.xlu0 %v3644, 32
        %v3655 = vpop.permute.xlu0 %3654
        %3656 = vrot.lane.b32.xlu0 %v3645, 32
        %v3657 = vpop.permute.xlu0 %3656
        %3658 = vrot.lane.b32.xlu0 %v3646, 32
        %v3659 = vpop.permute.xlu0 %3658
        %3660 = vrot.lane.b32.xlu0 %v3647, 32
        %v3661 = vpop.permute.xlu0 %3660
        %3662 = vrot.lane.b32.xlu0 %v3648, 32
        %v3663 = vpop.permute.xlu0 %3662
        %3664 = vrot.lane.b32.xlu0 %v3649, 32
        %v3665 = vpop.permute.xlu0 %3664
        %v3674 = vunpack.c.l.b16 %v3162
        %v3675 = vunpack.c.l.b16 %v3163
        %v3676 = vunpack.c.l.b16 %v3164
        %v3677 = vunpack.c.l.b16 %v3165
        %v3678 = vunpack.c.l.b16 %v3166
        %v3679 = vunpack.c.l.b16 %v3167
        %v3680 = vunpack.c.l.b16 %v3168
        %v3681 = vunpack.c.l.b16 %v3169
        %v3682 = vpack.c.b16 %v3674, %v3674
        %v3683 = vpack.c.b16 %v3675, %v3675
        %v3684 = vpack.c.b16 %v3676, %v3676
        %v3685 = vpack.c.b16 %v3677, %v3677
        %v3686 = vpack.c.b16 %v3678, %v3678
        %v3687 = vpack.c.b16 %v3679, %v3679
        %v3688 = vpack.c.b16 %v3680, %v3680
        %v3689 = vpack.c.b16 %v3681, %v3681
        %3690 = vrot.lane.b32.xlu0 %v3682, 64
        %v3691 = vpop.permute.xlu0 %3690
        %3692 = vrot.lane.b32.xlu0 %v3683, 64
        %v3693 = vpop.permute.xlu0 %3692
        %3694 = vrot.lane.b32.xlu0 %v3684, 64
        %v3695 = vpop.permute.xlu0 %3694
        %3696 = vrot.lane.b32.xlu0 %v3685, 64
        %v3697 = vpop.permute.xlu0 %3696
        %3698 = vrot.lane.b32.xlu0 %v3686, 64
        %v3699 = vpop.permute.xlu0 %3698
        %3700 = vrot.lane.b32.xlu0 %v3687, 64
        %v3701 = vpop.permute.xlu0 %3700
        %3702 = vrot.lane.b32.xlu0 %v3688, 64
        %v3703 = vpop.permute.xlu0 %3702
        %3704 = vrot.lane.b32.xlu0 %v3689, 64
        %v3705 = vpop.permute.xlu0 %3704
        %v3714 = vunpack.c.l.b16 %v3618
        %v3715 = vunpack.c.l.b16 %v3619
        %v3716 = vunpack.c.l.b16 %v3620
        %v3717 = vunpack.c.l.b16 %v3621
        %v3718 = vunpack.c.l.b16 %v3622
        %v3719 = vunpack.c.l.b16 %v3623
        %v3720 = vunpack.c.l.b16 %v3624
        %v3721 = vunpack.c.l.b16 %v3625
        %v3722 = vpack.c.b16 %v3714, %v3714
        %v3723 = vpack.c.b16 %v3715, %v3715
        %v3724 = vpack.c.b16 %v3716, %v3716
        %v3725 = vpack.c.b16 %v3717, %v3717
        %v3726 = vpack.c.b16 %v3718, %v3718
        %v3727 = vpack.c.b16 %v3719, %v3719
        %v3728 = vpack.c.b16 %v3720, %v3720
        %v3729 = vpack.c.b16 %v3721, %v3721
        %3730 = vrot.lane.b32.xlu0 %v3722, 96
        %v3731 = vpop.permute.xlu0 %3730
        %3732 = vrot.lane.b32.xlu0 %v3723, 96
        %v3733 = vpop.permute.xlu0 %3732
        %3734 = vrot.lane.b32.xlu0 %v3724, 96
        %v3735 = vpop.permute.xlu0 %3734
        %3736 = vrot.lane.b32.xlu0 %v3725, 96
        %v3737 = vpop.permute.xlu0 %3736
        %3738 = vrot.lane.b32.xlu0 %v3726, 96
        %v3739 = vpop.permute.xlu0 %3738
        %3740 = vrot.lane.b32.xlu0 %v3727, 96
        %v3741 = vpop.permute.xlu0 %3740
        %3742 = vrot.lane.b32.xlu0 %v3728, 96
        %v3743 = vpop.permute.xlu0 %3742
        %3744 = vrot.lane.b32.xlu0 %v3729, 96
        %v3745 = vpop.permute.xlu0 %3744
        %v3748 = vsel %vm1775, %v2178, %v3651
        %v3751 = vsel %vm1775, %v2179, %v3653
        %v3754 = vsel %vm1775, %v2180, %v3655
        %v3757 = vsel %vm1775, %v2181, %v3657
        %v3760 = vsel %vm1775, %v2182, %v3659
        %v3763 = vsel %vm1775, %v2183, %v3661
        %v3766 = vsel %vm1775, %v2184, %v3663
        %v3769 = vsel %vm1775, %v2185, %v3665
        %vm3770 = vcmask 523264
        %v3772 = vsel %vm3770, %v3748, %v3691
        %v3774 = vsel %vm3770, %v3751, %v3693
        %v3776 = vsel %vm3770, %v3754, %v3695
        %v3778 = vsel %vm3770, %v3757, %v3697
        %v3780 = vsel %vm3770, %v3760, %v3699
        %v3782 = vsel %vm3770, %v3763, %v3701
        %v3784 = vsel %vm3770, %v3766, %v3703
        %v3786 = vsel %vm3770, %v3769, %v3705
        %vm3787 = vcmask 785408
        %v3789 = vsel %vm3787, %v3772, %v3731
        %v3791 = vsel %vm3787, %v3774, %v3733
        %v3793 = vsel %vm3787, %v3776, %v3735
        %v3795 = vsel %vm3787, %v3778, %v3737
        %v3797 = vsel %vm3787, %v3780, %v3739
        %v3799 = vsel %vm3787, %v3782, %v3741
        %v3801 = vsel %vm3787, %v3784, %v3743
        %v3803 = vsel %vm3787, %v3786, %v3745
        %v3804 = vld [vmem:[#allocation9] sm:$0xf]
        %v3805 = vld [vmem:[#allocation9 + $0x4] sm:$0xf]
        %v3806 = vld [vmem:[#allocation9 + $0x8] sm:$0xf]
        %v3807 = vld [vmem:[#allocation9 + $0xc] sm:$0xf]
        %v3808 = vld [vmem:[#allocation9 + $0x10] sm:$0xf]
        %v3809 = vld [vmem:[#allocation9 + $0x14] sm:$0xf]
        %v3810 = vld [vmem:[#allocation9 + $0x18] sm:$0xf]
        %v3811 = vld [vmem:[#allocation9 + $0x1c] sm:$0xf]
        %v3812 = vld [vmem:[#allocation9 + $0x20] sm:$0xf]
        %v3813 = vld [vmem:[#allocation9 + $0x24] sm:$0xf]
        %v3814 = vld [vmem:[#allocation9 + $0x28] sm:$0xf]
        %v3815 = vld [vmem:[#allocation9 + $0x2c] sm:$0xf]
        %v3816 = vld [vmem:[#allocation9 + $0x30] sm:$0xf]
        %v3817 = vld [vmem:[#allocation9 + $0x34] sm:$0xf]
        %v3818 = vld [vmem:[#allocation9 + $0x38] sm:$0xf]
        %v3819 = vld [vmem:[#allocation9 + $0x3c] sm:$0xf]
        %v3820 = vld [vmem:[#allocation11] sm:$0x1]
        %v3822 = vperm.slane %v3820, 0
        %v3832 = vunpack.c.l.b16 %v3789
        %v3833 = vunpack.c.l.b16 %v3791
        %v3834 = vunpack.c.l.b16 %v3793
        %v3835 = vunpack.c.l.b16 %v3795
        %v3836 = vunpack.c.l.b16 %v3797
        %v3837 = vunpack.c.l.b16 %v3799
        %v3838 = vunpack.c.l.b16 %v3801
        %v3839 = vunpack.c.l.b16 %v3803
        %v3840 = vpack.c.b16 %v3833, %v3832
        %v3841 = vpack.c.b16 %v3835, %v3834
        %v3842 = vpack.c.b16 %v3837, %v3836
        %v3843 = vpack.c.b16 %v3839, %v3838
        %v3864 = vunpack.c.l.b16 %v3804
        %v3865 = vunpack.c.l.b16 %v3805
        %v3866 = vunpack.c.l.b16 %v3806
        %v3867 = vunpack.c.l.b16 %v3807
        %v3868 = vunpack.c.l.b16 %v3808
        %v3869 = vunpack.c.l.b16 %v3809
        %v3870 = vunpack.c.l.b16 %v3810
        %v3871 = vunpack.c.l.b16 %v3811
        %v3872 = vunpack.c.l.b16 %v3812
        %v3873 = vunpack.c.l.b16 %v3813
        %v3874 = vunpack.c.l.b16 %v3814
        %v3875 = vunpack.c.l.b16 %v3815
        %v3876 = vunpack.c.l.b16 %v3816
        %v3877 = vunpack.c.l.b16 %v3817
        %v3878 = vunpack.c.l.b16 %v3818
        %v3879 = vunpack.c.l.b16 %v3819
        %v3880 = vpack.c.b16 %v3865, %v3864
        %v3881 = vpack.c.b16 %v3867, %v3866
        %v3882 = vpack.c.b16 %v3869, %v3868
        %v3883 = vpack.c.b16 %v3871, %v3870
        %v3884 = vpack.c.b16 %v3873, %v3872
        %v3885 = vpack.c.b16 %v3875, %v3874
        %v3886 = vpack.c.b16 %v3877, %v3876
        %v3887 = vpack.c.b16 %v3879, %v3878
        %3896 = vmatpush.bf16.msra.mxu0 %v3887
        %3897 = vmatpush.bf16.msra.mxu0 %v3886
        %3898 = vmatpush.bf16.msra.mxu0 %v3885
        %3899 = vmatpush.bf16.msra.mxu0 %v3884
        %3900 = vmatpush.bf16.msra.mxu0 %v3883
        %3901 = vmatpush.bf16.msra.mxu0 %v3882
        %3902 = vmatpush.bf16.msra.mxu0 %v3881
        %3903 = vmatpush.bf16.msra.mxu0 %v3880
        %3904 = vmatmul.bf16.gmra.mxu0 %v3840
        %v3905 = vpop.f32.mrf.mxu0
        %v3906 = vadd.f32 %v3822, %v3905
        %v3907 = vpop.f32.mrf.mxu0
        %v3908 = vadd.f32 %v3822, %v3907
        %3909 = vmatmul.bf16.gmra.mxu0 %v3841
        %v3910 = vpop.f32.mrf.mxu0
        %v3911 = vadd.f32 %v3822, %v3910
        %v3912 = vpop.f32.mrf.mxu0
        %v3913 = vadd.f32 %v3822, %v3912
        %3914 = vmatmul.bf16.gmra.mxu0 %v3842
        %v3915 = vpop.f32.mrf.mxu0
        %v3916 = vadd.f32 %v3822, %v3915
        %v3917 = vpop.f32.mrf.mxu0
        %v3918 = vadd.f32 %v3822, %v3917
        %3919 = vmatmul.bf16.gmra.mxu0 %v3843
        %v3920 = vpop.f32.mrf.mxu0
        %v3921 = vadd.f32 %v3822, %v3920
        %v3922 = vpop.f32.mrf.mxu0
        %v3923 = vadd.f32 %v3822, %v3922
        %3924 = vdwg.mxu0
        %v3925 = vadd.f32 %v833, %v3906
        %v3926 = vadd.f32 %v856, %v3908
        %v3927 = vadd.f32 %v879, %v3911
        %v3928 = vadd.f32 %v902, %v3913
        %v3929 = vadd.f32 %v925, %v3916
        %v3930 = vadd.f32 %v948, %v3918
        %v3931 = vadd.f32 %v971, %v3921
        %v3932 = vadd.f32 %v994, %v3923
        %v3933 = vpack.c.bf16 %v3926, %v3925
        %v3934 = vpack.c.bf16 %v3928, %v3927
        %v3935 = vpack.c.bf16 %v3930, %v3929
        %v3936 = vpack.c.bf16 %v3932, %v3931
        %v3937 = vld [vmem:[#allocation12] sm:$0xf]
        %v3938 = vld [vmem:[#allocation12 + $0x4] sm:$0xf]
        %v3939 = vld [vmem:[#allocation12 + $0x8] sm:$0xf]
        %v3940 = vld [vmem:[#allocation12 + $0xc] sm:$0xf]
        %v3941 = vld [vmem:[#allocation12 + $0x10] sm:$0xf]
        %v3942 = vld [vmem:[#allocation12 + $0x14] sm:$0xf]
        %v3943 = vld [vmem:[#allocation12 + $0x18] sm:$0xf]
        %v3944 = vld [vmem:[#allocation12 + $0x1c] sm:$0xf]
        %v3945 = vld [vmem:[#allocation12 + $0x20] sm:$0xf]
        %v3946 = vld [vmem:[#allocation12 + $0x24] sm:$0xf]
        %v3947 = vld [vmem:[#allocation12 + $0x28] sm:$0xf]
        %v3948 = vld [vmem:[#allocation12 + $0x2c] sm:$0xf]
        %v3949 = vld [vmem:[#allocation12 + $0x30] sm:$0xf]
        %v3950 = vld [vmem:[#allocation12 + $0x34] sm:$0xf]
        %v3951 = vld [vmem:[#allocation12 + $0x38] sm:$0xf]
        %v3952 = vld [vmem:[#allocation12 + $0x3c] sm:$0xf]
        %v3953 = vld [vmem:[%s7] sm:$0x1]
        %v3955 = vperm.slane %v3953, 0
        %v3973 = vunpack.c.l.b16 %v3937
        %v3974 = vunpack.c.l.b16 %v3938
        %v3975 = vunpack.c.l.b16 %v3939
        %v3976 = vunpack.c.l.b16 %v3940
        %v3977 = vunpack.c.l.b16 %v3941
        %v3978 = vunpack.c.l.b16 %v3942
        %v3979 = vunpack.c.l.b16 %v3943
        %v3980 = vunpack.c.l.b16 %v3944
        %v3981 = vunpack.c.l.b16 %v3945
        %v3982 = vunpack.c.l.b16 %v3946
        %v3983 = vunpack.c.l.b16 %v3947
        %v3984 = vunpack.c.l.b16 %v3948
        %v3985 = vunpack.c.l.b16 %v3949
        %v3986 = vunpack.c.l.b16 %v3950
        %v3987 = vunpack.c.l.b16 %v3951
        %v3988 = vunpack.c.l.b16 %v3952
        %v3989 = vpack.c.b16 %v3974, %v3973
        %v3990 = vpack.c.b16 %v3976, %v3975
        %v3991 = vpack.c.b16 %v3978, %v3977
        %v3992 = vpack.c.b16 %v3980, %v3979
        %v3993 = vpack.c.b16 %v3982, %v3981
        %v3994 = vpack.c.b16 %v3984, %v3983
        %v3995 = vpack.c.b16 %v3986, %v3985
        %v3996 = vpack.c.b16 %v3988, %v3987
        %4005 = vmatpush.bf16.msra.mxu0 %v3996
        %4006 = vmatpush.bf16.msra.mxu0 %v3995
        %4007 = vmatpush.bf16.msra.mxu0 %v3994
        %4008 = vmatpush.bf16.msra.mxu0 %v3993
        %4009 = vmatpush.bf16.msra.mxu0 %v3992
        %4010 = vmatpush.bf16.msra.mxu0 %v3991
        %4011 = vmatpush.bf16.msra.mxu0 %v3990
        %4012 = vmatpush.bf16.msra.mxu0 %v3989
        %4013 = vmatmul.bf16.gmra.mxu0 %v3933
        %v4014 = vpop.f32.mrf.mxu0
        %v4015 = vadd.f32 %v3955, %v4014
        %v4016 = vpop.f32.mrf.mxu0
        %v4017 = vadd.f32 %v3955, %v4016
        %4018 = vmatmul.bf16.gmra.mxu0 %v3934
        %v4019 = vpop.f32.mrf.mxu0
        %v4020 = vadd.f32 %v3955, %v4019
        %v4021 = vpop.f32.mrf.mxu0
        %v4022 = vadd.f32 %v3955, %v4021
        %4023 = vmatmul.bf16.gmra.mxu0 %v3935
        %v4024 = vpop.f32.mrf.mxu0
        %v4025 = vadd.f32 %v3955, %v4024
        %v4026 = vpop.f32.mrf.mxu0
        %v4027 = vadd.f32 %v3955, %v4026
        %4028 = vmatmul.bf16.gmra.mxu0 %v3936
        %v4029 = vpop.f32.mrf.mxu0
        %v4030 = vadd.f32 %v3955, %v4029
        %v4031 = vpop.f32.mrf.mxu0
        %v4032 = vadd.f32 %v3955, %v4031
        %4033 = vdwg.mxu0
        %v4034 = vpack.c.bf16 %v4015, %v4015
        %v4035 = vpack.c.bf16 %v4017, %v4017
        %v4036 = vpack.c.bf16 %v4020, %v4020
        %v4037 = vpack.c.bf16 %v4022, %v4022
        %v4038 = vpack.c.bf16 %v4025, %v4025
        %v4039 = vpack.c.bf16 %v4027, %v4027
        %v4040 = vpack.c.bf16 %v4030, %v4030
        %v4041 = vpack.c.bf16 %v4032, %v4032
        %v4042 = vpack.c.bf16 %v1167, %v1153
        %v4043 = vpack.c.bf16 %v1213, %v1199
        %v4044 = vpack.c.bf16 %v1259, %v1245
        %v4045 = vpack.c.bf16 %v1305, %v1291
        %v4046 = vpack.c.bf16 %v1351, %v1337
        %v4047 = vpack.c.bf16 %v1397, %v1383
        %v4048 = vpack.c.bf16 %v1443, %v1429
        %v4049 = vpack.c.bf16 %v1489, %v1475
        %v4050 = vld [vmem:[#allocation14] sm:$0xff]
        %v4051 = vld [vmem:[#allocation14 + $0x8] sm:$0xff]
        %v4052 = vld [vmem:[#allocation14 + $0x10] sm:$0xff]
        %v4053 = vld [vmem:[#allocation14 + $0x18] sm:$0xff]
        %v4054 = vld [vmem:[#allocation14 + $0x20] sm:$0xff]
        %v4055 = vld [vmem:[#allocation14 + $0x28] sm:$0xff]
        %v4056 = vld [vmem:[#allocation14 + $0x30] sm:$0xff]
        %v4057 = vld [vmem:[#allocation14 + $0x38] sm:$0xff]
        %v4058 = vld [vmem:[#allocation14 + $0x40] sm:$0xff]
        %v4059 = vld [vmem:[#allocation14 + $0x48] sm:$0xff]
        %v4060 = vld [vmem:[#allocation14 + $0x50] sm:$0xff]
        %v4061 = vld [vmem:[#allocation14 + $0x58] sm:$0xff]
        %v4062 = vld [vmem:[#allocation14 + $0x60] sm:$0xff]
        %v4063 = vld [vmem:[#allocation14 + $0x68] sm:$0xff]
        %v4064 = vld [vmem:[#allocation14 + $0x70] sm:$0xff]
        %v4065 = vld [vmem:[#allocation14 + $0x78] sm:$0xff]
        %v4066 = vld [vmem:[%s9] sm:$0x3]
        %v4068 = vperm.slane %v4066, 0
        %v4069 = vperm.slane %v4066, 1
        %v4088 = vunpack.c.l.b16 %v4050
        %v4089 = vunpack.c.h.b16 %v4050
        %v4090 = vunpack.c.l.b16 %v4051
        %v4091 = vunpack.c.h.b16 %v4051
        %v4092 = vunpack.c.l.b16 %v4052
        %v4093 = vunpack.c.h.b16 %v4052
        %v4094 = vunpack.c.l.b16 %v4053
        %v4095 = vunpack.c.h.b16 %v4053
        %v4096 = vunpack.c.l.b16 %v4054
        %v4097 = vunpack.c.h.b16 %v4054
        %v4098 = vunpack.c.l.b16 %v4055
        %v4099 = vunpack.c.h.b16 %v4055
        %v4100 = vunpack.c.l.b16 %v4056
        %v4101 = vunpack.c.h.b16 %v4056
        %v4102 = vunpack.c.l.b16 %v4057
        %v4103 = vunpack.c.h.b16 %v4057
        %v4104 = vunpack.c.l.b16 %v4058
        %v4105 = vunpack.c.h.b16 %v4058
        %v4106 = vunpack.c.l.b16 %v4059
        %v4107 = vunpack.c.h.b16 %v4059
        %v4108 = vunpack.c.l.b16 %v4060
        %v4109 = vunpack.c.h.b16 %v4060
        %v4110 = vunpack.c.l.b16 %v4061
        %v4111 = vunpack.c.h.b16 %v4061
        %v4112 = vunpack.c.l.b16 %v4062
        %v4113 = vunpack.c.h.b16 %v4062
        %v4114 = vunpack.c.l.b16 %v4063
        %v4115 = vunpack.c.h.b16 %v4063
        %v4116 = vunpack.c.l.b16 %v4064
        %v4117 = vunpack.c.h.b16 %v4064
        %v4118 = vunpack.c.l.b16 %v4065
        %v4119 = vunpack.c.h.b16 %v4065
        %v4120 = vpack.c.b16 %v4090, %v4088
        %v4121 = vpack.c.b16 %v4091, %v4089
        %v4122 = vpack.c.b16 %v4094, %v4092
        %v4123 = vpack.c.b16 %v4095, %v4093
        %v4124 = vpack.c.b16 %v4098, %v4096
        %v4125 = vpack.c.b16 %v4099, %v4097
        %v4126 = vpack.c.b16 %v4102, %v4100
        %v4127 = vpack.c.b16 %v4103, %v4101
        %v4128 = vpack.c.b16 %v4106, %v4104
        %v4129 = vpack.c.b16 %v4107, %v4105
        %v4130 = vpack.c.b16 %v4110, %v4108
        %v4131 = vpack.c.b16 %v4111, %v4109
        %v4132 = vpack.c.b16 %v4114, %v4112
        %v4133 = vpack.c.b16 %v4115, %v4113
        %v4134 = vpack.c.b16 %v4118, %v4116
        %v4135 = vpack.c.b16 %v4119, %v4117
        %4152 = vmatpush.bf16.msra.mxu0 %v4134
        %4153 = vmatpush.bf16.msra.mxu0 %v4132
        %4154 = vmatpush.bf16.msra.mxu0 %v4130
        %4155 = vmatpush.bf16.msra.mxu0 %v4128
        %4156 = vmatpush.bf16.msra.mxu0 %v4126
        %4157 = vmatpush.bf16.msra.mxu0 %v4124
        %4158 = vmatpush.bf16.msra.mxu0 %v4122
        %4159 = vmatpush.bf16.msra.mxu0 %v4120
        %4160 = vmatmul.bf16.gmra.mxu0 %v4042
        %v4161 = vpop.f32.mrf.mxu0
        %v4162 = vadd.f32 %v4068, %v4161
        %v4163 = vpop.f32.mrf.mxu0
        %v4164 = vadd.f32 %v4068, %v4163
        %4165 = vmatmul.bf16.gmra.mxu0 %v4043
        %v4166 = vpop.f32.mrf.mxu0
        %v4167 = vadd.f32 %v4068, %v4166
        %v4168 = vpop.f32.mrf.mxu0
        %v4169 = vadd.f32 %v4068, %v4168
        %4170 = vmatmul.bf16.gmra.mxu0 %v4044
        %v4171 = vpop.f32.mrf.mxu0
        %v4172 = vadd.f32 %v4068, %v4171
        %v4173 = vpop.f32.mrf.mxu0
        %v4174 = vadd.f32 %v4068, %v4173
        %4175 = vmatmul.bf16.gmra.mxu0 %v4045
        %v4176 = vpop.f32.mrf.mxu0
        %v4177 = vadd.f32 %v4068, %v4176
        %v4178 = vpop.f32.mrf.mxu0
        %v4179 = vadd.f32 %v4068, %v4178
        %4180 = vmatmul.bf16.gmra.mxu0 %v4046
        %v4181 = vpop.f32.mrf.mxu0
        %v4182 = vadd.f32 %v4068, %v4181
        %v4183 = vpop.f32.mrf.mxu0
        %v4184 = vadd.f32 %v4068, %v4183
        %4185 = vmatmul.bf16.gmra.mxu0 %v4047
        %v4186 = vpop.f32.mrf.mxu0
        %v4187 = vadd.f32 %v4068, %v4186
        %v4188 = vpop.f32.mrf.mxu0
        %v4189 = vadd.f32 %v4068, %v4188
        %4190 = vmatmul.bf16.gmra.mxu0 %v4048
        %v4191 = vpop.f32.mrf.mxu0
        %v4192 = vadd.f32 %v4068, %v4191
        %v4193 = vpop.f32.mrf.mxu0
        %v4194 = vadd.f32 %v4068, %v4193
        %4195 = vmatmul.bf16.gmra.mxu0 %v4049
        %v4196 = vpop.f32.mrf.mxu0
        %v4197 = vadd.f32 %v4068, %v4196
        %v4198 = vpop.f32.mrf.mxu0
        %v4199 = vadd.f32 %v4068, %v4198
        %4200 = vdwg.mxu0
        %4201 = vmatpush.bf16.msra.mxu0 %v4135
        %4202 = vmatpush.bf16.msra.mxu0 %v4133
        %4203 = vmatpush.bf16.msra.mxu0 %v4131
        %4204 = vmatpush.bf16.msra.mxu0 %v4129
        %4205 = vmatpush.bf16.msra.mxu0 %v4127
        %4206 = vmatpush.bf16.msra.mxu0 %v4125
        %4207 = vmatpush.bf16.msra.mxu0 %v4123
        %4208 = vmatpush.bf16.msra.mxu0 %v4121
        %4209 = vmatmul.bf16.gmra.mxu0 %v4042
        %v4210 = vpop.f32.mrf.mxu0
        %v4211 = vadd.f32 %v4069, %v4210
        %v4212 = vpop.f32.mrf.mxu0
        %v4213 = vadd.f32 %v4069, %v4212
        %4214 = vmatmul.bf16.gmra.mxu0 %v4043
        %v4215 = vpop.f32.mrf.mxu0
        %v4216 = vadd.f32 %v4069, %v4215
        %v4217 = vpop.f32.mrf.mxu0
        %v4218 = vadd.f32 %v4069, %v4217
        %4219 = vmatmul.bf16.gmra.mxu0 %v4044
        %v4220 = vpop.f32.mrf.mxu0
        %v4221 = vadd.f32 %v4069, %v4220
        %v4222 = vpop.f32.mrf.mxu0
        %v4223 = vadd.f32 %v4069, %v4222
        %4224 = vmatmul.bf16.gmra.mxu0 %v4045
        %v4225 = vpop.f32.mrf.mxu0
        %v4226 = vadd.f32 %v4069, %v4225
        %v4227 = vpop.f32.mrf.mxu0
        %v4228 = vadd.f32 %v4069, %v4227
        %4229 = vmatmul.bf16.gmra.mxu0 %v4046
        %v4230 = vpop.f32.mrf.mxu0
        %v4231 = vadd.f32 %v4069, %v4230
        %v4232 = vpop.f32.mrf.mxu0
        %v4233 = vadd.f32 %v4069, %v4232
        %4234 = vmatmul.bf16.gmra.mxu0 %v4047
        %v4235 = vpop.f32.mrf.mxu0
        %v4236 = vadd.f32 %v4069, %v4235
        %v4237 = vpop.f32.mrf.mxu0
        %v4238 = vadd.f32 %v4069, %v4237
        %4239 = vmatmul.bf16.gmra.mxu0 %v4048
        %v4240 = vpop.f32.mrf.mxu0
        %v4241 = vadd.f32 %v4069, %v4240
        %v4242 = vpop.f32.mrf.mxu0
        %v4243 = vadd.f32 %v4069, %v4242
        %4244 = vmatmul.bf16.gmra.mxu0 %v4049
        %v4245 = vpop.f32.mrf.mxu0
        %v4246 = vadd.f32 %v4069, %v4245
        %v4247 = vpop.f32.mrf.mxu0
        %v4248 = vadd.f32 %v4069, %v4247
        %4249 = vdwg.mxu0
        %v4250 = vpack.c.bf16 %v4162, %v4162
        %v4251 = vpack.c.bf16 %v4164, %v4164
        %v4252 = vpack.c.bf16 %v4167, %v4167
        %v4253 = vpack.c.bf16 %v4169, %v4169
        %v4254 = vpack.c.bf16 %v4172, %v4172
        %v4255 = vpack.c.bf16 %v4174, %v4174
        %v4256 = vpack.c.bf16 %v4177, %v4177
        %v4257 = vpack.c.bf16 %v4179, %v4179
        %v4258 = vpack.c.bf16 %v4182, %v4182
        %v4259 = vpack.c.bf16 %v4184, %v4184
        %v4260 = vpack.c.bf16 %v4187, %v4187
        %v4261 = vpack.c.bf16 %v4189, %v4189
        %v4262 = vpack.c.bf16 %v4192, %v4192
        %v4263 = vpack.c.bf16 %v4194, %v4194
        %v4264 = vpack.c.bf16 %v4197, %v4197
        %v4265 = vpack.c.bf16 %v4199, %v4199
        %v4266 = vpack.c.bf16 %v4211, %v4211
        %v4267 = vpack.c.bf16 %v4213, %v4213
        %v4268 = vpack.c.bf16 %v4216, %v4216
        %v4269 = vpack.c.bf16 %v4218, %v4218
        %v4270 = vpack.c.bf16 %v4221, %v4221
        %v4271 = vpack.c.bf16 %v4223, %v4223
        %v4272 = vpack.c.bf16 %v4226, %v4226
        %v4273 = vpack.c.bf16 %v4228, %v4228
        %v4274 = vpack.c.bf16 %v4231, %v4231
        %v4275 = vpack.c.bf16 %v4233, %v4233
        %v4276 = vpack.c.bf16 %v4236, %v4236
        %v4277 = vpack.c.bf16 %v4238, %v4238
        %v4278 = vpack.c.bf16 %v4241, %v4241
        %v4279 = vpack.c.bf16 %v4243, %v4243
        %v4280 = vpack.c.bf16 %v4246, %v4246
        %v4281 = vpack.c.bf16 %v4248, %v4248
        %v4284 = vunpack.c.l.b16 %v4250
        %v4285 = vunpack.c.l.b16 %v4251
        %v4286 = vpack.c.b16 %v4285, %v4284
        %v4288 = vsel %vm1775, %v4034, 0
        %v4291 = vsel %vm1775, %v4286, 0
        %4293 = vmatpush.bf16.xpose.msra.mxu0 0
        %4294 = vmatpush.bf16.xpose.msra.mxu0 0
        %4295 = vmatpush.bf16.xpose.msra.mxu0 0
        %4296 = vmatpush.bf16.xpose.msra.mxu0 0
        %4297 = vmatpush.bf16.xpose.msra.mxu0 0
        %4298 = vmatpush.bf16.xpose.msra.mxu0 0
        %4299 = vmatpush.bf16.xpose.msra.mxu0 0
        %4300 = vmatpush.bf16.xpose.msra.mxu0 %v4291
        %4301 = vmatmul.bf16.gmra.mxu0 %v4288
        %v4302 = vpop.f32.mrf.mxu0
        %v4303 = vadd.f32 0.0, %v4302
        %v4304 = vpop.f32.mrf.mxu0
        %4305 = vdwg.mxu0
        %v4308 = vunpack.c.l.b16 %v4252
        %v4309 = vunpack.c.l.b16 %v4253
        %v4310 = vpack.c.b16 %v4309, %v4308
        %v4312 = vsel %vm1775, %v4035, 0
        %v4315 = vsel %vm1775, %v4310, 0
        %4317 = vmatpush.bf16.xpose.msra.mxu0 0
        %4318 = vmatpush.bf16.xpose.msra.mxu0 0
        %4319 = vmatpush.bf16.xpose.msra.mxu0 0
        %4320 = vmatpush.bf16.xpose.msra.mxu0 0
        %4321 = vmatpush.bf16.xpose.msra.mxu0 0
        %4322 = vmatpush.bf16.xpose.msra.mxu0 0
        %4323 = vmatpush.bf16.xpose.msra.mxu0 0
        %4324 = vmatpush.bf16.xpose.msra.mxu0 %v4315
        %4325 = vmatmul.bf16.gmra.mxu0 %v4312
        %v4326 = vpop.f32.mrf.mxu0
        %v4327 = vadd.f32 0.0, %v4326
        %v4328 = vpop.f32.mrf.mxu0
        %4329 = vdwg.mxu0
        %v4332 = vunpack.c.l.b16 %v4254
        %v4333 = vunpack.c.l.b16 %v4255
        %v4334 = vpack.c.b16 %v4333, %v4332
        %v4336 = vsel %vm1775, %v4036, 0
        %v4339 = vsel %vm1775, %v4334, 0
        %4341 = vmatpush.bf16.xpose.msra.mxu0 0
        %4342 = vmatpush.bf16.xpose.msra.mxu0 0
        %4343 = vmatpush.bf16.xpose.msra.mxu0 0
        %4344 = vmatpush.bf16.xpose.msra.mxu0 0
        %4345 = vmatpush.bf16.xpose.msra.mxu0 0
        %4346 = vmatpush.bf16.xpose.msra.mxu0 0
        %4347 = vmatpush.bf16.xpose.msra.mxu0 0
        %4348 = vmatpush.bf16.xpose.msra.mxu0 %v4339
        %4349 = vmatmul.bf16.gmra.mxu0 %v4336
        %v4350 = vpop.f32.mrf.mxu0
        %v4351 = vadd.f32 0.0, %v4350
        %v4352 = vpop.f32.mrf.mxu0
        %4353 = vdwg.mxu0
        %v4356 = vunpack.c.l.b16 %v4256
        %v4357 = vunpack.c.l.b16 %v4257
        %v4358 = vpack.c.b16 %v4357, %v4356
        %v4360 = vsel %vm1775, %v4037, 0
        %v4363 = vsel %vm1775, %v4358, 0
        %4365 = vmatpush.bf16.xpose.msra.mxu0 0
        %4366 = vmatpush.bf16.xpose.msra.mxu0 0
        %4367 = vmatpush.bf16.xpose.msra.mxu0 0
        %4368 = vmatpush.bf16.xpose.msra.mxu0 0
        %4369 = vmatpush.bf16.xpose.msra.mxu0 0
        %4370 = vmatpush.bf16.xpose.msra.mxu0 0
        %4371 = vmatpush.bf16.xpose.msra.mxu0 0
        %4372 = vmatpush.bf16.xpose.msra.mxu0 %v4363
        %4373 = vmatmul.bf16.gmra.mxu0 %v4360
        %v4374 = vpop.f32.mrf.mxu0
        %v4375 = vadd.f32 0.0, %v4374
        %v4376 = vpop.f32.mrf.mxu0
        %4377 = vdwg.mxu0
        %v4380 = vunpack.c.l.b16 %v4258
        %v4381 = vunpack.c.l.b16 %v4259
        %v4382 = vpack.c.b16 %v4381, %v4380
        %v4384 = vsel %vm1775, %v4038, 0
        %v4387 = vsel %vm1775, %v4382, 0
        %4389 = vmatpush.bf16.xpose.msra.mxu0 0
        %4390 = vmatpush.bf16.xpose.msra.mxu0 0
        %4391 = vmatpush.bf16.xpose.msra.mxu0 0
        %4392 = vmatpush.bf16.xpose.msra.mxu0 0
        %4393 = vmatpush.bf16.xpose.msra.mxu0 0
        %4394 = vmatpush.bf16.xpose.msra.mxu0 0
        %4395 = vmatpush.bf16.xpose.msra.mxu0 0
        %4396 = vmatpush.bf16.xpose.msra.mxu0 %v4387
        %4397 = vmatmul.bf16.gmra.mxu0 %v4384
        %v4398 = vpop.f32.mrf.mxu0
        %v4399 = vadd.f32 0.0, %v4398
        %v4400 = vpop.f32.mrf.mxu0
        %4401 = vdwg.mxu0
        %v4404 = vunpack.c.l.b16 %v4260
        %v4405 = vunpack.c.l.b16 %v4261
        %v4406 = vpack.c.b16 %v4405, %v4404
        %v4408 = vsel %vm1775, %v4039, 0
        %v4411 = vsel %vm1775, %v4406, 0
        %4413 = vmatpush.bf16.xpose.msra.mxu0 0
        %4414 = vmatpush.bf16.xpose.msra.mxu0 0
        %4415 = vmatpush.bf16.xpose.msra.mxu0 0
        %4416 = vmatpush.bf16.xpose.msra.mxu0 0
        %4417 = vmatpush.bf16.xpose.msra.mxu0 0
        %4418 = vmatpush.bf16.xpose.msra.mxu0 0
        %4419 = vmatpush.bf16.xpose.msra.mxu0 0
        %4420 = vmatpush.bf16.xpose.msra.mxu0 %v4411
        %4421 = vmatmul.bf16.gmra.mxu0 %v4408
        %v4422 = vpop.f32.mrf.mxu0
        %v4423 = vadd.f32 0.0, %v4422
        %v4424 = vpop.f32.mrf.mxu0
        %4425 = vdwg.mxu0
        %v4428 = vunpack.c.l.b16 %v4262
        %v4429 = vunpack.c.l.b16 %v4263
        %v4430 = vpack.c.b16 %v4429, %v4428
        %v4432 = vsel %vm1775, %v4040, 0
        %v4435 = vsel %vm1775, %v4430, 0
        %4437 = vmatpush.bf16.xpose.msra.mxu0 0
        %4438 = vmatpush.bf16.xpose.msra.mxu0 0
        %4439 = vmatpush.bf16.xpose.msra.mxu0 0
        %4440 = vmatpush.bf16.xpose.msra.mxu0 0
        %4441 = vmatpush.bf16.xpose.msra.mxu0 0
        %4442 = vmatpush.bf16.xpose.msra.mxu0 0
        %4443 = vmatpush.bf16.xpose.msra.mxu0 0
        %4444 = vmatpush.bf16.xpose.msra.mxu0 %v4435
        %4445 = vmatmul.bf16.gmra.mxu0 %v4432
        %v4446 = vpop.f32.mrf.mxu0
        %v4447 = vadd.f32 0.0, %v4446
        %v4448 = vpop.f32.mrf.mxu0
        %4449 = vdwg.mxu0
        %v4452 = vunpack.c.l.b16 %v4264
        %v4453 = vunpack.c.l.b16 %v4265
        %v4454 = vpack.c.b16 %v4453, %v4452
        %v4456 = vsel %vm1775, %v4041, 0
        %v4459 = vsel %vm1775, %v4454, 0
        %4461 = vmatpush.bf16.xpose.msra.mxu0 0
        %4462 = vmatpush.bf16.xpose.msra.mxu0 0
        %4463 = vmatpush.bf16.xpose.msra.mxu0 0
        %4464 = vmatpush.bf16.xpose.msra.mxu0 0
        %4465 = vmatpush.bf16.xpose.msra.mxu0 0
        %4466 = vmatpush.bf16.xpose.msra.mxu0 0
        %4467 = vmatpush.bf16.xpose.msra.mxu0 0
        %4468 = vmatpush.bf16.xpose.msra.mxu0 %v4459
        %4469 = vmatmul.bf16.gmra.mxu0 %v4456
        %v4470 = vpop.f32.mrf.mxu0
        %v4471 = vadd.f32 0.0, %v4470
        %v4472 = vpop.f32.mrf.mxu0
        %4473 = vdwg.mxu0
        %vm4474 = vcmask 130048
        %v4475 = vsel %vm4474, %v4303, -inf
        %4476 = vmax.xlane.f32.xlu0 %v4475
        %v4477 = vpop.xlane.xlu0 %4476
        %v4478 = vsel %vm4474, %v4327, -inf
        %4479 = vmax.xlane.f32.xlu0 %v4478
        %v4480 = vpop.xlane.xlu0 %4479
        %v4481 = vsel %vm4474, %v4351, -inf
        %4482 = vmax.xlane.f32.xlu0 %v4481
        %v4483 = vpop.xlane.xlu0 %4482
        %v4484 = vsel %vm4474, %v4375, -inf
        %4485 = vmax.xlane.f32.xlu0 %v4484
        %v4486 = vpop.xlane.xlu0 %4485
        %v4487 = vsel %vm4474, %v4399, -inf
        %4488 = vmax.xlane.f32.xlu0 %v4487
        %v4489 = vpop.xlane.xlu0 %4488
        %v4490 = vsel %vm4474, %v4423, -inf
        %4491 = vmax.xlane.f32.xlu0 %v4490
        %v4492 = vpop.xlane.xlu0 %4491
        %v4493 = vsel %vm4474, %v4447, -inf
        %4494 = vmax.xlane.f32.xlu0 %v4493
        %v4495 = vpop.xlane.xlu0 %4494
        %v4496 = vsel %vm4474, %v4471, -inf
        %4497 = vmax.xlane.f32.xlu0 %v4496
        %v4498 = vpop.xlane.xlu0 %4497
        %v4499 = vsub.f32 %v4303, %v4477
        %v4500 = vsub.f32 %v4327, %v4480
        %v4501 = vsub.f32 %v4351, %v4483
        %v4502 = vsub.f32 %v4375, %v4486
        %v4503 = vsub.f32 %v4399, %v4489
        %v4504 = vsub.f32 %v4423, %v4492
        %v4505 = vsub.f32 %v4447, %v4495
        %v4506 = vsub.f32 %v4471, %v4498
        %v4507 = vmul.f32 %v4499, 1.442695
        %v4508 = vpow.pop %v4507
        %v4509 = vmul.f32 %v4500, 1.442695
        %v4510 = vpow.pop %v4509
        %v4511 = vmul.f32 %v4501, 1.442695
        %v4512 = vpow.pop %v4511
        %v4513 = vmul.f32 %v4502, 1.442695
        %v4514 = vpow.pop %v4513
        %v4515 = vmul.f32 %v4503, 1.442695
        %v4516 = vpow.pop %v4515
        %v4517 = vmul.f32 %v4504, 1.442695
        %v4518 = vpow.pop %v4517
        %v4519 = vmul.f32 %v4505, 1.442695
        %v4520 = vpow.pop %v4519
        %v4521 = vmul.f32 %v4506, 1.442695
        %v4522 = vpow.pop %v4521
        %v4523 = vsel %vm4474, %v4508, 0.0
        %4524 = vadd.xlane.f32.xlu0 %v4523
        %v4525 = vpop.xlane.xlu0 %4524
        %v4526 = vsel %vm4474, %v4510, 0.0
        %4527 = vadd.xlane.f32.xlu0 %v4526
        %v4528 = vpop.xlane.xlu0 %4527
        %v4529 = vsel %vm4474, %v4512, 0.0
        %4530 = vadd.xlane.f32.xlu0 %v4529
        %v4531 = vpop.xlane.xlu0 %4530
        %v4532 = vsel %vm4474, %v4514, 0.0
        %4533 = vadd.xlane.f32.xlu0 %v4532
        %v4534 = vpop.xlane.xlu0 %4533
        %v4535 = vsel %vm4474, %v4516, 0.0
        %4536 = vadd.xlane.f32.xlu0 %v4535
        %v4537 = vpop.xlane.xlu0 %4536
        %v4538 = vsel %vm4474, %v4518, 0.0
        %4539 = vadd.xlane.f32.xlu0 %v4538
        %v4540 = vpop.xlane.xlu0 %4539
        %v4541 = vsel %vm4474, %v4520, 0.0
        %4542 = vadd.xlane.f32.xlu0 %v4541
        %v4543 = vpop.xlane.xlu0 %4542
        %v4544 = vsel %vm4474, %v4522, 0.0
        %4545 = vadd.xlane.f32.xlu0 %v4544
        %v4546 = vpop.xlane.xlu0 %4545
        %v4547 = vrcp.pop %v4525
        %v4548 = vrcp.pop %v4528
        %v4549 = vrcp.pop %v4531
        %v4550 = vrcp.pop %v4534
        %v4551 = vrcp.pop %v4537
        %v4552 = vrcp.pop %v4540
        %v4553 = vrcp.pop %v4543
        %v4554 = vrcp.pop %v4546
        %v4555 = vmul.f32 %v4508, %v4547
        %v4556 = vmul.f32 %v4510, %v4548
        %v4557 = vmul.f32 %v4512, %v4549
        %v4558 = vmul.f32 %v4514, %v4550
        %v4559 = vmul.f32 %v4516, %v4551
        %v4560 = vmul.f32 %v4518, %v4552
        %v4561 = vmul.f32 %v4520, %v4553
        %v4562 = vmul.f32 %v4522, %v4554
        %v4563 = vpack.c.bf16 %v4555, %v4555
        %v4564 = vpack.c.bf16 %v4556, %v4556
        %v4565 = vpack.c.bf16 %v4557, %v4557
        %v4566 = vpack.c.bf16 %v4558, %v4558
        %v4567 = vpack.c.bf16 %v4559, %v4559
        %v4568 = vpack.c.bf16 %v4560, %v4560
        %v4569 = vpack.c.bf16 %v4561, %v4561
        %v4570 = vpack.c.bf16 %v4562, %v4562
        %v4573 = vunpack.c.l.b16 %v4266
        %v4574 = vunpack.c.l.b16 %v4267
        %v4575 = vpack.c.b16 %v4574, %v4573
        %v4578 = vsel %vm4474, %v4563, 0
        %4580 = vmatpush.bf16.msra.mxu0 0
        %4581 = vmatpush.bf16.msra.mxu0 0
        %4582 = vmatpush.bf16.msra.mxu0 0
        %4583 = vmatpush.bf16.msra.mxu0 0
        %4584 = vmatpush.bf16.msra.mxu0 0
        %4585 = vmatpush.bf16.msra.mxu0 0
        %4586 = vmatpush.bf16.msra.mxu0 0
        %4587 = vmatpush.bf16.msra.mxu0 %v4575
        %4588 = vmatmul.bf16.gmra.mxu0 %v4578
        %v4589 = vpop.f32.mrf.mxu0
        %v4590 = vadd.f32 0.0, %v4589
        %v4591 = vpop.f32.mrf.mxu0
        %4592 = vdwg.mxu0
        %v4595 = vunpack.c.l.b16 %v4268
        %v4596 = vunpack.c.l.b16 %v4269
        %v4597 = vpack.c.b16 %v4596, %v4595
        %v4600 = vsel %vm4474, %v4564, 0
        %4602 = vmatpush.bf16.msra.mxu0 0
        %4603 = vmatpush.bf16.msra.mxu0 0
        %4604 = vmatpush.bf16.msra.mxu0 0
        %4605 = vmatpush.bf16.msra.mxu0 0
        %4606 = vmatpush.bf16.msra.mxu0 0
        %4607 = vmatpush.bf16.msra.mxu0 0
        %4608 = vmatpush.bf16.msra.mxu0 0
        %4609 = vmatpush.bf16.msra.mxu0 %v4597
        %4610 = vmatmul.bf16.gmra.mxu0 %v4600
        %v4611 = vpop.f32.mrf.mxu0
        %v4612 = vadd.f32 0.0, %v4611
        %v4613 = vpop.f32.mrf.mxu0
        %4614 = vdwg.mxu0
        %v4617 = vunpack.c.l.b16 %v4270
        %v4618 = vunpack.c.l.b16 %v4271
        %v4619 = vpack.c.b16 %v4618, %v4617
        %v4622 = vsel %vm4474, %v4565, 0
        %4624 = vmatpush.bf16.msra.mxu0 0
        %4625 = vmatpush.bf16.msra.mxu0 0
        %4626 = vmatpush.bf16.msra.mxu0 0
        %4627 = vmatpush.bf16.msra.mxu0 0
        %4628 = vmatpush.bf16.msra.mxu0 0
        %4629 = vmatpush.bf16.msra.mxu0 0
        %4630 = vmatpush.bf16.msra.mxu0 0
        %4631 = vmatpush.bf16.msra.mxu0 %v4619
        %4632 = vmatmul.bf16.gmra.mxu0 %v4622
        %v4633 = vpop.f32.mrf.mxu0
        %v4634 = vadd.f32 0.0, %v4633
        %v4635 = vpop.f32.mrf.mxu0
        %4636 = vdwg.mxu0
        %v4639 = vunpack.c.l.b16 %v4272
        %v4640 = vunpack.c.l.b16 %v4273
        %v4641 = vpack.c.b16 %v4640, %v4639
        %v4644 = vsel %vm4474, %v4566, 0
        %4646 = vmatpush.bf16.msra.mxu0 0
        %4647 = vmatpush.bf16.msra.mxu0 0
        %4648 = vmatpush.bf16.msra.mxu0 0
        %4649 = vmatpush.bf16.msra.mxu0 0
        %4650 = vmatpush.bf16.msra.mxu0 0
        %4651 = vmatpush.bf16.msra.mxu0 0
        %4652 = vmatpush.bf16.msra.mxu0 0
        %4653 = vmatpush.bf16.msra.mxu0 %v4641
        %4654 = vmatmul.bf16.gmra.mxu0 %v4644
        %v4655 = vpop.f32.mrf.mxu0
        %v4656 = vadd.f32 0.0, %v4655
        %v4657 = vpop.f32.mrf.mxu0
        %4658 = vdwg.mxu0
        %v4661 = vunpack.c.l.b16 %v4274
        %v4662 = vunpack.c.l.b16 %v4275
        %v4663 = vpack.c.b16 %v4662, %v4661
        %v4666 = vsel %vm4474, %v4567, 0
        %4668 = vmatpush.bf16.msra.mxu0 0
        %4669 = vmatpush.bf16.msra.mxu0 0
        %4670 = vmatpush.bf16.msra.mxu0 0
        %4671 = vmatpush.bf16.msra.mxu0 0
        %4672 = vmatpush.bf16.msra.mxu0 0
        %4673 = vmatpush.bf16.msra.mxu0 0
        %4674 = vmatpush.bf16.msra.mxu0 0
        %4675 = vmatpush.bf16.msra.mxu0 %v4663
        %4676 = vmatmul.bf16.gmra.mxu0 %v4666
        %v4677 = vpop.f32.mrf.mxu0
        %v4678 = vadd.f32 0.0, %v4677
        %v4679 = vpop.f32.mrf.mxu0
        %4680 = vdwg.mxu0
        %v4683 = vunpack.c.l.b16 %v4276
        %v4684 = vunpack.c.l.b16 %v4277
        %v4685 = vpack.c.b16 %v4684, %v4683
        %v4688 = vsel %vm4474, %v4568, 0
        %4690 = vmatpush.bf16.msra.mxu0 0
        %4691 = vmatpush.bf16.msra.mxu0 0
        %4692 = vmatpush.bf16.msra.mxu0 0
        %4693 = vmatpush.bf16.msra.mxu0 0
        %4694 = vmatpush.bf16.msra.mxu0 0
        %4695 = vmatpush.bf16.msra.mxu0 0
        %4696 = vmatpush.bf16.msra.mxu0 0
        %4697 = vmatpush.bf16.msra.mxu0 %v4685
        %4698 = vmatmul.bf16.gmra.mxu0 %v4688
        %v4699 = vpop.f32.mrf.mxu0
        %v4700 = vadd.f32 0.0, %v4699
        %v4701 = vpop.f32.mrf.mxu0
        %4702 = vdwg.mxu0
        %v4705 = vunpack.c.l.b16 %v4278
        %v4706 = vunpack.c.l.b16 %v4279
        %v4707 = vpack.c.b16 %v4706, %v4705
        %v4710 = vsel %vm4474, %v4569, 0
        %4712 = vmatpush.bf16.msra.mxu0 0
        %4713 = vmatpush.bf16.msra.mxu0 0
        %4714 = vmatpush.bf16.msra.mxu0 0
        %4715 = vmatpush.bf16.msra.mxu0 0
        %4716 = vmatpush.bf16.msra.mxu0 0
        %4717 = vmatpush.bf16.msra.mxu0 0
        %4718 = vmatpush.bf16.msra.mxu0 0
        %4719 = vmatpush.bf16.msra.mxu0 %v4707
        %4720 = vmatmul.bf16.gmra.mxu0 %v4710
        %v4721 = vpop.f32.mrf.mxu0
        %v4722 = vadd.f32 0.0, %v4721
        %v4723 = vpop.f32.mrf.mxu0
        %4724 = vdwg.mxu0
        %v4727 = vunpack.c.l.b16 %v4280
        %v4728 = vunpack.c.l.b16 %v4281
        %v4729 = vpack.c.b16 %v4728, %v4727
        %v4732 = vsel %vm4474, %v4570, 0
        %4734 = vmatpush.bf16.msra.mxu0 0
        %4735 = vmatpush.bf16.msra.mxu0 0
        %4736 = vmatpush.bf16.msra.mxu0 0
        %4737 = vmatpush.bf16.msra.mxu0 0
        %4738 = vmatpush.bf16.msra.mxu0 0
        %4739 = vmatpush.bf16.msra.mxu0 0
        %4740 = vmatpush.bf16.msra.mxu0 0
        %4741 = vmatpush.bf16.msra.mxu0 %v4729
        %4742 = vmatmul.bf16.gmra.mxu0 %v4732
        %v4743 = vpop.f32.mrf.mxu0
        %v4744 = vadd.f32 0.0, %v4743
        %v4745 = vpop.f32.mrf.mxu0
        %4746 = vdwg.mxu0
        %v4747 = vpack.c.bf16 %v4590, %v4590
        %v4748 = vpack.c.bf16 %v4612, %v4612
        %v4749 = vpack.c.bf16 %v4634, %v4634
        %v4750 = vpack.c.bf16 %v4656, %v4656
        %v4751 = vpack.c.bf16 %v4678, %v4678
        %v4752 = vpack.c.bf16 %v4700, %v4700
        %v4753 = vpack.c.bf16 %v4722, %v4722
        %v4754 = vpack.c.bf16 %v4744, %v4744
        %v4756 = vunpack.c.l.b16 %v4034
        %v4757 = vpack.c.b16 %v4756, %v4756
        %4758 = vrot.lane.b32.xlu0 %v4757, 96
        %v4759 = vpop.permute.xlu0 %4758
        %4760 = vrot.lane.b32.xlu0 %v4286, 96
        %v4761 = vpop.permute.xlu0 %4760
        %v4763 = vsel %vm1775, %v4759, 0
        %v4766 = vsel %vm1775, %v4761, 0
        %4768 = vmatpush.bf16.xpose.msra.mxu0 0
        %4769 = vmatpush.bf16.xpose.msra.mxu0 0
        %4770 = vmatpush.bf16.xpose.msra.mxu0 0
        %4771 = vmatpush.bf16.xpose.msra.mxu0 0
        %4772 = vmatpush.bf16.xpose.msra.mxu0 0
        %4773 = vmatpush.bf16.xpose.msra.mxu0 0
        %4774 = vmatpush.bf16.xpose.msra.mxu0 0
        %4775 = vmatpush.bf16.xpose.msra.mxu0 %v4766
        %4776 = vmatmul.bf16.gmra.mxu0 %v4763
        %v4777 = vpop.f32.mrf.mxu0
        %v4778 = vadd.f32 0.0, %v4777
        %v4779 = vpop.f32.mrf.mxu0
        %4780 = vdwg.mxu0
        %v4782 = vunpack.c.l.b16 %v4035
        %v4783 = vpack.c.b16 %v4782, %v4782
        %4784 = vrot.lane.b32.xlu0 %v4783, 96
        %v4785 = vpop.permute.xlu0 %4784
        %4786 = vrot.lane.b32.xlu0 %v4310, 96
        %v4787 = vpop.permute.xlu0 %4786
        %v4789 = vsel %vm1775, %v4785, 0
        %v4792 = vsel %vm1775, %v4787, 0
        %4794 = vmatpush.bf16.xpose.msra.mxu0 0
        %4795 = vmatpush.bf16.xpose.msra.mxu0 0
        %4796 = vmatpush.bf16.xpose.msra.mxu0 0
        %4797 = vmatpush.bf16.xpose.msra.mxu0 0
        %4798 = vmatpush.bf16.xpose.msra.mxu0 0
        %4799 = vmatpush.bf16.xpose.msra.mxu0 0
        %4800 = vmatpush.bf16.xpose.msra.mxu0 0
        %4801 = vmatpush.bf16.xpose.msra.mxu0 %v4792
        %4802 = vmatmul.bf16.gmra.mxu0 %v4789
        %v4803 = vpop.f32.mrf.mxu0
        %v4804 = vadd.f32 0.0, %v4803
        %v4805 = vpop.f32.mrf.mxu0
        %4806 = vdwg.mxu0
        %v4808 = vunpack.c.l.b16 %v4036
        %v4809 = vpack.c.b16 %v4808, %v4808
        %4810 = vrot.lane.b32.xlu0 %v4809, 96
        %v4811 = vpop.permute.xlu0 %4810
        %4812 = vrot.lane.b32.xlu0 %v4334, 96
        %v4813 = vpop.permute.xlu0 %4812
        %v4815 = vsel %vm1775, %v4811, 0
        %v4818 = vsel %vm1775, %v4813, 0
        %4820 = vmatpush.bf16.xpose.msra.mxu0 0
        %4821 = vmatpush.bf16.xpose.msra.mxu0 0
        %4822 = vmatpush.bf16.xpose.msra.mxu0 0
        %4823 = vmatpush.bf16.xpose.msra.mxu0 0
        %4824 = vmatpush.bf16.xpose.msra.mxu0 0
        %4825 = vmatpush.bf16.xpose.msra.mxu0 0
        %4826 = vmatpush.bf16.xpose.msra.mxu0 0
        %4827 = vmatpush.bf16.xpose.msra.mxu0 %v4818
        %4828 = vmatmul.bf16.gmra.mxu0 %v4815
        %v4829 = vpop.f32.mrf.mxu0
        %v4830 = vadd.f32 0.0, %v4829
        %v4831 = vpop.f32.mrf.mxu0
        %4832 = vdwg.mxu0
        %v4834 = vunpack.c.l.b16 %v4037
        %v4835 = vpack.c.b16 %v4834, %v4834
        %4836 = vrot.lane.b32.xlu0 %v4835, 96
        %v4837 = vpop.permute.xlu0 %4836
        %4838 = vrot.lane.b32.xlu0 %v4358, 96
        %v4839 = vpop.permute.xlu0 %4838
        %v4841 = vsel %vm1775, %v4837, 0
        %v4844 = vsel %vm1775, %v4839, 0
        %4846 = vmatpush.bf16.xpose.msra.mxu0 0
        %4847 = vmatpush.bf16.xpose.msra.mxu0 0
        %4848 = vmatpush.bf16.xpose.msra.mxu0 0
        %4849 = vmatpush.bf16.xpose.msra.mxu0 0
        %4850 = vmatpush.bf16.xpose.msra.mxu0 0
        %4851 = vmatpush.bf16.xpose.msra.mxu0 0
        %4852 = vmatpush.bf16.xpose.msra.mxu0 0
        %4853 = vmatpush.bf16.xpose.msra.mxu0 %v4844
        %4854 = vmatmul.bf16.gmra.mxu0 %v4841
        %v4855 = vpop.f32.mrf.mxu0
        %v4856 = vadd.f32 0.0, %v4855
        %v4857 = vpop.f32.mrf.mxu0
        %4858 = vdwg.mxu0
        %v4860 = vunpack.c.l.b16 %v4038
        %v4861 = vpack.c.b16 %v4860, %v4860
        %4862 = vrot.lane.b32.xlu0 %v4861, 96
        %v4863 = vpop.permute.xlu0 %4862
        %4864 = vrot.lane.b32.xlu0 %v4382, 96
        %v4865 = vpop.permute.xlu0 %4864
        %v4867 = vsel %vm1775, %v4863, 0
        %v4870 = vsel %vm1775, %v4865, 0
        %4872 = vmatpush.bf16.xpose.msra.mxu0 0
        %4873 = vmatpush.bf16.xpose.msra.mxu0 0
        %4874 = vmatpush.bf16.xpose.msra.mxu0 0
        %4875 = vmatpush.bf16.xpose.msra.mxu0 0
        %4876 = vmatpush.bf16.xpose.msra.mxu0 0
        %4877 = vmatpush.bf16.xpose.msra.mxu0 0
        %4878 = vmatpush.bf16.xpose.msra.mxu0 0
        %4879 = vmatpush.bf16.xpose.msra.mxu0 %v4870
        %4880 = vmatmul.bf16.gmra.mxu0 %v4867
        %v4881 = vpop.f32.mrf.mxu0
        %v4882 = vadd.f32 0.0, %v4881
        %v4883 = vpop.f32.mrf.mxu0
        %4884 = vdwg.mxu0
        %v4886 = vunpack.c.l.b16 %v4039
        %v4887 = vpack.c.b16 %v4886, %v4886
        %4888 = vrot.lane.b32.xlu0 %v4887, 96
        %v4889 = vpop.permute.xlu0 %4888
        %4890 = vrot.lane.b32.xlu0 %v4406, 96
        %v4891 = vpop.permute.xlu0 %4890
        %v4893 = vsel %vm1775, %v4889, 0
        %v4896 = vsel %vm1775, %v4891, 0
        %4898 = vmatpush.bf16.xpose.msra.mxu0 0
        %4899 = vmatpush.bf16.xpose.msra.mxu0 0
        %4900 = vmatpush.bf16.xpose.msra.mxu0 0
        %4901 = vmatpush.bf16.xpose.msra.mxu0 0
        %4902 = vmatpush.bf16.xpose.msra.mxu0 0
        %4903 = vmatpush.bf16.xpose.msra.mxu0 0
        %4904 = vmatpush.bf16.xpose.msra.mxu0 0
        %4905 = vmatpush.bf16.xpose.msra.mxu0 %v4896
        %4906 = vmatmul.bf16.gmra.mxu0 %v4893
        %v4907 = vpop.f32.mrf.mxu0
        %v4908 = vadd.f32 0.0, %v4907
        %v4909 = vpop.f32.mrf.mxu0
        %4910 = vdwg.mxu0
        %v4912 = vunpack.c.l.b16 %v4040
        %v4913 = vpack.c.b16 %v4912, %v4912
        %4914 = vrot.lane.b32.xlu0 %v4913, 96
        %v4915 = vpop.permute.xlu0 %4914
        %4916 = vrot.lane.b32.xlu0 %v4430, 96
        %v4917 = vpop.permute.xlu0 %4916
        %v4919 = vsel %vm1775, %v4915, 0
        %v4922 = vsel %vm1775, %v4917, 0
        %4924 = vmatpush.bf16.xpose.msra.mxu0 0
        %4925 = vmatpush.bf16.xpose.msra.mxu0 0
        %4926 = vmatpush.bf16.xpose.msra.mxu0 0
        %4927 = vmatpush.bf16.xpose.msra.mxu0 0
        %4928 = vmatpush.bf16.xpose.msra.mxu0 0
        %4929 = vmatpush.bf16.xpose.msra.mxu0 0
        %4930 = vmatpush.bf16.xpose.msra.mxu0 0
        %4931 = vmatpush.bf16.xpose.msra.mxu0 %v4922
        %4932 = vmatmul.bf16.gmra.mxu0 %v4919
        %v4933 = vpop.f32.mrf.mxu0
        %v4934 = vadd.f32 0.0, %v4933
        %v4935 = vpop.f32.mrf.mxu0
        %4936 = vdwg.mxu0
        %v4938 = vunpack.c.l.b16 %v4041
        %v4939 = vpack.c.b16 %v4938, %v4938
        %4940 = vrot.lane.b32.xlu0 %v4939, 96
        %v4941 = vpop.permute.xlu0 %4940
        %4942 = vrot.lane.b32.xlu0 %v4454, 96
        %v4943 = vpop.permute.xlu0 %4942
        %v4945 = vsel %vm1775, %v4941, 0
        %v4948 = vsel %vm1775, %v4943, 0
        %4950 = vmatpush.bf16.xpose.msra.mxu0 0
        %4951 = vmatpush.bf16.xpose.msra.mxu0 0
        %4952 = vmatpush.bf16.xpose.msra.mxu0 0
        %4953 = vmatpush.bf16.xpose.msra.mxu0 0
        %4954 = vmatpush.bf16.xpose.msra.mxu0 0
        %4955 = vmatpush.bf16.xpose.msra.mxu0 0
        %4956 = vmatpush.bf16.xpose.msra.mxu0 0
        %4957 = vmatpush.bf16.xpose.msra.mxu0 %v4948
        %4958 = vmatmul.bf16.gmra.mxu0 %v4945
        %v4959 = vpop.f32.mrf.mxu0
        %v4960 = vadd.f32 0.0, %v4959
        %v4961 = vpop.f32.mrf.mxu0
        %4962 = vdwg.mxu0
        %v4963 = vsel %vm4474, %v4778, -inf
        %4964 = vmax.xlane.f32.xlu0 %v4963
        %v4965 = vpop.xlane.xlu0 %4964
        %v4966 = vsel %vm4474, %v4804, -inf
        %4967 = vmax.xlane.f32.xlu0 %v4966
        %v4968 = vpop.xlane.xlu0 %4967
        %v4969 = vsel %vm4474, %v4830, -inf
        %4970 = vmax.xlane.f32.xlu0 %v4969
        %v4971 = vpop.xlane.xlu0 %4970
        %v4972 = vsel %vm4474, %v4856, -inf
        %4973 = vmax.xlane.f32.xlu0 %v4972
        %v4974 = vpop.xlane.xlu0 %4973
        %v4975 = vsel %vm4474, %v4882, -inf
        %4976 = vmax.xlane.f32.xlu0 %v4975
        %v4977 = vpop.xlane.xlu0 %4976
        %v4978 = vsel %vm4474, %v4908, -inf
        %4979 = vmax.xlane.f32.xlu0 %v4978
        %v4980 = vpop.xlane.xlu0 %4979
        %v4981 = vsel %vm4474, %v4934, -inf
        %4982 = vmax.xlane.f32.xlu0 %v4981
        %v4983 = vpop.xlane.xlu0 %4982
        %v4984 = vsel %vm4474, %v4960, -inf
        %4985 = vmax.xlane.f32.xlu0 %v4984
        %v4986 = vpop.xlane.xlu0 %4985
        %v4987 = vsub.f32 %v4778, %v4965
        %v4988 = vsub.f32 %v4804, %v4968
        %v4989 = vsub.f32 %v4830, %v4971
        %v4990 = vsub.f32 %v4856, %v4974
        %v4991 = vsub.f32 %v4882, %v4977
        %v4992 = vsub.f32 %v4908, %v4980
        %v4993 = vsub.f32 %v4934, %v4983
        %v4994 = vsub.f32 %v4960, %v4986
        %v4995 = vmul.f32 %v4987, 1.442695
        %v4996 = vpow.pop %v4995
        %v4997 = vmul.f32 %v4988, 1.442695
        %v4998 = vpow.pop %v4997
        %v4999 = vmul.f32 %v4989, 1.442695
        %v5000 = vpow.pop %v4999
        %v5001 = vmul.f32 %v4990, 1.442695
        %v5002 = vpow.pop %v5001
        %v5003 = vmul.f32 %v4991, 1.442695
        %v5004 = vpow.pop %v5003
        %v5005 = vmul.f32 %v4992, 1.442695
        %v5006 = vpow.pop %v5005
        %v5007 = vmul.f32 %v4993, 1.442695
        %v5008 = vpow.pop %v5007
        %v5009 = vmul.f32 %v4994, 1.442695
        %v5010 = vpow.pop %v5009
        %v5011 = vsel %vm4474, %v4996, 0.0
        %5012 = vadd.xlane.f32.xlu0 %v5011
        %v5013 = vpop.xlane.xlu0 %5012
        %v5014 = vsel %vm4474, %v4998, 0.0
        %5015 = vadd.xlane.f32.xlu0 %v5014
        %v5016 = vpop.xlane.xlu0 %5015
        %v5017 = vsel %vm4474, %v5000, 0.0
        %5018 = vadd.xlane.f32.xlu0 %v5017
        %v5019 = vpop.xlane.xlu0 %5018
        %v5020 = vsel %vm4474, %v5002, 0.0
        %5021 = vadd.xlane.f32.xlu0 %v5020
        %v5022 = vpop.xlane.xlu0 %5021
        %v5023 = vsel %vm4474, %v5004, 0.0
        %5024 = vadd.xlane.f32.xlu0 %v5023
        %v5025 = vpop.xlane.xlu0 %5024
        %v5026 = vsel %vm4474, %v5006, 0.0
        %5027 = vadd.xlane.f32.xlu0 %v5026
        %v5028 = vpop.xlane.xlu0 %5027
        %v5029 = vsel %vm4474, %v5008, 0.0
        %5030 = vadd.xlane.f32.xlu0 %v5029
        %v5031 = vpop.xlane.xlu0 %5030
        %v5032 = vsel %vm4474, %v5010, 0.0
        %5033 = vadd.xlane.f32.xlu0 %v5032
        %v5034 = vpop.xlane.xlu0 %5033
        %v5035 = vrcp.pop %v5013
        %v5036 = vrcp.pop %v5016
        %v5037 = vrcp.pop %v5019
        %v5038 = vrcp.pop %v5022
        %v5039 = vrcp.pop %v5025
        %v5040 = vrcp.pop %v5028
        %v5041 = vrcp.pop %v5031
        %v5042 = vrcp.pop %v5034
        %v5043 = vmul.f32 %v4996, %v5035
        %v5044 = vmul.f32 %v4998, %v5036
        %v5045 = vmul.f32 %v5000, %v5037
        %v5046 = vmul.f32 %v5002, %v5038
        %v5047 = vmul.f32 %v5004, %v5039
        %v5048 = vmul.f32 %v5006, %v5040
        %v5049 = vmul.f32 %v5008, %v5041
        %v5050 = vmul.f32 %v5010, %v5042
        %v5051 = vpack.c.bf16 %v5043, %v5043
        %v5052 = vpack.c.bf16 %v5044, %v5044
        %v5053 = vpack.c.bf16 %v5045, %v5045
        %v5054 = vpack.c.bf16 %v5046, %v5046
        %v5055 = vpack.c.bf16 %v5047, %v5047
        %v5056 = vpack.c.bf16 %v5048, %v5048
        %v5057 = vpack.c.bf16 %v5049, %v5049
        %v5058 = vpack.c.bf16 %v5050, %v5050
        %5059 = vrot.lane.b32.xlu0 %v4575, 96
        %v5060 = vpop.permute.xlu0 %5059
        %v5063 = vsel %vm4474, %v5051, 0
        %5065 = vmatpush.bf16.msra.mxu0 0
        %5066 = vmatpush.bf16.msra.mxu0 0
        %5067 = vmatpush.bf16.msra.mxu0 0
        %5068 = vmatpush.bf16.msra.mxu0 0
        %5069 = vmatpush.bf16.msra.mxu0 0
        %5070 = vmatpush.bf16.msra.mxu0 0
        %5071 = vmatpush.bf16.msra.mxu0 0
        %5072 = vmatpush.bf16.msra.mxu0 %v5060
        %5073 = vmatmul.bf16.gmra.mxu0 %v5063
        %v5074 = vpop.f32.mrf.mxu0
        %v5075 = vadd.f32 0.0, %v5074
        %v5076 = vpop.f32.mrf.mxu0
        %5077 = vdwg.mxu0
        %5078 = vrot.lane.b32.xlu0 %v4597, 96
        %v5079 = vpop.permute.xlu0 %5078
        %v5082 = vsel %vm4474, %v5052, 0
        %5084 = vmatpush.bf16.msra.mxu0 0
        %5085 = vmatpush.bf16.msra.mxu0 0
        %5086 = vmatpush.bf16.msra.mxu0 0
        %5087 = vmatpush.bf16.msra.mxu0 0
        %5088 = vmatpush.bf16.msra.mxu0 0
        %5089 = vmatpush.bf16.msra.mxu0 0
        %5090 = vmatpush.bf16.msra.mxu0 0
        %5091 = vmatpush.bf16.msra.mxu0 %v5079
        %5092 = vmatmul.bf16.gmra.mxu0 %v5082
        %v5093 = vpop.f32.mrf.mxu0
        %v5094 = vadd.f32 0.0, %v5093
        %v5095 = vpop.f32.mrf.mxu0
        %5096 = vdwg.mxu0
        %5097 = vrot.lane.b32.xlu0 %v4619, 96
        %v5098 = vpop.permute.xlu0 %5097
        %v5101 = vsel %vm4474, %v5053, 0
        %5103 = vmatpush.bf16.msra.mxu0 0
        %5104 = vmatpush.bf16.msra.mxu0 0
        %5105 = vmatpush.bf16.msra.mxu0 0
        %5106 = vmatpush.bf16.msra.mxu0 0
        %5107 = vmatpush.bf16.msra.mxu0 0
        %5108 = vmatpush.bf16.msra.mxu0 0
        %5109 = vmatpush.bf16.msra.mxu0 0
        %5110 = vmatpush.bf16.msra.mxu0 %v5098
        %5111 = vmatmul.bf16.gmra.mxu0 %v5101
        %v5112 = vpop.f32.mrf.mxu0
        %v5113 = vadd.f32 0.0, %v5112
        %v5114 = vpop.f32.mrf.mxu0
        %5115 = vdwg.mxu0
        %5116 = vrot.lane.b32.xlu0 %v4641, 96
        %v5117 = vpop.permute.xlu0 %5116
        %v5120 = vsel %vm4474, %v5054, 0
        %5122 = vmatpush.bf16.msra.mxu0 0
        %5123 = vmatpush.bf16.msra.mxu0 0
        %5124 = vmatpush.bf16.msra.mxu0 0
        %5125 = vmatpush.bf16.msra.mxu0 0
        %5126 = vmatpush.bf16.msra.mxu0 0
        %5127 = vmatpush.bf16.msra.mxu0 0
        %5128 = vmatpush.bf16.msra.mxu0 0
        %5129 = vmatpush.bf16.msra.mxu0 %v5117
        %5130 = vmatmul.bf16.gmra.mxu0 %v5120
        %v5131 = vpop.f32.mrf.mxu0
        %v5132 = vadd.f32 0.0, %v5131
        %v5133 = vpop.f32.mrf.mxu0
        %5134 = vdwg.mxu0
        %5135 = vrot.lane.b32.xlu0 %v4663, 96
        %v5136 = vpop.permute.xlu0 %5135
        %v5139 = vsel %vm4474, %v5055, 0
        %5141 = vmatpush.bf16.msra.mxu0 0
        %5142 = vmatpush.bf16.msra.mxu0 0
        %5143 = vmatpush.bf16.msra.mxu0 0
        %5144 = vmatpush.bf16.msra.mxu0 0
        %5145 = vmatpush.bf16.msra.mxu0 0
        %5146 = vmatpush.bf16.msra.mxu0 0
        %5147 = vmatpush.bf16.msra.mxu0 0
        %5148 = vmatpush.bf16.msra.mxu0 %v5136
        %5149 = vmatmul.bf16.gmra.mxu0 %v5139
        %v5150 = vpop.f32.mrf.mxu0
        %v5151 = vadd.f32 0.0, %v5150
        %v5152 = vpop.f32.mrf.mxu0
        %5153 = vdwg.mxu0
        %5154 = vrot.lane.b32.xlu0 %v4685, 96
        %v5155 = vpop.permute.xlu0 %5154
        %v5158 = vsel %vm4474, %v5056, 0
        %5160 = vmatpush.bf16.msra.mxu0 0
        %5161 = vmatpush.bf16.msra.mxu0 0
        %5162 = vmatpush.bf16.msra.mxu0 0
        %5163 = vmatpush.bf16.msra.mxu0 0
        %5164 = vmatpush.bf16.msra.mxu0 0
        %5165 = vmatpush.bf16.msra.mxu0 0
        %5166 = vmatpush.bf16.msra.mxu0 0
        %5167 = vmatpush.bf16.msra.mxu0 %v5155
        %5168 = vmatmul.bf16.gmra.mxu0 %v5158
        %v5169 = vpop.f32.mrf.mxu0
        %v5170 = vadd.f32 0.0, %v5169
        %v5171 = vpop.f32.mrf.mxu0
        %5172 = vdwg.mxu0
        %5173 = vrot.lane.b32.xlu0 %v4707, 96
        %v5174 = vpop.permute.xlu0 %5173
        %v5177 = vsel %vm4474, %v5057, 0
        %5179 = vmatpush.bf16.msra.mxu0 0
        %5180 = vmatpush.bf16.msra.mxu0 0
        %5181 = vmatpush.bf16.msra.mxu0 0
        %5182 = vmatpush.bf16.msra.mxu0 0
        %5183 = vmatpush.bf16.msra.mxu0 0
        %5184 = vmatpush.bf16.msra.mxu0 0
        %5185 = vmatpush.bf16.msra.mxu0 0
        %5186 = vmatpush.bf16.msra.mxu0 %v5174
        %5187 = vmatmul.bf16.gmra.mxu0 %v5177
        %v5188 = vpop.f32.mrf.mxu0
        %v5189 = vadd.f32 0.0, %v5188
        %v5190 = vpop.f32.mrf.mxu0
        %5191 = vdwg.mxu0
        %5192 = vrot.lane.b32.xlu0 %v4729, 96
        %v5193 = vpop.permute.xlu0 %5192
        %v5196 = vsel %vm4474, %v5058, 0
        %5198 = vmatpush.bf16.msra.mxu0 0
        %5199 = vmatpush.bf16.msra.mxu0 0
        %5200 = vmatpush.bf16.msra.mxu0 0
        %5201 = vmatpush.bf16.msra.mxu0 0
        %5202 = vmatpush.bf16.msra.mxu0 0
        %5203 = vmatpush.bf16.msra.mxu0 0
        %5204 = vmatpush.bf16.msra.mxu0 0
        %5205 = vmatpush.bf16.msra.mxu0 %v5193
        %5206 = vmatmul.bf16.gmra.mxu0 %v5196
        %v5207 = vpop.f32.mrf.mxu0
        %v5208 = vadd.f32 0.0, %v5207
        %v5209 = vpop.f32.mrf.mxu0
        %5210 = vdwg.mxu0
        %v5211 = vpack.c.bf16 %v5075, %v5075
        %v5212 = vpack.c.bf16 %v5094, %v5094
        %v5213 = vpack.c.bf16 %v5113, %v5113
        %v5214 = vpack.c.bf16 %v5132, %v5132
        %v5215 = vpack.c.bf16 %v5151, %v5151
        %v5216 = vpack.c.bf16 %v5170, %v5170
        %v5217 = vpack.c.bf16 %v5189, %v5189
        %v5218 = vpack.c.bf16 %v5208, %v5208
        %5219 = vrot.lane.b32.xlu0 %v4757, 64
        %v5220 = vpop.permute.xlu0 %5219
        %5221 = vrot.lane.b32.xlu0 %v4286, 64
        %v5222 = vpop.permute.xlu0 %5221
        %v5224 = vsel %vm1775, %v5220, 0
        %v5227 = vsel %vm1775, %v5222, 0
        %5229 = vmatpush.bf16.xpose.msra.mxu0 0
        %5230 = vmatpush.bf16.xpose.msra.mxu0 0
        %5231 = vmatpush.bf16.xpose.msra.mxu0 0
        %5232 = vmatpush.bf16.xpose.msra.mxu0 0
        %5233 = vmatpush.bf16.xpose.msra.mxu0 0
        %5234 = vmatpush.bf16.xpose.msra.mxu0 0
        %5235 = vmatpush.bf16.xpose.msra.mxu0 0
        %5236 = vmatpush.bf16.xpose.msra.mxu0 %v5227
        %5237 = vmatmul.bf16.gmra.mxu0 %v5224
        %v5238 = vpop.f32.mrf.mxu0
        %v5239 = vadd.f32 0.0, %v5238
        %v5240 = vpop.f32.mrf.mxu0
        %5241 = vdwg.mxu0
        %5242 = vrot.lane.b32.xlu0 %v4783, 64
        %v5243 = vpop.permute.xlu0 %5242
        %5244 = vrot.lane.b32.xlu0 %v4310, 64
        %v5245 = vpop.permute.xlu0 %5244
        %v5247 = vsel %vm1775, %v5243, 0
        %v5250 = vsel %vm1775, %v5245, 0
        %5252 = vmatpush.bf16.xpose.msra.mxu0 0
        %5253 = vmatpush.bf16.xpose.msra.mxu0 0
        %5254 = vmatpush.bf16.xpose.msra.mxu0 0
        %5255 = vmatpush.bf16.xpose.msra.mxu0 0
        %5256 = vmatpush.bf16.xpose.msra.mxu0 0
        %5257 = vmatpush.bf16.xpose.msra.mxu0 0
        %5258 = vmatpush.bf16.xpose.msra.mxu0 0
        %5259 = vmatpush.bf16.xpose.msra.mxu0 %v5250
        %5260 = vmatmul.bf16.gmra.mxu0 %v5247
        %v5261 = vpop.f32.mrf.mxu0
        %v5262 = vadd.f32 0.0, %v5261
        %v5263 = vpop.f32.mrf.mxu0
        %5264 = vdwg.mxu0
        %5265 = vrot.lane.b32.xlu0 %v4809, 64
        %v5266 = vpop.permute.xlu0 %5265
        %5267 = vrot.lane.b32.xlu0 %v4334, 64
        %v5268 = vpop.permute.xlu0 %5267
        %v5270 = vsel %vm1775, %v5266, 0
        %v5273 = vsel %vm1775, %v5268, 0
        %5275 = vmatpush.bf16.xpose.msra.mxu0 0
        %5276 = vmatpush.bf16.xpose.msra.mxu0 0
        %5277 = vmatpush.bf16.xpose.msra.mxu0 0
        %5278 = vmatpush.bf16.xpose.msra.mxu0 0
        %5279 = vmatpush.bf16.xpose.msra.mxu0 0
        %5280 = vmatpush.bf16.xpose.msra.mxu0 0
        %5281 = vmatpush.bf16.xpose.msra.mxu0 0
        %5282 = vmatpush.bf16.xpose.msra.mxu0 %v5273
        %5283 = vmatmul.bf16.gmra.mxu0 %v5270
        %v5284 = vpop.f32.mrf.mxu0
        %v5285 = vadd.f32 0.0, %v5284
        %v5286 = vpop.f32.mrf.mxu0
        %5287 = vdwg.mxu0
        %5288 = vrot.lane.b32.xlu0 %v4835, 64
        %v5289 = vpop.permute.xlu0 %5288
        %5290 = vrot.lane.b32.xlu0 %v4358, 64
        %v5291 = vpop.permute.xlu0 %5290
        %v5293 = vsel %vm1775, %v5289, 0
        %v5296 = vsel %vm1775, %v5291, 0
        %5298 = vmatpush.bf16.xpose.msra.mxu0 0
        %5299 = vmatpush.bf16.xpose.msra.mxu0 0
        %5300 = vmatpush.bf16.xpose.msra.mxu0 0
        %5301 = vmatpush.bf16.xpose.msra.mxu0 0
        %5302 = vmatpush.bf16.xpose.msra.mxu0 0
        %5303 = vmatpush.bf16.xpose.msra.mxu0 0
        %5304 = vmatpush.bf16.xpose.msra.mxu0 0
        %5305 = vmatpush.bf16.xpose.msra.mxu0 %v5296
        %5306 = vmatmul.bf16.gmra.mxu0 %v5293
        %v5307 = vpop.f32.mrf.mxu0
        %v5308 = vadd.f32 0.0, %v5307
        %v5309 = vpop.f32.mrf.mxu0
        %5310 = vdwg.mxu0
        %5311 = vrot.lane.b32.xlu0 %v4861, 64
        %v5312 = vpop.permute.xlu0 %5311
        %5313 = vrot.lane.b32.xlu0 %v4382, 64
        %v5314 = vpop.permute.xlu0 %5313
        %v5316 = vsel %vm1775, %v5312, 0
        %v5319 = vsel %vm1775, %v5314, 0
        %5321 = vmatpush.bf16.xpose.msra.mxu0 0
        %5322 = vmatpush.bf16.xpose.msra.mxu0 0
        %5323 = vmatpush.bf16.xpose.msra.mxu0 0
        %5324 = vmatpush.bf16.xpose.msra.mxu0 0
        %5325 = vmatpush.bf16.xpose.msra.mxu0 0
        %5326 = vmatpush.bf16.xpose.msra.mxu0 0
        %5327 = vmatpush.bf16.xpose.msra.mxu0 0
        %5328 = vmatpush.bf16.xpose.msra.mxu0 %v5319
        %5329 = vmatmul.bf16.gmra.mxu0 %v5316
        %v5330 = vpop.f32.mrf.mxu0
        %v5331 = vadd.f32 0.0, %v5330
        %v5332 = vpop.f32.mrf.mxu0
        %5333 = vdwg.mxu0
        %5334 = vrot.lane.b32.xlu0 %v4887, 64
        %v5335 = vpop.permute.xlu0 %5334
        %5336 = vrot.lane.b32.xlu0 %v4406, 64
        %v5337 = vpop.permute.xlu0 %5336
        %v5339 = vsel %vm1775, %v5335, 0
        %v5342 = vsel %vm1775, %v5337, 0
        %5344 = vmatpush.bf16.xpose.msra.mxu0 0
        %5345 = vmatpush.bf16.xpose.msra.mxu0 0
        %5346 = vmatpush.bf16.xpose.msra.mxu0 0
        %5347 = vmatpush.bf16.xpose.msra.mxu0 0
        %5348 = vmatpush.bf16.xpose.msra.mxu0 0
        %5349 = vmatpush.bf16.xpose.msra.mxu0 0
        %5350 = vmatpush.bf16.xpose.msra.mxu0 0
        %5351 = vmatpush.bf16.xpose.msra.mxu0 %v5342
        %5352 = vmatmul.bf16.gmra.mxu0 %v5339
        %v5353 = vpop.f32.mrf.mxu0
        %v5354 = vadd.f32 0.0, %v5353
        %v5355 = vpop.f32.mrf.mxu0
        %5356 = vdwg.mxu0
        %5357 = vrot.lane.b32.xlu0 %v4913, 64
        %v5358 = vpop.permute.xlu0 %5357
        %5359 = vrot.lane.b32.xlu0 %v4430, 64
        %v5360 = vpop.permute.xlu0 %5359
        %v5362 = vsel %vm1775, %v5358, 0
        %v5365 = vsel %vm1775, %v5360, 0
        %5367 = vmatpush.bf16.xpose.msra.mxu0 0
        %5368 = vmatpush.bf16.xpose.msra.mxu0 0
        %5369 = vmatpush.bf16.xpose.msra.mxu0 0
        %5370 = vmatpush.bf16.xpose.msra.mxu0 0
        %5371 = vmatpush.bf16.xpose.msra.mxu0 0
        %5372 = vmatpush.bf16.xpose.msra.mxu0 0
        %5373 = vmatpush.bf16.xpose.msra.mxu0 0
        %5374 = vmatpush.bf16.xpose.msra.mxu0 %v5365
        %5375 = vmatmul.bf16.gmra.mxu0 %v5362
        %v5376 = vpop.f32.mrf.mxu0
        %v5377 = vadd.f32 0.0, %v5376
        %v5378 = vpop.f32.mrf.mxu0
        %5379 = vdwg.mxu0
        %5380 = vrot.lane.b32.xlu0 %v4939, 64
        %v5381 = vpop.permute.xlu0 %5380
        %5382 = vrot.lane.b32.xlu0 %v4454, 64
        %v5383 = vpop.permute.xlu0 %5382
        %v5385 = vsel %vm1775, %v5381, 0
        %v5388 = vsel %vm1775, %v5383, 0
        %5390 = vmatpush.bf16.xpose.msra.mxu0 0
        %5391 = vmatpush.bf16.xpose.msra.mxu0 0
        %5392 = vmatpush.bf16.xpose.msra.mxu0 0
        %5393 = vmatpush.bf16.xpose.msra.mxu0 0
        %5394 = vmatpush.bf16.xpose.msra.mxu0 0
        %5395 = vmatpush.bf16.xpose.msra.mxu0 0
        %5396 = vmatpush.bf16.xpose.msra.mxu0 0
        %5397 = vmatpush.bf16.xpose.msra.mxu0 %v5388
        %5398 = vmatmul.bf16.gmra.mxu0 %v5385
        %v5399 = vpop.f32.mrf.mxu0
        %v5400 = vadd.f32 0.0, %v5399
        %v5401 = vpop.f32.mrf.mxu0
        %5402 = vdwg.mxu0
        %v5403 = vsel %vm4474, %v5239, -inf
        %5404 = vmax.xlane.f32.xlu0 %v5403
        %v5405 = vpop.xlane.xlu0 %5404
        %v5406 = vsel %vm4474, %v5262, -inf
        %5407 = vmax.xlane.f32.xlu0 %v5406
        %v5408 = vpop.xlane.xlu0 %5407
        %v5409 = vsel %vm4474, %v5285, -inf
        %5410 = vmax.xlane.f32.xlu0 %v5409
        %v5411 = vpop.xlane.xlu0 %5410
        %v5412 = vsel %vm4474, %v5308, -inf
        %5413 = vmax.xlane.f32.xlu0 %v5412
        %v5414 = vpop.xlane.xlu0 %5413
        %v5415 = vsel %vm4474, %v5331, -inf
        %5416 = vmax.xlane.f32.xlu0 %v5415
        %v5417 = vpop.xlane.xlu0 %5416
        %v5418 = vsel %vm4474, %v5354, -inf
        %5419 = vmax.xlane.f32.xlu0 %v5418
        %v5420 = vpop.xlane.xlu0 %5419
        %v5421 = vsel %vm4474, %v5377, -inf
        %5422 = vmax.xlane.f32.xlu0 %v5421
        %v5423 = vpop.xlane.xlu0 %5422
        %v5424 = vsel %vm4474, %v5400, -inf
        %5425 = vmax.xlane.f32.xlu0 %v5424
        %v5426 = vpop.xlane.xlu0 %5425
        %v5427 = vsub.f32 %v5239, %v5405
        %v5428 = vsub.f32 %v5262, %v5408
        %v5429 = vsub.f32 %v5285, %v5411
        %v5430 = vsub.f32 %v5308, %v5414
        %v5431 = vsub.f32 %v5331, %v5417
        %v5432 = vsub.f32 %v5354, %v5420
        %v5433 = vsub.f32 %v5377, %v5423
        %v5434 = vsub.f32 %v5400, %v5426
        %v5435 = vmul.f32 %v5427, 1.442695
        %v5436 = vpow.pop %v5435
        %v5437 = vmul.f32 %v5428, 1.442695
        %v5438 = vpow.pop %v5437
        %v5439 = vmul.f32 %v5429, 1.442695
        %v5440 = vpow.pop %v5439
        %v5441 = vmul.f32 %v5430, 1.442695
        %v5442 = vpow.pop %v5441
        %v5443 = vmul.f32 %v5431, 1.442695
        %v5444 = vpow.pop %v5443
        %v5445 = vmul.f32 %v5432, 1.442695
        %v5446 = vpow.pop %v5445
        %v5447 = vmul.f32 %v5433, 1.442695
        %v5448 = vpow.pop %v5447
        %v5449 = vmul.f32 %v5434, 1.442695
        %v5450 = vpow.pop %v5449
        %v5451 = vsel %vm4474, %v5436, 0.0
        %5452 = vadd.xlane.f32.xlu0 %v5451
        %v5453 = vpop.xlane.xlu0 %5452
        %v5454 = vsel %vm4474, %v5438, 0.0
        %5455 = vadd.xlane.f32.xlu0 %v5454
        %v5456 = vpop.xlane.xlu0 %5455
        %v5457 = vsel %vm4474, %v5440, 0.0
        %5458 = vadd.xlane.f32.xlu0 %v5457
        %v5459 = vpop.xlane.xlu0 %5458
        %v5460 = vsel %vm4474, %v5442, 0.0
        %5461 = vadd.xlane.f32.xlu0 %v5460
        %v5462 = vpop.xlane.xlu0 %5461
        %v5463 = vsel %vm4474, %v5444, 0.0
        %5464 = vadd.xlane.f32.xlu0 %v5463
        %v5465 = vpop.xlane.xlu0 %5464
        %v5466 = vsel %vm4474, %v5446, 0.0
        %5467 = vadd.xlane.f32.xlu0 %v5466
        %v5468 = vpop.xlane.xlu0 %5467
        %v5469 = vsel %vm4474, %v5448, 0.0
        %5470 = vadd.xlane.f32.xlu0 %v5469
        %v5471 = vpop.xlane.xlu0 %5470
        %v5472 = vsel %vm4474, %v5450, 0.0
        %5473 = vadd.xlane.f32.xlu0 %v5472
        %v5474 = vpop.xlane.xlu0 %5473
        %v5475 = vrcp.pop %v5453
        %v5476 = vrcp.pop %v5456
        %v5477 = vrcp.pop %v5459
        %v5478 = vrcp.pop %v5462
        %v5479 = vrcp.pop %v5465
        %v5480 = vrcp.pop %v5468
        %v5481 = vrcp.pop %v5471
        %v5482 = vrcp.pop %v5474
        %v5483 = vmul.f32 %v5436, %v5475
        %v5484 = vmul.f32 %v5438, %v5476
        %v5485 = vmul.f32 %v5440, %v5477
        %v5486 = vmul.f32 %v5442, %v5478
        %v5487 = vmul.f32 %v5444, %v5479
        %v5488 = vmul.f32 %v5446, %v5480
        %v5489 = vmul.f32 %v5448, %v5481
        %v5490 = vmul.f32 %v5450, %v5482
        %v5491 = vpack.c.bf16 %v5483, %v5483
        %v5492 = vpack.c.bf16 %v5484, %v5484
        %v5493 = vpack.c.bf16 %v5485, %v5485
        %v5494 = vpack.c.bf16 %v5486, %v5486
        %v5495 = vpack.c.bf16 %v5487, %v5487
        %v5496 = vpack.c.bf16 %v5488, %v5488
        %v5497 = vpack.c.bf16 %v5489, %v5489
        %v5498 = vpack.c.bf16 %v5490, %v5490
        %5499 = vrot.lane.b32.xlu0 %v4575, 64
        %v5500 = vpop.permute.xlu0 %5499
        %v5503 = vsel %vm4474, %v5491, 0
        %5505 = vmatpush.bf16.msra.mxu0 0
        %5506 = vmatpush.bf16.msra.mxu0 0
        %5507 = vmatpush.bf16.msra.mxu0 0
        %5508 = vmatpush.bf16.msra.mxu0 0
        %5509 = vmatpush.bf16.msra.mxu0 0
        %5510 = vmatpush.bf16.msra.mxu0 0
        %5511 = vmatpush.bf16.msra.mxu0 0
        %5512 = vmatpush.bf16.msra.mxu0 %v5500
        %5513 = vmatmul.bf16.gmra.mxu0 %v5503
        %v5514 = vpop.f32.mrf.mxu0
        %v5515 = vadd.f32 0.0, %v5514
        %v5516 = vpop.f32.mrf.mxu0
        %5517 = vdwg.mxu0
        %5518 = vrot.lane.b32.xlu0 %v4597, 64
        %v5519 = vpop.permute.xlu0 %5518
        %v5522 = vsel %vm4474, %v5492, 0
        %5524 = vmatpush.bf16.msra.mxu0 0
        %5525 = vmatpush.bf16.msra.mxu0 0
        %5526 = vmatpush.bf16.msra.mxu0 0
        %5527 = vmatpush.bf16.msra.mxu0 0
        %5528 = vmatpush.bf16.msra.mxu0 0
        %5529 = vmatpush.bf16.msra.mxu0 0
        %5530 = vmatpush.bf16.msra.mxu0 0
        %5531 = vmatpush.bf16.msra.mxu0 %v5519
        %5532 = vmatmul.bf16.gmra.mxu0 %v5522
        %v5533 = vpop.f32.mrf.mxu0
        %v5534 = vadd.f32 0.0, %v5533
        %v5535 = vpop.f32.mrf.mxu0
        %5536 = vdwg.mxu0
        %5537 = vrot.lane.b32.xlu0 %v4619, 64
        %v5538 = vpop.permute.xlu0 %5537
        %v5541 = vsel %vm4474, %v5493, 0
        %5543 = vmatpush.bf16.msra.mxu0 0
        %5544 = vmatpush.bf16.msra.mxu0 0
        %5545 = vmatpush.bf16.msra.mxu0 0
        %5546 = vmatpush.bf16.msra.mxu0 0
        %5547 = vmatpush.bf16.msra.mxu0 0
        %5548 = vmatpush.bf16.msra.mxu0 0
        %5549 = vmatpush.bf16.msra.mxu0 0
        %5550 = vmatpush.bf16.msra.mxu0 %v5538
        %5551 = vmatmul.bf16.gmra.mxu0 %v5541
        %v5552 = vpop.f32.mrf.mxu0
        %v5553 = vadd.f32 0.0, %v5552
        %v5554 = vpop.f32.mrf.mxu0
        %5555 = vdwg.mxu0
        %5556 = vrot.lane.b32.xlu0 %v4641, 64
        %v5557 = vpop.permute.xlu0 %5556
        %v5560 = vsel %vm4474, %v5494, 0
        %5562 = vmatpush.bf16.msra.mxu0 0
        %5563 = vmatpush.bf16.msra.mxu0 0
        %5564 = vmatpush.bf16.msra.mxu0 0
        %5565 = vmatpush.bf16.msra.mxu0 0
        %5566 = vmatpush.bf16.msra.mxu0 0
        %5567 = vmatpush.bf16.msra.mxu0 0
        %5568 = vmatpush.bf16.msra.mxu0 0
        %5569 = vmatpush.bf16.msra.mxu0 %v5557
        %5570 = vmatmul.bf16.gmra.mxu0 %v5560
        %v5571 = vpop.f32.mrf.mxu0
        %v5572 = vadd.f32 0.0, %v5571
        %v5573 = vpop.f32.mrf.mxu0
        %5574 = vdwg.mxu0
        %5575 = vrot.lane.b32.xlu0 %v4663, 64
        %v5576 = vpop.permute.xlu0 %5575
        %v5579 = vsel %vm4474, %v5495, 0
        %5581 = vmatpush.bf16.msra.mxu0 0
        %5582 = vmatpush.bf16.msra.mxu0 0
        %5583 = vmatpush.bf16.msra.mxu0 0
        %5584 = vmatpush.bf16.msra.mxu0 0
        %5585 = vmatpush.bf16.msra.mxu0 0
        %5586 = vmatpush.bf16.msra.mxu0 0
        %5587 = vmatpush.bf16.msra.mxu0 0
        %5588 = vmatpush.bf16.msra.mxu0 %v5576
        %5589 = vmatmul.bf16.gmra.mxu0 %v5579
        %v5590 = vpop.f32.mrf.mxu0
        %v5591 = vadd.f32 0.0, %v5590
        %v5592 = vpop.f32.mrf.mxu0
        %5593 = vdwg.mxu0
        %5594 = vrot.lane.b32.xlu0 %v4685, 64
        %v5595 = vpop.permute.xlu0 %5594
        %v5598 = vsel %vm4474, %v5496, 0
        %5600 = vmatpush.bf16.msra.mxu0 0
        %5601 = vmatpush.bf16.msra.mxu0 0
        %5602 = vmatpush.bf16.msra.mxu0 0
        %5603 = vmatpush.bf16.msra.mxu0 0
        %5604 = vmatpush.bf16.msra.mxu0 0
        %5605 = vmatpush.bf16.msra.mxu0 0
        %5606 = vmatpush.bf16.msra.mxu0 0
        %5607 = vmatpush.bf16.msra.mxu0 %v5595
        %5608 = vmatmul.bf16.gmra.mxu0 %v5598
        %v5609 = vpop.f32.mrf.mxu0
        %v5610 = vadd.f32 0.0, %v5609
        %v5611 = vpop.f32.mrf.mxu0
        %5612 = vdwg.mxu0
        %5613 = vrot.lane.b32.xlu0 %v4707, 64
        %v5614 = vpop.permute.xlu0 %5613
        %v5617 = vsel %vm4474, %v5497, 0
        %5619 = vmatpush.bf16.msra.mxu0 0
        %5620 = vmatpush.bf16.msra.mxu0 0
        %5621 = vmatpush.bf16.msra.mxu0 0
        %5622 = vmatpush.bf16.msra.mxu0 0
        %5623 = vmatpush.bf16.msra.mxu0 0
        %5624 = vmatpush.bf16.msra.mxu0 0
        %5625 = vmatpush.bf16.msra.mxu0 0
        %5626 = vmatpush.bf16.msra.mxu0 %v5614
        %5627 = vmatmul.bf16.gmra.mxu0 %v5617
        %v5628 = vpop.f32.mrf.mxu0
        %v5629 = vadd.f32 0.0, %v5628
        %v5630 = vpop.f32.mrf.mxu0
        %5631 = vdwg.mxu0
        %5632 = vrot.lane.b32.xlu0 %v4729, 64
        %v5633 = vpop.permute.xlu0 %5632
        %v5636 = vsel %vm4474, %v5498, 0
        %5638 = vmatpush.bf16.msra.mxu0 0
        %5639 = vmatpush.bf16.msra.mxu0 0
        %5640 = vmatpush.bf16.msra.mxu0 0
        %5641 = vmatpush.bf16.msra.mxu0 0
        %5642 = vmatpush.bf16.msra.mxu0 0
        %5643 = vmatpush.bf16.msra.mxu0 0
        %5644 = vmatpush.bf16.msra.mxu0 0
        %5645 = vmatpush.bf16.msra.mxu0 %v5633
        %5646 = vmatmul.bf16.gmra.mxu0 %v5636
        %v5647 = vpop.f32.mrf.mxu0
        %v5648 = vadd.f32 0.0, %v5647
        %v5649 = vpop.f32.mrf.mxu0
        %5650 = vdwg.mxu0
        %v5651 = vpack.c.bf16 %v5515, %v5515
        %v5652 = vpack.c.bf16 %v5534, %v5534
        %v5653 = vpack.c.bf16 %v5553, %v5553
        %v5654 = vpack.c.bf16 %v5572, %v5572
        %v5655 = vpack.c.bf16 %v5591, %v5591
        %v5656 = vpack.c.bf16 %v5610, %v5610
        %v5657 = vpack.c.bf16 %v5629, %v5629
        %v5658 = vpack.c.bf16 %v5648, %v5648
        %5659 = vrot.lane.b32.xlu0 %v4757, 32
        %v5660 = vpop.permute.xlu0 %5659
        %5661 = vrot.lane.b32.xlu0 %v4286, 32
        %v5662 = vpop.permute.xlu0 %5661
        %v5664 = vsel %vm1775, %v5660, 0
        %v5667 = vsel %vm1775, %v5662, 0
        %5669 = vmatpush.bf16.xpose.msra.mxu0 0
        %5670 = vmatpush.bf16.xpose.msra.mxu0 0
        %5671 = vmatpush.bf16.xpose.msra.mxu0 0
        %5672 = vmatpush.bf16.xpose.msra.mxu0 0
        %5673 = vmatpush.bf16.xpose.msra.mxu0 0
        %5674 = vmatpush.bf16.xpose.msra.mxu0 0
        %5675 = vmatpush.bf16.xpose.msra.mxu0 0
        %5676 = vmatpush.bf16.xpose.msra.mxu0 %v5667
        %5677 = vmatmul.bf16.gmra.mxu0 %v5664
        %v5678 = vpop.f32.mrf.mxu0
        %v5679 = vadd.f32 0.0, %v5678
        %v5680 = vpop.f32.mrf.mxu0
        %5681 = vdwg.mxu0
        %5682 = vrot.lane.b32.xlu0 %v4783, 32
        %v5683 = vpop.permute.xlu0 %5682
        %5684 = vrot.lane.b32.xlu0 %v4310, 32
        %v5685 = vpop.permute.xlu0 %5684
        %v5687 = vsel %vm1775, %v5683, 0
        %v5690 = vsel %vm1775, %v5685, 0
        %5692 = vmatpush.bf16.xpose.msra.mxu0 0
        %5693 = vmatpush.bf16.xpose.msra.mxu0 0
        %5694 = vmatpush.bf16.xpose.msra.mxu0 0
        %5695 = vmatpush.bf16.xpose.msra.mxu0 0
        %5696 = vmatpush.bf16.xpose.msra.mxu0 0
        %5697 = vmatpush.bf16.xpose.msra.mxu0 0
        %5698 = vmatpush.bf16.xpose.msra.mxu0 0
        %5699 = vmatpush.bf16.xpose.msra.mxu0 %v5690
        %5700 = vmatmul.bf16.gmra.mxu0 %v5687
        %v5701 = vpop.f32.mrf.mxu0
        %v5702 = vadd.f32 0.0, %v5701
        %v5703 = vpop.f32.mrf.mxu0
        %5704 = vdwg.mxu0
        %5705 = vrot.lane.b32.xlu0 %v4809, 32
        %v5706 = vpop.permute.xlu0 %5705
        %5707 = vrot.lane.b32.xlu0 %v4334, 32
        %v5708 = vpop.permute.xlu0 %5707
        %v5710 = vsel %vm1775, %v5706, 0
        %v5713 = vsel %vm1775, %v5708, 0
        %5715 = vmatpush.bf16.xpose.msra.mxu0 0
        %5716 = vmatpush.bf16.xpose.msra.mxu0 0
        %5717 = vmatpush.bf16.xpose.msra.mxu0 0
        %5718 = vmatpush.bf16.xpose.msra.mxu0 0
        %5719 = vmatpush.bf16.xpose.msra.mxu0 0
        %5720 = vmatpush.bf16.xpose.msra.mxu0 0
        %5721 = vmatpush.bf16.xpose.msra.mxu0 0
        %5722 = vmatpush.bf16.xpose.msra.mxu0 %v5713
        %5723 = vmatmul.bf16.gmra.mxu0 %v5710
        %v5724 = vpop.f32.mrf.mxu0
        %v5725 = vadd.f32 0.0, %v5724
        %v5726 = vpop.f32.mrf.mxu0
        %5727 = vdwg.mxu0
        %5728 = vrot.lane.b32.xlu0 %v4835, 32
        %v5729 = vpop.permute.xlu0 %5728
        %5730 = vrot.lane.b32.xlu0 %v4358, 32
        %v5731 = vpop.permute.xlu0 %5730
        %v5733 = vsel %vm1775, %v5729, 0
        %v5736 = vsel %vm1775, %v5731, 0
        %5738 = vmatpush.bf16.xpose.msra.mxu0 0
        %5739 = vmatpush.bf16.xpose.msra.mxu0 0
        %5740 = vmatpush.bf16.xpose.msra.mxu0 0
        %5741 = vmatpush.bf16.xpose.msra.mxu0 0
        %5742 = vmatpush.bf16.xpose.msra.mxu0 0
        %5743 = vmatpush.bf16.xpose.msra.mxu0 0
        %5744 = vmatpush.bf16.xpose.msra.mxu0 0
        %5745 = vmatpush.bf16.xpose.msra.mxu0 %v5736
        %5746 = vmatmul.bf16.gmra.mxu0 %v5733
        %v5747 = vpop.f32.mrf.mxu0
        %v5748 = vadd.f32 0.0, %v5747
        %v5749 = vpop.f32.mrf.mxu0
        %5750 = vdwg.mxu0
        %5751 = vrot.lane.b32.xlu0 %v4861, 32
        %v5752 = vpop.permute.xlu0 %5751
        %5753 = vrot.lane.b32.xlu0 %v4382, 32
        %v5754 = vpop.permute.xlu0 %5753
        %v5756 = vsel %vm1775, %v5752, 0
        %v5759 = vsel %vm1775, %v5754, 0
        %5761 = vmatpush.bf16.xpose.msra.mxu0 0
        %5762 = vmatpush.bf16.xpose.msra.mxu0 0
        %5763 = vmatpush.bf16.xpose.msra.mxu0 0
        %5764 = vmatpush.bf16.xpose.msra.mxu0 0
        %5765 = vmatpush.bf16.xpose.msra.mxu0 0
        %5766 = vmatpush.bf16.xpose.msra.mxu0 0
        %5767 = vmatpush.bf16.xpose.msra.mxu0 0
        %5768 = vmatpush.bf16.xpose.msra.mxu0 %v5759
        %5769 = vmatmul.bf16.gmra.mxu0 %v5756
        %v5770 = vpop.f32.mrf.mxu0
        %v5771 = vadd.f32 0.0, %v5770
        %v5772 = vpop.f32.mrf.mxu0
        %5773 = vdwg.mxu0
        %5774 = vrot.lane.b32.xlu0 %v4887, 32
        %v5775 = vpop.permute.xlu0 %5774
        %5776 = vrot.lane.b32.xlu0 %v4406, 32
        %v5777 = vpop.permute.xlu0 %5776
        %v5779 = vsel %vm1775, %v5775, 0
        %v5782 = vsel %vm1775, %v5777, 0
        %5784 = vmatpush.bf16.xpose.msra.mxu0 0
        %5785 = vmatpush.bf16.xpose.msra.mxu0 0
        %5786 = vmatpush.bf16.xpose.msra.mxu0 0
        %5787 = vmatpush.bf16.xpose.msra.mxu0 0
        %5788 = vmatpush.bf16.xpose.msra.mxu0 0
        %5789 = vmatpush.bf16.xpose.msra.mxu0 0
        %5790 = vmatpush.bf16.xpose.msra.mxu0 0
        %5791 = vmatpush.bf16.xpose.msra.mxu0 %v5782
        %5792 = vmatmul.bf16.gmra.mxu0 %v5779
        %v5793 = vpop.f32.mrf.mxu0
        %v5794 = vadd.f32 0.0, %v5793
        %v5795 = vpop.f32.mrf.mxu0
        %5796 = vdwg.mxu0
        %5797 = vrot.lane.b32.xlu0 %v4913, 32
        %v5798 = vpop.permute.xlu0 %5797
        %5799 = vrot.lane.b32.xlu0 %v4430, 32
        %v5800 = vpop.permute.xlu0 %5799
        %v5802 = vsel %vm1775, %v5798, 0
        %v5805 = vsel %vm1775, %v5800, 0
        %5807 = vmatpush.bf16.xpose.msra.mxu0 0
        %5808 = vmatpush.bf16.xpose.msra.mxu0 0
        %5809 = vmatpush.bf16.xpose.msra.mxu0 0
        %5810 = vmatpush.bf16.xpose.msra.mxu0 0
        %5811 = vmatpush.bf16.xpose.msra.mxu0 0
        %5812 = vmatpush.bf16.xpose.msra.mxu0 0
        %5813 = vmatpush.bf16.xpose.msra.mxu0 0
        %5814 = vmatpush.bf16.xpose.msra.mxu0 %v5805
        %5815 = vmatmul.bf16.gmra.mxu0 %v5802
        %v5816 = vpop.f32.mrf.mxu0
        %v5817 = vadd.f32 0.0, %v5816
        %v5818 = vpop.f32.mrf.mxu0
        %5819 = vdwg.mxu0
        %5820 = vrot.lane.b32.xlu0 %v4939, 32
        %v5821 = vpop.permute.xlu0 %5820
        %5822 = vrot.lane.b32.xlu0 %v4454, 32
        %v5823 = vpop.permute.xlu0 %5822
        %v5825 = vsel %vm1775, %v5821, 0
        %v5828 = vsel %vm1775, %v5823, 0
        %5830 = vmatpush.bf16.xpose.msra.mxu0 0
        %5831 = vmatpush.bf16.xpose.msra.mxu0 0
        %5832 = vmatpush.bf16.xpose.msra.mxu0 0
        %5833 = vmatpush.bf16.xpose.msra.mxu0 0
        %5834 = vmatpush.bf16.xpose.msra.mxu0 0
        %5835 = vmatpush.bf16.xpose.msra.mxu0 0
        %5836 = vmatpush.bf16.xpose.msra.mxu0 0
        %5837 = vmatpush.bf16.xpose.msra.mxu0 %v5828
        %5838 = vmatmul.bf16.gmra.mxu0 %v5825
        %v5839 = vpop.f32.mrf.mxu0
        %v5840 = vadd.f32 0.0, %v5839
        %v5841 = vpop.f32.mrf.mxu0
        %5842 = vdwg.mxu0
        %v5843 = vsel %vm4474, %v5679, -inf
        %5844 = vmax.xlane.f32.xlu0 %v5843
        %v5845 = vpop.xlane.xlu0 %5844
        %v5846 = vsel %vm4474, %v5702, -inf
        %5847 = vmax.xlane.f32.xlu0 %v5846
        %v5848 = vpop.xlane.xlu0 %5847
        %v5849 = vsel %vm4474, %v5725, -inf
        %5850 = vmax.xlane.f32.xlu0 %v5849
        %v5851 = vpop.xlane.xlu0 %5850
        %v5852 = vsel %vm4474, %v5748, -inf
        %5853 = vmax.xlane.f32.xlu0 %v5852
        %v5854 = vpop.xlane.xlu0 %5853
        %v5855 = vsel %vm4474, %v5771, -inf
        %5856 = vmax.xlane.f32.xlu0 %v5855
        %v5857 = vpop.xlane.xlu0 %5856
        %v5858 = vsel %vm4474, %v5794, -inf
        %5859 = vmax.xlane.f32.xlu0 %v5858
        %v5860 = vpop.xlane.xlu0 %5859
        %v5861 = vsel %vm4474, %v5817, -inf
        %5862 = vmax.xlane.f32.xlu0 %v5861
        %v5863 = vpop.xlane.xlu0 %5862
        %v5864 = vsel %vm4474, %v5840, -inf
        %5865 = vmax.xlane.f32.xlu0 %v5864
        %v5866 = vpop.xlane.xlu0 %5865
        %v5867 = vsub.f32 %v5679, %v5845
        %v5868 = vsub.f32 %v5702, %v5848
        %v5869 = vsub.f32 %v5725, %v5851
        %v5870 = vsub.f32 %v5748, %v5854
        %v5871 = vsub.f32 %v5771, %v5857
        %v5872 = vsub.f32 %v5794, %v5860
        %v5873 = vsub.f32 %v5817, %v5863
        %v5874 = vsub.f32 %v5840, %v5866
        %v5875 = vmul.f32 %v5867, 1.442695
        %v5876 = vpow.pop %v5875
        %v5877 = vmul.f32 %v5868, 1.442695
        %v5878 = vpow.pop %v5877
        %v5879 = vmul.f32 %v5869, 1.442695
        %v5880 = vpow.pop %v5879
        %v5881 = vmul.f32 %v5870, 1.442695
        %v5882 = vpow.pop %v5881
        %v5883 = vmul.f32 %v5871, 1.442695
        %v5884 = vpow.pop %v5883
        %v5885 = vmul.f32 %v5872, 1.442695
        %v5886 = vpow.pop %v5885
        %v5887 = vmul.f32 %v5873, 1.442695
        %v5888 = vpow.pop %v5887
        %v5889 = vmul.f32 %v5874, 1.442695
        %v5890 = vpow.pop %v5889
        %v5891 = vsel %vm4474, %v5876, 0.0
        %5892 = vadd.xlane.f32.xlu0 %v5891
        %v5893 = vpop.xlane.xlu0 %5892
        %v5894 = vsel %vm4474, %v5878, 0.0
        %5895 = vadd.xlane.f32.xlu0 %v5894
        %v5896 = vpop.xlane.xlu0 %5895
        %v5897 = vsel %vm4474, %v5880, 0.0
        %5898 = vadd.xlane.f32.xlu0 %v5897
        %v5899 = vpop.xlane.xlu0 %5898
        %v5900 = vsel %vm4474, %v5882, 0.0
        %5901 = vadd.xlane.f32.xlu0 %v5900
        %v5902 = vpop.xlane.xlu0 %5901
        %v5903 = vsel %vm4474, %v5884, 0.0
        %5904 = vadd.xlane.f32.xlu0 %v5903
        %v5905 = vpop.xlane.xlu0 %5904
        %v5906 = vsel %vm4474, %v5886, 0.0
        %5907 = vadd.xlane.f32.xlu0 %v5906
        %v5908 = vpop.xlane.xlu0 %5907
        %v5909 = vsel %vm4474, %v5888, 0.0
        %5910 = vadd.xlane.f32.xlu0 %v5909
        %v5911 = vpop.xlane.xlu0 %5910
        %v5912 = vsel %vm4474, %v5890, 0.0
        %5913 = vadd.xlane.f32.xlu0 %v5912
        %v5914 = vpop.xlane.xlu0 %5913
        %v5915 = vrcp.pop %v5893
        %v5916 = vrcp.pop %v5896
        %v5917 = vrcp.pop %v5899
        %v5918 = vrcp.pop %v5902
        %v5919 = vrcp.pop %v5905
        %v5920 = vrcp.pop %v5908
        %v5921 = vrcp.pop %v5911
        %v5922 = vrcp.pop %v5914
        %v5923 = vmul.f32 %v5876, %v5915
        %v5924 = vmul.f32 %v5878, %v5916
        %v5925 = vmul.f32 %v5880, %v5917
        %v5926 = vmul.f32 %v5882, %v5918
        %v5927 = vmul.f32 %v5884, %v5919
        %v5928 = vmul.f32 %v5886, %v5920
        %v5929 = vmul.f32 %v5888, %v5921
        %v5930 = vmul.f32 %v5890, %v5922
        %v5931 = vpack.c.bf16 %v5923, %v5923
        %v5932 = vpack.c.bf16 %v5924, %v5924
        %v5933 = vpack.c.bf16 %v5925, %v5925
        %v5934 = vpack.c.bf16 %v5926, %v5926
        %v5935 = vpack.c.bf16 %v5927, %v5927
        %v5936 = vpack.c.bf16 %v5928, %v5928
        %v5937 = vpack.c.bf16 %v5929, %v5929
        %v5938 = vpack.c.bf16 %v5930, %v5930
        %5939 = vrot.lane.b32.xlu0 %v4575, 32
        %v5940 = vpop.permute.xlu0 %5939
        %v5943 = vsel %vm4474, %v5931, 0
        %5945 = vmatpush.bf16.msra.mxu0 0
        %5946 = vmatpush.bf16.msra.mxu0 0
        %5947 = vmatpush.bf16.msra.mxu0 0
        %5948 = vmatpush.bf16.msra.mxu0 0
        %5949 = vmatpush.bf16.msra.mxu0 0
        %5950 = vmatpush.bf16.msra.mxu0 0
        %5951 = vmatpush.bf16.msra.mxu0 0
        %5952 = vmatpush.bf16.msra.mxu0 %v5940
        %5953 = vmatmul.bf16.gmra.mxu0 %v5943
        %v5954 = vpop.f32.mrf.mxu0
        %v5955 = vadd.f32 0.0, %v5954
        %v5956 = vpop.f32.mrf.mxu0
        %5957 = vdwg.mxu0
        %5958 = vrot.lane.b32.xlu0 %v4597, 32
        %v5959 = vpop.permute.xlu0 %5958
        %v5962 = vsel %vm4474, %v5932, 0
        %5964 = vmatpush.bf16.msra.mxu0 0
        %5965 = vmatpush.bf16.msra.mxu0 0
        %5966 = vmatpush.bf16.msra.mxu0 0
        %5967 = vmatpush.bf16.msra.mxu0 0
        %5968 = vmatpush.bf16.msra.mxu0 0
        %5969 = vmatpush.bf16.msra.mxu0 0
        %5970 = vmatpush.bf16.msra.mxu0 0
        %5971 = vmatpush.bf16.msra.mxu0 %v5959
        %5972 = vmatmul.bf16.gmra.mxu0 %v5962
        %v5973 = vpop.f32.mrf.mxu0
        %v5974 = vadd.f32 0.0, %v5973
        %v5975 = vpop.f32.mrf.mxu0
        %5976 = vdwg.mxu0
        %5977 = vrot.lane.b32.xlu0 %v4619, 32
        %v5978 = vpop.permute.xlu0 %5977
        %v5981 = vsel %vm4474, %v5933, 0
        %5983 = vmatpush.bf16.msra.mxu0 0
        %5984 = vmatpush.bf16.msra.mxu0 0
        %5985 = vmatpush.bf16.msra.mxu0 0
        %5986 = vmatpush.bf16.msra.mxu0 0
        %5987 = vmatpush.bf16.msra.mxu0 0
        %5988 = vmatpush.bf16.msra.mxu0 0
        %5989 = vmatpush.bf16.msra.mxu0 0
        %5990 = vmatpush.bf16.msra.mxu0 %v5978
        %5991 = vmatmul.bf16.gmra.mxu0 %v5981
        %v5992 = vpop.f32.mrf.mxu0
        %v5993 = vadd.f32 0.0, %v5992
        %v5994 = vpop.f32.mrf.mxu0
        %5995 = vdwg.mxu0
        %5996 = vrot.lane.b32.xlu0 %v4641, 32
        %v5997 = vpop.permute.xlu0 %5996
        %v6000 = vsel %vm4474, %v5934, 0
        %6002 = vmatpush.bf16.msra.mxu0 0
        %6003 = vmatpush.bf16.msra.mxu0 0
        %6004 = vmatpush.bf16.msra.mxu0 0
        %6005 = vmatpush.bf16.msra.mxu0 0
        %6006 = vmatpush.bf16.msra.mxu0 0
        %6007 = vmatpush.bf16.msra.mxu0 0
        %6008 = vmatpush.bf16.msra.mxu0 0
        %6009 = vmatpush.bf16.msra.mxu0 %v5997
        %6010 = vmatmul.bf16.gmra.mxu0 %v6000
        %v6011 = vpop.f32.mrf.mxu0
        %v6012 = vadd.f32 0.0, %v6011
        %v6013 = vpop.f32.mrf.mxu0
        %6014 = vdwg.mxu0
        %6015 = vrot.lane.b32.xlu0 %v4663, 32
        %v6016 = vpop.permute.xlu0 %6015
        %v6019 = vsel %vm4474, %v5935, 0
        %6021 = vmatpush.bf16.msra.mxu0 0
        %6022 = vmatpush.bf16.msra.mxu0 0
        %6023 = vmatpush.bf16.msra.mxu0 0
        %6024 = vmatpush.bf16.msra.mxu0 0
        %6025 = vmatpush.bf16.msra.mxu0 0
        %6026 = vmatpush.bf16.msra.mxu0 0
        %6027 = vmatpush.bf16.msra.mxu0 0
        %6028 = vmatpush.bf16.msra.mxu0 %v6016
        %6029 = vmatmul.bf16.gmra.mxu0 %v6019
        %v6030 = vpop.f32.mrf.mxu0
        %v6031 = vadd.f32 0.0, %v6030
        %v6032 = vpop.f32.mrf.mxu0
        %6033 = vdwg.mxu0
        %6034 = vrot.lane.b32.xlu0 %v4685, 32
        %v6035 = vpop.permute.xlu0 %6034
        %v6038 = vsel %vm4474, %v5936, 0
        %6040 = vmatpush.bf16.msra.mxu0 0
        %6041 = vmatpush.bf16.msra.mxu0 0
        %6042 = vmatpush.bf16.msra.mxu0 0
        %6043 = vmatpush.bf16.msra.mxu0 0
        %6044 = vmatpush.bf16.msra.mxu0 0
        %6045 = vmatpush.bf16.msra.mxu0 0
        %6046 = vmatpush.bf16.msra.mxu0 0
        %6047 = vmatpush.bf16.msra.mxu0 %v6035
        %6048 = vmatmul.bf16.gmra.mxu0 %v6038
        %v6049 = vpop.f32.mrf.mxu0
        %v6050 = vadd.f32 0.0, %v6049
        %v6051 = vpop.f32.mrf.mxu0
        %6052 = vdwg.mxu0
        %6053 = vrot.lane.b32.xlu0 %v4707, 32
        %v6054 = vpop.permute.xlu0 %6053
        %v6057 = vsel %vm4474, %v5937, 0
        %6059 = vmatpush.bf16.msra.mxu0 0
        %6060 = vmatpush.bf16.msra.mxu0 0
        %6061 = vmatpush.bf16.msra.mxu0 0
        %6062 = vmatpush.bf16.msra.mxu0 0
        %6063 = vmatpush.bf16.msra.mxu0 0
        %6064 = vmatpush.bf16.msra.mxu0 0
        %6065 = vmatpush.bf16.msra.mxu0 0
        %6066 = vmatpush.bf16.msra.mxu0 %v6054
        %6067 = vmatmul.bf16.gmra.mxu0 %v6057
        %v6068 = vpop.f32.mrf.mxu0
        %v6069 = vadd.f32 0.0, %v6068
        %v6070 = vpop.f32.mrf.mxu0
        %6071 = vdwg.mxu0
        %6072 = vrot.lane.b32.xlu0 %v4729, 32
        %v6073 = vpop.permute.xlu0 %6072
        %v6076 = vsel %vm4474, %v5938, 0
        %6078 = vmatpush.bf16.msra.mxu0 0
        %6079 = vmatpush.bf16.msra.mxu0 0
        %6080 = vmatpush.bf16.msra.mxu0 0
        %6081 = vmatpush.bf16.msra.mxu0 0
        %6082 = vmatpush.bf16.msra.mxu0 0
        %6083 = vmatpush.bf16.msra.mxu0 0
        %6084 = vmatpush.bf16.msra.mxu0 0
        %6085 = vmatpush.bf16.msra.mxu0 %v6073
        %6086 = vmatmul.bf16.gmra.mxu0 %v6076
        %v6087 = vpop.f32.mrf.mxu0
        %v6088 = vadd.f32 0.0, %v6087
        %v6089 = vpop.f32.mrf.mxu0
        %6090 = vdwg.mxu0
        %v6091 = vpack.c.bf16 %v5955, %v5955
        %v6092 = vpack.c.bf16 %v5974, %v5974
        %v6093 = vpack.c.bf16 %v5993, %v5993
        %v6094 = vpack.c.bf16 %v6012, %v6012
        %v6095 = vpack.c.bf16 %v6031, %v6031
        %v6096 = vpack.c.bf16 %v6050, %v6050
        %v6097 = vpack.c.bf16 %v6069, %v6069
        %v6098 = vpack.c.bf16 %v6088, %v6088
        %v6107 = vunpack.c.l.b16 %v5211
        %v6108 = vunpack.c.l.b16 %v5212
        %v6109 = vunpack.c.l.b16 %v5213
        %v6110 = vunpack.c.l.b16 %v5214
        %v6111 = vunpack.c.l.b16 %v5215
        %v6112 = vunpack.c.l.b16 %v5216
        %v6113 = vunpack.c.l.b16 %v5217
        %v6114 = vunpack.c.l.b16 %v5218
        %v6115 = vpack.c.b16 %v6107, %v6107
        %v6116 = vpack.c.b16 %v6108, %v6108
        %v6117 = vpack.c.b16 %v6109, %v6109
        %v6118 = vpack.c.b16 %v6110, %v6110
        %v6119 = vpack.c.b16 %v6111, %v6111
        %v6120 = vpack.c.b16 %v6112, %v6112
        %v6121 = vpack.c.b16 %v6113, %v6113
        %v6122 = vpack.c.b16 %v6114, %v6114
        %6123 = vrot.lane.b32.xlu0 %v6115, 32
        %v6124 = vpop.permute.xlu0 %6123
        %6125 = vrot.lane.b32.xlu0 %v6116, 32
        %v6126 = vpop.permute.xlu0 %6125
        %6127 = vrot.lane.b32.xlu0 %v6117, 32
        %v6128 = vpop.permute.xlu0 %6127
        %6129 = vrot.lane.b32.xlu0 %v6118, 32
        %v6130 = vpop.permute.xlu0 %6129
        %6131 = vrot.lane.b32.xlu0 %v6119, 32
        %v6132 = vpop.permute.xlu0 %6131
        %6133 = vrot.lane.b32.xlu0 %v6120, 32
        %v6134 = vpop.permute.xlu0 %6133
        %6135 = vrot.lane.b32.xlu0 %v6121, 32
        %v6136 = vpop.permute.xlu0 %6135
        %6137 = vrot.lane.b32.xlu0 %v6122, 32
        %v6138 = vpop.permute.xlu0 %6137
        %v6147 = vunpack.c.l.b16 %v5651
        %v6148 = vunpack.c.l.b16 %v5652
        %v6149 = vunpack.c.l.b16 %v5653
        %v6150 = vunpack.c.l.b16 %v5654
        %v6151 = vunpack.c.l.b16 %v5655
        %v6152 = vunpack.c.l.b16 %v5656
        %v6153 = vunpack.c.l.b16 %v5657
        %v6154 = vunpack.c.l.b16 %v5658
        %v6155 = vpack.c.b16 %v6147, %v6147
        %v6156 = vpack.c.b16 %v6148, %v6148
        %v6157 = vpack.c.b16 %v6149, %v6149
        %v6158 = vpack.c.b16 %v6150, %v6150
        %v6159 = vpack.c.b16 %v6151, %v6151
        %v6160 = vpack.c.b16 %v6152, %v6152
        %v6161 = vpack.c.b16 %v6153, %v6153
        %v6162 = vpack.c.b16 %v6154, %v6154
        %6163 = vrot.lane.b32.xlu0 %v6155, 64
        %v6164 = vpop.permute.xlu0 %6163
        %6165 = vrot.lane.b32.xlu0 %v6156, 64
        %v6166 = vpop.permute.xlu0 %6165
        %6167 = vrot.lane.b32.xlu0 %v6157, 64
        %v6168 = vpop.permute.xlu0 %6167
        %6169 = vrot.lane.b32.xlu0 %v6158, 64
        %v6170 = vpop.permute.xlu0 %6169
        %6171 = vrot.lane.b32.xlu0 %v6159, 64
        %v6172 = vpop.permute.xlu0 %6171
        %6173 = vrot.lane.b32.xlu0 %v6160, 64
        %v6174 = vpop.permute.xlu0 %6173
        %6175 = vrot.lane.b32.xlu0 %v6161, 64
        %v6176 = vpop.permute.xlu0 %6175
        %6177 = vrot.lane.b32.xlu0 %v6162, 64
        %v6178 = vpop.permute.xlu0 %6177
        %v6187 = vunpack.c.l.b16 %v6091
        %v6188 = vunpack.c.l.b16 %v6092
        %v6189 = vunpack.c.l.b16 %v6093
        %v6190 = vunpack.c.l.b16 %v6094
        %v6191 = vunpack.c.l.b16 %v6095
        %v6192 = vunpack.c.l.b16 %v6096
        %v6193 = vunpack.c.l.b16 %v6097
        %v6194 = vunpack.c.l.b16 %v6098
        %v6195 = vpack.c.b16 %v6187, %v6187
        %v6196 = vpack.c.b16 %v6188, %v6188
        %v6197 = vpack.c.b16 %v6189, %v6189
        %v6198 = vpack.c.b16 %v6190, %v6190
        %v6199 = vpack.c.b16 %v6191, %v6191
        %v6200 = vpack.c.b16 %v6192, %v6192
        %v6201 = vpack.c.b16 %v6193, %v6193
        %v6202 = vpack.c.b16 %v6194, %v6194
        %6203 = vrot.lane.b32.xlu0 %v6195, 96
        %v6204 = vpop.permute.xlu0 %6203
        %6205 = vrot.lane.b32.xlu0 %v6196, 96
        %v6206 = vpop.permute.xlu0 %6205
        %6207 = vrot.lane.b32.xlu0 %v6197, 96
        %v6208 = vpop.permute.xlu0 %6207
        %6209 = vrot.lane.b32.xlu0 %v6198, 96
        %v6210 = vpop.permute.xlu0 %6209
        %6211 = vrot.lane.b32.xlu0 %v6199, 96
        %v6212 = vpop.permute.xlu0 %6211
        %6213 = vrot.lane.b32.xlu0 %v6200, 96
        %v6214 = vpop.permute.xlu0 %6213
        %6215 = vrot.lane.b32.xlu0 %v6201, 96
        %v6216 = vpop.permute.xlu0 %6215
        %6217 = vrot.lane.b32.xlu0 %v6202, 96
        %v6218 = vpop.permute.xlu0 %6217
        %v6221 = vsel %vm1775, %v4747, %v6124
        %v6224 = vsel %vm1775, %v4748, %v6126
        %v6227 = vsel %vm1775, %v4749, %v6128
        %v6230 = vsel %vm1775, %v4750, %v6130
        %v6233 = vsel %vm1775, %v4751, %v6132
        %v6236 = vsel %vm1775, %v4752, %v6134
        %v6239 = vsel %vm1775, %v4753, %v6136
        %v6242 = vsel %vm1775, %v4754, %v6138
        %v6244 = vsel %vm3770, %v6221, %v6164
        %v6246 = vsel %vm3770, %v6224, %v6166
        %v6248 = vsel %vm3770, %v6227, %v6168
        %v6250 = vsel %vm3770, %v6230, %v6170
        %v6252 = vsel %vm3770, %v6233, %v6172
        %v6254 = vsel %vm3770, %v6236, %v6174
        %v6256 = vsel %vm3770, %v6239, %v6176
        %v6258 = vsel %vm3770, %v6242, %v6178
        %v6260 = vsel %vm3787, %v6244, %v6204
        %v6262 = vsel %vm3787, %v6246, %v6206
        %v6264 = vsel %vm3787, %v6248, %v6208
        %v6266 = vsel %vm3787, %v6250, %v6210
        %v6268 = vsel %vm3787, %v6252, %v6212
        %v6270 = vsel %vm3787, %v6254, %v6214
        %v6272 = vsel %vm3787, %v6256, %v6216
        %v6274 = vsel %vm3787, %v6258, %v6218
        %v6275 = vld [vmem:[#allocation15] sm:$0xf]
        %v6276 = vld [vmem:[#allocation15 + $0x4] sm:$0xf]
        %v6277 = vld [vmem:[#allocation15 + $0x8] sm:$0xf]
        %v6278 = vld [vmem:[#allocation15 + $0xc] sm:$0xf]
        %v6279 = vld [vmem:[#allocation15 + $0x10] sm:$0xf]
        %v6280 = vld [vmem:[#allocation15 + $0x14] sm:$0xf]
        %v6281 = vld [vmem:[#allocation15 + $0x18] sm:$0xf]
        %v6282 = vld [vmem:[#allocation15 + $0x1c] sm:$0xf]
        %v6283 = vld [vmem:[#allocation15 + $0x20] sm:$0xf]
        %v6284 = vld [vmem:[#allocation15 + $0x24] sm:$0xf]
        %v6285 = vld [vmem:[#allocation15 + $0x28] sm:$0xf]
        %v6286 = vld [vmem:[#allocation15 + $0x2c] sm:$0xf]
        %v6287 = vld [vmem:[#allocation15 + $0x30] sm:$0xf]
        %v6288 = vld [vmem:[#allocation15 + $0x34] sm:$0xf]
        %v6289 = vld [vmem:[#allocation15 + $0x38] sm:$0xf]
        %v6290 = vld [vmem:[#allocation15 + $0x3c] sm:$0xf]
        %v6291 = vld [vmem:[%s11] sm:$0x1]
        %v6293 = vperm.slane %v6291, 0
        %v6303 = vunpack.c.l.b16 %v6260
        %v6304 = vunpack.c.l.b16 %v6262
        %v6305 = vunpack.c.l.b16 %v6264
        %v6306 = vunpack.c.l.b16 %v6266
        %v6307 = vunpack.c.l.b16 %v6268
        %v6308 = vunpack.c.l.b16 %v6270
        %v6309 = vunpack.c.l.b16 %v6272
        %v6310 = vunpack.c.l.b16 %v6274
        %v6311 = vpack.c.b16 %v6304, %v6303
        %v6312 = vpack.c.b16 %v6306, %v6305
        %v6313 = vpack.c.b16 %v6308, %v6307
        %v6314 = vpack.c.b16 %v6310, %v6309
        %v6335 = vunpack.c.l.b16 %v6275
        %v6336 = vunpack.c.l.b16 %v6276
        %v6337 = vunpack.c.l.b16 %v6277
        %v6338 = vunpack.c.l.b16 %v6278
        %v6339 = vunpack.c.l.b16 %v6279
        %v6340 = vunpack.c.l.b16 %v6280
        %v6341 = vunpack.c.l.b16 %v6281
        %v6342 = vunpack.c.l.b16 %v6282
        %v6343 = vunpack.c.l.b16 %v6283
        %v6344 = vunpack.c.l.b16 %v6284
        %v6345 = vunpack.c.l.b16 %v6285
        %v6346 = vunpack.c.l.b16 %v6286
        %v6347 = vunpack.c.l.b16 %v6287
        %v6348 = vunpack.c.l.b16 %v6288
        %v6349 = vunpack.c.l.b16 %v6289
        %v6350 = vunpack.c.l.b16 %v6290
        %v6351 = vpack.c.b16 %v6336, %v6335
        %v6352 = vpack.c.b16 %v6338, %v6337
        %v6353 = vpack.c.b16 %v6340, %v6339
        %v6354 = vpack.c.b16 %v6342, %v6341
        %v6355 = vpack.c.b16 %v6344, %v6343
        %v6356 = vpack.c.b16 %v6346, %v6345
        %v6357 = vpack.c.b16 %v6348, %v6347
        %v6358 = vpack.c.b16 %v6350, %v6349
        %6367 = vmatpush.bf16.msra.mxu0 %v6358
        %6368 = vmatpush.bf16.msra.mxu0 %v6357
        %6369 = vmatpush.bf16.msra.mxu0 %v6356
        %6370 = vmatpush.bf16.msra.mxu0 %v6355
        %6371 = vmatpush.bf16.msra.mxu0 %v6354
        %6372 = vmatpush.bf16.msra.mxu0 %v6353
        %6373 = vmatpush.bf16.msra.mxu0 %v6352
        %6374 = vmatpush.bf16.msra.mxu0 %v6351
        %6375 = vmatmul.bf16.gmra.mxu0 %v6311
        %v6376 = vpop.f32.mrf.mxu0
        %v6377 = vadd.f32 %v6293, %v6376
        %v6378 = vpop.f32.mrf.mxu0
        %v6379 = vadd.f32 %v6293, %v6378
        %6380 = vmatmul.bf16.gmra.mxu0 %v6312
        %v6381 = vpop.f32.mrf.mxu0
        %v6382 = vadd.f32 %v6293, %v6381
        %v6383 = vpop.f32.mrf.mxu0
        %v6384 = vadd.f32 %v6293, %v6383
        %6385 = vmatmul.bf16.gmra.mxu0 %v6313
        %v6386 = vpop.f32.mrf.mxu0
        %v6387 = vadd.f32 %v6293, %v6386
        %v6388 = vpop.f32.mrf.mxu0
        %v6389 = vadd.f32 %v6293, %v6388
        %6390 = vmatmul.bf16.gmra.mxu0 %v6314
        %v6391 = vpop.f32.mrf.mxu0
        %v6392 = vadd.f32 %v6293, %v6391
        %v6393 = vpop.f32.mrf.mxu0
        %v6394 = vadd.f32 %v6293, %v6393
        %6395 = vdwg.mxu0
        %v6396 = vadd.f32 %v3925, %v6377
        %v6397 = vadd.f32 %v3926, %v6379
        %v6398 = vadd.f32 %v3927, %v6382
        %v6399 = vadd.f32 %v3928, %v6384
        %v6400 = vadd.f32 %v3929, %v6387
        %v6401 = vadd.f32 %v3930, %v6389
        %v6402 = vadd.f32 %v3931, %v6392
        %v6403 = vadd.f32 %v3932, %v6394
        %v6404 = vpack.c.bf16 %v6397, %v6396
        %v6405 = vpack.c.bf16 %v6399, %v6398
        %v6406 = vpack.c.bf16 %v6401, %v6400
        %v6407 = vpack.c.bf16 %v6403, %v6402
        %v6408 = vld [vmem:[#allocation17] sm:$0xff]
        %v6409 = vld [vmem:[#allocation17 + $0x8] sm:$0xff]
        %v6410 = vld [vmem:[#allocation17 + $0x10] sm:$0xff]
        %v6411 = vld [vmem:[#allocation17 + $0x18] sm:$0xff]
        %v6412 = vld [vmem:[#allocation17 + $0x20] sm:$0xff]
        %v6413 = vld [vmem:[#allocation17 + $0x28] sm:$0xff]
        %v6414 = vld [vmem:[#allocation17 + $0x30] sm:$0xff]
        %v6415 = vld [vmem:[#allocation17 + $0x38] sm:$0xff]
        %v6416 = vld [vmem:[#allocation17 + $0x40] sm:$0xff]
        %v6417 = vld [vmem:[#allocation17 + $0x48] sm:$0xff]
        %v6418 = vld [vmem:[#allocation17 + $0x50] sm:$0xff]
        %v6419 = vld [vmem:[#allocation17 + $0x58] sm:$0xff]
        %v6420 = vld [vmem:[#allocation17 + $0x60] sm:$0xff]
        %v6421 = vld [vmem:[#allocation17 + $0x68] sm:$0xff]
        %v6422 = vld [vmem:[#allocation17 + $0x70] sm:$0xff]
        %v6423 = vld [vmem:[#allocation17 + $0x78] sm:$0xff]
        %v6424 = vld [vmem:[%s13] sm:$0x3]
        %v6426 = vperm.slane %v6424, 0
        %v6427 = vperm.slane %v6424, 1
        %v6446 = vunpack.c.l.b16 %v6408
        %v6447 = vunpack.c.h.b16 %v6408
        %v6448 = vunpack.c.l.b16 %v6409
        %v6449 = vunpack.c.h.b16 %v6409
        %v6450 = vunpack.c.l.b16 %v6410
        %v6451 = vunpack.c.h.b16 %v6410
        %v6452 = vunpack.c.l.b16 %v6411
        %v6453 = vunpack.c.h.b16 %v6411
        %v6454 = vunpack.c.l.b16 %v6412
        %v6455 = vunpack.c.h.b16 %v6412
        %v6456 = vunpack.c.l.b16 %v6413
        %v6457 = vunpack.c.h.b16 %v6413
        %v6458 = vunpack.c.l.b16 %v6414
        %v6459 = vunpack.c.h.b16 %v6414
        %v6460 = vunpack.c.l.b16 %v6415
        %v6461 = vunpack.c.h.b16 %v6415
        %v6462 = vunpack.c.l.b16 %v6416
        %v6463 = vunpack.c.h.b16 %v6416
        %v6464 = vunpack.c.l.b16 %v6417
        %v6465 = vunpack.c.h.b16 %v6417
        %v6466 = vunpack.c.l.b16 %v6418
        %v6467 = vunpack.c.h.b16 %v6418
        %v6468 = vunpack.c.l.b16 %v6419
        %v6469 = vunpack.c.h.b16 %v6419
        %v6470 = vunpack.c.l.b16 %v6420
        %v6471 = vunpack.c.h.b16 %v6420
        %v6472 = vunpack.c.l.b16 %v6421
        %v6473 = vunpack.c.h.b16 %v6421
        %v6474 = vunpack.c.l.b16 %v6422
        %v6475 = vunpack.c.h.b16 %v6422
        %v6476 = vunpack.c.l.b16 %v6423
        %v6477 = vunpack.c.h.b16 %v6423
        %v6478 = vpack.c.b16 %v6448, %v6446
        %v6479 = vpack.c.b16 %v6449, %v6447
        %v6480 = vpack.c.b16 %v6452, %v6450
        %v6481 = vpack.c.b16 %v6453, %v6451
        %v6482 = vpack.c.b16 %v6456, %v6454
        %v6483 = vpack.c.b16 %v6457, %v6455
        %v6484 = vpack.c.b16 %v6460, %v6458
        %v6485 = vpack.c.b16 %v6461, %v6459
        %v6486 = vpack.c.b16 %v6464, %v6462
        %v6487 = vpack.c.b16 %v6465, %v6463
        %v6488 = vpack.c.b16 %v6468, %v6466
        %v6489 = vpack.c.b16 %v6469, %v6467
        %v6490 = vpack.c.b16 %v6472, %v6470
        %v6491 = vpack.c.b16 %v6473, %v6471
        %v6492 = vpack.c.b16 %v6476, %v6474
        %v6493 = vpack.c.b16 %v6477, %v6475
        %6510 = vmatpush.bf16.msra.mxu0 %v6492
        %6511 = vmatpush.bf16.msra.mxu0 %v6490
        %6512 = vmatpush.bf16.msra.mxu0 %v6488
        %6513 = vmatpush.bf16.msra.mxu0 %v6486
        %6514 = vmatpush.bf16.msra.mxu0 %v6484
        %6515 = vmatpush.bf16.msra.mxu0 %v6482
        %6516 = vmatpush.bf16.msra.mxu0 %v6480
        %6517 = vmatpush.bf16.msra.mxu0 %v6478
        %6518 = vmatmul.bf16.gmra.mxu0 %v6404
        %v6519 = vpop.f32.mrf.mxu0
        %v6520 = vadd.f32 %v6426, %v6519
        %v6521 = vpop.f32.mrf.mxu0
        %v6522 = vadd.f32 %v6426, %v6521
        %6523 = vmatmul.bf16.gmra.mxu0 %v6405
        %v6524 = vpop.f32.mrf.mxu0
        %v6525 = vadd.f32 %v6426, %v6524
        %v6526 = vpop.f32.mrf.mxu0
        %v6527 = vadd.f32 %v6426, %v6526
        %6528 = vmatmul.bf16.gmra.mxu0 %v6406
        %v6529 = vpop.f32.mrf.mxu0
        %v6530 = vadd.f32 %v6426, %v6529
        %v6531 = vpop.f32.mrf.mxu0
        %v6532 = vadd.f32 %v6426, %v6531
        %6533 = vmatmul.bf16.gmra.mxu0 %v6407
        %v6534 = vpop.f32.mrf.mxu0
        %v6535 = vadd.f32 %v6426, %v6534
        %v6536 = vpop.f32.mrf.mxu0
        %v6537 = vadd.f32 %v6426, %v6536
        %6538 = vdwg.mxu0
        %6539 = vmatpush.bf16.msra.mxu0 %v6493
        %6540 = vmatpush.bf16.msra.mxu0 %v6491
        %6541 = vmatpush.bf16.msra.mxu0 %v6489
        %6542 = vmatpush.bf16.msra.mxu0 %v6487
        %6543 = vmatpush.bf16.msra.mxu0 %v6485
        %6544 = vmatpush.bf16.msra.mxu0 %v6483
        %6545 = vmatpush.bf16.msra.mxu0 %v6481
        %6546 = vmatpush.bf16.msra.mxu0 %v6479
        %6547 = vmatmul.bf16.gmra.mxu0 %v6404
        %v6548 = vpop.f32.mrf.mxu0
        %v6549 = vadd.f32 %v6427, %v6548
        %v6550 = vpop.f32.mrf.mxu0
        %v6551 = vadd.f32 %v6427, %v6550
        %6552 = vmatmul.bf16.gmra.mxu0 %v6405
        %v6553 = vpop.f32.mrf.mxu0
        %v6554 = vadd.f32 %v6427, %v6553
        %v6555 = vpop.f32.mrf.mxu0
        %v6556 = vadd.f32 %v6427, %v6555
        %6557 = vmatmul.bf16.gmra.mxu0 %v6406
        %v6558 = vpop.f32.mrf.mxu0
        %v6559 = vadd.f32 %v6427, %v6558
        %v6560 = vpop.f32.mrf.mxu0
        %v6561 = vadd.f32 %v6427, %v6560
        %6562 = vmatmul.bf16.gmra.mxu0 %v6407
        %v6563 = vpop.f32.mrf.mxu0
        %v6564 = vadd.f32 %v6427, %v6563
        %v6565 = vpop.f32.mrf.mxu0
        %v6566 = vadd.f32 %v6427, %v6565
        %6567 = vdwg.mxu0
        %v6568 = vsub.f32 %v6520, 1.0
        %v6569 = vsub.f32 %v6549, 1.0
        %v6570 = vsub.f32 %v6522, 1.0
        %v6571 = vsub.f32 %v6551, 1.0
        %v6572 = vsub.f32 %v6525, 1.0
        %v6573 = vsub.f32 %v6554, 1.0
        %v6574 = vsub.f32 %v6527, 1.0
        %v6575 = vsub.f32 %v6556, 1.0
        %v6576 = vsub.f32 %v6530, 1.0
        %v6577 = vsub.f32 %v6559, 1.0
        %v6578 = vsub.f32 %v6532, 1.0
        %v6579 = vsub.f32 %v6561, 1.0
        %v6580 = vsub.f32 %v6535, 1.0
        %v6581 = vsub.f32 %v6564, 1.0
        %v6582 = vsub.f32 %v6537, 1.0
        %v6583 = vsub.f32 %v6566, 1.0
        %v6584 = vxor.u32 %v6568, 2147483648
        %v6585 = vxor.u32 %v6569, 2147483648
        %v6586 = vxor.u32 %v6570, 2147483648
        %v6587 = vxor.u32 %v6571, 2147483648
        %v6588 = vxor.u32 %v6572, 2147483648
        %v6589 = vxor.u32 %v6573, 2147483648
        %v6590 = vxor.u32 %v6574, 2147483648
        %v6591 = vxor.u32 %v6575, 2147483648
        %v6592 = vxor.u32 %v6576, 2147483648
        %v6593 = vxor.u32 %v6577, 2147483648
        %v6594 = vxor.u32 %v6578, 2147483648
        %v6595 = vxor.u32 %v6579, 2147483648
        %v6596 = vxor.u32 %v6580, 2147483648
        %v6597 = vxor.u32 %v6581, 2147483648
        %v6598 = vxor.u32 %v6582, 2147483648
        %v6599 = vxor.u32 %v6583, 2147483648
        %v6600 = vmul.f32 %v6584, 1.442695
        %v6601 = vpow.pop %v6600
        %v6602 = vmul.f32 %v6585, 1.442695
        %v6603 = vpow.pop %v6602
        %v6604 = vmul.f32 %v6586, 1.442695
        %v6605 = vpow.pop %v6604
        %v6606 = vmul.f32 %v6587, 1.442695
        %v6607 = vpow.pop %v6606
        %v6608 = vmul.f32 %v6588, 1.442695
        %v6609 = vpow.pop %v6608
        %v6610 = vmul.f32 %v6589, 1.442695
        %v6611 = vpow.pop %v6610
        %v6612 = vmul.f32 %v6590, 1.442695
        %v6613 = vpow.pop %v6612
        %v6614 = vmul.f32 %v6591, 1.442695
        %v6615 = vpow.pop %v6614
        %v6616 = vmul.f32 %v6592, 1.442695
        %v6617 = vpow.pop %v6616
        %v6618 = vmul.f32 %v6593, 1.442695
        %v6619 = vpow.pop %v6618
        %v6620 = vmul.f32 %v6594, 1.442695
        %v6621 = vpow.pop %v6620
        %v6622 = vmul.f32 %v6595, 1.442695
        %v6623 = vpow.pop %v6622
        %v6624 = vmul.f32 %v6596, 1.442695
        %v6625 = vpow.pop %v6624
        %v6626 = vmul.f32 %v6597, 1.442695
        %v6627 = vpow.pop %v6626
        %v6628 = vmul.f32 %v6598, 1.442695
        %v6629 = vpow.pop %v6628
        %v6630 = vmul.f32 %v6599, 1.442695
        %v6631 = vpow.pop %v6630
        %v6632 = vadd.f32 %v6601, 1.0
        %v6633 = vadd.f32 %v6603, 1.0
        %v6634 = vadd.f32 %v6605, 1.0
        %v6635 = vadd.f32 %v6607, 1.0
        %v6636 = vadd.f32 %v6609, 1.0
        %v6637 = vadd.f32 %v6611, 1.0
        %v6638 = vadd.f32 %v6613, 1.0
        %v6639 = vadd.f32 %v6615, 1.0
        %v6640 = vadd.f32 %v6617, 1.0
        %v6641 = vadd.f32 %v6619, 1.0
        %v6642 = vadd.f32 %v6621, 1.0
        %v6643 = vadd.f32 %v6623, 1.0
        %v6644 = vadd.f32 %v6625, 1.0
        %v6645 = vadd.f32 %v6627, 1.0
        %v6646 = vadd.f32 %v6629, 1.0
        %v6647 = vadd.f32 %v6631, 1.0
        %v6648 = vrcp.pop %v6632
        %v6649 = vmul.f32 %v6632, %v6648
        %v6650 = vsub.f32 1.0, %v6649
        %v6651 = vmul.f32 %v6648, %v6650
        %v6652 = vadd.f32 %v6648, %v6651
        %vm6653 = vweird.f32 %v6632
        %vm6654 = vweird.f32 %v6648
        %vm6655 = vmor %vm6653, %vm6654
        %v6656 = vsel %vm6655, %v6648, %v6652
        %v6657 = vand.u32 2147483647, %v6632
        %vm6658 = vcmp.eq.f32.partialorder %v6657, 8.507059e+37
        %v6659 = vand.u32 %v6632, 2147483648
        %v6660 = vor.u32 1.1754944e-38, %v6659
        %v6661 = vsel %vm6658, %v6660, %v6656
        %v6662 = vmul.f32 1.0, %v6661
        %v6663 = vrcp.pop %v6633
        %v6664 = vmul.f32 %v6633, %v6663
        %v6665 = vsub.f32 1.0, %v6664
        %v6666 = vmul.f32 %v6663, %v6665
        %v6667 = vadd.f32 %v6663, %v6666
        %vm6668 = vweird.f32 %v6633
        %vm6669 = vweird.f32 %v6663
        %vm6670 = vmor %vm6668, %vm6669
        %v6671 = vsel %vm6670, %v6663, %v6667
        %v6672 = vand.u32 2147483647, %v6633
        %vm6673 = vcmp.eq.f32.partialorder %v6672, 8.507059e+37
        %v6674 = vand.u32 %v6633, 2147483648
        %v6675 = vor.u32 1.1754944e-38, %v6674
        %v6676 = vsel %vm6673, %v6675, %v6671
        %v6677 = vmul.f32 1.0, %v6676
        %v6678 = vrcp.pop %v6634
        %v6679 = vmul.f32 %v6634, %v6678
        %v6680 = vsub.f32 1.0, %v6679
        %v6681 = vmul.f32 %v6678, %v6680
        %v6682 = vadd.f32 %v6678, %v6681
        %vm6683 = vweird.f32 %v6634
        %vm6684 = vweird.f32 %v6678
        %vm6685 = vmor %vm6683, %vm6684
        %v6686 = vsel %vm6685, %v6678, %v6682
        %v6687 = vand.u32 2147483647, %v6634
        %vm6688 = vcmp.eq.f32.partialorder %v6687, 8.507059e+37
        %v6689 = vand.u32 %v6634, 2147483648
        %v6690 = vor.u32 1.1754944e-38, %v6689
        %v6691 = vsel %vm6688, %v6690, %v6686
        %v6692 = vmul.f32 1.0, %v6691
        %v6693 = vrcp.pop %v6635
        %v6694 = vmul.f32 %v6635, %v6693
        %v6695 = vsub.f32 1.0, %v6694
        %v6696 = vmul.f32 %v6693, %v6695
        %v6697 = vadd.f32 %v6693, %v6696
        %vm6698 = vweird.f32 %v6635
        %vm6699 = vweird.f32 %v6693
        %vm6700 = vmor %vm6698, %vm6699
        %v6701 = vsel %vm6700, %v6693, %v6697
        %v6702 = vand.u32 2147483647, %v6635
        %vm6703 = vcmp.eq.f32.partialorder %v6702, 8.507059e+37
        %v6704 = vand.u32 %v6635, 2147483648
        %v6705 = vor.u32 1.1754944e-38, %v6704
        %v6706 = vsel %vm6703, %v6705, %v6701
        %v6707 = vmul.f32 1.0, %v6706
        %v6708 = vrcp.pop %v6636
        %v6709 = vmul.f32 %v6636, %v6708
        %v6710 = vsub.f32 1.0, %v6709
        %v6711 = vmul.f32 %v6708, %v6710
        %v6712 = vadd.f32 %v6708, %v6711
        %vm6713 = vweird.f32 %v6636
        %vm6714 = vweird.f32 %v6708
        %vm6715 = vmor %vm6713, %vm6714
        %v6716 = vsel %vm6715, %v6708, %v6712
        %v6717 = vand.u32 2147483647, %v6636
        %vm6718 = vcmp.eq.f32.partialorder %v6717, 8.507059e+37
        %v6719 = vand.u32 %v6636, 2147483648
        %v6720 = vor.u32 1.1754944e-38, %v6719
        %v6721 = vsel %vm6718, %v6720, %v6716
        %v6722 = vmul.f32 1.0, %v6721
        %v6723 = vrcp.pop %v6637
        %v6724 = vmul.f32 %v6637, %v6723
        %v6725 = vsub.f32 1.0, %v6724
        %v6726 = vmul.f32 %v6723, %v6725
        %v6727 = vadd.f32 %v6723, %v6726
        %vm6728 = vweird.f32 %v6637
        %vm6729 = vweird.f32 %v6723
        %vm6730 = vmor %vm6728, %vm6729
        %v6731 = vsel %vm6730, %v6723, %v6727
        %v6732 = vand.u32 2147483647, %v6637
        %vm6733 = vcmp.eq.f32.partialorder %v6732, 8.507059e+37
        %v6734 = vand.u32 %v6637, 2147483648
        %v6735 = vor.u32 1.1754944e-38, %v6734
        %v6736 = vsel %vm6733, %v6735, %v6731
        %v6737 = vmul.f32 1.0, %v6736
        %v6738 = vrcp.pop %v6638
        %v6739 = vmul.f32 %v6638, %v6738
        %v6740 = vsub.f32 1.0, %v6739
        %v6741 = vmul.f32 %v6738, %v6740
        %v6742 = vadd.f32 %v6738, %v6741
        %vm6743 = vweird.f32 %v6638
        %vm6744 = vweird.f32 %v6738
        %vm6745 = vmor %vm6743, %vm6744
        %v6746 = vsel %vm6745, %v6738, %v6742
        %v6747 = vand.u32 2147483647, %v6638
        %vm6748 = vcmp.eq.f32.partialorder %v6747, 8.507059e+37
        %v6749 = vand.u32 %v6638, 2147483648
        %v6750 = vor.u32 1.1754944e-38, %v6749
        %v6751 = vsel %vm6748, %v6750, %v6746
        %v6752 = vmul.f32 1.0, %v6751
        %v6753 = vrcp.pop %v6639
        %v6754 = vmul.f32 %v6639, %v6753
        %v6755 = vsub.f32 1.0, %v6754
        %v6756 = vmul.f32 %v6753, %v6755
        %v6757 = vadd.f32 %v6753, %v6756
        %vm6758 = vweird.f32 %v6639
        %vm6759 = vweird.f32 %v6753
        %vm6760 = vmor %vm6758, %vm6759
        %v6761 = vsel %vm6760, %v6753, %v6757
        %v6762 = vand.u32 2147483647, %v6639
        %vm6763 = vcmp.eq.f32.partialorder %v6762, 8.507059e+37
        %v6764 = vand.u32 %v6639, 2147483648
        %v6765 = vor.u32 1.1754944e-38, %v6764
        %v6766 = vsel %vm6763, %v6765, %v6761
        %v6767 = vmul.f32 1.0, %v6766
        %v6768 = vrcp.pop %v6640
        %v6769 = vmul.f32 %v6640, %v6768
        %v6770 = vsub.f32 1.0, %v6769
        %v6771 = vmul.f32 %v6768, %v6770
        %v6772 = vadd.f32 %v6768, %v6771
        %vm6773 = vweird.f32 %v6640
        %vm6774 = vweird.f32 %v6768
        %vm6775 = vmor %vm6773, %vm6774
        %v6776 = vsel %vm6775, %v6768, %v6772
        %v6777 = vand.u32 2147483647, %v6640
        %vm6778 = vcmp.eq.f32.partialorder %v6777, 8.507059e+37
        %v6779 = vand.u32 %v6640, 2147483648
        %v6780 = vor.u32 1.1754944e-38, %v6779
        %v6781 = vsel %vm6778, %v6780, %v6776
        %v6782 = vmul.f32 1.0, %v6781
        %v6783 = vrcp.pop %v6641
        %v6784 = vmul.f32 %v6641, %v6783
        %v6785 = vsub.f32 1.0, %v6784
        %v6786 = vmul.f32 %v6783, %v6785
        %v6787 = vadd.f32 %v6783, %v6786
        %vm6788 = vweird.f32 %v6641
        %vm6789 = vweird.f32 %v6783
        %vm6790 = vmor %vm6788, %vm6789
        %v6791 = vsel %vm6790, %v6783, %v6787
        %v6792 = vand.u32 2147483647, %v6641
        %vm6793 = vcmp.eq.f32.partialorder %v6792, 8.507059e+37
        %v6794 = vand.u32 %v6641, 2147483648
        %v6795 = vor.u32 1.1754944e-38, %v6794
        %v6796 = vsel %vm6793, %v6795, %v6791
        %v6797 = vmul.f32 1.0, %v6796
        %v6798 = vrcp.pop %v6642
        %v6799 = vmul.f32 %v6642, %v6798
        %v6800 = vsub.f32 1.0, %v6799
        %v6801 = vmul.f32 %v6798, %v6800
        %v6802 = vadd.f32 %v6798, %v6801
        %vm6803 = vweird.f32 %v6642
        %vm6804 = vweird.f32 %v6798
        %vm6805 = vmor %vm6803, %vm6804
        %v6806 = vsel %vm6805, %v6798, %v6802
        %v6807 = vand.u32 2147483647, %v6642
        %vm6808 = vcmp.eq.f32.partialorder %v6807, 8.507059e+37
        %v6809 = vand.u32 %v6642, 2147483648
        %v6810 = vor.u32 1.1754944e-38, %v6809
        %v6811 = vsel %vm6808, %v6810, %v6806
        %v6812 = vmul.f32 1.0, %v6811
        %v6813 = vrcp.pop %v6643
        %v6814 = vmul.f32 %v6643, %v6813
        %v6815 = vsub.f32 1.0, %v6814
        %v6816 = vmul.f32 %v6813, %v6815
        %v6817 = vadd.f32 %v6813, %v6816
        %vm6818 = vweird.f32 %v6643
        %vm6819 = vweird.f32 %v6813
        %vm6820 = vmor %vm6818, %vm6819
        %v6821 = vsel %vm6820, %v6813, %v6817
        %v6822 = vand.u32 2147483647, %v6643
        %vm6823 = vcmp.eq.f32.partialorder %v6822, 8.507059e+37
        %v6824 = vand.u32 %v6643, 2147483648
        %v6825 = vor.u32 1.1754944e-38, %v6824
        %v6826 = vsel %vm6823, %v6825, %v6821
        %v6827 = vmul.f32 1.0, %v6826
        %v6828 = vrcp.pop %v6644
        %v6829 = vmul.f32 %v6644, %v6828
        %v6830 = vsub.f32 1.0, %v6829
        %v6831 = vmul.f32 %v6828, %v6830
        %v6832 = vadd.f32 %v6828, %v6831
        %vm6833 = vweird.f32 %v6644
        %vm6834 = vweird.f32 %v6828
        %vm6835 = vmor %vm6833, %vm6834
        %v6836 = vsel %vm6835, %v6828, %v6832
        %v6837 = vand.u32 2147483647, %v6644
        %vm6838 = vcmp.eq.f32.partialorder %v6837, 8.507059e+37
        %v6839 = vand.u32 %v6644, 2147483648
        %v6840 = vor.u32 1.1754944e-38, %v6839
        %v6841 = vsel %vm6838, %v6840, %v6836
        %v6842 = vmul.f32 1.0, %v6841
        %v6843 = vrcp.pop %v6645
        %v6844 = vmul.f32 %v6645, %v6843
        %v6845 = vsub.f32 1.0, %v6844
        %v6846 = vmul.f32 %v6843, %v6845
        %v6847 = vadd.f32 %v6843, %v6846
        %vm6848 = vweird.f32 %v6645
        %vm6849 = vweird.f32 %v6843
        %vm6850 = vmor %vm6848, %vm6849
        %v6851 = vsel %vm6850, %v6843, %v6847
        %v6852 = vand.u32 2147483647, %v6645
        %vm6853 = vcmp.eq.f32.partialorder %v6852, 8.507059e+37
        %v6854 = vand.u32 %v6645, 2147483648
        %v6855 = vor.u32 1.1754944e-38, %v6854
        %v6856 = vsel %vm6853, %v6855, %v6851
        %v6857 = vmul.f32 1.0, %v6856
        %v6858 = vrcp.pop %v6646
        %v6859 = vmul.f32 %v6646, %v6858
        %v6860 = vsub.f32 1.0, %v6859
        %v6861 = vmul.f32 %v6858, %v6860
        %v6862 = vadd.f32 %v6858, %v6861
        %vm6863 = vweird.f32 %v6646
        %vm6864 = vweird.f32 %v6858
        %vm6865 = vmor %vm6863, %vm6864
        %v6866 = vsel %vm6865, %v6858, %v6862
        %v6867 = vand.u32 2147483647, %v6646
        %vm6868 = vcmp.eq.f32.partialorder %v6867, 8.507059e+37
        %v6869 = vand.u32 %v6646, 2147483648
        %v6870 = vor.u32 1.1754944e-38, %v6869
        %v6871 = vsel %vm6868, %v6870, %v6866
        %v6872 = vmul.f32 1.0, %v6871
        %v6873 = vrcp.pop %v6647
        %v6874 = vmul.f32 %v6647, %v6873
        %v6875 = vsub.f32 1.0, %v6874
        %v6876 = vmul.f32 %v6873, %v6875
        %v6877 = vadd.f32 %v6873, %v6876
        %vm6878 = vweird.f32 %v6647
        %vm6879 = vweird.f32 %v6873
        %vm6880 = vmor %vm6878, %vm6879
        %v6881 = vsel %vm6880, %v6873, %v6877
        %v6882 = vand.u32 2147483647, %v6647
        %vm6883 = vcmp.eq.f32.partialorder %v6882, 8.507059e+37
        %v6884 = vand.u32 %v6647, 2147483648
        %v6885 = vor.u32 1.1754944e-38, %v6884
        %v6886 = vsel %vm6883, %v6885, %v6881
        %v6887 = vmul.f32 1.0, %v6886
        %v6888 = vmul.f32 %v6520, %v6662
        %v6889 = vmul.f32 %v6549, %v6677
        %v6890 = vmul.f32 %v6522, %v6692
        %v6891 = vmul.f32 %v6551, %v6707
        %v6892 = vmul.f32 %v6525, %v6722
        %v6893 = vmul.f32 %v6554, %v6737
        %v6894 = vmul.f32 %v6527, %v6752
        %v6895 = vmul.f32 %v6556, %v6767
        %v6896 = vmul.f32 %v6530, %v6782
        %v6897 = vmul.f32 %v6559, %v6797
        %v6898 = vmul.f32 %v6532, %v6812
        %v6899 = vmul.f32 %v6561, %v6827
        %v6900 = vmul.f32 %v6535, %v6842
        %v6901 = vmul.f32 %v6564, %v6857
        %v6902 = vmul.f32 %v6537, %v6872
        %v6903 = vmul.f32 %v6566, %v6887
        %v6904 = vpack.c.bf16 %v6890, %v6888
        %v6905 = vpack.c.bf16 %v6891, %v6889
        %v6906 = vpack.c.bf16 %v6894, %v6892
        %v6907 = vpack.c.bf16 %v6895, %v6893
        %v6908 = vpack.c.bf16 %v6898, %v6896
        %v6909 = vpack.c.bf16 %v6899, %v6897
        %v6910 = vpack.c.bf16 %v6902, %v6900
        %v6911 = vpack.c.bf16 %v6903, %v6901
        %v6912 = vld [vmem:[#allocation18] sm:$0xf]
        %v6913 = vld [vmem:[#allocation18 + $0x4] sm:$0xf]
        %v6914 = vld [vmem:[#allocation18 + $0x8] sm:$0xf]
        %v6915 = vld [vmem:[#allocation18 + $0xc] sm:$0xf]
        %v6916 = vld [vmem:[#allocation18 + $0x10] sm:$0xf]
        %v6917 = vld [vmem:[#allocation18 + $0x14] sm:$0xf]
        %v6918 = vld [vmem:[#allocation18 + $0x18] sm:$0xf]
        %v6919 = vld [vmem:[#allocation18 + $0x1c] sm:$0xf]
        %v6920 = vld [vmem:[#allocation18 + $0x20] sm:$0xf]
        %v6921 = vld [vmem:[#allocation18 + $0x24] sm:$0xf]
        %v6922 = vld [vmem:[#allocation18 + $0x28] sm:$0xf]
        %v6923 = vld [vmem:[#allocation18 + $0x2c] sm:$0xf]
        %v6924 = vld [vmem:[#allocation18 + $0x30] sm:$0xf]
        %v6925 = vld [vmem:[#allocation18 + $0x34] sm:$0xf]
        %v6926 = vld [vmem:[#allocation18 + $0x38] sm:$0xf]
        %v6927 = vld [vmem:[#allocation18 + $0x3c] sm:$0xf]
        %v6928 = vld [vmem:[#allocation18 + $0x40] sm:$0xf]
        %v6929 = vld [vmem:[#allocation18 + $0x44] sm:$0xf]
        %v6930 = vld [vmem:[#allocation18 + $0x48] sm:$0xf]
        %v6931 = vld [vmem:[#allocation18 + $0x4c] sm:$0xf]
        %v6932 = vld [vmem:[#allocation18 + $0x50] sm:$0xf]
        %v6933 = vld [vmem:[#allocation18 + $0x54] sm:$0xf]
        %v6934 = vld [vmem:[#allocation18 + $0x58] sm:$0xf]
        %v6935 = vld [vmem:[#allocation18 + $0x5c] sm:$0xf]
        %v6936 = vld [vmem:[#allocation18 + $0x60] sm:$0xf]
        %v6937 = vld [vmem:[#allocation18 + $0x64] sm:$0xf]
        %v6938 = vld [vmem:[#allocation18 + $0x68] sm:$0xf]
        %v6939 = vld [vmem:[#allocation18 + $0x6c] sm:$0xf]
        %v6940 = vld [vmem:[#allocation18 + $0x70] sm:$0xf]
        %v6941 = vld [vmem:[#allocation18 + $0x74] sm:$0xf]
        %v6942 = vld [vmem:[#allocation18 + $0x78] sm:$0xf]
        %v6943 = vld [vmem:[#allocation18 + $0x7c] sm:$0xf]
        %v6944 = vld [vmem:[%s15] sm:$0x1]
        %v6946 = vperm.slane %v6944, 0
        %v6980 = vunpack.c.l.b16 %v6912
        %v6981 = vunpack.c.l.b16 %v6913
        %v6982 = vunpack.c.l.b16 %v6914
        %v6983 = vunpack.c.l.b16 %v6915
        %v6984 = vunpack.c.l.b16 %v6916
        %v6985 = vunpack.c.l.b16 %v6917
        %v6986 = vunpack.c.l.b16 %v6918
        %v6987 = vunpack.c.l.b16 %v6919
        %v6988 = vunpack.c.l.b16 %v6920
        %v6989 = vunpack.c.l.b16 %v6921
        %v6990 = vunpack.c.l.b16 %v6922
        %v6991 = vunpack.c.l.b16 %v6923
        %v6992 = vunpack.c.l.b16 %v6924
        %v6993 = vunpack.c.l.b16 %v6925
        %v6994 = vunpack.c.l.b16 %v6926
        %v6995 = vunpack.c.l.b16 %v6927
        %v6996 = vunpack.c.l.b16 %v6928
        %v6997 = vunpack.c.l.b16 %v6929
        %v6998 = vunpack.c.l.b16 %v6930
        %v6999 = vunpack.c.l.b16 %v6931
        %v7000 = vunpack.c.l.b16 %v6932
        %v7001 = vunpack.c.l.b16 %v6933
        %v7002 = vunpack.c.l.b16 %v6934
        %v7003 = vunpack.c.l.b16 %v6935
        %v7004 = vunpack.c.l.b16 %v6936
        %v7005 = vunpack.c.l.b16 %v6937
        %v7006 = vunpack.c.l.b16 %v6938
        %v7007 = vunpack.c.l.b16 %v6939
        %v7008 = vunpack.c.l.b16 %v6940
        %v7009 = vunpack.c.l.b16 %v6941
        %v7010 = vunpack.c.l.b16 %v6942
        %v7011 = vunpack.c.l.b16 %v6943
        %v7012 = vpack.c.b16 %v6981, %v6980
        %v7013 = vpack.c.b16 %v6983, %v6982
        %v7014 = vpack.c.b16 %v6985, %v6984
        %v7015 = vpack.c.b16 %v6987, %v6986
        %v7016 = vpack.c.b16 %v6989, %v6988
        %v7017 = vpack.c.b16 %v6991, %v6990
        %v7018 = vpack.c.b16 %v6993, %v6992
        %v7019 = vpack.c.b16 %v6995, %v6994
        %v7020 = vpack.c.b16 %v6997, %v6996
        %v7021 = vpack.c.b16 %v6999, %v6998
        %v7022 = vpack.c.b16 %v7001, %v7000
        %v7023 = vpack.c.b16 %v7003, %v7002
        %v7024 = vpack.c.b16 %v7005, %v7004
        %v7025 = vpack.c.b16 %v7007, %v7006
        %v7026 = vpack.c.b16 %v7009, %v7008
        %v7027 = vpack.c.b16 %v7011, %v7010
        %7044 = vmatpush.bf16.msra.mxu0 %v7019
        %7045 = vmatpush.bf16.msra.mxu0 %v7018
        %7046 = vmatpush.bf16.msra.mxu0 %v7017
        %7047 = vmatpush.bf16.msra.mxu0 %v7016
        %7048 = vmatpush.bf16.msra.mxu0 %v7015
        %7049 = vmatpush.bf16.msra.mxu0 %v7014
        %7050 = vmatpush.bf16.msra.mxu0 %v7013
        %7051 = vmatpush.bf16.msra.mxu0 %v7012
        %7052 = vmatmul.bf16.gmra.mxu0 %v6904
        %v7053 = vpop.f32.mrf.mxu0
        %v7054 = vadd.f32 %v6946, %v7053
        %v7055 = vpop.f32.mrf.mxu0
        %v7056 = vadd.f32 %v6946, %v7055
        %7057 = vmatmul.bf16.gmra.mxu0 %v6906
        %v7058 = vpop.f32.mrf.mxu0
        %v7059 = vadd.f32 %v6946, %v7058
        %v7060 = vpop.f32.mrf.mxu0
        %v7061 = vadd.f32 %v6946, %v7060
        %7062 = vmatmul.bf16.gmra.mxu0 %v6908
        %v7063 = vpop.f32.mrf.mxu0
        %v7064 = vadd.f32 %v6946, %v7063
        %v7065 = vpop.f32.mrf.mxu0
        %v7066 = vadd.f32 %v6946, %v7065
        %7067 = vmatmul.bf16.gmra.mxu0 %v6910
        %v7068 = vpop.f32.mrf.mxu0
        %v7069 = vadd.f32 %v6946, %v7068
        %v7070 = vpop.f32.mrf.mxu0
        %v7071 = vadd.f32 %v6946, %v7070
        %7072 = vdwg.mxu0
        %7073 = vmatpush.bf16.msra.mxu0 %v7027
        %7074 = vmatpush.bf16.msra.mxu0 %v7026
        %7075 = vmatpush.bf16.msra.mxu0 %v7025
        %7076 = vmatpush.bf16.msra.mxu0 %v7024
        %7077 = vmatpush.bf16.msra.mxu0 %v7023
        %7078 = vmatpush.bf16.msra.mxu0 %v7022
        %7079 = vmatpush.bf16.msra.mxu0 %v7021
        %7080 = vmatpush.bf16.msra.mxu0 %v7020
        %7081 = vmatmul.bf16.gmra.mxu0 %v6905
        %v7082 = vpop.f32.mrf.mxu0
        %v7083 = vadd.f32 %v7054, %v7082
        %v7084 = vpop.f32.mrf.mxu0
        %v7085 = vadd.f32 %v7056, %v7084
        %7086 = vmatmul.bf16.gmra.mxu0 %v6907
        %v7087 = vpop.f32.mrf.mxu0
        %v7088 = vadd.f32 %v7059, %v7087
        %v7089 = vpop.f32.mrf.mxu0
        %v7090 = vadd.f32 %v7061, %v7089
        %7091 = vmatmul.bf16.gmra.mxu0 %v6909
        %v7092 = vpop.f32.mrf.mxu0
        %v7093 = vadd.f32 %v7064, %v7092
        %v7094 = vpop.f32.mrf.mxu0
        %v7095 = vadd.f32 %v7066, %v7094
        %7096 = vmatmul.bf16.gmra.mxu0 %v6911
        %v7097 = vpop.f32.mrf.mxu0
        %v7098 = vadd.f32 %v7069, %v7097
        %v7099 = vpop.f32.mrf.mxu0
        %v7100 = vadd.f32 %v7071, %v7099
        %7101 = vdwg.mxu0
        %v7102 = vadd.f32 %v6396, %v7083
        %v7103 = vadd.f32 %v6397, %v7085
        %v7104 = vadd.f32 %v6398, %v7088
        %v7105 = vadd.f32 %v6399, %v7090
        %v7106 = vadd.f32 %v6400, %v7093
        %v7107 = vadd.f32 %v6401, %v7095
        %v7108 = vadd.f32 %v6402, %v7098
        %v7109 = vadd.f32 %v6403, %v7100
        %s7110 = sld [smem:[#allocation2]]
        %v7111 = vmul.f32 %v7102, %v7102
        %v7112 = vmul.f32 %v7103, %v7103
        %v7113 = vmul.f32 %v7104, %v7104
        %v7114 = vmul.f32 %v7105, %v7105
        %v7115 = vmul.f32 %v7106, %v7106
        %v7116 = vmul.f32 %v7107, %v7107
        %v7117 = vmul.f32 %v7108, %v7108
        %v7118 = vmul.f32 %v7109, %v7109
        %7119 = vadd.xlane.f32.xlu0 %v7111
        %v7120 = vpop.xlane.xlu0 %7119
        %7121 = vadd.xlane.f32.xlu0 %v7112
        %v7122 = vpop.xlane.xlu0 %7121
        %7123 = vadd.xlane.f32.xlu0 %v7113
        %v7124 = vpop.xlane.xlu0 %7123
        %7125 = vadd.xlane.f32.xlu0 %v7114
        %v7126 = vpop.xlane.xlu0 %7125
        %7127 = vadd.xlane.f32.xlu0 %v7115
        %v7128 = vpop.xlane.xlu0 %7127
        %7129 = vadd.xlane.f32.xlu0 %v7116
        %v7130 = vpop.xlane.xlu0 %7129
        %7131 = vadd.xlane.f32.xlu0 %v7117
        %v7132 = vpop.xlane.xlu0 %7131
        %7133 = vadd.xlane.f32.xlu0 %v7118
        %v7134 = vpop.xlane.xlu0 %7133
        %v7135 = vrcp.pop 128.0
        %v7136 = vmul.f32 128.0, %v7135
        %v7137 = vsub.f32 1.0, %v7136
        %v7138 = vmul.f32 %v7135, %v7137
        %v7139 = vadd.f32 %v7135, %v7138
        %vm7140 = vweird.f32 %v7135
        %v7141 = vsel %vm7140, %v7135, %v7139
        %v7142 = vmul.f32 %v7120, %v7141
        %v7143 = vmul.f32 %v7122, %v7141
        %v7144 = vmul.f32 %v7124, %v7141
        %v7145 = vmul.f32 %v7126, %v7141
        %v7146 = vmul.f32 %v7128, %v7141
        %v7147 = vmul.f32 %v7130, %v7141
        %v7148 = vmul.f32 %v7132, %v7141
        %v7149 = vmul.f32 %v7134, %v7141
        %v7150 = vstv %s7110
        %v7151 = vadd.f32 %v7142, %v7150
        %v7152 = vadd.f32 %v7143, %v7150
        %v7153 = vadd.f32 %v7144, %v7150
        %v7154 = vadd.f32 %v7145, %v7150
        %v7155 = vadd.f32 %v7146, %v7150
        %v7156 = vadd.f32 %v7147, %v7150
        %v7157 = vadd.f32 %v7148, %v7150
        %v7158 = vadd.f32 %v7149, %v7150
        %v7159 = vrsqrt.pop %v7151
        %v7160 = vmul.f32 %v7159, %v7151
        %v7161 = vmul.f32 %v7160, %v7159
        %v7162 = vmul.f32 0.5, %v7161
        %v7163 = vsub.f32 1.5, %v7162
        %v7164 = vmul.f32 %v7159, %v7163
        %vm7165 = vweird.f32 %v7151
        %vm7166 = vweird.f32 %v7159
        %vm7167 = vmor %vm7165, %vm7166
        %v7168 = vsel %vm7167, %v7159, %v7164
        %v7169 = vrsqrt.pop %v7152
        %v7170 = vmul.f32 %v7169, %v7152
        %v7171 = vmul.f32 %v7170, %v7169
        %v7172 = vmul.f32 0.5, %v7171
        %v7173 = vsub.f32 1.5, %v7172
        %v7174 = vmul.f32 %v7169, %v7173
        %vm7175 = vweird.f32 %v7152
        %vm7176 = vweird.f32 %v7169
        %vm7177 = vmor %vm7175, %vm7176
        %v7178 = vsel %vm7177, %v7169, %v7174
        %v7179 = vrsqrt.pop %v7153
        %v7180 = vmul.f32 %v7179, %v7153
        %v7181 = vmul.f32 %v7180, %v7179
        %v7182 = vmul.f32 0.5, %v7181
        %v7183 = vsub.f32 1.5, %v7182
        %v7184 = vmul.f32 %v7179, %v7183
        %vm7185 = vweird.f32 %v7153
        %vm7186 = vweird.f32 %v7179
        %vm7187 = vmor %vm7185, %vm7186
        %v7188 = vsel %vm7187, %v7179, %v7184
        %v7189 = vrsqrt.pop %v7154
        %v7190 = vmul.f32 %v7189, %v7154
        %v7191 = vmul.f32 %v7190, %v7189
        %v7192 = vmul.f32 0.5, %v7191
        %v7193 = vsub.f32 1.5, %v7192
        %v7194 = vmul.f32 %v7189, %v7193
        %vm7195 = vweird.f32 %v7154
        %vm7196 = vweird.f32 %v7189
        %vm7197 = vmor %vm7195, %vm7196
        %v7198 = vsel %vm7197, %v7189, %v7194
        %v7199 = vrsqrt.pop %v7155
        %v7200 = vmul.f32 %v7199, %v7155
        %v7201 = vmul.f32 %v7200, %v7199
        %v7202 = vmul.f32 0.5, %v7201
        %v7203 = vsub.f32 1.5, %v7202
        %v7204 = vmul.f32 %v7199, %v7203
        %vm7205 = vweird.f32 %v7155
        %vm7206 = vweird.f32 %v7199
        %vm7207 = vmor %vm7205, %vm7206
        %v7208 = vsel %vm7207, %v7199, %v7204
        %v7209 = vrsqrt.pop %v7156
        %v7210 = vmul.f32 %v7209, %v7156
        %v7211 = vmul.f32 %v7210, %v7209
        %v7212 = vmul.f32 0.5, %v7211
        %v7213 = vsub.f32 1.5, %v7212
        %v7214 = vmul.f32 %v7209, %v7213
        %vm7215 = vweird.f32 %v7156
        %vm7216 = vweird.f32 %v7209
        %vm7217 = vmor %vm7215, %vm7216
        %v7218 = vsel %vm7217, %v7209, %v7214
        %v7219 = vrsqrt.pop %v7157
        %v7220 = vmul.f32 %v7219, %v7157
        %v7221 = vmul.f32 %v7220, %v7219
        %v7222 = vmul.f32 0.5, %v7221
        %v7223 = vsub.f32 1.5, %v7222
        %v7224 = vmul.f32 %v7219, %v7223
        %vm7225 = vweird.f32 %v7157
        %vm7226 = vweird.f32 %v7219
        %vm7227 = vmor %vm7225, %vm7226
        %v7228 = vsel %vm7227, %v7219, %v7224
        %v7229 = vrsqrt.pop %v7158
        %v7230 = vmul.f32 %v7229, %v7158
        %v7231 = vmul.f32 %v7230, %v7229
        %v7232 = vmul.f32 0.5, %v7231
        %v7233 = vsub.f32 1.5, %v7232
        %v7234 = vmul.f32 %v7229, %v7233
        %vm7235 = vweird.f32 %v7158
        %vm7236 = vweird.f32 %v7229
        %vm7237 = vmor %vm7235, %vm7236
        %v7238 = vsel %vm7237, %v7229, %v7234
        %v7239 = vmul.f32 %v7102, %v7168
        %v7240 = vmul.f32 %v7103, %v7178
        %v7241 = vmul.f32 %v7104, %v7188
        %v7242 = vmul.f32 %v7105, %v7198
        %v7243 = vmul.f32 %v7106, %v7208
        %v7244 = vmul.f32 %v7107, %v7218
        %v7245 = vmul.f32 %v7108, %v7228
        %v7246 = vmul.f32 %v7109, %v7238
        %v7248 = vrot.slane %v7239, 1
        %v7249 = vrot.slane %v7239, 2
        %v7250 = vrot.slane %v7239, 3
        %v7251 = vrot.slane %v7239, 4
        %v7252 = vrot.slane %v7239, 5
        %v7253 = vrot.slane %v7239, 6
        %v7254 = vrot.slane %v7239, 7
        %7262 = vst [vmem:[%s739] sm:$0x1] %v7239
        %7263 = vst [vmem:[%s739 + $0x8] sm:$0x1] %v7248
        %7264 = vst [vmem:[%s739 + $0x10] sm:$0x1] %v7249
        %7265 = vst [vmem:[%s739 + $0x18] sm:$0x1] %v7250
        %7266 = vst [vmem:[%s739 + $0x20] sm:$0x1] %v7251
        %7267 = vst [vmem:[%s739 + $0x28] sm:$0x1] %v7252
        %7268 = vst [vmem:[%s739 + $0x30] sm:$0x1] %v7253
        %7269 = vst [vmem:[%s739 + $0x38] sm:$0x1] %v7254
        %v7271 = vrot.slane %v7240, 1
        %v7272 = vrot.slane %v7240, 2
        %v7273 = vrot.slane %v7240, 3
        %v7274 = vrot.slane %v7240, 4
        %v7275 = vrot.slane %v7240, 5
        %v7276 = vrot.slane %v7240, 6
        %v7277 = vrot.slane %v7240, 7
        %7285 = vst [vmem:[%s739 + $0x1] sm:$0x1] %v7240
        %7286 = vst [vmem:[%s739 + $0x9] sm:$0x1] %v7271
        %7287 = vst [vmem:[%s739 + $0x11] sm:$0x1] %v7272
        %7288 = vst [vmem:[%s739 + $0x19] sm:$0x1] %v7273
        %7289 = vst [vmem:[%s739 + $0x21] sm:$0x1] %v7274
        %7290 = vst [vmem:[%s739 + $0x29] sm:$0x1] %v7275
        %7291 = vst [vmem:[%s739 + $0x31] sm:$0x1] %v7276
        %7292 = vst [vmem:[%s739 + $0x39] sm:$0x1] %v7277
        %v7294 = vrot.slane %v7241, 1
        %v7295 = vrot.slane %v7241, 2
        %v7296 = vrot.slane %v7241, 3
        %v7297 = vrot.slane %v7241, 4
        %v7298 = vrot.slane %v7241, 5
        %v7299 = vrot.slane %v7241, 6
        %v7300 = vrot.slane %v7241, 7
        %7308 = vst [vmem:[%s739 + $0x2] sm:$0x1] %v7241
        %7309 = vst [vmem:[%s739 + $0xa] sm:$0x1] %v7294
        %7310 = vst [vmem:[%s739 + $0x12] sm:$0x1] %v7295
        %7311 = vst [vmem:[%s739 + $0x1a] sm:$0x1] %v7296
        %7312 = vst [vmem:[%s739 + $0x22] sm:$0x1] %v7297
        %7313 = vst [vmem:[%s739 + $0x2a] sm:$0x1] %v7298
        %7314 = vst [vmem:[%s739 + $0x32] sm:$0x1] %v7299
        %7315 = vst [vmem:[%s739 + $0x3a] sm:$0x1] %v7300
        %v7317 = vrot.slane %v7242, 1
        %v7318 = vrot.slane %v7242, 2
        %v7319 = vrot.slane %v7242, 3
        %v7320 = vrot.slane %v7242, 4
        %v7321 = vrot.slane %v7242, 5
        %v7322 = vrot.slane %v7242, 6
        %v7323 = vrot.slane %v7242, 7
        %7331 = vst [vmem:[%s739 + $0x3] sm:$0x1] %v7242
        %7332 = vst [vmem:[%s739 + $0xb] sm:$0x1] %v7317
        %7333 = vst [vmem:[%s739 + $0x13] sm:$0x1] %v7318
        %7334 = vst [vmem:[%s739 + $0x1b] sm:$0x1] %v7319
        %7335 = vst [vmem:[%s739 + $0x23] sm:$0x1] %v7320
        %7336 = vst [vmem:[%s739 + $0x2b] sm:$0x1] %v7321
        %7337 = vst [vmem:[%s739 + $0x33] sm:$0x1] %v7322
        %7338 = vst [vmem:[%s739 + $0x3b] sm:$0x1] %v7323
        %v7340 = vrot.slane %v7243, 1
        %v7341 = vrot.slane %v7243, 2
        %v7342 = vrot.slane %v7243, 3
        %v7343 = vrot.slane %v7243, 4
        %v7344 = vrot.slane %v7243, 5
        %v7345 = vrot.slane %v7243, 6
        %v7346 = vrot.slane %v7243, 7
        %7354 = vst [vmem:[%s739 + $0x4] sm:$0x1] %v7243
        %7355 = vst [vmem:[%s739 + $0xc] sm:$0x1] %v7340
        %7356 = vst [vmem:[%s739 + $0x14] sm:$0x1] %v7341
        %7357 = vst [vmem:[%s739 + $0x1c] sm:$0x1] %v7342
        %7358 = vst [vmem:[%s739 + $0x24] sm:$0x1] %v7343
        %7359 = vst [vmem:[%s739 + $0x2c] sm:$0x1] %v7344
        %7360 = vst [vmem:[%s739 + $0x34] sm:$0x1] %v7345
        %7361 = vst [vmem:[%s739 + $0x3c] sm:$0x1] %v7346
        %v7363 = vrot.slane %v7244, 1
        %v7364 = vrot.slane %v7244, 2
        %v7365 = vrot.slane %v7244, 3
        %v7366 = vrot.slane %v7244, 4
        %v7367 = vrot.slane %v7244, 5
        %v7368 = vrot.slane %v7244, 6
        %v7369 = vrot.slane %v7244, 7
        %7377 = vst [vmem:[%s739 + $0x5] sm:$0x1] %v7244
        %7378 = vst [vmem:[%s739 + $0xd] sm:$0x1] %v7363
        %7379 = vst [vmem:[%s739 + $0x15] sm:$0x1] %v7364
        %7380 = vst [vmem:[%s739 + $0x1d] sm:$0x1] %v7365
        %7381 = vst [vmem:[%s739 + $0x25] sm:$0x1] %v7366
        %7382 = vst [vmem:[%s739 + $0x2d] sm:$0x1] %v7367
        %7383 = vst [vmem:[%s739 + $0x35] sm:$0x1] %v7368
        %7384 = vst [vmem:[%s739 + $0x3d] sm:$0x1] %v7369
        %v7386 = vrot.slane %v7245, 1
        %v7387 = vrot.slane %v7245, 2
        %v7388 = vrot.slane %v7245, 3
        %v7389 = vrot.slane %v7245, 4
        %v7390 = vrot.slane %v7245, 5
        %v7391 = vrot.slane %v7245, 6
        %v7392 = vrot.slane %v7245, 7
        %7400 = vst [vmem:[%s739 + $0x6] sm:$0x1] %v7245
        %7401 = vst [vmem:[%s739 + $0xe] sm:$0x1] %v7386
        %7402 = vst [vmem:[%s739 + $0x16] sm:$0x1] %v7387
        %7403 = vst [vmem:[%s739 + $0x1e] sm:$0x1] %v7388
        %7404 = vst [vmem:[%s739 + $0x26] sm:$0x1] %v7389
        %7405 = vst [vmem:[%s739 + $0x2e] sm:$0x1] %v7390
        %7406 = vst [vmem:[%s739 + $0x36] sm:$0x1] %v7391
        %7407 = vst [vmem:[%s739 + $0x3e] sm:$0x1] %v7392
        %v7409 = vrot.slane %v7246, 1
        %v7410 = vrot.slane %v7246, 2
        %v7411 = vrot.slane %v7246, 3
        %v7412 = vrot.slane %v7246, 4
        %v7413 = vrot.slane %v7246, 5
        %v7414 = vrot.slane %v7246, 6
        %v7415 = vrot.slane %v7246, 7
        %7423 = vst [vmem:[%s739 + $0x7] sm:$0x1] %v7246
        %7424 = vst [vmem:[%s739 + $0xf] sm:$0x1] %v7409
        %7425 = vst [vmem:[%s739 + $0x17] sm:$0x1] %v7410
        %7426 = vst [vmem:[%s739 + $0x1f] sm:$0x1] %v7411
        %7427 = vst [vmem:[%s739 + $0x27] sm:$0x1] %v7412
        %7428 = vst [vmem:[%s739 + $0x2f] sm:$0x1] %v7413
        %7429 = vst [vmem:[%s739 + $0x37] sm:$0x1] %v7414
        %7430 = vst [vmem:[%s739 + $0x3f] sm:$0x1] %v7415
        %s7431 = sand.u32 %s417, 1
        %s7432 = scalar_lea.sflag [#allocation5], %s7431
        %s7433 = sand.u32 %s417, 1
        %s7434 = smul.addr %s7433, 64
        %s7435 = scalar_lea.vmem [#allocation20], %s7434
        // Predicated region
        $region129: #{tpu_custom_call.1} parent=87 // pred_check
          %p7436 = pneg %p427
        $region130: #{tpu_custom_call.1} parent=87 // pred_check_branch
          %7438 = sbr.rel (%p7436) target = $region132
        $region131: #{tpu_custom_call.1} parent=87 // pred_region
          %7440 = vsyncadd %s7432, 0
          %s7441 = smul.addr %s42, 8
          %s7442 = scalar_lea.hbm %s17, %s7441
          %s7443 = sshll.u32 %s7435, 4
          %s7444 = int_to_ptr.vmem [resolvable:$true] %s7443
          %s7445 = sshll.u32 %s7442, 4
          %s7446 = int_to_ptr.hbm [resolvable:$true] %s7445
          %7451 = dma.vmem_to_hbm [thread:$0]  %s7444, 1024, %s7446, %s7432, 128, 256, 8
        $region132: #{tpu_custom_call.1} parent=87 // pred_fallthru
          _
      $region88: #{tpu_custom_call.1} parent=5 // pred_fallthru
        _
      %p7452 = scmp.le.s32.totalorder 2, %s37
      // Predicated region
      $region133: #{tpu_custom_call.1} parent=5 // pred_check
        %p7453 = pneg %p7452
      $region134: #{tpu_custom_call.1} parent=5 // pred_check_branch
        %7455 = sbr.rel (%p7453) target = $region136
      $region135: #{tpu_custom_call.1} parent=5 // pred_region
        %s7456 = ssub.s32 %s37, 2
        // Predicated region
        $region137: #{tpu_custom_call.1} parent=135 // pred_check
          %p7457 = pneg %p433
        $region138: #{tpu_custom_call.1} parent=135 // pred_check_branch
          %7459 = sbr.rel (%p7457) target = $region140
        $region139: #{tpu_custom_call.1} parent=135 // pred_region
          %s7460 = sand.u32 %s418, 1
          %s7461 = scalar_lea.sflag [#allocation5], %s7460
          %s7462 = sand.u32 %s418, 1
          %s7463 = smul.addr %s7462, 64
          %s7464 = scalar_lea.vmem [#allocation20], %s7463
          %7466 = dma.done %s7461, 1024
        $region140: #{tpu_custom_call.1} parent=135 // pred_fallthru
          _
      $region136: #{tpu_custom_call.1} parent=5 // pred_fallthru
        _
    $region6: #{tpu_custom_call.1} parent=1 // loop_footer
      %s41 = sadd.s32 1, %s37
    $region7: #{tpu_custom_call.1} parent=1 // loop_footer_branch
      %36 = sbr.rel target = $region3
    $region8: #{tpu_custom_call.1} parent=1 // loop_exit
      _
    %7467 = vsyncpa [#allocation4], 1
    %s7468 = scalar_lea.sflag [#allocation4], 1
    %7469 = vsyncpa %s7468, 1
    %7470 = vsyncpa [#allocation7], 1
    %s7471 = scalar_lea.sflag [#allocation7], 1
    %7472 = vsyncpa %s7471, 1
    %7473 = vsyncpa [#allocation10], 1
    %7474 = vsyncpa [#allocation13], 1
    %7475 = vsyncpa [#allocation16], 1
    %7476 = vsyncpa [#allocation19], 1
    %7477 = vsyncpa [#allocation5], 1
    %s7478 = scalar_lea.sflag [#allocation5], 1
    %7479 = vsyncpa %s7478, 1

</llo_original>
